<compile_context>
chip_gen: v6e
topology: v6e:2x2x1
jax: 0.10.0
libtpu: 0.0.40
codegen_flags: <defaults>
</compile_context>

<pallas_src>
import math
import functools

import numpy as np
import jax
import jax.numpy as jnp
from jax.experimental import pallas as pl
from jax.experimental.pallas import tpu as pltpu

# ----------------------------- configuration --------------------------------
IMG_SIZE = 32
PATCH_SIZE = 8
IN_CHANS = 3
EMBED_DIM = 32
MEMORY_DIM = 48
DEPTH = 2
NUM_HEADS = 4
MLP_RATIO = 4.0
INIT_STD = 0.02
LN_EPS = 1e-5                                    # torch.nn.LayerNorm default eps
GRID = IMG_SIZE // PATCH_SIZE                    # 4
NUM_PATCHES = GRID * GRID                        # 16
HIDDEN_DIM = int(EMBED_DIM * MLP_RATIO)          # 128
HEAD_DIM = EMBED_DIM // NUM_HEADS                # 8
PATCH_DIM = PATCH_SIZE * PATCH_SIZE * IN_CHANS   # 192
PATCH_DIM_PAD = 256                              # lane-dense output (2 x 128)
BATCH = 2

# ---- packed input layouts ---------------------------------------------------
# xin (B*N, 128) f32: [ decoder tokens+pos | block-diag mask bias | memory | pad ]
XIN_LANES = 128

# bias slab (rows, 256) f32 — LayerNorm affines already folded into the following
# projection's weight/bias at prep time, so only true biases remain.
VEC_WIDTH = 256
ROWS_PER_LAYER = 7
R_CQB, R_CKVB, R_CPB, R_QKVB, R_APB, R_F1B, R_F2B = range(ROWS_PER_LAYER)

# wA slab (DEPTH+1, EMBED_DIM, 384) f32 — every weight whose contraction dim is
# EMBED_DIM, lane-concatenated; slot DEPTH holds the (LN-folded) decoder_proj head.
# Kept f32 so the per-head 8-row slices of the proj weights stay sublane-aligned;
# operands are cast to bf16 right before each dot.
WA_LANES = 384
L_CQW = 0                      # cross_q            lanes [0,32)
L_CPW = EMBED_DIM              # cross_attn proj    lanes [32,64)
L_APW = 2 * EMBED_DIM          # self_attn proj     lanes [64,96)
L_QKVW = 128                   # qkv (96 cols, zero-padded to 128)  lanes [128,256)
L_F1W = 256                    # fc1 (128 cols)     lanes [256,384)


# ----------------------------- fused Pallas kernel ---------------------------
def decoder_kernel(xin_ref, vec_ref, wa_ref, wb_ref, wc_ref, out_ref, *,
                   batch, tokens, num_heads, depth):
    d, dm, dh = EMBED_DIM, MEMORY_DIM, HIDDEN_DIM
    bn = batch * tokens
    hd = d // num_heads
    scale = 1.0 / math.sqrt(hd)

    x = xin_ref[:, 0:d]                               # (BN, D)  decoder tokens + pos
    mask_bias = xin_ref[:, d:d + bn]                  # (BN, BN) block-diagonal bias
    mem = xin_ref[:, d + bn:d + bn + dm]              # (BN, Dm) predictor tokens

    def normalize(v):
        # LayerNorm with gamma/beta folded into the next linear: mean/var only.
        mu = jnp.mean(v, axis=-1, keepdims=True)
        vc = v - mu
        var = jnp.mean(vc * vc, axis=-1, keepdims=True)
        return vc * jax.lax.rsqrt(var + LN_EPS)

    def gelu(v):
        # TODO(synk): torch nn.GELU default is exact erf-GELU; tanh approximation here.
        c = math.sqrt(2.0 / math.pi)
        return 0.5 * v * (1.0 + jnp.tanh(c * (v + 0.044715 * v * v * v)))

    def attention_delta(q, k, v, proj_w):
        """Both images in one masked matmul per head; output projection folded per
        head, so head outputs are never concatenated."""
        q = q * scale                                 # fold 1/sqrt(hd) into q
        delta = jnp.zeros((bn, d), jnp.float32)
        for h in range(num_heads):
            c0 = h * hd
            qh = q[:, c0:c0 + hd].astype(jnp.bfloat16)
            kh = k[:, c0:c0 + hd].astype(jnp.bfloat16)
            vh = v[:, c0:c0 + hd].astype(jnp.bfloat16)
            logits = jax.lax.dot_general(
                qh, kh, (((1,), (1,)), ((), ())), preferred_element_type=jnp.float32)
            logits = logits + mask_bias               # -1e9 on cross-image entries
            logits = logits - jnp.max(logits, axis=-1, keepdims=True)
            p = jnp.exp(logits)
            p = p / jnp.sum(p, axis=-1, keepdims=True)
            o = jnp.dot(p.astype(jnp.bfloat16), vh, preferred_element_type=jnp.float32)
            wh = proj_w[c0:c0 + hd, :].astype(jnp.bfloat16)   # (hd, D) rows of W_proj
            delta = delta + jnp.dot(o.astype(jnp.bfloat16), wh,
                                    preferred_element_type=jnp.float32)
        return delta

    # norm_memory's mean/var part is identical for every block (affines folded into
    # the kv weights) and memory never changes across blocks -> normalize once.
    mem_hat = normalize(mem).astype(jnp.bfloat16)

    for layer in range(depth):
        r = layer * ROWS_PER_LAYER
        cqb = vec_ref[r + R_CQB:r + R_CQB + 1, 0:d]
        kvb = vec_ref[r + R_CKVB:r + R_CKVB + 1, 0:4 * d]   # 64 used, 128 read (pad 0)
        cpb = vec_ref[r + R_CPB:r + R_CPB + 1, 0:d]
        qkvb = vec_ref[r + R_QKVB:r + R_QKVB + 1, 0:4 * d]  # 96 used, 128 read (pad 0)
        apb = vec_ref[r + R_APB:r + R_APB + 1, 0:d]
        f1b = vec_ref[r + R_F1B:r + R_F1B + 1, 0:dh]
        f2b = vec_ref[r + R_F2B:r + R_F2B + 1, 0:d]

        cqw = wa_ref[layer, :, L_CQW:L_CQW + d]
        cpw = wa_ref[layer, :, L_CPW:L_CPW + d]
        apw = wa_ref[layer, :, L_APW:L_APW + d]
        qkvw = wa_ref[layer, :, L_QKVW:L_QKVW + 4 * d]      # zero-padded 96 -> 128
        f1w = wa_ref[layer, :, L_F1W:L_F1W + dh]
        ckvw = wb_ref[layer]                                # (Dm, 128) bf16, 64 used
        f2w = wc_ref[layer]                                 # (dh, D)   bf16

        # ---- cross-attention (norm_cross / norm_memory / memory_proj folded) ----
        q_hat = normalize(x).astype(jnp.bfloat16)
        q = jnp.dot(q_hat, cqw.astype(jnp.bfloat16),
                    preferred_element_type=jnp.float32) + cqb
        kv = jnp.dot(mem_hat, ckvw, preferred_element_type=jnp.float32) + kvb
        x = x + attention_delta(q, kv[:, 0:d], kv[:, d:2 * d], cpw) + cpb

        # ---- ACBlock self-attention (action_tokens=0, no mask for images) -------
        h = normalize(x).astype(jnp.bfloat16)
        qkv = jnp.dot(h, qkvw.astype(jnp.bfloat16),
                      preferred_element_type=jnp.float32) + qkvb
        x = x + attention_delta(qkv[:, 0:d], qkv[:, d:2 * d], qkv[:, 2 * d:3 * d],
                                apw) + apb

        # ---- MLP -----------------------------------------------------------------
        h = normalize(x).astype(jnp.bfloat16)
        h = jnp.dot(h, f1w.astype(jnp.bfloat16),
                    preferred_element_type=jnp.float32) + f1b
        h = gelu(h).astype(jnp.bfloat16)
        x = x + jnp.dot(h, f2w, preferred_element_type=jnp.float32) + f2b

    # ---- head: final LayerNorm folded into decoder_proj, lane-dense 256 cols -----
    hr = depth * ROWS_PER_LAYER
    hpw = wa_ref[depth, :, 0:PATCH_DIM_PAD]
    hpb = vec_ref[hr:hr + 1, 0:PATCH_DIM_PAD]
    h = normalize(x).astype(jnp.bfloat16)
    out_ref[...] = jnp.dot(h, hpw.astype(jnp.bfloat16),
                           preferred_element_type=jnp.float32) + hpb


# ----------------------------- parameter prep --------------------------------
def _set_row(slab, r, vec):
    vec = jnp.reshape(vec, (-1,)).astype(jnp.float32)
    return slab.at[r, :vec.shape[0]].set(vec)


def _fold_ln(ln_w, ln_b, w, b):
    """Fold LayerNorm affine into the following linear:
       (gamma*xhat + beta) @ W + b == xhat @ (gamma[:,None]*W) + (beta@W + b)."""
    gamma = jnp.reshape(ln_w, (-1, 1)).astype(jnp.float32)
    beta = jnp.reshape(ln_b, (1, -1)).astype(jnp.float32)
    return gamma * w, beta @ w + b


def prepare_params(params):
    """One-time packing / folding of module parameters into kernel inputs."""
    blocks = params["blocks"]
    depth = len(blocks)
    d, dm, dh = EMBED_DIM, MEMORY_DIM, HIDDEN_DIM

    n_rows = depth * ROWS_PER_LAYER + 1
    vec = jnp.zeros((((n_rows + 7) // 8) * 8, VEC_WIDTH), jnp.float32)
    wa = jnp.zeros((depth + 1, d, WA_LANES), jnp.float32)
    wb = jnp.zeros((depth, dm, 4 * d), jnp.float32)
    wc = jnp.zeros((depth, dh, d), jnp.float32)

    for i, blk in enumerate(blocks):
        # fold memory_proj (bias-free) into cross_kv, then fold norm_memory affine
        ckv = blk["mem_proj_w"] @ blk["cross_kv_w"]                      # (Dm, 2D)
        cqw, cqb = _fold_ln(blk["norm_cross_w"], blk["norm_cross_b"],
                            blk["cross_q_w"], blk["cross_q_b"])
        ckvw, ckvb = _fold_ln(blk["norm_mem_w"], blk["norm_mem_b"],
                              ckv, blk["cross_kv_b"])
        qkvw, qkvb = _fold_ln(blk["norm1_w"], blk["norm1_b"],
                              blk["qkv_w"], blk["qkv_b"])
        f1w, f1b = _fold_ln(blk["norm2_w"], blk["norm2_b"],
                            blk["fc1_w"], blk["fc1_b"])

        wa = wa.at[i, :, L_CQW:L_CQW + d].set(cqw)
        wa = wa.at[i, :, L_CPW:L_CPW + d].set(blk["cross_proj_w"])
        wa = wa.at[i, :, L_APW:L_APW + d].set(blk["attn_proj_w"])
        wa = wa.at[i, :, L_QKVW:L_QKVW + 3 * d].set(qkvw)
        wa = wa.at[i, :, L_F1W:L_F1W + dh].set(f1w)
        wb = wb.at[i, :, :2 * d].set(ckvw)
        wc = wc.at[i].set(blk["fc2_w"])

        r = i * ROWS_PER_LAYER
        vec = _set_row(vec, r + R_CQB, cqb)
        vec = _set_row(vec, r + R_CKVB, ckvb)
        vec = _set_row(vec, r + R_CPB, blk["cross_proj_b"])
        vec = _set_row(vec, r + R_QKVB, qkvb)
        vec = _set_row(vec, r + R_APB, blk["attn_proj_b"])
        vec = _set_row(vec, r + R_F1B, f1b)
        vec = _set_row(vec, r + R_F2B, blk["fc2_b"])

    hpw, hpb = _fold_ln(params["norm_w"], params["norm_b"],
                        params["proj_w"], params["proj_b"])
    wa = wa.at[depth, :, :PATCH_DIM].set(hpw)
    vec = _set_row(vec, depth * ROWS_PER_LAYER, hpb)

    return {
        "vec": vec,                                # f32 bias slab
        "wa": wa,                                  # f32 (8-row head slices stay aligned)
        "wb": wb.astype(jnp.bfloat16),             # MXU operand dtype
        "wc": wc.astype(jnp.bfloat16),
        "x0": (params["decoder_tokens"] + params["pos_embed"])[0],   # (N, D)
    }


# ----------------------------- wrappers --------------------------------------
def unpatchify(x, grid_h, grid_w, patch_size):
    b, n, d = x.shape
    c = d // (patch_size * patch_size)
    x = x.reshape(b, grid_h, grid_w, patch_size, patch_size, c)
    x = x.transpose(0, 5, 1, 3, 2, 4)                  # (B, C, H, p, W, p)
    return x.reshape(b, c, grid_h * patch_size, grid_w * patch_size)


def decoder_forward(x_pred, prepped):
    b, n, dm = x_pred.shape
    d = EMBED_DIM
    bn = b * n
    assert d + bn + dm <= XIN_LANES, "xin packing overflow for this config"

    x0 = jnp.broadcast_to(prepped["x0"][None], (b, n, d)).reshape(bn, d)
    mem = x_pred.astype(jnp.float32).reshape(bn, dm)

    # block-diagonal mask bias: each image's tokens attend only within that image
    grp = jnp.arange(bn, dtype=jnp.int32) // n
    mask_bias = jnp.where(grp[:, None] == grp[None, :],
                          jnp.float32(0.0), jnp.float32(-1e9))

    xin = jnp.zeros((bn, XIN_LANES), jnp.float32)
    xin = xin.at[:, 0:d].set(x0)
    xin = xin.at[:, d:d + bn].set(mask_bias)
    xin = xin.at[:, d + bn:d + bn + dm].set(mem)

    vmem = pl.BlockSpec(memory_space=pltpu.MemorySpace.VMEM)
    out = pl.pallas_call(
        functools.partial(decoder_kernel, batch=b, tokens=n,
                          num_heads=NUM_HEADS, depth=DEPTH),
        out_shape=jax.ShapeDtypeStruct((bn, PATCH_DIM_PAD), jnp.float32),
        in_specs=[vmem] * 5,
        out_specs=vmem,
        compiler_params=pltpu.CompilerParams(vmem_limit_bytes=8 * 1024 * 1024),
    )(xin, prepped["vec"], prepped["wa"], prepped["wb"], prepped["wc"])

    out = out[:, :PATCH_DIM].reshape(b, n, PATCH_DIM)
    return unpatchify(out, GRID, GRID, PATCH_SIZE)


# ----------------------------- parameter init --------------------------------
def get_2d_sincos_pos_embed(embed_dim, grid_size):
    def sincos_1d(dim, pos):
        omega = np.arange(dim // 2, dtype=np.float64) / (dim / 2.0)
        omega = 1.0 / (10000.0 ** omega)
        out = np.einsum("m,d->md", pos.reshape(-1), omega)
        return np.concatenate([np.sin(out), np.cos(out)], axis=1)

    gh = np.arange(grid_size, dtype=np.float64)
    gw = np.arange(grid_size, dtype=np.float64)
    grid = np.meshgrid(gw, gh)                   # w varies fastest, same as reference
    emb_h = sincos_1d(embed_dim // 2, grid[0])
    emb_w = sincos_1d(embed_dim // 2, grid[1])
    return np.concatenate([emb_h, emb_w], axis=1).astype(np.float32)


def init_block_params(key, layer_id, d=EMBED_DIM, dm=MEMORY_DIM, dh=HIDDEN_DIM,
                      std=INIT_STD):
    ks = jax.random.split(key, 8)
    rescale = 1.0 / math.sqrt(2.0 * (layer_id + 1))   # _rescale_blocks
    return {
        "norm_cross_w": jnp.ones((1, d), jnp.float32),
        "norm_cross_b": jnp.zeros((1, d), jnp.float32),
        "norm_mem_w": jnp.ones((1, dm), jnp.float32),
        "norm_mem_b": jnp.zeros((1, dm), jnp.float32),
        "mem_proj_w": jax.random.normal(ks[0], (dm, d), jnp.float32) * std * rescale,
        "cross_q_w": jax.random.normal(ks[1], (d, d), jnp.float32) * std,
        "cross_q_b": jnp.zeros((1, d), jnp.float32),
        "cross_kv_w": jax.random.normal(ks[2], (d, 2 * d), jnp.float32) * std,
        "cross_kv_b": jnp.zeros((1, 2 * d), jnp.float32),
        "cross_proj_w": jax.random.normal(ks[3], (d, d), jnp.float32) * std,
        "cross_proj_b": jnp.zeros((1, d), jnp.float32),
        "norm1_w": jnp.ones((1, d), jnp.float32),
        "norm1_b": jnp.zeros((1, d), jnp.float32),
        "qkv_w": jax.random.normal(ks[4], (d, 3 * d), jnp.float32) * std,
        "qkv_b": jnp.zeros((1, 3 * d), jnp.float32),
        "attn_proj_w": jax.random.normal(ks[5], (d, d), jnp.float32) * std * rescale,
        "attn_proj_b": jnp.zeros((1, d), jnp.float32),
        "norm2_w": jnp.ones((1, d), jnp.float32),
        "norm2_b": jnp.zeros((1, d), jnp.float32),
        "fc1_w": jax.random.normal(ks[6], (d, dh), jnp.float32) * std,
        "fc1_b": jnp.zeros((1, dh), jnp.float32),
        "fc2_w": jax.random.normal(ks[7], (dh, d), jnp.float32) * std * rescale,
        "fc2_b": jnp.zeros((1, d), jnp.float32),
    }


def init_params(key):
    keys = jax.random.split(key, DEPTH + 3)
    return {
        "decoder_tokens": jax.random.normal(keys[0], (1, NUM_PATCHES, EMBED_DIM),
                                            jnp.float32) * INIT_STD,
        "pos_embed": jnp.asarray(get_2d_sincos_pos_embed(EMBED_DIM, GRID))[None],
        "blocks": [init_block_params(keys[1 + i], i) for i in range(DEPTH)],
        "norm_w": jnp.ones((1, EMBED_DIM), jnp.float32),
        "norm_b": jnp.zeros((1, EMBED_DIM), jnp.float32),
        "proj_w": jax.random.normal(keys[DEPTH + 1], (EMBED_DIM, PATCH_DIM),
                                    jnp.float32) * INIT_STD,
        "proj_b": jnp.zeros((1, PATCH_DIM), jnp.float32),
    }


# ----------------------------- main -------------------------------------------
if __name__ == "__main__":
    root = jax.random.PRNGKey(0)
    k_params, k_input = jax.random.split(root)
    params = init_params(k_params)
    prepped = prepare_params(params)

    # predictor latent tokens [B, N, memory_dim]
    x_pred = jax.random.normal(k_input, (BATCH, NUM_PATCHES, MEMORY_DIM), jnp.float32)

    fwd = jax.jit(decoder_forward)
    out = fwd(x_pred, prepped)
    out = jax.block_until_ready(out)

    assert out.shape == (BATCH, IN_CHANS, IMG_SIZE, IMG_SIZE), out.shape
    assert bool(jnp.all(jnp.isfinite(out)))
    print("KERNEL_OK")
</pallas_src>

<mosaic_0001>
module attributes {stable_mosaic.version = 11 : i64} {
  func.func @decoder_kernel(%arg0: memref<32x128xf32, #tpu.memory_space<vmem>>, %arg1: memref<16x256xf32, #tpu.memory_space<vmem>>, %arg2: memref<3x32x384xf32, #tpu.memory_space<vmem>>, %arg3: memref<2x48x128xbf16, #tpu.memory_space<vmem>>, %arg4: memref<2x128x32xbf16, #tpu.memory_space<vmem>>, %arg5: memref<32x256xf32, #tpu.memory_space<vmem>>) attributes {dimension_semantics = [], scalar_prefetch = 0 : i64, scratch_operands = 0 : i64, tpu.core_type = #tpu.core_type<tc>} {
    %c0 = arith.constant 0 : index
    %c0_0 = arith.constant 0 : index
    %0 = vector.load %arg0[%c0, %c0_0] : memref<32x128xf32, #tpu.memory_space<vmem>>, vector<32x32xf32>
    %c0_1 = arith.constant 0 : index
    %c32 = arith.constant 32 : index
    %1 = vector.load %arg0[%c0_1, %c32] : memref<32x128xf32, #tpu.memory_space<vmem>>, vector<32x32xf32>
    %c0_2 = arith.constant 0 : index
    %c64 = arith.constant 64 : index
    %2 = vector.load %arg0[%c0_2, %c64] : memref<32x128xf32, #tpu.memory_space<vmem>>, vector<32x48xf32>
    %cst = arith.constant dense<0.000000e+00> : vector<32xf32>
    %3 = vector.multi_reduction <add>, %2, %cst [1] : vector<32x48xf32> to vector<32xf32>
    %4 = vector.shape_cast %3 : vector<32xf32> to vector<32x1xf32>
    %cst_3 = arith.constant 4.800000e+01 : f32
    %5 = vector.broadcast %cst_3 : f32 to vector<32x1xf32>
    %6 = arith.divf %4, %5 : vector<32x1xf32>
    %7 = vector.broadcast %6 : vector<32x1xf32> to vector<32x48xf32>
    %8 = arith.subf %2, %7 : vector<32x48xf32>
    %9 = arith.mulf %8, %8 : vector<32x48xf32>
    %cst_4 = arith.constant dense<0.000000e+00> : vector<32xf32>
    %10 = vector.multi_reduction <add>, %9, %cst_4 [1] : vector<32x48xf32> to vector<32xf32>
    %11 = vector.shape_cast %10 : vector<32xf32> to vector<32x1xf32>
    %cst_5 = arith.constant 4.800000e+01 : f32
    %12 = vector.broadcast %cst_5 : f32 to vector<32x1xf32>
    %13 = arith.divf %11, %12 : vector<32x1xf32>
    %cst_6 = arith.constant 9.99999974E-6 : f32
    %14 = vector.broadcast %cst_6 : f32 to vector<32x1xf32>
    %15 = arith.addf %13, %14 : vector<32x1xf32>
    %16 = math.rsqrt %15 : vector<32x1xf32>
    %17 = vector.broadcast %16 : vector<32x1xf32> to vector<32x48xf32>
    %18 = arith.mulf %8, %17 : vector<32x48xf32>
    %19 = arith.truncf %18 : vector<32x48xf32> to vector<32x48xbf16>
    %c0_7 = arith.constant 0 : index
    %c0_8 = arith.constant 0 : index
    %20 = vector.load %arg1[%c0_7, %c0_8] : memref<16x256xf32, #tpu.memory_space<vmem>>, vector<1x32xf32>
    %c1 = arith.constant 1 : index
    %c0_9 = arith.constant 0 : index
    %21 = vector.load %arg1[%c1, %c0_9] : memref<16x256xf32, #tpu.memory_space<vmem>>, vector<1x128xf32>
    %c2 = arith.constant 2 : index
    %c0_10 = arith.constant 0 : index
    %22 = vector.load %arg1[%c2, %c0_10] : memref<16x256xf32, #tpu.memory_space<vmem>>, vector<1x32xf32>
    %c3 = arith.constant 3 : index
    %c0_11 = arith.constant 0 : index
    %23 = vector.load %arg1[%c3, %c0_11] : memref<16x256xf32, #tpu.memory_space<vmem>>, vector<1x128xf32>
    %c4 = arith.constant 4 : index
    %c0_12 = arith.constant 0 : index
    %24 = vector.load %arg1[%c4, %c0_12] : memref<16x256xf32, #tpu.memory_space<vmem>>, vector<1x32xf32>
    %c5 = arith.constant 5 : index
    %c0_13 = arith.constant 0 : index
    %25 = vector.load %arg1[%c5, %c0_13] : memref<16x256xf32, #tpu.memory_space<vmem>>, vector<1x128xf32>
    %c6 = arith.constant 6 : index
    %c0_14 = arith.constant 0 : index
    %26 = vector.load %arg1[%c6, %c0_14] : memref<16x256xf32, #tpu.memory_space<vmem>>, vector<1x32xf32>
    %c0_15 = arith.constant 0 : index
    %c0_16 = arith.constant 0 : index
    %c0_17 = arith.constant 0 : index
    %27 = vector.load %arg2[%c0_15, %c0_16, %c0_17] : memref<3x32x384xf32, #tpu.memory_space<vmem>>, vector<1x32x32xf32>
    %28 = vector.shape_cast %27 : vector<1x32x32xf32> to vector<32x32xf32>
    %c0_18 = arith.constant 0 : index
    %c0_19 = arith.constant 0 : index
    %c32_20 = arith.constant 32 : index
    %29 = vector.load %arg2[%c0_18, %c0_19, %c32_20] : memref<3x32x384xf32, #tpu.memory_space<vmem>>, vector<1x32x32xf32>
    %30 = vector.shape_cast %29 : vector<1x32x32xf32> to vector<32x32xf32>
    %c0_21 = arith.constant 0 : index
    %c0_22 = arith.constant 0 : index
    %c64_23 = arith.constant 64 : index
    %31 = vector.load %arg2[%c0_21, %c0_22, %c64_23] : memref<3x32x384xf32, #tpu.memory_space<vmem>>, vector<1x32x32xf32>
    %32 = vector.shape_cast %31 : vector<1x32x32xf32> to vector<32x32xf32>
    %c0_24 = arith.constant 0 : index
    %c0_25 = arith.constant 0 : index
    %c128 = arith.constant 128 : index
    %33 = vector.load %arg2[%c0_24, %c0_25, %c128] : memref<3x32x384xf32, #tpu.memory_space<vmem>>, vector<1x32x128xf32>
    %34 = vector.shape_cast %33 : vector<1x32x128xf32> to vector<32x128xf32>
    %c0_26 = arith.constant 0 : index
    %c0_27 = arith.constant 0 : index
    %c256 = arith.constant 256 : index
    %35 = vector.load %arg2[%c0_26, %c0_27, %c256] : memref<3x32x384xf32, #tpu.memory_space<vmem>>, vector<1x32x128xf32>
    %36 = vector.shape_cast %35 : vector<1x32x128xf32> to vector<32x128xf32>
    %c0_28 = arith.constant 0 : index
    %c0_29 = arith.constant 0 : index
    %c0_30 = arith.constant 0 : index
    %37 = vector.load %arg3[%c0_28, %c0_29, %c0_30] : memref<2x48x128xbf16, #tpu.memory_space<vmem>>, vector<1x48x128xbf16>
    %38 = vector.shape_cast %37 : vector<1x48x128xbf16> to vector<48x128xbf16>
    %c0_31 = arith.constant 0 : index
    %c0_32 = arith.constant 0 : index
    %c0_33 = arith.constant 0 : index
    %39 = vector.load %arg4[%c0_31, %c0_32, %c0_33] : memref<2x128x32xbf16, #tpu.memory_space<vmem>>, vector<1x128x32xbf16>
    %40 = vector.shape_cast %39 : vector<1x128x32xbf16> to vector<128x32xbf16>
    %cst_34 = arith.constant dense<0.000000e+00> : vector<32xf32>
    %41 = vector.multi_reduction <add>, %0, %cst_34 [1] : vector<32x32xf32> to vector<32xf32>
    %42 = vector.shape_cast %41 : vector<32xf32> to vector<32x1xf32>
    %cst_35 = arith.constant 3.200000e+01 : f32
    %43 = vector.broadcast %cst_35 : f32 to vector<32x1xf32>
    %44 = arith.divf %42, %43 : vector<32x1xf32>
    %45 = vector.broadcast %44 : vector<32x1xf32> to vector<32x32xf32>
    %46 = arith.subf %0, %45 : vector<32x32xf32>
    %47 = arith.mulf %46, %46 : vector<32x32xf32>
    %cst_36 = arith.constant dense<0.000000e+00> : vector<32xf32>
    %48 = vector.multi_reduction <add>, %47, %cst_36 [1] : vector<32x32xf32> to vector<32xf32>
    %49 = vector.shape_cast %48 : vector<32xf32> to vector<32x1xf32>
    %cst_37 = arith.constant 3.200000e+01 : f32
    %50 = vector.broadcast %cst_37 : f32 to vector<32x1xf32>
    %51 = arith.divf %49, %50 : vector<32x1xf32>
    %cst_38 = arith.constant 9.99999974E-6 : f32
    %52 = vector.broadcast %cst_38 : f32 to vector<32x1xf32>
    %53 = arith.addf %51, %52 : vector<32x1xf32>
    %54 = math.rsqrt %53 : vector<32x1xf32>
    %55 = vector.broadcast %54 : vector<32x1xf32> to vector<32x32xf32>
    %56 = arith.mulf %46, %55 : vector<32x32xf32>
    %57 = arith.truncf %56 : vector<32x32xf32> to vector<32x32xbf16>
    %58 = arith.truncf %28 : vector<32x32xf32> to vector<32x32xbf16>
    %cst_39 = arith.constant dense<0.000000e+00> : vector<32x32xf32>
    %59 = tpu.matmul %57, %58, %cst_39 {dimension_numbers = #tpu.dot_dimension_numbers<[1], [0], [0], [1], [0, 0, 1, 1], [], []>} : vector<32x32xbf16>, vector<32x32xbf16>, vector<32x32xf32> -> vector<32x32xf32>
    %60 = vector.broadcast %20 : vector<1x32xf32> to vector<32x32xf32>
    %61 = arith.addf %59, %60 : vector<32x32xf32>
    %cst_40 = arith.constant dense<0.000000e+00> : vector<32x128xf32>
    %62 = tpu.matmul %19, %38, %cst_40 {dimension_numbers = #tpu.dot_dimension_numbers<[1], [0], [0], [1], [0, 0, 1, 1], [], []>} : vector<32x48xbf16>, vector<48x128xbf16>, vector<32x128xf32> -> vector<32x128xf32>
    %63 = vector.broadcast %21 : vector<1x128xf32> to vector<32x128xf32>
    %64 = arith.addf %62, %63 : vector<32x128xf32>
    %65 = vector.extract_strided_slice %64 {offsets = [0, 0], sizes = [32, 32], strides = [1, 1]} : vector<32x128xf32> to vector<32x32xf32>
    %66 = vector.extract_strided_slice %64 {offsets = [0, 32], sizes = [32, 32], strides = [1, 1]} : vector<32x128xf32> to vector<32x32xf32>
    %cst_41 = arith.constant 0.353553385 : f32
    %67 = vector.broadcast %cst_41 : f32 to vector<32x32xf32>
    %68 = arith.mulf %61, %67 : vector<32x32xf32>
    %cst_42 = arith.constant 0.000000e+00 : f32
    %69 = vector.broadcast %cst_42 : f32 to vector<32x32xf32>
    %70 = vector.extract_strided_slice %68 {offsets = [0, 0], sizes = [32, 8], strides = [1, 1]} : vector<32x32xf32> to vector<32x8xf32>
    %71 = arith.truncf %70 : vector<32x8xf32> to vector<32x8xbf16>
    %72 = vector.extract_strided_slice %65 {offsets = [0, 0], sizes = [32, 8], strides = [1, 1]} : vector<32x32xf32> to vector<32x8xf32>
    %73 = arith.truncf %72 : vector<32x8xf32> to vector<32x8xbf16>
    %74 = vector.extract_strided_slice %66 {offsets = [0, 0], sizes = [32, 8], strides = [1, 1]} : vector<32x32xf32> to vector<32x8xf32>
    %75 = arith.truncf %74 : vector<32x8xf32> to vector<32x8xbf16>
    %cst_43 = arith.constant dense<0.000000e+00> : vector<32x32xf32>
    %76 = tpu.matmul %71, %73, %cst_43 {dimension_numbers = #tpu.dot_dimension_numbers<[1], [1], [0], [0], [0, 0, 1, 0], [], []>} : vector<32x8xbf16>, vector<32x8xbf16>, vector<32x32xf32> -> vector<32x32xf32>
    %77 = arith.addf %76, %1 : vector<32x32xf32>
    %cst_44 = arith.constant dense<0xFF800000> : vector<32xf32>
    %78 = vector.multi_reduction <maximumf>, %77, %cst_44 [1] : vector<32x32xf32> to vector<32xf32>
    %79 = vector.shape_cast %78 : vector<32xf32> to vector<32x1xf32>
    %80 = vector.broadcast %79 : vector<32x1xf32> to vector<32x32xf32>
    %81 = arith.subf %77, %80 : vector<32x32xf32>
    %82 = math.exp %81 : vector<32x32xf32>
    %cst_45 = arith.constant dense<0.000000e+00> : vector<32xf32>
    %83 = vector.multi_reduction <add>, %82, %cst_45 [1] : vector<32x32xf32> to vector<32xf32>
    %84 = vector.shape_cast %83 : vector<32xf32> to vector<32x1xf32>
    %85 = vector.broadcast %84 : vector<32x1xf32> to vector<32x32xf32>
    %86 = arith.divf %82, %85 : vector<32x32xf32>
    %87 = arith.truncf %86 : vector<32x32xf32> to vector<32x32xbf16>
    %cst_46 = arith.constant dense<0.000000e+00> : vector<32x8xf32>
    %88 = tpu.matmul %87, %75, %cst_46 {dimension_numbers = #tpu.dot_dimension_numbers<[1], [0], [0], [1], [0, 0, 1, 1], [], []>} : vector<32x32xbf16>, vector<32x8xbf16>, vector<32x8xf32> -> vector<32x8xf32>
    %89 = vector.extract_strided_slice %30 {offsets = [0, 0], sizes = [8, 32], strides = [1, 1]} : vector<32x32xf32> to vector<8x32xf32>
    %90 = arith.truncf %89 : vector<8x32xf32> to vector<8x32xbf16>
    %91 = arith.truncf %88 : vector<32x8xf32> to vector<32x8xbf16>
    %cst_47 = arith.constant dense<0.000000e+00> : vector<32x32xf32>
    %92 = tpu.matmul %91, %90, %cst_47 {dimension_numbers = #tpu.dot_dimension_numbers<[1], [0], [0], [1], [0, 0, 1, 1], [], []>} : vector<32x8xbf16>, vector<8x32xbf16>, vector<32x32xf32> -> vector<32x32xf32>
    %93 = arith.addf %69, %92 : vector<32x32xf32>
    %94 = vector.extract_strided_slice %68 {offsets = [0, 8], sizes = [32, 8], strides = [1, 1]} : vector<32x32xf32> to vector<32x8xf32>
    %95 = arith.truncf %94 : vector<32x8xf32> to vector<32x8xbf16>
    %96 = vector.extract_strided_slice %65 {offsets = [0, 8], sizes = [32, 8], strides = [1, 1]} : vector<32x32xf32> to vector<32x8xf32>
    %97 = arith.truncf %96 : vector<32x8xf32> to vector<32x8xbf16>
    %98 = vector.extract_strided_slice %66 {offsets = [0, 8], sizes = [32, 8], strides = [1, 1]} : vector<32x32xf32> to vector<32x8xf32>
    %99 = arith.truncf %98 : vector<32x8xf32> to vector<32x8xbf16>
    %cst_48 = arith.constant dense<0.000000e+00> : vector<32x32xf32>
    %100 = tpu.matmul %95, %97, %cst_48 {dimension_numbers = #tpu.dot_dimension_numbers<[1], [1], [0], [0], [0, 0, 1, 0], [], []>} : vector<32x8xbf16>, vector<32x8xbf16>, vector<32x32xf32> -> vector<32x32xf32>
    %101 = arith.addf %100, %1 : vector<32x32xf32>
    %cst_49 = arith.constant dense<0xFF800000> : vector<32xf32>
    %102 = vector.multi_reduction <maximumf>, %101, %cst_49 [1] : vector<32x32xf32> to vector<32xf32>
    %103 = vector.shape_cast %102 : vector<32xf32> to vector<32x1xf32>
    %104 = vector.broadcast %103 : vector<32x1xf32> to vector<32x32xf32>
    %105 = arith.subf %101, %104 : vector<32x32xf32>
    %106 = math.exp %105 : vector<32x32xf32>
    %cst_50 = arith.constant dense<0.000000e+00> : vector<32xf32>
    %107 = vector.multi_reduction <add>, %106, %cst_50 [1] : vector<32x32xf32> to vector<32xf32>
    %108 = vector.shape_cast %107 : vector<32xf32> to vector<32x1xf32>
    %109 = vector.broadcast %108 : vector<32x1xf32> to vector<32x32xf32>
    %110 = arith.divf %106, %109 : vector<32x32xf32>
    %111 = arith.truncf %110 : vector<32x32xf32> to vector<32x32xbf16>
    %cst_51 = arith.constant dense<0.000000e+00> : vector<32x8xf32>
    %112 = tpu.matmul %111, %99, %cst_51 {dimension_numbers = #tpu.dot_dimension_numbers<[1], [0], [0], [1], [0, 0, 1, 1], [], []>} : vector<32x32xbf16>, vector<32x8xbf16>, vector<32x8xf32> -> vector<32x8xf32>
    %113 = vector.extract_strided_slice %30 {offsets = [8, 0], sizes = [8, 32], strides = [1, 1]} : vector<32x32xf32> to vector<8x32xf32>
    %114 = arith.truncf %113 : vector<8x32xf32> to vector<8x32xbf16>
    %115 = arith.truncf %112 : vector<32x8xf32> to vector<32x8xbf16>
    %cst_52 = arith.constant dense<0.000000e+00> : vector<32x32xf32>
    %116 = tpu.matmul %115, %114, %cst_52 {dimension_numbers = #tpu.dot_dimension_numbers<[1], [0], [0], [1], [0, 0, 1, 1], [], []>} : vector<32x8xbf16>, vector<8x32xbf16>, vector<32x32xf32> -> vector<32x32xf32>
    %117 = arith.addf %93, %116 : vector<32x32xf32>
    %118 = vector.extract_strided_slice %68 {offsets = [0, 16], sizes = [32, 8], strides = [1, 1]} : vector<32x32xf32> to vector<32x8xf32>
    %119 = arith.truncf %118 : vector<32x8xf32> to vector<32x8xbf16>
    %120 = vector.extract_strided_slice %65 {offsets = [0, 16], sizes = [32, 8], strides = [1, 1]} : vector<32x32xf32> to vector<32x8xf32>
    %121 = arith.truncf %120 : vector<32x8xf32> to vector<32x8xbf16>
    %122 = vector.extract_strided_slice %66 {offsets = [0, 16], sizes = [32, 8], strides = [1, 1]} : vector<32x32xf32> to vector<32x8xf32>
    %123 = arith.truncf %122 : vector<32x8xf32> to vector<32x8xbf16>
    %cst_53 = arith.constant dense<0.000000e+00> : vector<32x32xf32>
    %124 = tpu.matmul %119, %121, %cst_53 {dimension_numbers = #tpu.dot_dimension_numbers<[1], [1], [0], [0], [0, 0, 1, 0], [], []>} : vector<32x8xbf16>, vector<32x8xbf16>, vector<32x32xf32> -> vector<32x32xf32>
    %125 = arith.addf %124, %1 : vector<32x32xf32>
    %cst_54 = arith.constant dense<0xFF800000> : vector<32xf32>
    %126 = vector.multi_reduction <maximumf>, %125, %cst_54 [1] : vector<32x32xf32> to vector<32xf32>
    %127 = vector.shape_cast %126 : vector<32xf32> to vector<32x1xf32>
    %128 = vector.broadcast %127 : vector<32x1xf32> to vector<32x32xf32>
    %129 = arith.subf %125, %128 : vector<32x32xf32>
    %130 = math.exp %129 : vector<32x32xf32>
    %cst_55 = arith.constant dense<0.000000e+00> : vector<32xf32>
    %131 = vector.multi_reduction <add>, %130, %cst_55 [1] : vector<32x32xf32> to vector<32xf32>
    %132 = vector.shape_cast %131 : vector<32xf32> to vector<32x1xf32>
    %133 = vector.broadcast %132 : vector<32x1xf32> to vector<32x32xf32>
    %134 = arith.divf %130, %133 : vector<32x32xf32>
    %135 = arith.truncf %134 : vector<32x32xf32> to vector<32x32xbf16>
    %cst_56 = arith.constant dense<0.000000e+00> : vector<32x8xf32>
    %136 = tpu.matmul %135, %123, %cst_56 {dimension_numbers = #tpu.dot_dimension_numbers<[1], [0], [0], [1], [0, 0, 1, 1], [], []>} : vector<32x32xbf16>, vector<32x8xbf16>, vector<32x8xf32> -> vector<32x8xf32>
    %137 = vector.extract_strided_slice %30 {offsets = [16, 0], sizes = [8, 32], strides = [1, 1]} : vector<32x32xf32> to vector<8x32xf32>
    %138 = arith.truncf %137 : vector<8x32xf32> to vector<8x32xbf16>
    %139 = arith.truncf %136 : vector<32x8xf32> to vector<32x8xbf16>
    %cst_57 = arith.constant dense<0.000000e+00> : vector<32x32xf32>
    %140 = tpu.matmul %139, %138, %cst_57 {dimension_numbers = #tpu.dot_dimension_numbers<[1], [0], [0], [1], [0, 0, 1, 1], [], []>} : vector<32x8xbf16>, vector<8x32xbf16>, vector<32x32xf32> -> vector<32x32xf32>
    %141 = arith.addf %117, %140 : vector<32x32xf32>
    %142 = vector.extract_strided_slice %68 {offsets = [0, 24], sizes = [32, 8], strides = [1, 1]} : vector<32x32xf32> to vector<32x8xf32>
    %143 = arith.truncf %142 : vector<32x8xf32> to vector<32x8xbf16>
    %144 = vector.extract_strided_slice %65 {offsets = [0, 24], sizes = [32, 8], strides = [1, 1]} : vector<32x32xf32> to vector<32x8xf32>
    %145 = arith.truncf %144 : vector<32x8xf32> to vector<32x8xbf16>
    %146 = vector.extract_strided_slice %66 {offsets = [0, 24], sizes = [32, 8], strides = [1, 1]} : vector<32x32xf32> to vector<32x8xf32>
    %147 = arith.truncf %146 : vector<32x8xf32> to vector<32x8xbf16>
    %cst_58 = arith.constant dense<0.000000e+00> : vector<32x32xf32>
    %148 = tpu.matmul %143, %145, %cst_58 {dimension_numbers = #tpu.dot_dimension_numbers<[1], [1], [0], [0], [0, 0, 1, 0], [], []>} : vector<32x8xbf16>, vector<32x8xbf16>, vector<32x32xf32> -> vector<32x32xf32>
    %149 = arith.addf %148, %1 : vector<32x32xf32>
    %cst_59 = arith.constant dense<0xFF800000> : vector<32xf32>
    %150 = vector.multi_reduction <maximumf>, %149, %cst_59 [1] : vector<32x32xf32> to vector<32xf32>
    %151 = vector.shape_cast %150 : vector<32xf32> to vector<32x1xf32>
    %152 = vector.broadcast %151 : vector<32x1xf32> to vector<32x32xf32>
    %153 = arith.subf %149, %152 : vector<32x32xf32>
    %154 = math.exp %153 : vector<32x32xf32>
    %cst_60 = arith.constant dense<0.000000e+00> : vector<32xf32>
    %155 = vector.multi_reduction <add>, %154, %cst_60 [1] : vector<32x32xf32> to vector<32xf32>
    %156 = vector.shape_cast %155 : vector<32xf32> to vector<32x1xf32>
    %157 = vector.broadcast %156 : vector<32x1xf32> to vector<32x32xf32>
    %158 = arith.divf %154, %157 : vector<32x32xf32>
    %159 = arith.truncf %158 : vector<32x32xf32> to vector<32x32xbf16>
    %cst_61 = arith.constant dense<0.000000e+00> : vector<32x8xf32>
    %160 = tpu.matmul %159, %147, %cst_61 {dimension_numbers = #tpu.dot_dimension_numbers<[1], [0], [0], [1], [0, 0, 1, 1], [], []>} : vector<32x32xbf16>, vector<32x8xbf16>, vector<32x8xf32> -> vector<32x8xf32>
    %161 = vector.extract_strided_slice %30 {offsets = [24, 0], sizes = [8, 32], strides = [1, 1]} : vector<32x32xf32> to vector<8x32xf32>
    %162 = arith.truncf %161 : vector<8x32xf32> to vector<8x32xbf16>
    %163 = arith.truncf %160 : vector<32x8xf32> to vector<32x8xbf16>
    %cst_62 = arith.constant dense<0.000000e+00> : vector<32x32xf32>
    %164 = tpu.matmul %163, %162, %cst_62 {dimension_numbers = #tpu.dot_dimension_numbers<[1], [0], [0], [1], [0, 0, 1, 1], [], []>} : vector<32x8xbf16>, vector<8x32xbf16>, vector<32x32xf32> -> vector<32x32xf32>
    %165 = arith.addf %141, %164 : vector<32x32xf32>
    %166 = arith.addf %0, %165 : vector<32x32xf32>
    %167 = vector.broadcast %22 : vector<1x32xf32> to vector<32x32xf32>
    %168 = arith.addf %166, %167 : vector<32x32xf32>
    %cst_63 = arith.constant dense<0.000000e+00> : vector<32xf32>
    %169 = vector.multi_reduction <add>, %168, %cst_63 [1] : vector<32x32xf32> to vector<32xf32>
    %170 = vector.shape_cast %169 : vector<32xf32> to vector<32x1xf32>
    %cst_64 = arith.constant 3.200000e+01 : f32
    %171 = vector.broadcast %cst_64 : f32 to vector<32x1xf32>
    %172 = arith.divf %170, %171 : vector<32x1xf32>
    %173 = vector.broadcast %172 : vector<32x1xf32> to vector<32x32xf32>
    %174 = arith.subf %168, %173 : vector<32x32xf32>
    %175 = arith.mulf %174, %174 : vector<32x32xf32>
    %cst_65 = arith.constant dense<0.000000e+00> : vector<32xf32>
    %176 = vector.multi_reduction <add>, %175, %cst_65 [1] : vector<32x32xf32> to vector<32xf32>
    %177 = vector.shape_cast %176 : vector<32xf32> to vector<32x1xf32>
    %cst_66 = arith.constant 3.200000e+01 : f32
    %178 = vector.broadcast %cst_66 : f32 to vector<32x1xf32>
    %179 = arith.divf %177, %178 : vector<32x1xf32>
    %cst_67 = arith.constant 9.99999974E-6 : f32
    %180 = vector.broadcast %cst_67 : f32 to vector<32x1xf32>
    %181 = arith.addf %179, %180 : vector<32x1xf32>
    %182 = math.rsqrt %181 : vector<32x1xf32>
    %183 = vector.broadcast %182 : vector<32x1xf32> to vector<32x32xf32>
    %184 = arith.mulf %174, %183 : vector<32x32xf32>
    %185 = arith.truncf %184 : vector<32x32xf32> to vector<32x32xbf16>
    %186 = arith.truncf %34 : vector<32x128xf32> to vector<32x128xbf16>
    %cst_68 = arith.constant dense<0.000000e+00> : vector<32x128xf32>
    %187 = tpu.matmul %185, %186, %cst_68 {dimension_numbers = #tpu.dot_dimension_numbers<[1], [0], [0], [1], [0, 0, 1, 1], [], []>} : vector<32x32xbf16>, vector<32x128xbf16>, vector<32x128xf32> -> vector<32x128xf32>
    %188 = vector.broadcast %23 : vector<1x128xf32> to vector<32x128xf32>
    %189 = arith.addf %187, %188 : vector<32x128xf32>
    %190 = vector.extract_strided_slice %189 {offsets = [0, 0], sizes = [32, 32], strides = [1, 1]} : vector<32x128xf32> to vector<32x32xf32>
    %191 = vector.extract_strided_slice %189 {offsets = [0, 32], sizes = [32, 32], strides = [1, 1]} : vector<32x128xf32> to vector<32x32xf32>
    %192 = vector.extract_strided_slice %189 {offsets = [0, 64], sizes = [32, 32], strides = [1, 1]} : vector<32x128xf32> to vector<32x32xf32>
    %cst_69 = arith.constant 0.353553385 : f32
    %193 = vector.broadcast %cst_69 : f32 to vector<32x32xf32>
    %194 = arith.mulf %190, %193 : vector<32x32xf32>
    %cst_70 = arith.constant 0.000000e+00 : f32
    %195 = vector.broadcast %cst_70 : f32 to vector<32x32xf32>
    %196 = vector.extract_strided_slice %194 {offsets = [0, 0], sizes = [32, 8], strides = [1, 1]} : vector<32x32xf32> to vector<32x8xf32>
    %197 = arith.truncf %196 : vector<32x8xf32> to vector<32x8xbf16>
    %198 = vector.extract_strided_slice %191 {offsets = [0, 0], sizes = [32, 8], strides = [1, 1]} : vector<32x32xf32> to vector<32x8xf32>
    %199 = arith.truncf %198 : vector<32x8xf32> to vector<32x8xbf16>
    %200 = vector.extract_strided_slice %192 {offsets = [0, 0], sizes = [32, 8], strides = [1, 1]} : vector<32x32xf32> to vector<32x8xf32>
    %201 = arith.truncf %200 : vector<32x8xf32> to vector<32x8xbf16>
    %cst_71 = arith.constant dense<0.000000e+00> : vector<32x32xf32>
    %202 = tpu.matmul %197, %199, %cst_71 {dimension_numbers = #tpu.dot_dimension_numbers<[1], [1], [0], [0], [0, 0, 1, 0], [], []>} : vector<32x8xbf16>, vector<32x8xbf16>, vector<32x32xf32> -> vector<32x32xf32>
    %203 = arith.addf %202, %1 : vector<32x32xf32>
    %cst_72 = arith.constant dense<0xFF800000> : vector<32xf32>
    %204 = vector.multi_reduction <maximumf>, %203, %cst_72 [1] : vector<32x32xf32> to vector<32xf32>
    %205 = vector.shape_cast %204 : vector<32xf32> to vector<32x1xf32>
    %206 = vector.broadcast %205 : vector<32x1xf32> to vector<32x32xf32>
    %207 = arith.subf %203, %206 : vector<32x32xf32>
    %208 = math.exp %207 : vector<32x32xf32>
    %cst_73 = arith.constant dense<0.000000e+00> : vector<32xf32>
    %209 = vector.multi_reduction <add>, %208, %cst_73 [1] : vector<32x32xf32> to vector<32xf32>
    %210 = vector.shape_cast %209 : vector<32xf32> to vector<32x1xf32>
    %211 = vector.broadcast %210 : vector<32x1xf32> to vector<32x32xf32>
    %212 = arith.divf %208, %211 : vector<32x32xf32>
    %213 = arith.truncf %212 : vector<32x32xf32> to vector<32x32xbf16>
    %cst_74 = arith.constant dense<0.000000e+00> : vector<32x8xf32>
    %214 = tpu.matmul %213, %201, %cst_74 {dimension_numbers = #tpu.dot_dimension_numbers<[1], [0], [0], [1], [0, 0, 1, 1], [], []>} : vector<32x32xbf16>, vector<32x8xbf16>, vector<32x8xf32> -> vector<32x8xf32>
    %215 = vector.extract_strided_slice %32 {offsets = [0, 0], sizes = [8, 32], strides = [1, 1]} : vector<32x32xf32> to vector<8x32xf32>
    %216 = arith.truncf %215 : vector<8x32xf32> to vector<8x32xbf16>
    %217 = arith.truncf %214 : vector<32x8xf32> to vector<32x8xbf16>
    %cst_75 = arith.constant dense<0.000000e+00> : vector<32x32xf32>
    %218 = tpu.matmul %217, %216, %cst_75 {dimension_numbers = #tpu.dot_dimension_numbers<[1], [0], [0], [1], [0, 0, 1, 1], [], []>} : vector<32x8xbf16>, vector<8x32xbf16>, vector<32x32xf32> -> vector<32x32xf32>
    %219 = arith.addf %195, %218 : vector<32x32xf32>
    %220 = vector.extract_strided_slice %194 {offsets = [0, 8], sizes = [32, 8], strides = [1, 1]} : vector<32x32xf32> to vector<32x8xf32>
    %221 = arith.truncf %220 : vector<32x8xf32> to vector<32x8xbf16>
    %222 = vector.extract_strided_slice %191 {offsets = [0, 8], sizes = [32, 8], strides = [1, 1]} : vector<32x32xf32> to vector<32x8xf32>
    %223 = arith.truncf %222 : vector<32x8xf32> to vector<32x8xbf16>
    %224 = vector.extract_strided_slice %192 {offsets = [0, 8], sizes = [32, 8], strides = [1, 1]} : vector<32x32xf32> to vector<32x8xf32>
    %225 = arith.truncf %224 : vector<32x8xf32> to vector<32x8xbf16>
    %cst_76 = arith.constant dense<0.000000e+00> : vector<32x32xf32>
    %226 = tpu.matmul %221, %223, %cst_76 {dimension_numbers = #tpu.dot_dimension_numbers<[1], [1], [0], [0], [0, 0, 1, 0], [], []>} : vector<32x8xbf16>, vector<32x8xbf16>, vector<32x32xf32> -> vector<32x32xf32>
    %227 = arith.addf %226, %1 : vector<32x32xf32>
    %cst_77 = arith.constant dense<0xFF800000> : vector<32xf32>
    %228 = vector.multi_reduction <maximumf>, %227, %cst_77 [1] : vector<32x32xf32> to vector<32xf32>
    %229 = vector.shape_cast %228 : vector<32xf32> to vector<32x1xf32>
    %230 = vector.broadcast %229 : vector<32x1xf32> to vector<32x32xf32>
    %231 = arith.subf %227, %230 : vector<32x32xf32>
    %232 = math.exp %231 : vector<32x32xf32>
    %cst_78 = arith.constant dense<0.000000e+00> : vector<32xf32>
    %233 = vector.multi_reduction <add>, %232, %cst_78 [1] : vector<32x32xf32> to vector<32xf32>
    %234 = vector.shape_cast %233 : vector<32xf32> to vector<32x1xf32>
    %235 = vector.broadcast %234 : vector<32x1xf32> to vector<32x32xf32>
    %236 = arith.divf %232, %235 : vector<32x32xf32>
    %237 = arith.truncf %236 : vector<32x32xf32> to vector<32x32xbf16>
    %cst_79 = arith.constant dense<0.000000e+00> : vector<32x8xf32>
    %238 = tpu.matmul %237, %225, %cst_79 {dimension_numbers = #tpu.dot_dimension_numbers<[1], [0], [0], [1], [0, 0, 1, 1], [], []>} : vector<32x32xbf16>, vector<32x8xbf16>, vector<32x8xf32> -> vector<32x8xf32>
    %239 = vector.extract_strided_slice %32 {offsets = [8, 0], sizes = [8, 32], strides = [1, 1]} : vector<32x32xf32> to vector<8x32xf32>
    %240 = arith.truncf %239 : vector<8x32xf32> to vector<8x32xbf16>
    %241 = arith.truncf %238 : vector<32x8xf32> to vector<32x8xbf16>
    %cst_80 = arith.constant dense<0.000000e+00> : vector<32x32xf32>
    %242 = tpu.matmul %241, %240, %cst_80 {dimension_numbers = #tpu.dot_dimension_numbers<[1], [0], [0], [1], [0, 0, 1, 1], [], []>} : vector<32x8xbf16>, vector<8x32xbf16>, vector<32x32xf32> -> vector<32x32xf32>
    %243 = arith.addf %219, %242 : vector<32x32xf32>
    %244 = vector.extract_strided_slice %194 {offsets = [0, 16], sizes = [32, 8], strides = [1, 1]} : vector<32x32xf32> to vector<32x8xf32>
    %245 = arith.truncf %244 : vector<32x8xf32> to vector<32x8xbf16>
    %246 = vector.extract_strided_slice %191 {offsets = [0, 16], sizes = [32, 8], strides = [1, 1]} : vector<32x32xf32> to vector<32x8xf32>
    %247 = arith.truncf %246 : vector<32x8xf32> to vector<32x8xbf16>
    %248 = vector.extract_strided_slice %192 {offsets = [0, 16], sizes = [32, 8], strides = [1, 1]} : vector<32x32xf32> to vector<32x8xf32>
    %249 = arith.truncf %248 : vector<32x8xf32> to vector<32x8xbf16>
    %cst_81 = arith.constant dense<0.000000e+00> : vector<32x32xf32>
    %250 = tpu.matmul %245, %247, %cst_81 {dimension_numbers = #tpu.dot_dimension_numbers<[1], [1], [0], [0], [0, 0, 1, 0], [], []>} : vector<32x8xbf16>, vector<32x8xbf16>, vector<32x32xf32> -> vector<32x32xf32>
    %251 = arith.addf %250, %1 : vector<32x32xf32>
    %cst_82 = arith.constant dense<0xFF800000> : vector<32xf32>
    %252 = vector.multi_reduction <maximumf>, %251, %cst_82 [1] : vector<32x32xf32> to vector<32xf32>
    %253 = vector.shape_cast %252 : vector<32xf32> to vector<32x1xf32>
    %254 = vector.broadcast %253 : vector<32x1xf32> to vector<32x32xf32>
    %255 = arith.subf %251, %254 : vector<32x32xf32>
    %256 = math.exp %255 : vector<32x32xf32>
    %cst_83 = arith.constant dense<0.000000e+00> : vector<32xf32>
    %257 = vector.multi_reduction <add>, %256, %cst_83 [1] : vector<32x32xf32> to vector<32xf32>
    %258 = vector.shape_cast %257 : vector<32xf32> to vector<32x1xf32>
    %259 = vector.broadcast %258 : vector<32x1xf32> to vector<32x32xf32>
    %260 = arith.divf %256, %259 : vector<32x32xf32>
    %261 = arith.truncf %260 : vector<32x32xf32> to vector<32x32xbf16>
    %cst_84 = arith.constant dense<0.000000e+00> : vector<32x8xf32>
    %262 = tpu.matmul %261, %249, %cst_84 {dimension_numbers = #tpu.dot_dimension_numbers<[1], [0], [0], [1], [0, 0, 1, 1], [], []>} : vector<32x32xbf16>, vector<32x8xbf16>, vector<32x8xf32> -> vector<32x8xf32>
    %263 = vector.extract_strided_slice %32 {offsets = [16, 0], sizes = [8, 32], strides = [1, 1]} : vector<32x32xf32> to vector<8x32xf32>
    %264 = arith.truncf %263 : vector<8x32xf32> to vector<8x32xbf16>
    %265 = arith.truncf %262 : vector<32x8xf32> to vector<32x8xbf16>
    %cst_85 = arith.constant dense<0.000000e+00> : vector<32x32xf32>
    %266 = tpu.matmul %265, %264, %cst_85 {dimension_numbers = #tpu.dot_dimension_numbers<[1], [0], [0], [1], [0, 0, 1, 1], [], []>} : vector<32x8xbf16>, vector<8x32xbf16>, vector<32x32xf32> -> vector<32x32xf32>
    %267 = arith.addf %243, %266 : vector<32x32xf32>
    %268 = vector.extract_strided_slice %194 {offsets = [0, 24], sizes = [32, 8], strides = [1, 1]} : vector<32x32xf32> to vector<32x8xf32>
    %269 = arith.truncf %268 : vector<32x8xf32> to vector<32x8xbf16>
    %270 = vector.extract_strided_slice %191 {offsets = [0, 24], sizes = [32, 8], strides = [1, 1]} : vector<32x32xf32> to vector<32x8xf32>
    %271 = arith.truncf %270 : vector<32x8xf32> to vector<32x8xbf16>
    %272 = vector.extract_strided_slice %192 {offsets = [0, 24], sizes = [32, 8], strides = [1, 1]} : vector<32x32xf32> to vector<32x8xf32>
    %273 = arith.truncf %272 : vector<32x8xf32> to vector<32x8xbf16>
    %cst_86 = arith.constant dense<0.000000e+00> : vector<32x32xf32>
    %274 = tpu.matmul %269, %271, %cst_86 {dimension_numbers = #tpu.dot_dimension_numbers<[1], [1], [0], [0], [0, 0, 1, 0], [], []>} : vector<32x8xbf16>, vector<32x8xbf16>, vector<32x32xf32> -> vector<32x32xf32>
    %275 = arith.addf %274, %1 : vector<32x32xf32>
    %cst_87 = arith.constant dense<0xFF800000> : vector<32xf32>
    %276 = vector.multi_reduction <maximumf>, %275, %cst_87 [1] : vector<32x32xf32> to vector<32xf32>
    %277 = vector.shape_cast %276 : vector<32xf32> to vector<32x1xf32>
    %278 = vector.broadcast %277 : vector<32x1xf32> to vector<32x32xf32>
    %279 = arith.subf %275, %278 : vector<32x32xf32>
    %280 = math.exp %279 : vector<32x32xf32>
    %cst_88 = arith.constant dense<0.000000e+00> : vector<32xf32>
    %281 = vector.multi_reduction <add>, %280, %cst_88 [1] : vector<32x32xf32> to vector<32xf32>
    %282 = vector.shape_cast %281 : vector<32xf32> to vector<32x1xf32>
    %283 = vector.broadcast %282 : vector<32x1xf32> to vector<32x32xf32>
    %284 = arith.divf %280, %283 : vector<32x32xf32>
    %285 = arith.truncf %284 : vector<32x32xf32> to vector<32x32xbf16>
    %cst_89 = arith.constant dense<0.000000e+00> : vector<32x8xf32>
    %286 = tpu.matmul %285, %273, %cst_89 {dimension_numbers = #tpu.dot_dimension_numbers<[1], [0], [0], [1], [0, 0, 1, 1], [], []>} : vector<32x32xbf16>, vector<32x8xbf16>, vector<32x8xf32> -> vector<32x8xf32>
    %287 = vector.extract_strided_slice %32 {offsets = [24, 0], sizes = [8, 32], strides = [1, 1]} : vector<32x32xf32> to vector<8x32xf32>
    %288 = arith.truncf %287 : vector<8x32xf32> to vector<8x32xbf16>
    %289 = arith.truncf %286 : vector<32x8xf32> to vector<32x8xbf16>
    %cst_90 = arith.constant dense<0.000000e+00> : vector<32x32xf32>
    %290 = tpu.matmul %289, %288, %cst_90 {dimension_numbers = #tpu.dot_dimension_numbers<[1], [0], [0], [1], [0, 0, 1, 1], [], []>} : vector<32x8xbf16>, vector<8x32xbf16>, vector<32x32xf32> -> vector<32x32xf32>
    %291 = arith.addf %267, %290 : vector<32x32xf32>
    %292 = arith.addf %168, %291 : vector<32x32xf32>
    %293 = vector.broadcast %24 : vector<1x32xf32> to vector<32x32xf32>
    %294 = arith.addf %292, %293 : vector<32x32xf32>
    %cst_91 = arith.constant dense<0.000000e+00> : vector<32xf32>
    %295 = vector.multi_reduction <add>, %294, %cst_91 [1] : vector<32x32xf32> to vector<32xf32>
    %296 = vector.shape_cast %295 : vector<32xf32> to vector<32x1xf32>
    %cst_92 = arith.constant 3.200000e+01 : f32
    %297 = vector.broadcast %cst_92 : f32 to vector<32x1xf32>
    %298 = arith.divf %296, %297 : vector<32x1xf32>
    %299 = vector.broadcast %298 : vector<32x1xf32> to vector<32x32xf32>
    %300 = arith.subf %294, %299 : vector<32x32xf32>
    %301 = arith.mulf %300, %300 : vector<32x32xf32>
    %cst_93 = arith.constant dense<0.000000e+00> : vector<32xf32>
    %302 = vector.multi_reduction <add>, %301, %cst_93 [1] : vector<32x32xf32> to vector<32xf32>
    %303 = vector.shape_cast %302 : vector<32xf32> to vector<32x1xf32>
    %cst_94 = arith.constant 3.200000e+01 : f32
    %304 = vector.broadcast %cst_94 : f32 to vector<32x1xf32>
    %305 = arith.divf %303, %304 : vector<32x1xf32>
    %cst_95 = arith.constant 9.99999974E-6 : f32
    %306 = vector.broadcast %cst_95 : f32 to vector<32x1xf32>
    %307 = arith.addf %305, %306 : vector<32x1xf32>
    %308 = math.rsqrt %307 : vector<32x1xf32>
    %309 = vector.broadcast %308 : vector<32x1xf32> to vector<32x32xf32>
    %310 = arith.mulf %300, %309 : vector<32x32xf32>
    %311 = arith.truncf %310 : vector<32x32xf32> to vector<32x32xbf16>
    %312 = arith.truncf %36 : vector<32x128xf32> to vector<32x128xbf16>
    %cst_96 = arith.constant dense<0.000000e+00> : vector<32x128xf32>
    %313 = tpu.matmul %311, %312, %cst_96 {dimension_numbers = #tpu.dot_dimension_numbers<[1], [0], [0], [1], [0, 0, 1, 1], [], []>} : vector<32x32xbf16>, vector<32x128xbf16>, vector<32x128xf32> -> vector<32x128xf32>
    %314 = vector.broadcast %25 : vector<1x128xf32> to vector<32x128xf32>
    %315 = arith.addf %313, %314 : vector<32x128xf32>
    %cst_97 = arith.constant 5.000000e-01 : f32
    %316 = vector.broadcast %cst_97 : f32 to vector<32x128xf32>
    %317 = arith.mulf %316, %315 : vector<32x128xf32>
    %cst_98 = arith.constant 4.471500e-02 : f32
    %318 = vector.broadcast %cst_98 : f32 to vector<32x128xf32>
    %319 = arith.mulf %318, %315 : vector<32x128xf32>
    %320 = arith.mulf %319, %315 : vector<32x128xf32>
    %321 = arith.mulf %320, %315 : vector<32x128xf32>
    %322 = arith.addf %315, %321 : vector<32x128xf32>
    %cst_99 = arith.constant 0.797884583 : f32
    %323 = vector.broadcast %cst_99 : f32 to vector<32x128xf32>
    %324 = arith.mulf %323, %322 : vector<32x128xf32>
    %325 = math.tanh %324 : vector<32x128xf32>
    %cst_100 = arith.constant 1.000000e+00 : f32
    %326 = vector.broadcast %cst_100 : f32 to vector<32x128xf32>
    %327 = arith.addf %326, %325 : vector<32x128xf32>
    %328 = arith.mulf %317, %327 : vector<32x128xf32>
    %329 = arith.truncf %328 : vector<32x128xf32> to vector<32x128xbf16>
    %cst_101 = arith.constant dense<0.000000e+00> : vector<32x32xf32>
    %330 = tpu.matmul %329, %40, %cst_101 {dimension_numbers = #tpu.dot_dimension_numbers<[1], [0], [0], [1], [0, 0, 1, 1], [], []>} : vector<32x128xbf16>, vector<128x32xbf16>, vector<32x32xf32> -> vector<32x32xf32>
    %331 = arith.addf %294, %330 : vector<32x32xf32>
    %332 = vector.broadcast %26 : vector<1x32xf32> to vector<32x32xf32>
    %333 = arith.addf %331, %332 : vector<32x32xf32>
    %c7 = arith.constant 7 : index
    %c0_102 = arith.constant 0 : index
    %334 = vector.load %arg1[%c7, %c0_102] : memref<16x256xf32, #tpu.memory_space<vmem>>, vector<1x32xf32>
    %c8 = arith.constant 8 : index
    %c0_103 = arith.constant 0 : index
    %335 = vector.load %arg1[%c8, %c0_103] : memref<16x256xf32, #tpu.memory_space<vmem>>, vector<1x128xf32>
    %c9 = arith.constant 9 : index
    %c0_104 = arith.constant 0 : index
    %336 = vector.load %arg1[%c9, %c0_104] : memref<16x256xf32, #tpu.memory_space<vmem>>, vector<1x32xf32>
    %c10 = arith.constant 10 : index
    %c0_105 = arith.constant 0 : index
    %337 = vector.load %arg1[%c10, %c0_105] : memref<16x256xf32, #tpu.memory_space<vmem>>, vector<1x128xf32>
    %c11 = arith.constant 11 : index
    %c0_106 = arith.constant 0 : index
    %338 = vector.load %arg1[%c11, %c0_106] : memref<16x256xf32, #tpu.memory_space<vmem>>, vector<1x32xf32>
    %c12 = arith.constant 12 : index
    %c0_107 = arith.constant 0 : index
    %339 = vector.load %arg1[%c12, %c0_107] : memref<16x256xf32, #tpu.memory_space<vmem>>, vector<1x128xf32>
    %c13 = arith.constant 13 : index
    %c0_108 = arith.constant 0 : index
    %340 = vector.load %arg1[%c13, %c0_108] : memref<16x256xf32, #tpu.memory_space<vmem>>, vector<1x32xf32>
    %c1_109 = arith.constant 1 : index
    %c0_110 = arith.constant 0 : index
    %c0_111 = arith.constant 0 : index
    %341 = vector.load %arg2[%c1_109, %c0_110, %c0_111] : memref<3x32x384xf32, #tpu.memory_space<vmem>>, vector<1x32x32xf32>
    %342 = vector.shape_cast %341 : vector<1x32x32xf32> to vector<32x32xf32>
    %c1_112 = arith.constant 1 : index
    %c0_113 = arith.constant 0 : index
    %c32_114 = arith.constant 32 : index
    %343 = vector.load %arg2[%c1_112, %c0_113, %c32_114] : memref<3x32x384xf32, #tpu.memory_space<vmem>>, vector<1x32x32xf32>
    %344 = vector.shape_cast %343 : vector<1x32x32xf32> to vector<32x32xf32>
    %c1_115 = arith.constant 1 : index
    %c0_116 = arith.constant 0 : index
    %c64_117 = arith.constant 64 : index
    %345 = vector.load %arg2[%c1_115, %c0_116, %c64_117] : memref<3x32x384xf32, #tpu.memory_space<vmem>>, vector<1x32x32xf32>
    %346 = vector.shape_cast %345 : vector<1x32x32xf32> to vector<32x32xf32>
    %c1_118 = arith.constant 1 : index
    %c0_119 = arith.constant 0 : index
    %c128_120 = arith.constant 128 : index
    %347 = vector.load %arg2[%c1_118, %c0_119, %c128_120] : memref<3x32x384xf32, #tpu.memory_space<vmem>>, vector<1x32x128xf32>
    %348 = vector.shape_cast %347 : vector<1x32x128xf32> to vector<32x128xf32>
    %c1_121 = arith.constant 1 : index
    %c0_122 = arith.constant 0 : index
    %c256_123 = arith.constant 256 : index
    %349 = vector.load %arg2[%c1_121, %c0_122, %c256_123] : memref<3x32x384xf32, #tpu.memory_space<vmem>>, vector<1x32x128xf32>
    %350 = vector.shape_cast %349 : vector<1x32x128xf32> to vector<32x128xf32>
    %c1_124 = arith.constant 1 : index
    %c0_125 = arith.constant 0 : index
    %c0_126 = arith.constant 0 : index
    %351 = vector.load %arg3[%c1_124, %c0_125, %c0_126] : memref<2x48x128xbf16, #tpu.memory_space<vmem>>, vector<1x48x128xbf16>
    %352 = vector.shape_cast %351 : vector<1x48x128xbf16> to vector<48x128xbf16>
    %c1_127 = arith.constant 1 : index
    %c0_128 = arith.constant 0 : index
    %c0_129 = arith.constant 0 : index
    %353 = vector.load %arg4[%c1_127, %c0_128, %c0_129] : memref<2x128x32xbf16, #tpu.memory_space<vmem>>, vector<1x128x32xbf16>
    %354 = vector.shape_cast %353 : vector<1x128x32xbf16> to vector<128x32xbf16>
    %cst_130 = arith.constant dense<0.000000e+00> : vector<32xf32>
    %355 = vector.multi_reduction <add>, %333, %cst_130 [1] : vector<32x32xf32> to vector<32xf32>
    %356 = vector.shape_cast %355 : vector<32xf32> to vector<32x1xf32>
    %cst_131 = arith.constant 3.200000e+01 : f32
    %357 = vector.broadcast %cst_131 : f32 to vector<32x1xf32>
    %358 = arith.divf %356, %357 : vector<32x1xf32>
    %359 = vector.broadcast %358 : vector<32x1xf32> to vector<32x32xf32>
    %360 = arith.subf %333, %359 : vector<32x32xf32>
    %361 = arith.mulf %360, %360 : vector<32x32xf32>
    %cst_132 = arith.constant dense<0.000000e+00> : vector<32xf32>
    %362 = vector.multi_reduction <add>, %361, %cst_132 [1] : vector<32x32xf32> to vector<32xf32>
    %363 = vector.shape_cast %362 : vector<32xf32> to vector<32x1xf32>
    %cst_133 = arith.constant 3.200000e+01 : f32
    %364 = vector.broadcast %cst_133 : f32 to vector<32x1xf32>
    %365 = arith.divf %363, %364 : vector<32x1xf32>
    %cst_134 = arith.constant 9.99999974E-6 : f32
    %366 = vector.broadcast %cst_134 : f32 to vector<32x1xf32>
    %367 = arith.addf %365, %366 : vector<32x1xf32>
    %368 = math.rsqrt %367 : vector<32x1xf32>
    %369 = vector.broadcast %368 : vector<32x1xf32> to vector<32x32xf32>
    %370 = arith.mulf %360, %369 : vector<32x32xf32>
    %371 = arith.truncf %370 : vector<32x32xf32> to vector<32x32xbf16>
    %372 = arith.truncf %342 : vector<32x32xf32> to vector<32x32xbf16>
    %cst_135 = arith.constant dense<0.000000e+00> : vector<32x32xf32>
    %373 = tpu.matmul %371, %372, %cst_135 {dimension_numbers = #tpu.dot_dimension_numbers<[1], [0], [0], [1], [0, 0, 1, 1], [], []>} : vector<32x32xbf16>, vector<32x32xbf16>, vector<32x32xf32> -> vector<32x32xf32>
    %374 = vector.broadcast %334 : vector<1x32xf32> to vector<32x32xf32>
    %375 = arith.addf %373, %374 : vector<32x32xf32>
    %cst_136 = arith.constant dense<0.000000e+00> : vector<32x128xf32>
    %376 = tpu.matmul %19, %352, %cst_136 {dimension_numbers = #tpu.dot_dimension_numbers<[1], [0], [0], [1], [0, 0, 1, 1], [], []>} : vector<32x48xbf16>, vector<48x128xbf16>, vector<32x128xf32> -> vector<32x128xf32>
    %377 = vector.broadcast %335 : vector<1x128xf32> to vector<32x128xf32>
    %378 = arith.addf %376, %377 : vector<32x128xf32>
    %379 = vector.extract_strided_slice %378 {offsets = [0, 0], sizes = [32, 32], strides = [1, 1]} : vector<32x128xf32> to vector<32x32xf32>
    %380 = vector.extract_strided_slice %378 {offsets = [0, 32], sizes = [32, 32], strides = [1, 1]} : vector<32x128xf32> to vector<32x32xf32>
    %cst_137 = arith.constant 0.353553385 : f32
    %381 = vector.broadcast %cst_137 : f32 to vector<32x32xf32>
    %382 = arith.mulf %375, %381 : vector<32x32xf32>
    %cst_138 = arith.constant 0.000000e+00 : f32
    %383 = vector.broadcast %cst_138 : f32 to vector<32x32xf32>
    %384 = vector.extract_strided_slice %382 {offsets = [0, 0], sizes = [32, 8], strides = [1, 1]} : vector<32x32xf32> to vector<32x8xf32>
    %385 = arith.truncf %384 : vector<32x8xf32> to vector<32x8xbf16>
    %386 = vector.extract_strided_slice %379 {offsets = [0, 0], sizes = [32, 8], strides = [1, 1]} : vector<32x32xf32> to vector<32x8xf32>
    %387 = arith.truncf %386 : vector<32x8xf32> to vector<32x8xbf16>
    %388 = vector.extract_strided_slice %380 {offsets = [0, 0], sizes = [32, 8], strides = [1, 1]} : vector<32x32xf32> to vector<32x8xf32>
    %389 = arith.truncf %388 : vector<32x8xf32> to vector<32x8xbf16>
    %cst_139 = arith.constant dense<0.000000e+00> : vector<32x32xf32>
    %390 = tpu.matmul %385, %387, %cst_139 {dimension_numbers = #tpu.dot_dimension_numbers<[1], [1], [0], [0], [0, 0, 1, 0], [], []>} : vector<32x8xbf16>, vector<32x8xbf16>, vector<32x32xf32> -> vector<32x32xf32>
    %391 = arith.addf %390, %1 : vector<32x32xf32>
    %cst_140 = arith.constant dense<0xFF800000> : vector<32xf32>
    %392 = vector.multi_reduction <maximumf>, %391, %cst_140 [1] : vector<32x32xf32> to vector<32xf32>
    %393 = vector.shape_cast %392 : vector<32xf32> to vector<32x1xf32>
    %394 = vector.broadcast %393 : vector<32x1xf32> to vector<32x32xf32>
    %395 = arith.subf %391, %394 : vector<32x32xf32>
    %396 = math.exp %395 : vector<32x32xf32>
    %cst_141 = arith.constant dense<0.000000e+00> : vector<32xf32>
    %397 = vector.multi_reduction <add>, %396, %cst_141 [1] : vector<32x32xf32> to vector<32xf32>
    %398 = vector.shape_cast %397 : vector<32xf32> to vector<32x1xf32>
    %399 = vector.broadcast %398 : vector<32x1xf32> to vector<32x32xf32>
    %400 = arith.divf %396, %399 : vector<32x32xf32>
    %401 = arith.truncf %400 : vector<32x32xf32> to vector<32x32xbf16>
    %cst_142 = arith.constant dense<0.000000e+00> : vector<32x8xf32>
    %402 = tpu.matmul %401, %389, %cst_142 {dimension_numbers = #tpu.dot_dimension_numbers<[1], [0], [0], [1], [0, 0, 1, 1], [], []>} : vector<32x32xbf16>, vector<32x8xbf16>, vector<32x8xf32> -> vector<32x8xf32>
    %403 = vector.extract_strided_slice %344 {offsets = [0, 0], sizes = [8, 32], strides = [1, 1]} : vector<32x32xf32> to vector<8x32xf32>
    %404 = arith.truncf %403 : vector<8x32xf32> to vector<8x32xbf16>
    %405 = arith.truncf %402 : vector<32x8xf32> to vector<32x8xbf16>
    %cst_143 = arith.constant dense<0.000000e+00> : vector<32x32xf32>
    %406 = tpu.matmul %405, %404, %cst_143 {dimension_numbers = #tpu.dot_dimension_numbers<[1], [0], [0], [1], [0, 0, 1, 1], [], []>} : vector<32x8xbf16>, vector<8x32xbf16>, vector<32x32xf32> -> vector<32x32xf32>
    %407 = arith.addf %383, %406 : vector<32x32xf32>
    %408 = vector.extract_strided_slice %382 {offsets = [0, 8], sizes = [32, 8], strides = [1, 1]} : vector<32x32xf32> to vector<32x8xf32>
    %409 = arith.truncf %408 : vector<32x8xf32> to vector<32x8xbf16>
    %410 = vector.extract_strided_slice %379 {offsets = [0, 8], sizes = [32, 8], strides = [1, 1]} : vector<32x32xf32> to vector<32x8xf32>
    %411 = arith.truncf %410 : vector<32x8xf32> to vector<32x8xbf16>
    %412 = vector.extract_strided_slice %380 {offsets = [0, 8], sizes = [32, 8], strides = [1, 1]} : vector<32x32xf32> to vector<32x8xf32>
    %413 = arith.truncf %412 : vector<32x8xf32> to vector<32x8xbf16>
    %cst_144 = arith.constant dense<0.000000e+00> : vector<32x32xf32>
    %414 = tpu.matmul %409, %411, %cst_144 {dimension_numbers = #tpu.dot_dimension_numbers<[1], [1], [0], [0], [0, 0, 1, 0], [], []>} : vector<32x8xbf16>, vector<32x8xbf16>, vector<32x32xf32> -> vector<32x32xf32>
    %415 = arith.addf %414, %1 : vector<32x32xf32>
    %cst_145 = arith.constant dense<0xFF800000> : vector<32xf32>
    %416 = vector.multi_reduction <maximumf>, %415, %cst_145 [1] : vector<32x32xf32> to vector<32xf32>
    %417 = vector.shape_cast %416 : vector<32xf32> to vector<32x1xf32>
    %418 = vector.broadcast %417 : vector<32x1xf32> to vector<32x32xf32>
    %419 = arith.subf %415, %418 : vector<32x32xf32>
    %420 = math.exp %419 : vector<32x32xf32>
    %cst_146 = arith.constant dense<0.000000e+00> : vector<32xf32>
    %421 = vector.multi_reduction <add>, %420, %cst_146 [1] : vector<32x32xf32> to vector<32xf32>
    %422 = vector.shape_cast %421 : vector<32xf32> to vector<32x1xf32>
    %423 = vector.broadcast %422 : vector<32x1xf32> to vector<32x32xf32>
    %424 = arith.divf %420, %423 : vector<32x32xf32>
    %425 = arith.truncf %424 : vector<32x32xf32> to vector<32x32xbf16>
    %cst_147 = arith.constant dense<0.000000e+00> : vector<32x8xf32>
    %426 = tpu.matmul %425, %413, %cst_147 {dimension_numbers = #tpu.dot_dimension_numbers<[1], [0], [0], [1], [0, 0, 1, 1], [], []>} : vector<32x32xbf16>, vector<32x8xbf16>, vector<32x8xf32> -> vector<32x8xf32>
    %427 = vector.extract_strided_slice %344 {offsets = [8, 0], sizes = [8, 32], strides = [1, 1]} : vector<32x32xf32> to vector<8x32xf32>
    %428 = arith.truncf %427 : vector<8x32xf32> to vector<8x32xbf16>
    %429 = arith.truncf %426 : vector<32x8xf32> to vector<32x8xbf16>
    %cst_148 = arith.constant dense<0.000000e+00> : vector<32x32xf32>
    %430 = tpu.matmul %429, %428, %cst_148 {dimension_numbers = #tpu.dot_dimension_numbers<[1], [0], [0], [1], [0, 0, 1, 1], [], []>} : vector<32x8xbf16>, vector<8x32xbf16>, vector<32x32xf32> -> vector<32x32xf32>
    %431 = arith.addf %407, %430 : vector<32x32xf32>
    %432 = vector.extract_strided_slice %382 {offsets = [0, 16], sizes = [32, 8], strides = [1, 1]} : vector<32x32xf32> to vector<32x8xf32>
    %433 = arith.truncf %432 : vector<32x8xf32> to vector<32x8xbf16>
    %434 = vector.extract_strided_slice %379 {offsets = [0, 16], sizes = [32, 8], strides = [1, 1]} : vector<32x32xf32> to vector<32x8xf32>
    %435 = arith.truncf %434 : vector<32x8xf32> to vector<32x8xbf16>
    %436 = vector.extract_strided_slice %380 {offsets = [0, 16], sizes = [32, 8], strides = [1, 1]} : vector<32x32xf32> to vector<32x8xf32>
    %437 = arith.truncf %436 : vector<32x8xf32> to vector<32x8xbf16>
    %cst_149 = arith.constant dense<0.000000e+00> : vector<32x32xf32>
    %438 = tpu.matmul %433, %435, %cst_149 {dimension_numbers = #tpu.dot_dimension_numbers<[1], [1], [0], [0], [0, 0, 1, 0], [], []>} : vector<32x8xbf16>, vector<32x8xbf16>, vector<32x32xf32> -> vector<32x32xf32>
    %439 = arith.addf %438, %1 : vector<32x32xf32>
    %cst_150 = arith.constant dense<0xFF800000> : vector<32xf32>
    %440 = vector.multi_reduction <maximumf>, %439, %cst_150 [1] : vector<32x32xf32> to vector<32xf32>
    %441 = vector.shape_cast %440 : vector<32xf32> to vector<32x1xf32>
    %442 = vector.broadcast %441 : vector<32x1xf32> to vector<32x32xf32>
    %443 = arith.subf %439, %442 : vector<32x32xf32>
    %444 = math.exp %443 : vector<32x32xf32>
    %cst_151 = arith.constant dense<0.000000e+00> : vector<32xf32>
    %445 = vector.multi_reduction <add>, %444, %cst_151 [1] : vector<32x32xf32> to vector<32xf32>
    %446 = vector.shape_cast %445 : vector<32xf32> to vector<32x1xf32>
    %447 = vector.broadcast %446 : vector<32x1xf32> to vector<32x32xf32>
    %448 = arith.divf %444, %447 : vector<32x32xf32>
    %449 = arith.truncf %448 : vector<32x32xf32> to vector<32x32xbf16>
    %cst_152 = arith.constant dense<0.000000e+00> : vector<32x8xf32>
    %450 = tpu.matmul %449, %437, %cst_152 {dimension_numbers = #tpu.dot_dimension_numbers<[1], [0], [0], [1], [0, 0, 1, 1], [], []>} : vector<32x32xbf16>, vector<32x8xbf16>, vector<32x8xf32> -> vector<32x8xf32>
    %451 = vector.extract_strided_slice %344 {offsets = [16, 0], sizes = [8, 32], strides = [1, 1]} : vector<32x32xf32> to vector<8x32xf32>
    %452 = arith.truncf %451 : vector<8x32xf32> to vector<8x32xbf16>
    %453 = arith.truncf %450 : vector<32x8xf32> to vector<32x8xbf16>
    %cst_153 = arith.constant dense<0.000000e+00> : vector<32x32xf32>
    %454 = tpu.matmul %453, %452, %cst_153 {dimension_numbers = #tpu.dot_dimension_numbers<[1], [0], [0], [1], [0, 0, 1, 1], [], []>} : vector<32x8xbf16>, vector<8x32xbf16>, vector<32x32xf32> -> vector<32x32xf32>
    %455 = arith.addf %431, %454 : vector<32x32xf32>
    %456 = vector.extract_strided_slice %382 {offsets = [0, 24], sizes = [32, 8], strides = [1, 1]} : vector<32x32xf32> to vector<32x8xf32>
    %457 = arith.truncf %456 : vector<32x8xf32> to vector<32x8xbf16>
    %458 = vector.extract_strided_slice %379 {offsets = [0, 24], sizes = [32, 8], strides = [1, 1]} : vector<32x32xf32> to vector<32x8xf32>
    %459 = arith.truncf %458 : vector<32x8xf32> to vector<32x8xbf16>
    %460 = vector.extract_strided_slice %380 {offsets = [0, 24], sizes = [32, 8], strides = [1, 1]} : vector<32x32xf32> to vector<32x8xf32>
    %461 = arith.truncf %460 : vector<32x8xf32> to vector<32x8xbf16>
    %cst_154 = arith.constant dense<0.000000e+00> : vector<32x32xf32>
    %462 = tpu.matmul %457, %459, %cst_154 {dimension_numbers = #tpu.dot_dimension_numbers<[1], [1], [0], [0], [0, 0, 1, 0], [], []>} : vector<32x8xbf16>, vector<32x8xbf16>, vector<32x32xf32> -> vector<32x32xf32>
    %463 = arith.addf %462, %1 : vector<32x32xf32>
    %cst_155 = arith.constant dense<0xFF800000> : vector<32xf32>
    %464 = vector.multi_reduction <maximumf>, %463, %cst_155 [1] : vector<32x32xf32> to vector<32xf32>
    %465 = vector.shape_cast %464 : vector<32xf32> to vector<32x1xf32>
    %466 = vector.broadcast %465 : vector<32x1xf32> to vector<32x32xf32>
    %467 = arith.subf %463, %466 : vector<32x32xf32>
    %468 = math.exp %467 : vector<32x32xf32>
    %cst_156 = arith.constant dense<0.000000e+00> : vector<32xf32>
    %469 = vector.multi_reduction <add>, %468, %cst_156 [1] : vector<32x32xf32> to vector<32xf32>
    %470 = vector.shape_cast %469 : vector<32xf32> to vector<32x1xf32>
    %471 = vector.broadcast %470 : vector<32x1xf32> to vector<32x32xf32>
    %472 = arith.divf %468, %471 : vector<32x32xf32>
    %473 = arith.truncf %472 : vector<32x32xf32> to vector<32x32xbf16>
    %cst_157 = arith.constant dense<0.000000e+00> : vector<32x8xf32>
    %474 = tpu.matmul %473, %461, %cst_157 {dimension_numbers = #tpu.dot_dimension_numbers<[1], [0], [0], [1], [0, 0, 1, 1], [], []>} : vector<32x32xbf16>, vector<32x8xbf16>, vector<32x8xf32> -> vector<32x8xf32>
    %475 = vector.extract_strided_slice %344 {offsets = [24, 0], sizes = [8, 32], strides = [1, 1]} : vector<32x32xf32> to vector<8x32xf32>
    %476 = arith.truncf %475 : vector<8x32xf32> to vector<8x32xbf16>
    %477 = arith.truncf %474 : vector<32x8xf32> to vector<32x8xbf16>
    %cst_158 = arith.constant dense<0.000000e+00> : vector<32x32xf32>
    %478 = tpu.matmul %477, %476, %cst_158 {dimension_numbers = #tpu.dot_dimension_numbers<[1], [0], [0], [1], [0, 0, 1, 1], [], []>} : vector<32x8xbf16>, vector<8x32xbf16>, vector<32x32xf32> -> vector<32x32xf32>
    %479 = arith.addf %455, %478 : vector<32x32xf32>
    %480 = arith.addf %333, %479 : vector<32x32xf32>
    %481 = vector.broadcast %336 : vector<1x32xf32> to vector<32x32xf32>
    %482 = arith.addf %480, %481 : vector<32x32xf32>
    %cst_159 = arith.constant dense<0.000000e+00> : vector<32xf32>
    %483 = vector.multi_reduction <add>, %482, %cst_159 [1] : vector<32x32xf32> to vector<32xf32>
    %484 = vector.shape_cast %483 : vector<32xf32> to vector<32x1xf32>
    %cst_160 = arith.constant 3.200000e+01 : f32
    %485 = vector.broadcast %cst_160 : f32 to vector<32x1xf32>
    %486 = arith.divf %484, %485 : vector<32x1xf32>
    %487 = vector.broadcast %486 : vector<32x1xf32> to vector<32x32xf32>
    %488 = arith.subf %482, %487 : vector<32x32xf32>
    %489 = arith.mulf %488, %488 : vector<32x32xf32>
    %cst_161 = arith.constant dense<0.000000e+00> : vector<32xf32>
    %490 = vector.multi_reduction <add>, %489, %cst_161 [1] : vector<32x32xf32> to vector<32xf32>
    %491 = vector.shape_cast %490 : vector<32xf32> to vector<32x1xf32>
    %cst_162 = arith.constant 3.200000e+01 : f32
    %492 = vector.broadcast %cst_162 : f32 to vector<32x1xf32>
    %493 = arith.divf %491, %492 : vector<32x1xf32>
    %cst_163 = arith.constant 9.99999974E-6 : f32
    %494 = vector.broadcast %cst_163 : f32 to vector<32x1xf32>
    %495 = arith.addf %493, %494 : vector<32x1xf32>
    %496 = math.rsqrt %495 : vector<32x1xf32>
    %497 = vector.broadcast %496 : vector<32x1xf32> to vector<32x32xf32>
    %498 = arith.mulf %488, %497 : vector<32x32xf32>
    %499 = arith.truncf %498 : vector<32x32xf32> to vector<32x32xbf16>
    %500 = arith.truncf %348 : vector<32x128xf32> to vector<32x128xbf16>
    %cst_164 = arith.constant dense<0.000000e+00> : vector<32x128xf32>
    %501 = tpu.matmul %499, %500, %cst_164 {dimension_numbers = #tpu.dot_dimension_numbers<[1], [0], [0], [1], [0, 0, 1, 1], [], []>} : vector<32x32xbf16>, vector<32x128xbf16>, vector<32x128xf32> -> vector<32x128xf32>
    %502 = vector.broadcast %337 : vector<1x128xf32> to vector<32x128xf32>
    %503 = arith.addf %501, %502 : vector<32x128xf32>
    %504 = vector.extract_strided_slice %503 {offsets = [0, 0], sizes = [32, 32], strides = [1, 1]} : vector<32x128xf32> to vector<32x32xf32>
    %505 = vector.extract_strided_slice %503 {offsets = [0, 32], sizes = [32, 32], strides = [1, 1]} : vector<32x128xf32> to vector<32x32xf32>
    %506 = vector.extract_strided_slice %503 {offsets = [0, 64], sizes = [32, 32], strides = [1, 1]} : vector<32x128xf32> to vector<32x32xf32>
    %cst_165 = arith.constant 0.353553385 : f32
    %507 = vector.broadcast %cst_165 : f32 to vector<32x32xf32>
    %508 = arith.mulf %504, %507 : vector<32x32xf32>
    %cst_166 = arith.constant 0.000000e+00 : f32
    %509 = vector.broadcast %cst_166 : f32 to vector<32x32xf32>
    %510 = vector.extract_strided_slice %508 {offsets = [0, 0], sizes = [32, 8], strides = [1, 1]} : vector<32x32xf32> to vector<32x8xf32>
    %511 = arith.truncf %510 : vector<32x8xf32> to vector<32x8xbf16>
    %512 = vector.extract_strided_slice %505 {offsets = [0, 0], sizes = [32, 8], strides = [1, 1]} : vector<32x32xf32> to vector<32x8xf32>
    %513 = arith.truncf %512 : vector<32x8xf32> to vector<32x8xbf16>
    %514 = vector.extract_strided_slice %506 {offsets = [0, 0], sizes = [32, 8], strides = [1, 1]} : vector<32x32xf32> to vector<32x8xf32>
    %515 = arith.truncf %514 : vector<32x8xf32> to vector<32x8xbf16>
    %cst_167 = arith.constant dense<0.000000e+00> : vector<32x32xf32>
    %516 = tpu.matmul %511, %513, %cst_167 {dimension_numbers = #tpu.dot_dimension_numbers<[1], [1], [0], [0], [0, 0, 1, 0], [], []>} : vector<32x8xbf16>, vector<32x8xbf16>, vector<32x32xf32> -> vector<32x32xf32>
    %517 = arith.addf %516, %1 : vector<32x32xf32>
    %cst_168 = arith.constant dense<0xFF800000> : vector<32xf32>
    %518 = vector.multi_reduction <maximumf>, %517, %cst_168 [1] : vector<32x32xf32> to vector<32xf32>
    %519 = vector.shape_cast %518 : vector<32xf32> to vector<32x1xf32>
    %520 = vector.broadcast %519 : vector<32x1xf32> to vector<32x32xf32>
    %521 = arith.subf %517, %520 : vector<32x32xf32>
    %522 = math.exp %521 : vector<32x32xf32>
    %cst_169 = arith.constant dense<0.000000e+00> : vector<32xf32>
    %523 = vector.multi_reduction <add>, %522, %cst_169 [1] : vector<32x32xf32> to vector<32xf32>
    %524 = vector.shape_cast %523 : vector<32xf32> to vector<32x1xf32>
    %525 = vector.broadcast %524 : vector<32x1xf32> to vector<32x32xf32>
    %526 = arith.divf %522, %525 : vector<32x32xf32>
    %527 = arith.truncf %526 : vector<32x32xf32> to vector<32x32xbf16>
    %cst_170 = arith.constant dense<0.000000e+00> : vector<32x8xf32>
    %528 = tpu.matmul %527, %515, %cst_170 {dimension_numbers = #tpu.dot_dimension_numbers<[1], [0], [0], [1], [0, 0, 1, 1], [], []>} : vector<32x32xbf16>, vector<32x8xbf16>, vector<32x8xf32> -> vector<32x8xf32>
    %529 = vector.extract_strided_slice %346 {offsets = [0, 0], sizes = [8, 32], strides = [1, 1]} : vector<32x32xf32> to vector<8x32xf32>
    %530 = arith.truncf %529 : vector<8x32xf32> to vector<8x32xbf16>
    %531 = arith.truncf %528 : vector<32x8xf32> to vector<32x8xbf16>
    %cst_171 = arith.constant dense<0.000000e+00> : vector<32x32xf32>
    %532 = tpu.matmul %531, %530, %cst_171 {dimension_numbers = #tpu.dot_dimension_numbers<[1], [0], [0], [1], [0, 0, 1, 1], [], []>} : vector<32x8xbf16>, vector<8x32xbf16>, vector<32x32xf32> -> vector<32x32xf32>
    %533 = arith.addf %509, %532 : vector<32x32xf32>
    %534 = vector.extract_strided_slice %508 {offsets = [0, 8], sizes = [32, 8], strides = [1, 1]} : vector<32x32xf32> to vector<32x8xf32>
    %535 = arith.truncf %534 : vector<32x8xf32> to vector<32x8xbf16>
    %536 = vector.extract_strided_slice %505 {offsets = [0, 8], sizes = [32, 8], strides = [1, 1]} : vector<32x32xf32> to vector<32x8xf32>
    %537 = arith.truncf %536 : vector<32x8xf32> to vector<32x8xbf16>
    %538 = vector.extract_strided_slice %506 {offsets = [0, 8], sizes = [32, 8], strides = [1, 1]} : vector<32x32xf32> to vector<32x8xf32>
    %539 = arith.truncf %538 : vector<32x8xf32> to vector<32x8xbf16>
    %cst_172 = arith.constant dense<0.000000e+00> : vector<32x32xf32>
    %540 = tpu.matmul %535, %537, %cst_172 {dimension_numbers = #tpu.dot_dimension_numbers<[1], [1], [0], [0], [0, 0, 1, 0], [], []>} : vector<32x8xbf16>, vector<32x8xbf16>, vector<32x32xf32> -> vector<32x32xf32>
    %541 = arith.addf %540, %1 : vector<32x32xf32>
    %cst_173 = arith.constant dense<0xFF800000> : vector<32xf32>
    %542 = vector.multi_reduction <maximumf>, %541, %cst_173 [1] : vector<32x32xf32> to vector<32xf32>
    %543 = vector.shape_cast %542 : vector<32xf32> to vector<32x1xf32>
    %544 = vector.broadcast %543 : vector<32x1xf32> to vector<32x32xf32>
    %545 = arith.subf %541, %544 : vector<32x32xf32>
    %546 = math.exp %545 : vector<32x32xf32>
    %cst_174 = arith.constant dense<0.000000e+00> : vector<32xf32>
    %547 = vector.multi_reduction <add>, %546, %cst_174 [1] : vector<32x32xf32> to vector<32xf32>
    %548 = vector.shape_cast %547 : vector<32xf32> to vector<32x1xf32>
    %549 = vector.broadcast %548 : vector<32x1xf32> to vector<32x32xf32>
    %550 = arith.divf %546, %549 : vector<32x32xf32>
    %551 = arith.truncf %550 : vector<32x32xf32> to vector<32x32xbf16>
    %cst_175 = arith.constant dense<0.000000e+00> : vector<32x8xf32>
    %552 = tpu.matmul %551, %539, %cst_175 {dimension_numbers = #tpu.dot_dimension_numbers<[1], [0], [0], [1], [0, 0, 1, 1], [], []>} : vector<32x32xbf16>, vector<32x8xbf16>, vector<32x8xf32> -> vector<32x8xf32>
    %553 = vector.extract_strided_slice %346 {offsets = [8, 0], sizes = [8, 32], strides = [1, 1]} : vector<32x32xf32> to vector<8x32xf32>
    %554 = arith.truncf %553 : vector<8x32xf32> to vector<8x32xbf16>
    %555 = arith.truncf %552 : vector<32x8xf32> to vector<32x8xbf16>
    %cst_176 = arith.constant dense<0.000000e+00> : vector<32x32xf32>
    %556 = tpu.matmul %555, %554, %cst_176 {dimension_numbers = #tpu.dot_dimension_numbers<[1], [0], [0], [1], [0, 0, 1, 1], [], []>} : vector<32x8xbf16>, vector<8x32xbf16>, vector<32x32xf32> -> vector<32x32xf32>
    %557 = arith.addf %533, %556 : vector<32x32xf32>
    %558 = vector.extract_strided_slice %508 {offsets = [0, 16], sizes = [32, 8], strides = [1, 1]} : vector<32x32xf32> to vector<32x8xf32>
    %559 = arith.truncf %558 : vector<32x8xf32> to vector<32x8xbf16>
    %560 = vector.extract_strided_slice %505 {offsets = [0, 16], sizes = [32, 8], strides = [1, 1]} : vector<32x32xf32> to vector<32x8xf32>
    %561 = arith.truncf %560 : vector<32x8xf32> to vector<32x8xbf16>
    %562 = vector.extract_strided_slice %506 {offsets = [0, 16], sizes = [32, 8], strides = [1, 1]} : vector<32x32xf32> to vector<32x8xf32>
    %563 = arith.truncf %562 : vector<32x8xf32> to vector<32x8xbf16>
    %cst_177 = arith.constant dense<0.000000e+00> : vector<32x32xf32>
    %564 = tpu.matmul %559, %561, %cst_177 {dimension_numbers = #tpu.dot_dimension_numbers<[1], [1], [0], [0], [0, 0, 1, 0], [], []>} : vector<32x8xbf16>, vector<32x8xbf16>, vector<32x32xf32> -> vector<32x32xf32>
    %565 = arith.addf %564, %1 : vector<32x32xf32>
    %cst_178 = arith.constant dense<0xFF800000> : vector<32xf32>
    %566 = vector.multi_reduction <maximumf>, %565, %cst_178 [1] : vector<32x32xf32> to vector<32xf32>
    %567 = vector.shape_cast %566 : vector<32xf32> to vector<32x1xf32>
    %568 = vector.broadcast %567 : vector<32x1xf32> to vector<32x32xf32>
    %569 = arith.subf %565, %568 : vector<32x32xf32>
    %570 = math.exp %569 : vector<32x32xf32>
    %cst_179 = arith.constant dense<0.000000e+00> : vector<32xf32>
    %571 = vector.multi_reduction <add>, %570, %cst_179 [1] : vector<32x32xf32> to vector<32xf32>
    %572 = vector.shape_cast %571 : vector<32xf32> to vector<32x1xf32>
    %573 = vector.broadcast %572 : vector<32x1xf32> to vector<32x32xf32>
    %574 = arith.divf %570, %573 : vector<32x32xf32>
    %575 = arith.truncf %574 : vector<32x32xf32> to vector<32x32xbf16>
    %cst_180 = arith.constant dense<0.000000e+00> : vector<32x8xf32>
    %576 = tpu.matmul %575, %563, %cst_180 {dimension_numbers = #tpu.dot_dimension_numbers<[1], [0], [0], [1], [0, 0, 1, 1], [], []>} : vector<32x32xbf16>, vector<32x8xbf16>, vector<32x8xf32> -> vector<32x8xf32>
    %577 = vector.extract_strided_slice %346 {offsets = [16, 0], sizes = [8, 32], strides = [1, 1]} : vector<32x32xf32> to vector<8x32xf32>
    %578 = arith.truncf %577 : vector<8x32xf32> to vector<8x32xbf16>
    %579 = arith.truncf %576 : vector<32x8xf32> to vector<32x8xbf16>
    %cst_181 = arith.constant dense<0.000000e+00> : vector<32x32xf32>
    %580 = tpu.matmul %579, %578, %cst_181 {dimension_numbers = #tpu.dot_dimension_numbers<[1], [0], [0], [1], [0, 0, 1, 1], [], []>} : vector<32x8xbf16>, vector<8x32xbf16>, vector<32x32xf32> -> vector<32x32xf32>
    %581 = arith.addf %557, %580 : vector<32x32xf32>
    %582 = vector.extract_strided_slice %508 {offsets = [0, 24], sizes = [32, 8], strides = [1, 1]} : vector<32x32xf32> to vector<32x8xf32>
    %583 = arith.truncf %582 : vector<32x8xf32> to vector<32x8xbf16>
    %584 = vector.extract_strided_slice %505 {offsets = [0, 24], sizes = [32, 8], strides = [1, 1]} : vector<32x32xf32> to vector<32x8xf32>
    %585 = arith.truncf %584 : vector<32x8xf32> to vector<32x8xbf16>
    %586 = vector.extract_strided_slice %506 {offsets = [0, 24], sizes = [32, 8], strides = [1, 1]} : vector<32x32xf32> to vector<32x8xf32>
    %587 = arith.truncf %586 : vector<32x8xf32> to vector<32x8xbf16>
    %cst_182 = arith.constant dense<0.000000e+00> : vector<32x32xf32>
    %588 = tpu.matmul %583, %585, %cst_182 {dimension_numbers = #tpu.dot_dimension_numbers<[1], [1], [0], [0], [0, 0, 1, 0], [], []>} : vector<32x8xbf16>, vector<32x8xbf16>, vector<32x32xf32> -> vector<32x32xf32>
    %589 = arith.addf %588, %1 : vector<32x32xf32>
    %cst_183 = arith.constant dense<0xFF800000> : vector<32xf32>
    %590 = vector.multi_reduction <maximumf>, %589, %cst_183 [1] : vector<32x32xf32> to vector<32xf32>
    %591 = vector.shape_cast %590 : vector<32xf32> to vector<32x1xf32>
    %592 = vector.broadcast %591 : vector<32x1xf32> to vector<32x32xf32>
    %593 = arith.subf %589, %592 : vector<32x32xf32>
    %594 = math.exp %593 : vector<32x32xf32>
    %cst_184 = arith.constant dense<0.000000e+00> : vector<32xf32>
    %595 = vector.multi_reduction <add>, %594, %cst_184 [1] : vector<32x32xf32> to vector<32xf32>
    %596 = vector.shape_cast %595 : vector<32xf32> to vector<32x1xf32>
    %597 = vector.broadcast %596 : vector<32x1xf32> to vector<32x32xf32>
    %598 = arith.divf %594, %597 : vector<32x32xf32>
    %599 = arith.truncf %598 : vector<32x32xf32> to vector<32x32xbf16>
    %cst_185 = arith.constant dense<0.000000e+00> : vector<32x8xf32>
    %600 = tpu.matmul %599, %587, %cst_185 {dimension_numbers = #tpu.dot_dimension_numbers<[1], [0], [0], [1], [0, 0, 1, 1], [], []>} : vector<32x32xbf16>, vector<32x8xbf16>, vector<32x8xf32> -> vector<32x8xf32>
    %601 = vector.extract_strided_slice %346 {offsets = [24, 0], sizes = [8, 32], strides = [1, 1]} : vector<32x32xf32> to vector<8x32xf32>
    %602 = arith.truncf %601 : vector<8x32xf32> to vector<8x32xbf16>
    %603 = arith.truncf %600 : vector<32x8xf32> to vector<32x8xbf16>
    %cst_186 = arith.constant dense<0.000000e+00> : vector<32x32xf32>
    %604 = tpu.matmul %603, %602, %cst_186 {dimension_numbers = #tpu.dot_dimension_numbers<[1], [0], [0], [1], [0, 0, 1, 1], [], []>} : vector<32x8xbf16>, vector<8x32xbf16>, vector<32x32xf32> -> vector<32x32xf32>
    %605 = arith.addf %581, %604 : vector<32x32xf32>
    %606 = arith.addf %482, %605 : vector<32x32xf32>
    %607 = vector.broadcast %338 : vector<1x32xf32> to vector<32x32xf32>
    %608 = arith.addf %606, %607 : vector<32x32xf32>
    %cst_187 = arith.constant dense<0.000000e+00> : vector<32xf32>
    %609 = vector.multi_reduction <add>, %608, %cst_187 [1] : vector<32x32xf32> to vector<32xf32>
    %610 = vector.shape_cast %609 : vector<32xf32> to vector<32x1xf32>
    %cst_188 = arith.constant 3.200000e+01 : f32
    %611 = vector.broadcast %cst_188 : f32 to vector<32x1xf32>
    %612 = arith.divf %610, %611 : vector<32x1xf32>
    %613 = vector.broadcast %612 : vector<32x1xf32> to vector<32x32xf32>
    %614 = arith.subf %608, %613 : vector<32x32xf32>
    %615 = arith.mulf %614, %614 : vector<32x32xf32>
    %cst_189 = arith.constant dense<0.000000e+00> : vector<32xf32>
    %616 = vector.multi_reduction <add>, %615, %cst_189 [1] : vector<32x32xf32> to vector<32xf32>
    %617 = vector.shape_cast %616 : vector<32xf32> to vector<32x1xf32>
    %cst_190 = arith.constant 3.200000e+01 : f32
    %618 = vector.broadcast %cst_190 : f32 to vector<32x1xf32>
    %619 = arith.divf %617, %618 : vector<32x1xf32>
    %cst_191 = arith.constant 9.99999974E-6 : f32
    %620 = vector.broadcast %cst_191 : f32 to vector<32x1xf32>
    %621 = arith.addf %619, %620 : vector<32x1xf32>
    %622 = math.rsqrt %621 : vector<32x1xf32>
    %623 = vector.broadcast %622 : vector<32x1xf32> to vector<32x32xf32>
    %624 = arith.mulf %614, %623 : vector<32x32xf32>
    %625 = arith.truncf %624 : vector<32x32xf32> to vector<32x32xbf16>
    %626 = arith.truncf %350 : vector<32x128xf32> to vector<32x128xbf16>
    %cst_192 = arith.constant dense<0.000000e+00> : vector<32x128xf32>
    %627 = tpu.matmul %625, %626, %cst_192 {dimension_numbers = #tpu.dot_dimension_numbers<[1], [0], [0], [1], [0, 0, 1, 1], [], []>} : vector<32x32xbf16>, vector<32x128xbf16>, vector<32x128xf32> -> vector<32x128xf32>
    %628 = vector.broadcast %339 : vector<1x128xf32> to vector<32x128xf32>
    %629 = arith.addf %627, %628 : vector<32x128xf32>
    %cst_193 = arith.constant 5.000000e-01 : f32
    %630 = vector.broadcast %cst_193 : f32 to vector<32x128xf32>
    %631 = arith.mulf %630, %629 : vector<32x128xf32>
    %cst_194 = arith.constant 4.471500e-02 : f32
    %632 = vector.broadcast %cst_194 : f32 to vector<32x128xf32>
    %633 = arith.mulf %632, %629 : vector<32x128xf32>
    %634 = arith.mulf %633, %629 : vector<32x128xf32>
    %635 = arith.mulf %634, %629 : vector<32x128xf32>
    %636 = arith.addf %629, %635 : vector<32x128xf32>
    %cst_195 = arith.constant 0.797884583 : f32
    %637 = vector.broadcast %cst_195 : f32 to vector<32x128xf32>
    %638 = arith.mulf %637, %636 : vector<32x128xf32>
    %639 = math.tanh %638 : vector<32x128xf32>
    %cst_196 = arith.constant 1.000000e+00 : f32
    %640 = vector.broadcast %cst_196 : f32 to vector<32x128xf32>
    %641 = arith.addf %640, %639 : vector<32x128xf32>
    %642 = arith.mulf %631, %641 : vector<32x128xf32>
    %643 = arith.truncf %642 : vector<32x128xf32> to vector<32x128xbf16>
    %cst_197 = arith.constant dense<0.000000e+00> : vector<32x32xf32>
    %644 = tpu.matmul %643, %354, %cst_197 {dimension_numbers = #tpu.dot_dimension_numbers<[1], [0], [0], [1], [0, 0, 1, 1], [], []>} : vector<32x128xbf16>, vector<128x32xbf16>, vector<32x32xf32> -> vector<32x32xf32>
    %645 = arith.addf %608, %644 : vector<32x32xf32>
    %646 = vector.broadcast %340 : vector<1x32xf32> to vector<32x32xf32>
    %647 = arith.addf %645, %646 : vector<32x32xf32>
    %c2_198 = arith.constant 2 : index
    %c0_199 = arith.constant 0 : index
    %c0_200 = arith.constant 0 : index
    %648 = vector.load %arg2[%c2_198, %c0_199, %c0_200] : memref<3x32x384xf32, #tpu.memory_space<vmem>>, vector<1x32x256xf32>
    %649 = vector.shape_cast %648 : vector<1x32x256xf32> to vector<32x256xf32>
    %c14 = arith.constant 14 : index
    %c0_201 = arith.constant 0 : index
    %650 = vector.load %arg1[%c14, %c0_201] : memref<16x256xf32, #tpu.memory_space<vmem>>, vector<1x256xf32>
    %cst_202 = arith.constant dense<0.000000e+00> : vector<32xf32>
    %651 = vector.multi_reduction <add>, %647, %cst_202 [1] : vector<32x32xf32> to vector<32xf32>
    %652 = vector.shape_cast %651 : vector<32xf32> to vector<32x1xf32>
    %cst_203 = arith.constant 3.200000e+01 : f32
    %653 = vector.broadcast %cst_203 : f32 to vector<32x1xf32>
    %654 = arith.divf %652, %653 : vector<32x1xf32>
    %655 = vector.broadcast %654 : vector<32x1xf32> to vector<32x32xf32>
    %656 = arith.subf %647, %655 : vector<32x32xf32>
    %657 = arith.mulf %656, %656 : vector<32x32xf32>
    %cst_204 = arith.constant dense<0.000000e+00> : vector<32xf32>
    %658 = vector.multi_reduction <add>, %657, %cst_204 [1] : vector<32x32xf32> to vector<32xf32>
    %659 = vector.shape_cast %658 : vector<32xf32> to vector<32x1xf32>
    %cst_205 = arith.constant 3.200000e+01 : f32
    %660 = vector.broadcast %cst_205 : f32 to vector<32x1xf32>
    %661 = arith.divf %659, %660 : vector<32x1xf32>
    %cst_206 = arith.constant 9.99999974E-6 : f32
    %662 = vector.broadcast %cst_206 : f32 to vector<32x1xf32>
    %663 = arith.addf %661, %662 : vector<32x1xf32>
    %664 = math.rsqrt %663 : vector<32x1xf32>
    %665 = vector.broadcast %664 : vector<32x1xf32> to vector<32x32xf32>
    %666 = arith.mulf %656, %665 : vector<32x32xf32>
    %667 = arith.truncf %666 : vector<32x32xf32> to vector<32x32xbf16>
    %668 = arith.truncf %649 : vector<32x256xf32> to vector<32x256xbf16>
    %cst_207 = arith.constant dense<0.000000e+00> : vector<32x256xf32>
    %669 = tpu.matmul %667, %668, %cst_207 {dimension_numbers = #tpu.dot_dimension_numbers<[1], [0], [0], [1], [0, 0, 1, 1], [], []>} : vector<32x32xbf16>, vector<32x256xbf16>, vector<32x256xf32> -> vector<32x256xf32>
    %670 = vector.broadcast %650 : vector<1x256xf32> to vector<32x256xf32>
    %671 = arith.addf %669, %670 : vector<32x256xf32>
    %c0_208 = arith.constant 0 : index
    %c0_209 = arith.constant 0 : index
    %672 = vector.load %arg5[%c0_208, %c0_209] : memref<32x256xf32, #tpu.memory_space<vmem>>, vector<32x256xf32>
    tpu.vector_store %arg5[%c0_208, %c0_209], %671 {strides = array<i32>} : memref<32x256xf32, #tpu.memory_space<vmem>>, vector<32x256xf32>,
    return
  }
}

</mosaic_0001>

<llo_original>
// kernel: decoder_forward.1
$region0: #{decoder_forward.1}
  #allocation0 [shape = 'u32[]', space=smem, size = 0x4, offset = 0x4, fixed_abs, tag = 'smem constant byte address 0x4 - core index']
  #allocation1 [shape = 'u32[144,128]{1,0:T(1,128)}', space=vmem, size = 0x12000, scoped, tag = 'internal scratch']
  %s0 = inlined_call_operand.vmem [shape: f32[32,128], index: 0, kind: input, shape index: {}]
  %s1 = inlined_call_operand.vmem [shape: f32[16,256], index: 1, kind: input, shape index: {}]
  %s2 = inlined_call_operand.vmem [shape: f32[3,32,384], index: 2, kind: input, shape index: {}]
  %s3 = inlined_call_operand.vmem [shape: bf16[2,48,128], index: 3, kind: input, shape index: {}]
  %s4 = inlined_call_operand.vmem [shape: bf16[2,128,32], index: 4, kind: input, shape index: {}]
  %s5 = inlined_call_operand.vmem [shape: f32[32,256], index: 5, kind: output, shape index: {}]
  %s6 = sld [smem:[#allocation0]]
  $region30: #{decoder_forward.1} parent=0
    _
  %s8 = ssub.s32 1, %s6
  %s9 = scalar_select 0, %s8, %s6
  // Predicated region
  $region2: #{decoder_forward.1} parent=0 // pred_check
    _
  $region3: #{decoder_forward.1} parent=0 // pred_check_branch
    %11 = sbr.rel (0) target = $region5
  $region4: #{decoder_forward.1} parent=0 // pred_region
    _
  $region5: #{decoder_forward.1} parent=0 // pred_fallthru
    _
  // Predicated region
  $region6: #{decoder_forward.1} parent=0 // pred_check
    _
  $region7: #{decoder_forward.1} parent=0 // pred_check_branch
    %13 = sbr.rel (0) target = $region9
  $region8: #{decoder_forward.1} parent=0 // pred_region
    _
  $region9: #{decoder_forward.1} parent=0 // pred_fallthru
    _
  // Predicated region
  $region10: #{decoder_forward.1} parent=0 // pred_check
    _
  $region11: #{decoder_forward.1} parent=0 // pred_check_branch
    %15 = sbr.rel (0) target = $region13
  $region12: #{decoder_forward.1} parent=0 // pred_region
    _
  $region13: #{decoder_forward.1} parent=0 // pred_fallthru
    _
  // Predicated region
  $region14: #{decoder_forward.1} parent=0 // pred_check
    _
  $region15: #{decoder_forward.1} parent=0 // pred_check_branch
    %17 = sbr.rel (0) target = $region17
  $region16: #{decoder_forward.1} parent=0 // pred_region
    _
  $region17: #{decoder_forward.1} parent=0 // pred_fallthru
    _
  // Predicated region
  $region18: #{decoder_forward.1} parent=0 // pred_check
    _
  $region19: #{decoder_forward.1} parent=0 // pred_check_branch
    %19 = sbr.rel (0) target = $region21
  $region20: #{decoder_forward.1} parent=0 // pred_region
    _
  $region21: #{decoder_forward.1} parent=0 // pred_fallthru
    _
  %v21 = vld [vmem:[%s0] sm:$0xff]
  %v22 = vld [vmem:[%s0 + $0x8] sm:$0xff]
  %v23 = vld [vmem:[%s0 + $0x10] sm:$0xff]
  %v24 = vld [vmem:[%s0 + $0x18] sm:$0xff]
  %29 = vrot.lane.b32.xlu0 %v21, 64
  %v30 = vpop.permute.xlu0 %29
  %31 = vrot.lane.b32.xlu0 %v22, 64
  %v32 = vpop.permute.xlu0 %31
  %33 = vrot.lane.b32.xlu0 %v23, 64
  %v34 = vpop.permute.xlu0 %33
  %35 = vrot.lane.b32.xlu0 %v24, 64
  %v36 = vpop.permute.xlu0 %35
  %vm41 = vcmask 392192
  %v42 = vsel %vm41, %v30, 0.0
  %43 = vadd.xlane.f32.xlu0 %v42
  %v44 = vpop.xlane.xlu0 %43
  %v45 = vsel %vm41, %v32, 0.0
  %46 = vadd.xlane.f32.xlu0 %v45
  %v47 = vpop.xlane.xlu0 %46
  %v48 = vsel %vm41, %v34, 0.0
  %49 = vadd.xlane.f32.xlu0 %v48
  %v50 = vpop.xlane.xlu0 %49
  %v51 = vsel %vm41, %v36, 0.0
  %52 = vadd.xlane.f32.xlu0 %v51
  %v53 = vpop.xlane.xlu0 %52
  %v54 = vrcp.pop 48.0
  %v55 = vmul.f32 %v44, %v54
  %v56 = vmul.f32 %v47, %v54
  %v57 = vmul.f32 %v50, %v54
  %v58 = vmul.f32 %v53, %v54
  %v59 = vsub.f32 %v21, %v55
  %v60 = vsub.f32 %v22, %v56
  %v61 = vsub.f32 %v23, %v57
  %v62 = vsub.f32 %v24, %v58
  %v63 = vmul.f32 %v59, %v59
  %v64 = vmul.f32 %v60, %v60
  %v65 = vmul.f32 %v61, %v61
  %v66 = vmul.f32 %v62, %v62
  %71 = vrot.lane.b32.xlu0 %v63, 64
  %v72 = vpop.permute.xlu0 %71
  %73 = vrot.lane.b32.xlu0 %v64, 64
  %v74 = vpop.permute.xlu0 %73
  %75 = vrot.lane.b32.xlu0 %v65, 64
  %v76 = vpop.permute.xlu0 %75
  %77 = vrot.lane.b32.xlu0 %v66, 64
  %v78 = vpop.permute.xlu0 %77
  %v83 = vsel %vm41, %v72, 0.0
  %84 = vadd.xlane.f32.xlu0 %v83
  %v85 = vpop.xlane.xlu0 %84
  %v86 = vsel %vm41, %v74, 0.0
  %87 = vadd.xlane.f32.xlu0 %v86
  %v88 = vpop.xlane.xlu0 %87
  %v89 = vsel %vm41, %v76, 0.0
  %90 = vadd.xlane.f32.xlu0 %v89
  %v91 = vpop.xlane.xlu0 %90
  %v92 = vsel %vm41, %v78, 0.0
  %93 = vadd.xlane.f32.xlu0 %v92
  %v94 = vpop.xlane.xlu0 %93
  %v95 = vmul.f32 %v85, %v54
  %v96 = vmul.f32 %v88, %v54
  %v97 = vmul.f32 %v91, %v54
  %v98 = vmul.f32 %v94, %v54
  %v99 = vadd.f32 %v95, 1e-05
  %v100 = vadd.f32 %v96, 1e-05
  %v101 = vadd.f32 %v97, 1e-05
  %v102 = vadd.f32 %v98, 1e-05
  %v103 = vrsqrt.pop %v99
  %v104 = vrsqrt.pop %v100
  %v105 = vrsqrt.pop %v101
  %v106 = vrsqrt.pop %v102
  %v107 = vmul.f32 %v59, %v103
  %v108 = vmul.f32 %v60, %v104
  %v109 = vmul.f32 %v61, %v105
  %v110 = vmul.f32 %v62, %v106
  %v111 = vpack.c.bf16 %v108, %v107
  %v112 = vpack.c.bf16 %v110, %v109
  %v113 = vld [vmem:[%s1] ss:$0 sm:$0xff]
  %v114 = vld [vmem:[%s1 + $0x1] ss:$0 sm:$0xff]
  %v115 = vld [vmem:[%s1 + $0x2] ss:$0 sm:$0xff]
  %v116 = vld [vmem:[%s1 + $0x3] ss:$0 sm:$0xff]
  %v117 = vld [vmem:[%s1 + $0x4] ss:$0 sm:$0xff]
  %v118 = vld [vmem:[%s1 + $0x5] ss:$0 sm:$0xff]
  %v119 = vld [vmem:[%s1 + $0x6] ss:$0 sm:$0xff]
  %v120 = vld [vmem:[%s2] sm:$0xff]
  %v121 = vld [vmem:[%s2 + $0x18] sm:$0xff]
  %v122 = vld [vmem:[%s2 + $0x30] sm:$0xff]
  %v123 = vld [vmem:[%s2 + $0x48] sm:$0xff]
  %v124 = vld [vmem:[%s2 + $0x8] sm:$0xff]
  %v125 = vld [vmem:[%s2 + $0x20] sm:$0xff]
  %v126 = vld [vmem:[%s2 + $0x38] sm:$0xff]
  %v127 = vld [vmem:[%s2 + $0x50] sm:$0xff]
  %v128 = vld [vmem:[%s2 + $0x10] sm:$0xff]
  %v129 = vld [vmem:[%s2 + $0x28] sm:$0xff]
  %v130 = vld [vmem:[%s2 + $0x40] sm:$0xff]
  %v131 = vld [vmem:[%s2 + $0x58] sm:$0xff]
  %v132 = vld [vmem:[%s3] sm:$0xf]
  %v133 = vld [vmem:[%s3 + $0x4] sm:$0xf]
  %v134 = vld [vmem:[%s3 + $0x8] sm:$0xf]
  %v135 = vld [vmem:[%s3 + $0xc] sm:$0xf]
  %v136 = vld [vmem:[%s3 + $0x10] sm:$0xf]
  %v137 = vld [vmem:[%s3 + $0x14] sm:$0xf]
  %v138 = vld [vmem:[%s4] sm:$0xf]
  %v139 = vld [vmem:[%s4 + $0x4] sm:$0xf]
  %v140 = vld [vmem:[%s4 + $0x8] sm:$0xf]
  %v141 = vld [vmem:[%s4 + $0xc] sm:$0xf]
  %v142 = vld [vmem:[%s4 + $0x10] sm:$0xf]
  %v143 = vld [vmem:[%s4 + $0x14] sm:$0xf]
  %v144 = vld [vmem:[%s4 + $0x18] sm:$0xf]
  %v145 = vld [vmem:[%s4 + $0x1c] sm:$0xf]
  %v146 = vld [vmem:[%s4 + $0x20] sm:$0xf]
  %v147 = vld [vmem:[%s4 + $0x24] sm:$0xf]
  %v148 = vld [vmem:[%s4 + $0x28] sm:$0xf]
  %v149 = vld [vmem:[%s4 + $0x2c] sm:$0xf]
  %v150 = vld [vmem:[%s4 + $0x30] sm:$0xf]
  %v151 = vld [vmem:[%s4 + $0x34] sm:$0xf]
  %v152 = vld [vmem:[%s4 + $0x38] sm:$0xf]
  %v153 = vld [vmem:[%s4 + $0x3c] sm:$0xf]
  %vm154 = vcmask 261120
  %v155 = vsel %vm154, %v21, 0.0
  %156 = vadd.xlane.f32.xlu0 %v155
  %v157 = vpop.xlane.xlu0 %156
  %v158 = vsel %vm154, %v22, 0.0
  %159 = vadd.xlane.f32.xlu0 %v158
  %v160 = vpop.xlane.xlu0 %159
  %v161 = vsel %vm154, %v23, 0.0
  %162 = vadd.xlane.f32.xlu0 %v161
  %v163 = vpop.xlane.xlu0 %162
  %v164 = vsel %vm154, %v24, 0.0
  %165 = vadd.xlane.f32.xlu0 %v164
  %v166 = vpop.xlane.xlu0 %165
  %v167 = vrcp.pop 32.0
  %v168 = vmul.f32 %v157, %v167
  %v169 = vmul.f32 %v160, %v167
  %v170 = vmul.f32 %v163, %v167
  %v171 = vmul.f32 %v166, %v167
  %v172 = vsub.f32 %v21, %v168
  %v173 = vsub.f32 %v22, %v169
  %v174 = vsub.f32 %v23, %v170
  %v175 = vsub.f32 %v24, %v171
  %v176 = vmul.f32 %v172, %v172
  %v177 = vmul.f32 %v173, %v173
  %v178 = vmul.f32 %v174, %v174
  %v179 = vmul.f32 %v175, %v175
  %v180 = vsel %vm154, %v176, 0.0
  %181 = vadd.xlane.f32.xlu0 %v180
  %v182 = vpop.xlane.xlu0 %181
  %v183 = vsel %vm154, %v177, 0.0
  %184 = vadd.xlane.f32.xlu0 %v183
  %v185 = vpop.xlane.xlu0 %184
  %v186 = vsel %vm154, %v178, 0.0
  %187 = vadd.xlane.f32.xlu0 %v186
  %v188 = vpop.xlane.xlu0 %187
  %v189 = vsel %vm154, %v179, 0.0
  %190 = vadd.xlane.f32.xlu0 %v189
  %v191 = vpop.xlane.xlu0 %190
  %v192 = vmul.f32 %v182, %v167
  %v193 = vmul.f32 %v185, %v167
  %v194 = vmul.f32 %v188, %v167
  %v195 = vmul.f32 %v191, %v167
  %v196 = vadd.f32 %v192, 1e-05
  %v197 = vadd.f32 %v193, 1e-05
  %v198 = vadd.f32 %v194, 1e-05
  %v199 = vadd.f32 %v195, 1e-05
  %v200 = vrsqrt.pop %v196
  %v201 = vrsqrt.pop %v197
  %v202 = vrsqrt.pop %v198
  %v203 = vrsqrt.pop %v199
  %v204 = vmul.f32 %v172, %v200
  %v205 = vmul.f32 %v173, %v201
  %v206 = vmul.f32 %v174, %v202
  %v207 = vmul.f32 %v175, %v203
  %v208 = vpack.c.bf16 %v205, %v204
  %v209 = vpack.c.bf16 %v207, %v206
  %v210 = vpack.c.bf16 %v121, %v120
  %v211 = vpack.c.bf16 %v123, %v122
  %v213 = vsel %vm154, %v208, 0
  %v216 = vsel %vm154, %v209, 0
  %218 = vmatprep.subr.bf16.mxu0 0
  %219 = vmatpush1.bf16.msra.mxu0 0
  %220 = vmatprep.subr.bf16.mxu0 0
  %221 = vmatpush1.bf16.msra.mxu0 0
  %222 = vmatprep.subr.bf16.mxu0 0
  %223 = vmatpush1.bf16.msra.mxu0 0
  %224 = vmatprep.subr.bf16.mxu0 0
  %225 = vmatpush1.bf16.msra.mxu0 0
  %226 = vmatprep.subr.bf16.mxu0 0
  %227 = vmatpush1.bf16.msra.mxu0 0
  %228 = vmatprep.subr.bf16.mxu0 0
  %229 = vmatpush1.bf16.msra.mxu0 0
  %230 = vmatprep.subr.bf16.mxu0 0
  %231 = vmatpush1.bf16.msra.mxu0 %v211
  %232 = vmatprep.subr.bf16.mxu0 0
  %233 = vmatpush1.bf16.msra.mxu0 %v210
  %234 = vmatprep.subr.bf16.mxu0 0
  %235 = vmatpush2.bf16.msra.mxu0 0
  %236 = vmatprep.subr.bf16.mxu0 0
  %237 = vmatpush2.bf16.msra.mxu0 0
  %238 = vmatprep.subr.bf16.mxu0 0
  %239 = vmatpush2.bf16.msra.mxu0 0
  %240 = vmatprep.subr.bf16.mxu0 0
  %241 = vmatpush2.bf16.msra.mxu0 0
  %242 = vmatprep.subr.bf16.mxu0 0
  %243 = vmatpush2.bf16.msra.mxu0 0
  %244 = vmatprep.subr.bf16.mxu0 0
  %245 = vmatpush2.bf16.msra.mxu0 0
  %246 = vmatprep.subr.bf16.mxu0 0
  %247 = vmatpush2.bf16.msra.mxu0 0
  %248 = vmatprep.subr.bf16.mxu0 0
  %249 = vmatpush2.bf16.msra.mxu0 0
  %250 = vmatprep.mubr.bf16.mxu0 0
  %251 = vmatmul.mubr.bf16.gmra.mxu0 %v213
  %v252 = vpop.f32.mrf.mxu0
  %v253 = vadd.f32 %v113, %v252
  %v254 = vpop.f32.mrf.mxu0
  %v255 = vpop.f32.mrf.mxu0
  %v256 = vadd.f32 %v113, %v255
  %v257 = vpop.f32.mrf.mxu0
  %258 = vmatprep.mubr.bf16.mxu0 0
  %259 = vmatmul.mubr.bf16.gmra.mxu0 %v216
  %v260 = vpop.f32.mrf.mxu0
  %v261 = vadd.f32 %v113, %v260
  %v262 = vpop.f32.mrf.mxu0
  %v263 = vpop.f32.mrf.mxu0
  %v264 = vadd.f32 %v113, %v263
  %v265 = vpop.f32.mrf.mxu0
  %266 = vdwg.mxu0
  %269 = vrot.lane.b32.xlu0 %v111, 64
  %v270 = vpop.permute.xlu0 %269
  %271 = vrot.lane.b32.xlu0 %v112, 64
  %v272 = vpop.permute.xlu0 %271
  %v279 = vunpack.c.l.b16 %v132
  %v280 = vunpack.c.l.b16 %v133
  %v281 = vunpack.c.l.b16 %v134
  %v282 = vunpack.c.l.b16 %v135
  %v283 = vunpack.c.l.b16 %v136
  %v284 = vunpack.c.l.b16 %v137
  %v285 = vpack.c.b16 %v280, %v279
  %v286 = vpack.c.b16 %v282, %v281
  %v287 = vpack.c.b16 %v284, %v283
  %v292 = vsel %vm41, %v270, 0
  %v295 = vsel %vm41, %v272, 0
  %297 = vmatprep.subr.bf16.mxu0 0
  %298 = vmatpush1.bf16.msra.mxu0 0
  %299 = vmatprep.subr.bf16.mxu0 0
  %300 = vmatpush1.bf16.msra.mxu0 0
  %301 = vmatprep.subr.bf16.mxu0 0
  %302 = vmatpush1.bf16.msra.mxu0 0
  %303 = vmatprep.subr.bf16.mxu0 0
  %304 = vmatpush1.bf16.msra.mxu0 0
  %305 = vmatprep.subr.bf16.mxu0 0
  %306 = vmatpush1.bf16.msra.mxu0 0
  %307 = vmatprep.subr.bf16.mxu0 0
  %308 = vmatpush1.bf16.msra.mxu0 %v287
  %309 = vmatprep.subr.bf16.mxu0 0
  %310 = vmatpush1.bf16.msra.mxu0 %v286
  %311 = vmatprep.subr.bf16.mxu0 0
  %312 = vmatpush1.bf16.msra.mxu0 %v285
  %313 = vmatprep.subr.bf16.mxu0 0
  %314 = vmatpush2.bf16.msra.mxu0 0
  %315 = vmatprep.subr.bf16.mxu0 0
  %316 = vmatpush2.bf16.msra.mxu0 0
  %317 = vmatprep.subr.bf16.mxu0 0
  %318 = vmatpush2.bf16.msra.mxu0 0
  %319 = vmatprep.subr.bf16.mxu0 0
  %320 = vmatpush2.bf16.msra.mxu0 0
  %321 = vmatprep.subr.bf16.mxu0 0
  %322 = vmatpush2.bf16.msra.mxu0 0
  %323 = vmatprep.subr.bf16.mxu0 0
  %324 = vmatpush2.bf16.msra.mxu0 0
  %325 = vmatprep.subr.bf16.mxu0 0
  %326 = vmatpush2.bf16.msra.mxu0 0
  %327 = vmatprep.subr.bf16.mxu0 0
  %328 = vmatpush2.bf16.msra.mxu0 0
  %329 = vmatprep.mubr.bf16.mxu0 0
  %330 = vmatmul.mubr.bf16.gmra.mxu0 %v292
  %v331 = vpop.f32.mrf.mxu0
  %v332 = vadd.f32 %v114, %v331
  %v333 = vpop.f32.mrf.mxu0
  %v334 = vpop.f32.mrf.mxu0
  %v335 = vadd.f32 %v114, %v334
  %v336 = vpop.f32.mrf.mxu0
  %337 = vmatprep.mubr.bf16.mxu0 0
  %338 = vmatmul.mubr.bf16.gmra.mxu0 %v295
  %v339 = vpop.f32.mrf.mxu0
  %v340 = vadd.f32 %v114, %v339
  %v341 = vpop.f32.mrf.mxu0
  %v342 = vpop.f32.mrf.mxu0
  %v343 = vadd.f32 %v114, %v342
  %v344 = vpop.f32.mrf.mxu0
  %345 = vdwg.mxu0
  %v346 = vmul.f32 %v253, 0.35355338
  %v347 = vmul.f32 %v256, 0.35355338
  %v348 = vmul.f32 %v261, 0.35355338
  %v349 = vmul.f32 %v264, 0.35355338
  %v350 = vpack.c.bf16 %v347, %v346
  %v351 = vpack.c.bf16 %v349, %v348
  %v352 = vpack.c.bf16 %v335, %v332
  %v353 = vpack.c.bf16 %v343, %v340
  %354 = vrot.lane.b32.xlu0 %v21, 96
  %v355 = vpop.permute.xlu0 %354
  %356 = vrot.lane.b32.xlu0 %v22, 96
  %v357 = vpop.permute.xlu0 %356
  %358 = vrot.lane.b32.xlu0 %v23, 96
  %v359 = vpop.permute.xlu0 %358
  %360 = vrot.lane.b32.xlu0 %v24, 96
  %v361 = vpop.permute.xlu0 %360
  %vm366 = vcmask 64512
  %v368 = vsel %vm366, %v350, 0
  %v371 = vsel %vm366, %v351, 0
  %v374 = vsel %vm366, %v352, 0
  %v377 = vsel %vm366, %v353, 0
  %379 = vmatprep.subr.bf16.mxu0 0
  %380 = vmatpush1.bf16.xpose.msra.mxu0 0
  %381 = vmatprep.subr.bf16.mxu0 0
  %382 = vmatpush1.bf16.xpose.msra.mxu0 0
  %383 = vmatprep.subr.bf16.mxu0 0
  %384 = vmatpush1.bf16.xpose.msra.mxu0 0
  %385 = vmatprep.subr.bf16.mxu0 0
  %386 = vmatpush1.bf16.xpose.msra.mxu0 0
  %387 = vmatprep.subr.bf16.mxu0 0
  %388 = vmatpush1.bf16.xpose.msra.mxu0 0
  %389 = vmatprep.subr.bf16.mxu0 0
  %390 = vmatpush1.bf16.xpose.msra.mxu0 0
  %391 = vmatprep.subr.bf16.mxu0 0
  %392 = vmatpush1.bf16.xpose.msra.mxu0 %v377
  %393 = vmatprep.subr.bf16.mxu0 0
  %394 = vmatpush1.bf16.xpose.msra.mxu0 %v374
  %395 = vmatprep.subr.bf16.mxu0 0
  %396 = vmatpush2.bf16.xpose.msra.mxu0 0
  %397 = vmatprep.subr.bf16.mxu0 0
  %398 = vmatpush2.bf16.xpose.msra.mxu0 0
  %399 = vmatprep.subr.bf16.mxu0 0
  %400 = vmatpush2.bf16.xpose.msra.mxu0 0
  %401 = vmatprep.subr.bf16.mxu0 0
  %402 = vmatpush2.bf16.xpose.msra.mxu0 0
  %403 = vmatprep.subr.bf16.mxu0 0
  %404 = vmatpush2.bf16.xpose.msra.mxu0 0
  %405 = vmatprep.subr.bf16.mxu0 0
  %406 = vmatpush2.bf16.xpose.msra.mxu0 0
  %407 = vmatprep.subr.bf16.mxu0 0
  %408 = vmatpush2.bf16.xpose.msra.mxu0 0
  %409 = vmatprep.subr.bf16.mxu0 0
  %410 = vmatpush2.bf16.xpose.msra.mxu0 0
  %411 = vmatprep.mubr.bf16.mxu0 0
  %412 = vmatmul.mubr.bf16.gmra.mxu0 %v368
  %v413 = vpop.f32.mrf.mxu0
  %v414 = vadd.f32 %v355, %v413
  %v415 = vpop.f32.mrf.mxu0
  %v416 = vpop.f32.mrf.mxu0
  %v417 = vadd.f32 %v357, %v416
  %v418 = vpop.f32.mrf.mxu0
  %419 = vmatprep.mubr.bf16.mxu0 0
  %420 = vmatmul.mubr.bf16.gmra.mxu0 %v371
  %v421 = vpop.f32.mrf.mxu0
  %v422 = vadd.f32 %v359, %v421
  %v423 = vpop.f32.mrf.mxu0
  %v424 = vpop.f32.mrf.mxu0
  %v425 = vadd.f32 %v361, %v424
  %v426 = vpop.f32.mrf.mxu0
  %427 = vdwg.mxu0
  %v428 = vsel %vm154, %v414, -inf
  %429 = vmax.xlane.f32.xlu0 %v428
  %v430 = vpop.xlane.xlu0 %429
  %v431 = vsel %vm154, %v417, -inf
  %432 = vmax.xlane.f32.xlu0 %v431
  %v433 = vpop.xlane.xlu0 %432
  %v434 = vsel %vm154, %v422, -inf
  %435 = vmax.xlane.f32.xlu0 %v434
  %v436 = vpop.xlane.xlu0 %435
  %v437 = vsel %vm154, %v425, -inf
  %438 = vmax.xlane.f32.xlu0 %v437
  %v439 = vpop.xlane.xlu0 %438
  %v440 = vsub.f32 %v414, %v430
  %v441 = vsub.f32 %v417, %v433
  %v442 = vsub.f32 %v422, %v436
  %v443 = vsub.f32 %v425, %v439
  %v444 = vmul.f32 %v440, 1.442695
  %v445 = vpow.pop %v444
  %v446 = vmul.f32 %v441, 1.442695
  %v447 = vpow.pop %v446
  %v448 = vmul.f32 %v442, 1.442695
  %v449 = vpow.pop %v448
  %v450 = vmul.f32 %v443, 1.442695
  %v451 = vpow.pop %v450
  %v452 = vsel %vm154, %v445, 0.0
  %453 = vadd.xlane.f32.xlu0 %v452
  %v454 = vpop.xlane.xlu0 %453
  %v455 = vsel %vm154, %v447, 0.0
  %456 = vadd.xlane.f32.xlu0 %v455
  %v457 = vpop.xlane.xlu0 %456
  %v458 = vsel %vm154, %v449, 0.0
  %459 = vadd.xlane.f32.xlu0 %v458
  %v460 = vpop.xlane.xlu0 %459
  %v461 = vsel %vm154, %v451, 0.0
  %462 = vadd.xlane.f32.xlu0 %v461
  %v463 = vpop.xlane.xlu0 %462
  %v464 = vrcp.pop %v454
  %v465 = vmul.f32 %v445, %v464
  %v466 = vrcp.pop %v457
  %v467 = vmul.f32 %v447, %v466
  %v468 = vrcp.pop %v460
  %v469 = vmul.f32 %v449, %v468
  %v470 = vrcp.pop %v463
  %v471 = vmul.f32 %v451, %v470
  %v472 = vpack.c.bf16 %v467, %v465
  %v473 = vpack.c.bf16 %v471, %v469
  %476 = vrot.lane.b32.xlu0 %v352, 96
  %v477 = vpop.permute.xlu0 %476
  %478 = vrot.lane.b32.xlu0 %v353, 96
  %v479 = vpop.permute.xlu0 %478
  %v483 = vsel %vm154, %v472, 0
  %v486 = vsel %vm154, %v473, 0
  %488 = vmatprep.subr.bf16.mxu0 0
  %489 = vmatpush1.bf16.msra.mxu0 0
  %490 = vmatprep.subr.bf16.mxu0 0
  %491 = vmatpush1.bf16.msra.mxu0 0
  %492 = vmatprep.subr.bf16.mxu0 0
  %493 = vmatpush1.bf16.msra.mxu0 0
  %494 = vmatprep.subr.bf16.mxu0 0
  %495 = vmatpush1.bf16.msra.mxu0 0
  %496 = vmatprep.subr.bf16.mxu0 0
  %497 = vmatpush1.bf16.msra.mxu0 0
  %498 = vmatprep.subr.bf16.mxu0 0
  %499 = vmatpush1.bf16.msra.mxu0 0
  %500 = vmatprep.subr.bf16.mxu0 0
  %501 = vmatpush1.bf16.msra.mxu0 %v479
  %502 = vmatprep.subr.bf16.mxu0 0
  %503 = vmatpush1.bf16.msra.mxu0 %v477
  %504 = vmatprep.subr.bf16.mxu0 0
  %505 = vmatpush2.bf16.msra.mxu0 0
  %506 = vmatprep.subr.bf16.mxu0 0
  %507 = vmatpush2.bf16.msra.mxu0 0
  %508 = vmatprep.subr.bf16.mxu0 0
  %509 = vmatpush2.bf16.msra.mxu0 0
  %510 = vmatprep.subr.bf16.mxu0 0
  %511 = vmatpush2.bf16.msra.mxu0 0
  %512 = vmatprep.subr.bf16.mxu0 0
  %513 = vmatpush2.bf16.msra.mxu0 0
  %514 = vmatprep.subr.bf16.mxu0 0
  %515 = vmatpush2.bf16.msra.mxu0 0
  %516 = vmatprep.subr.bf16.mxu0 0
  %517 = vmatpush2.bf16.msra.mxu0 0
  %518 = vmatprep.subr.bf16.mxu0 0
  %519 = vmatpush2.bf16.msra.mxu0 0
  %520 = vmatprep.mubr.bf16.mxu0 0
  %521 = vmatmul.mubr.bf16.gmra.mxu0 %v483
  %v522 = vpop.f32.mrf.mxu0
  %v523 = vadd.f32 0.0, %v522
  %v524 = vpop.f32.mrf.mxu0
  %v525 = vpop.f32.mrf.mxu0
  %v526 = vadd.f32 0.0, %v525
  %v527 = vpop.f32.mrf.mxu0
  %528 = vmatprep.mubr.bf16.mxu0 0
  %529 = vmatmul.mubr.bf16.gmra.mxu0 %v486
  %v530 = vpop.f32.mrf.mxu0
  %v531 = vadd.f32 0.0, %v530
  %v532 = vpop.f32.mrf.mxu0
  %v533 = vpop.f32.mrf.mxu0
  %v534 = vadd.f32 0.0, %v533
  %v535 = vpop.f32.mrf.mxu0
  %536 = vdwg.mxu0
  %v537 = vpack.c.bf16 %v120, %v120
  %v538 = vpack.c.bf16 %v526, %v523
  %v539 = vpack.c.bf16 %v534, %v531
  %542 = vrot.lane.b32.xlu0 %v350, 120
  %v543 = vpop.permute.xlu0 %542
  %544 = vrot.lane.b32.xlu0 %v351, 120
  %v545 = vpop.permute.xlu0 %544
  %546 = vrot.lane.b32.xlu0 %v352, 120
  %v547 = vpop.permute.xlu0 %546
  %548 = vrot.lane.b32.xlu0 %v353, 120
  %v549 = vpop.permute.xlu0 %548
  %v551 = vsel %vm366, %v543, 0
  %v554 = vsel %vm366, %v545, 0
  %v557 = vsel %vm366, %v547, 0
  %v560 = vsel %vm366, %v549, 0
  %562 = vmatprep.subr.bf16.mxu0 0
  %563 = vmatpush1.bf16.xpose.msra.mxu0 0
  %564 = vmatprep.subr.bf16.mxu0 0
  %565 = vmatpush1.bf16.xpose.msra.mxu0 0
  %566 = vmatprep.subr.bf16.mxu0 0
  %567 = vmatpush1.bf16.xpose.msra.mxu0 0
  %568 = vmatprep.subr.bf16.mxu0 0
  %569 = vmatpush1.bf16.xpose.msra.mxu0 0
  %570 = vmatprep.subr.bf16.mxu0 0
  %571 = vmatpush1.bf16.xpose.msra.mxu0 0
  %572 = vmatprep.subr.bf16.mxu0 0
  %573 = vmatpush1.bf16.xpose.msra.mxu0 0
  %574 = vmatprep.subr.bf16.mxu0 0
  %575 = vmatpush1.bf16.xpose.msra.mxu0 %v560
  %576 = vmatprep.subr.bf16.mxu0 0
  %577 = vmatpush1.bf16.xpose.msra.mxu0 %v557
  %578 = vmatprep.subr.bf16.mxu0 0
  %579 = vmatpush2.bf16.xpose.msra.mxu0 0
  %580 = vmatprep.subr.bf16.mxu0 0
  %581 = vmatpush2.bf16.xpose.msra.mxu0 0
  %582 = vmatprep.subr.bf16.mxu0 0
  %583 = vmatpush2.bf16.xpose.msra.mxu0 0
  %584 = vmatprep.subr.bf16.mxu0 0
  %585 = vmatpush2.bf16.xpose.msra.mxu0 0
  %586 = vmatprep.subr.bf16.mxu0 0
  %587 = vmatpush2.bf16.xpose.msra.mxu0 0
  %588 = vmatprep.subr.bf16.mxu0 0
  %589 = vmatpush2.bf16.xpose.msra.mxu0 0
  %590 = vmatprep.subr.bf16.mxu0 0
  %591 = vmatpush2.bf16.xpose.msra.mxu0 0
  %592 = vmatprep.subr.bf16.mxu0 0
  %593 = vmatpush2.bf16.xpose.msra.mxu0 0
  %594 = vmatprep.mubr.bf16.mxu0 0
  %595 = vmatmul.mubr.bf16.gmra.mxu0 %v551
  %v596 = vpop.f32.mrf.mxu0
  %v597 = vadd.f32 %v355, %v596
  %v598 = vpop.f32.mrf.mxu0
  %v599 = vpop.f32.mrf.mxu0
  %v600 = vadd.f32 %v357, %v599
  %v601 = vpop.f32.mrf.mxu0
  %602 = vmatprep.mubr.bf16.mxu0 0
  %603 = vmatmul.mubr.bf16.gmra.mxu0 %v554
  %v604 = vpop.f32.mrf.mxu0
  %v605 = vadd.f32 %v359, %v604
  %v606 = vpop.f32.mrf.mxu0
  %v607 = vpop.f32.mrf.mxu0
  %v608 = vadd.f32 %v361, %v607
  %v609 = vpop.f32.mrf.mxu0
  %610 = vdwg.mxu0
  %v611 = vsel %vm154, %v597, -inf
  %612 = vmax.xlane.f32.xlu0 %v611
  %v613 = vpop.xlane.xlu0 %612
  %v614 = vsel %vm154, %v600, -inf
  %615 = vmax.xlane.f32.xlu0 %v614
  %v616 = vpop.xlane.xlu0 %615
  %v617 = vsel %vm154, %v605, -inf
  %618 = vmax.xlane.f32.xlu0 %v617
  %v619 = vpop.xlane.xlu0 %618
  %v620 = vsel %vm154, %v608, -inf
  %621 = vmax.xlane.f32.xlu0 %v620
  %v622 = vpop.xlane.xlu0 %621
  %v623 = vsub.f32 %v597, %v613
  %v624 = vsub.f32 %v600, %v616
  %v625 = vsub.f32 %v605, %v619
  %v626 = vsub.f32 %v608, %v622
  %v627 = vmul.f32 %v623, 1.442695
  %v628 = vpow.pop %v627
  %v629 = vmul.f32 %v624, 1.442695
  %v630 = vpow.pop %v629
  %v631 = vmul.f32 %v625, 1.442695
  %v632 = vpow.pop %v631
  %v633 = vmul.f32 %v626, 1.442695
  %v634 = vpow.pop %v633
  %v635 = vsel %vm154, %v628, 0.0
  %636 = vadd.xlane.f32.xlu0 %v635
  %v637 = vpop.xlane.xlu0 %636
  %v638 = vsel %vm154, %v630, 0.0
  %639 = vadd.xlane.f32.xlu0 %v638
  %v640 = vpop.xlane.xlu0 %639
  %v641 = vsel %vm154, %v632, 0.0
  %642 = vadd.xlane.f32.xlu0 %v641
  %v643 = vpop.xlane.xlu0 %642
  %v644 = vsel %vm154, %v634, 0.0
  %645 = vadd.xlane.f32.xlu0 %v644
  %v646 = vpop.xlane.xlu0 %645
  %v647 = vrcp.pop %v637
  %v648 = vmul.f32 %v628, %v647
  %v649 = vrcp.pop %v640
  %v650 = vmul.f32 %v630, %v649
  %v651 = vrcp.pop %v643
  %v652 = vmul.f32 %v632, %v651
  %v653 = vrcp.pop %v646
  %v654 = vmul.f32 %v634, %v653
  %v655 = vpack.c.bf16 %v650, %v648
  %v656 = vpack.c.bf16 %v654, %v652
  %657 = vrot.lane.b32.xlu0 %v352, 88
  %v658 = vpop.permute.xlu0 %657
  %659 = vrot.lane.b32.xlu0 %v353, 88
  %v660 = vpop.permute.xlu0 %659
  %v664 = vsel %vm154, %v655, 0
  %v667 = vsel %vm154, %v656, 0
  %669 = vmatprep.subr.bf16.mxu0 0
  %670 = vmatpush1.bf16.msra.mxu0 0
  %671 = vmatprep.subr.bf16.mxu0 0
  %672 = vmatpush1.bf16.msra.mxu0 0
  %673 = vmatprep.subr.bf16.mxu0 0
  %674 = vmatpush1.bf16.msra.mxu0 0
  %675 = vmatprep.subr.bf16.mxu0 0
  %676 = vmatpush1.bf16.msra.mxu0 0
  %677 = vmatprep.subr.bf16.mxu0 0
  %678 = vmatpush1.bf16.msra.mxu0 0
  %679 = vmatprep.subr.bf16.mxu0 0
  %680 = vmatpush1.bf16.msra.mxu0 0
  %681 = vmatprep.subr.bf16.mxu0 0
  %682 = vmatpush1.bf16.msra.mxu0 %v660
  %683 = vmatprep.subr.bf16.mxu0 0
  %684 = vmatpush1.bf16.msra.mxu0 %v658
  %685 = vmatprep.subr.bf16.mxu0 0
  %686 = vmatpush2.bf16.msra.mxu0 0
  %687 = vmatprep.subr.bf16.mxu0 0
  %688 = vmatpush2.bf16.msra.mxu0 0
  %689 = vmatprep.subr.bf16.mxu0 0
  %690 = vmatpush2.bf16.msra.mxu0 0
  %691 = vmatprep.subr.bf16.mxu0 0
  %692 = vmatpush2.bf16.msra.mxu0 0
  %693 = vmatprep.subr.bf16.mxu0 0
  %694 = vmatpush2.bf16.msra.mxu0 0
  %695 = vmatprep.subr.bf16.mxu0 0
  %696 = vmatpush2.bf16.msra.mxu0 0
  %697 = vmatprep.subr.bf16.mxu0 0
  %698 = vmatpush2.bf16.msra.mxu0 0
  %699 = vmatprep.subr.bf16.mxu0 0
  %700 = vmatpush2.bf16.msra.mxu0 0
  %701 = vmatprep.mubr.bf16.mxu0 0
  %702 = vmatmul.mubr.bf16.gmra.mxu0 %v664
  %v703 = vpop.f32.mrf.mxu0
  %v704 = vadd.f32 0.0, %v703
  %v705 = vpop.f32.mrf.mxu0
  %v706 = vpop.f32.mrf.mxu0
  %v707 = vadd.f32 0.0, %v706
  %v708 = vpop.f32.mrf.mxu0
  %709 = vmatprep.mubr.bf16.mxu0 0
  %710 = vmatmul.mubr.bf16.gmra.mxu0 %v667
  %v711 = vpop.f32.mrf.mxu0
  %v712 = vadd.f32 0.0, %v711
  %v713 = vpop.f32.mrf.mxu0
  %v714 = vpop.f32.mrf.mxu0
  %v715 = vadd.f32 0.0, %v714
  %v716 = vpop.f32.mrf.mxu0
  %717 = vdwg.mxu0
  %v718 = vpack.c.bf16 %v121, %v121
  %v719 = vpack.c.bf16 %v707, %v704
  %v720 = vpack.c.bf16 %v715, %v712
  %722 = vrot.lane.b32.xlu0 %v718, 96
  %v723 = vpop.permute.xlu0 %722
  %v725 = vsel %vm366, %v719, 0
  %v728 = vsel %vm366, %v720, 0
  %vm730 = vcmask 1043456
  %v732 = vsel %vm730, %v723, 0
  %734 = vmatprep.subr.bf16.mxu0 0
  %735 = vmatpush1.bf16.msra.mxu0 0
  %736 = vmatprep.subr.bf16.mxu0 0
  %737 = vmatpush1.bf16.msra.mxu0 0
  %738 = vmatprep.subr.bf16.mxu0 0
  %739 = vmatpush1.bf16.msra.mxu0 0
  %740 = vmatprep.subr.bf16.mxu0 0
  %741 = vmatpush1.bf16.msra.mxu0 0
  %742 = vmatprep.subr.bf16.mxu0 0
  %743 = vmatpush1.bf16.msra.mxu0 0
  %744 = vmatprep.subr.bf16.mxu0 0
  %745 = vmatpush1.bf16.msra.mxu0 0
  %746 = vmatprep.subr.bf16.mxu0 0
  %747 = vmatpush1.bf16.msra.mxu0 0
  %748 = vmatprep.subr.bf16.mxu0 0
  %749 = vmatpush1.bf16.msra.mxu0 %v732
  %750 = vmatprep.subr.bf16.mxu0 0
  %751 = vmatpush2.bf16.msra.mxu0 0
  %752 = vmatprep.subr.bf16.mxu0 0
  %753 = vmatpush2.bf16.msra.mxu0 0
  %754 = vmatprep.subr.bf16.mxu0 0
  %755 = vmatpush2.bf16.msra.mxu0 0
  %756 = vmatprep.subr.bf16.mxu0 0
  %757 = vmatpush2.bf16.msra.mxu0 0
  %758 = vmatprep.subr.bf16.mxu0 0
  %759 = vmatpush2.bf16.msra.mxu0 0
  %760 = vmatprep.subr.bf16.mxu0 0
  %761 = vmatpush2.bf16.msra.mxu0 0
  %762 = vmatprep.subr.bf16.mxu0 0
  %763 = vmatpush2.bf16.msra.mxu0 0
  %764 = vmatprep.subr.bf16.mxu0 0
  %765 = vmatpush2.bf16.msra.mxu0 0
  %766 = vmatprep.mubr.bf16.mxu0 0
  %767 = vmatmul.mubr.bf16.gmra.mxu0 %v725
  %v768 = vpop.f32.mrf.mxu0
  %v769 = vadd.f32 0.0, %v768
  %v770 = vpop.f32.mrf.mxu0
  %v771 = vpop.f32.mrf.mxu0
  %v772 = vadd.f32 0.0, %v771
  %v773 = vpop.f32.mrf.mxu0
  %774 = vmatprep.mubr.bf16.mxu0 0
  %775 = vmatmul.mubr.bf16.gmra.mxu0 %v728
  %v776 = vpop.f32.mrf.mxu0
  %v777 = vadd.f32 0.0, %v776
  %v778 = vpop.f32.mrf.mxu0
  %v779 = vpop.f32.mrf.mxu0
  %v780 = vadd.f32 0.0, %v779
  %v781 = vpop.f32.mrf.mxu0
  %782 = vdwg.mxu0
  %784 = vrot.lane.b32.xlu0 %v537, 96
  %v785 = vpop.permute.xlu0 %784
  %v787 = vsel %vm366, %v538, 0
  %v790 = vsel %vm366, %v539, 0
  %v793 = vsel %vm730, %v785, 0
  %795 = vmatprep.subr.bf16.mxu0 0
  %796 = vmatpush1.bf16.msra.mxu0 0
  %797 = vmatprep.subr.bf16.mxu0 0
  %798 = vmatpush1.bf16.msra.mxu0 0
  %799 = vmatprep.subr.bf16.mxu0 0
  %800 = vmatpush1.bf16.msra.mxu0 0
  %801 = vmatprep.subr.bf16.mxu0 0
  %802 = vmatpush1.bf16.msra.mxu0 0
  %803 = vmatprep.subr.bf16.mxu0 0
  %804 = vmatpush1.bf16.msra.mxu0 0
  %805 = vmatprep.subr.bf16.mxu0 0
  %806 = vmatpush1.bf16.msra.mxu0 0
  %807 = vmatprep.subr.bf16.mxu0 0
  %808 = vmatpush1.bf16.msra.mxu0 0
  %809 = vmatprep.subr.bf16.mxu0 0
  %810 = vmatpush1.bf16.msra.mxu0 %v793
  %811 = vmatprep.subr.bf16.mxu0 0
  %812 = vmatpush2.bf16.msra.mxu0 0
  %813 = vmatprep.subr.bf16.mxu0 0
  %814 = vmatpush2.bf16.msra.mxu0 0
  %815 = vmatprep.subr.bf16.mxu0 0
  %816 = vmatpush2.bf16.msra.mxu0 0
  %817 = vmatprep.subr.bf16.mxu0 0
  %818 = vmatpush2.bf16.msra.mxu0 0
  %819 = vmatprep.subr.bf16.mxu0 0
  %820 = vmatpush2.bf16.msra.mxu0 0
  %821 = vmatprep.subr.bf16.mxu0 0
  %822 = vmatpush2.bf16.msra.mxu0 0
  %823 = vmatprep.subr.bf16.mxu0 0
  %824 = vmatpush2.bf16.msra.mxu0 0
  %825 = vmatprep.subr.bf16.mxu0 0
  %826 = vmatpush2.bf16.msra.mxu0 0
  %827 = vmatprep.mubr.bf16.mxu0 0
  %828 = vmatmul.mubr.bf16.gmra.mxu0 %v787
  %v829 = vpop.f32.mrf.mxu0
  %v830 = vadd.f32 %v769, %v829
  %v831 = vpop.f32.mrf.mxu0
  %v832 = vpop.f32.mrf.mxu0
  %v833 = vadd.f32 %v772, %v832
  %v834 = vpop.f32.mrf.mxu0
  %835 = vmatprep.mubr.bf16.mxu0 0
  %836 = vmatmul.mubr.bf16.gmra.mxu0 %v790
  %v837 = vpop.f32.mrf.mxu0
  %v838 = vadd.f32 %v777, %v837
  %v839 = vpop.f32.mrf.mxu0
  %v840 = vpop.f32.mrf.mxu0
  %v841 = vadd.f32 %v780, %v840
  %v842 = vpop.f32.mrf.mxu0
  %843 = vdwg.mxu0
  %844 = vrot.lane.b32.xlu0 %v350, 112
  %v845 = vpop.permute.xlu0 %844
  %846 = vrot.lane.b32.xlu0 %v351, 112
  %v847 = vpop.permute.xlu0 %846
  %848 = vrot.lane.b32.xlu0 %v352, 112
  %v849 = vpop.permute.xlu0 %848
  %850 = vrot.lane.b32.xlu0 %v353, 112
  %v851 = vpop.permute.xlu0 %850
  %v853 = vsel %vm366, %v845, 0
  %v856 = vsel %vm366, %v847, 0
  %v859 = vsel %vm366, %v849, 0
  %v862 = vsel %vm366, %v851, 0
  %864 = vmatprep.subr.bf16.mxu0 0
  %865 = vmatpush1.bf16.xpose.msra.mxu0 0
  %866 = vmatprep.subr.bf16.mxu0 0
  %867 = vmatpush1.bf16.xpose.msra.mxu0 0
  %868 = vmatprep.subr.bf16.mxu0 0
  %869 = vmatpush1.bf16.xpose.msra.mxu0 0
  %870 = vmatprep.subr.bf16.mxu0 0
  %871 = vmatpush1.bf16.xpose.msra.mxu0 0
  %872 = vmatprep.subr.bf16.mxu0 0
  %873 = vmatpush1.bf16.xpose.msra.mxu0 0
  %874 = vmatprep.subr.bf16.mxu0 0
  %875 = vmatpush1.bf16.xpose.msra.mxu0 0
  %876 = vmatprep.subr.bf16.mxu0 0
  %877 = vmatpush1.bf16.xpose.msra.mxu0 %v862
  %878 = vmatprep.subr.bf16.mxu0 0
  %879 = vmatpush1.bf16.xpose.msra.mxu0 %v859
  %880 = vmatprep.subr.bf16.mxu0 0
  %881 = vmatpush2.bf16.xpose.msra.mxu0 0
  %882 = vmatprep.subr.bf16.mxu0 0
  %883 = vmatpush2.bf16.xpose.msra.mxu0 0
  %884 = vmatprep.subr.bf16.mxu0 0
  %885 = vmatpush2.bf16.xpose.msra.mxu0 0
  %886 = vmatprep.subr.bf16.mxu0 0
  %887 = vmatpush2.bf16.xpose.msra.mxu0 0
  %888 = vmatprep.subr.bf16.mxu0 0
  %889 = vmatpush2.bf16.xpose.msra.mxu0 0
  %890 = vmatprep.subr.bf16.mxu0 0
  %891 = vmatpush2.bf16.xpose.msra.mxu0 0
  %892 = vmatprep.subr.bf16.mxu0 0
  %893 = vmatpush2.bf16.xpose.msra.mxu0 0
  %894 = vmatprep.subr.bf16.mxu0 0
  %895 = vmatpush2.bf16.xpose.msra.mxu0 0
  %896 = vmatprep.mubr.bf16.mxu0 0
  %897 = vmatmul.mubr.bf16.gmra.mxu0 %v853
  %v898 = vpop.f32.mrf.mxu0
  %v899 = vadd.f32 %v355, %v898
  %v900 = vpop.f32.mrf.mxu0
  %v901 = vpop.f32.mrf.mxu0
  %v902 = vadd.f32 %v357, %v901
  %v903 = vpop.f32.mrf.mxu0
  %904 = vmatprep.mubr.bf16.mxu0 0
  %905 = vmatmul.mubr.bf16.gmra.mxu0 %v856
  %v906 = vpop.f32.mrf.mxu0
  %v907 = vadd.f32 %v359, %v906
  %v908 = vpop.f32.mrf.mxu0
  %v909 = vpop.f32.mrf.mxu0
  %v910 = vadd.f32 %v361, %v909
  %v911 = vpop.f32.mrf.mxu0
  %912 = vdwg.mxu0
  %v913 = vsel %vm154, %v899, -inf
  %914 = vmax.xlane.f32.xlu0 %v913
  %v915 = vpop.xlane.xlu0 %914
  %v916 = vsel %vm154, %v902, -inf
  %917 = vmax.xlane.f32.xlu0 %v916
  %v918 = vpop.xlane.xlu0 %917
  %v919 = vsel %vm154, %v907, -inf
  %920 = vmax.xlane.f32.xlu0 %v919
  %v921 = vpop.xlane.xlu0 %920
  %v922 = vsel %vm154, %v910, -inf
  %923 = vmax.xlane.f32.xlu0 %v922
  %v924 = vpop.xlane.xlu0 %923
  %v925 = vsub.f32 %v899, %v915
  %v926 = vsub.f32 %v902, %v918
  %v927 = vsub.f32 %v907, %v921
  %v928 = vsub.f32 %v910, %v924
  %v929 = vmul.f32 %v925, 1.442695
  %v930 = vpow.pop %v929
  %v931 = vmul.f32 %v926, 1.442695
  %v932 = vpow.pop %v931
  %v933 = vmul.f32 %v927, 1.442695
  %v934 = vpow.pop %v933
  %v935 = vmul.f32 %v928, 1.442695
  %v936 = vpow.pop %v935
  %v937 = vsel %vm154, %v930, 0.0
  %938 = vadd.xlane.f32.xlu0 %v937
  %v939 = vpop.xlane.xlu0 %938
  %v940 = vsel %vm154, %v932, 0.0
  %941 = vadd.xlane.f32.xlu0 %v940
  %v942 = vpop.xlane.xlu0 %941
  %v943 = vsel %vm154, %v934, 0.0
  %944 = vadd.xlane.f32.xlu0 %v943
  %v945 = vpop.xlane.xlu0 %944
  %v946 = vsel %vm154, %v936, 0.0
  %947 = vadd.xlane.f32.xlu0 %v946
  %v948 = vpop.xlane.xlu0 %947
  %v949 = vrcp.pop %v939
  %v950 = vmul.f32 %v930, %v949
  %v951 = vrcp.pop %v942
  %v952 = vmul.f32 %v932, %v951
  %v953 = vrcp.pop %v945
  %v954 = vmul.f32 %v934, %v953
  %v955 = vrcp.pop %v948
  %v956 = vmul.f32 %v936, %v955
  %v957 = vpack.c.bf16 %v952, %v950
  %v958 = vpack.c.bf16 %v956, %v954
  %959 = vrot.lane.b32.xlu0 %v352, 80
  %v960 = vpop.permute.xlu0 %959
  %961 = vrot.lane.b32.xlu0 %v353, 80
  %v962 = vpop.permute.xlu0 %961
  %v966 = vsel %vm154, %v957, 0
  %v969 = vsel %vm154, %v958, 0
  %971 = vmatprep.subr.bf16.mxu0 0
  %972 = vmatpush1.bf16.msra.mxu0 0
  %973 = vmatprep.subr.bf16.mxu0 0
  %974 = vmatpush1.bf16.msra.mxu0 0
  %975 = vmatprep.subr.bf16.mxu0 0
  %976 = vmatpush1.bf16.msra.mxu0 0
  %977 = vmatprep.subr.bf16.mxu0 0
  %978 = vmatpush1.bf16.msra.mxu0 0
  %979 = vmatprep.subr.bf16.mxu0 0
  %980 = vmatpush1.bf16.msra.mxu0 0
  %981 = vmatprep.subr.bf16.mxu0 0
  %982 = vmatpush1.bf16.msra.mxu0 0
  %983 = vmatprep.subr.bf16.mxu0 0
  %984 = vmatpush1.bf16.msra.mxu0 %v962
  %985 = vmatprep.subr.bf16.mxu0 0
  %986 = vmatpush1.bf16.msra.mxu0 %v960
  %987 = vmatprep.subr.bf16.mxu0 0
  %988 = vmatpush2.bf16.msra.mxu0 0
  %989 = vmatprep.subr.bf16.mxu0 0
  %990 = vmatpush2.bf16.msra.mxu0 0
  %991 = vmatprep.subr.bf16.mxu0 0
  %992 = vmatpush2.bf16.msra.mxu0 0
  %993 = vmatprep.subr.bf16.mxu0 0
  %994 = vmatpush2.bf16.msra.mxu0 0
  %995 = vmatprep.subr.bf16.mxu0 0
  %996 = vmatpush2.bf16.msra.mxu0 0
  %997 = vmatprep.subr.bf16.mxu0 0
  %998 = vmatpush2.bf16.msra.mxu0 0
  %999 = vmatprep.subr.bf16.mxu0 0
  %1000 = vmatpush2.bf16.msra.mxu0 0
  %1001 = vmatprep.subr.bf16.mxu0 0
  %1002 = vmatpush2.bf16.msra.mxu0 0
  %1003 = vmatprep.mubr.bf16.mxu0 0
  %1004 = vmatmul.mubr.bf16.gmra.mxu0 %v966
  %v1005 = vpop.f32.mrf.mxu0
  %v1006 = vadd.f32 0.0, %v1005
  %v1007 = vpop.f32.mrf.mxu0
  %v1008 = vpop.f32.mrf.mxu0
  %v1009 = vadd.f32 0.0, %v1008
  %v1010 = vpop.f32.mrf.mxu0
  %1011 = vmatprep.mubr.bf16.mxu0 0
  %1012 = vmatmul.mubr.bf16.gmra.mxu0 %v969
  %v1013 = vpop.f32.mrf.mxu0
  %v1014 = vadd.f32 0.0, %v1013
  %v1015 = vpop.f32.mrf.mxu0
  %v1016 = vpop.f32.mrf.mxu0
  %v1017 = vadd.f32 0.0, %v1016
  %v1018 = vpop.f32.mrf.mxu0
  %1019 = vdwg.mxu0
  %v1020 = vpack.c.bf16 %v122, %v122
  %v1021 = vpack.c.bf16 %v1009, %v1006
  %v1022 = vpack.c.bf16 %v1017, %v1014
  %1024 = vrot.lane.b32.xlu0 %v1020, 96
  %v1025 = vpop.permute.xlu0 %1024
  %v1027 = vsel %vm366, %v1021, 0
  %v1030 = vsel %vm366, %v1022, 0
  %v1033 = vsel %vm730, %v1025, 0
  %1035 = vmatprep.subr.bf16.mxu0 0
  %1036 = vmatpush1.bf16.msra.mxu0 0
  %1037 = vmatprep.subr.bf16.mxu0 0
  %1038 = vmatpush1.bf16.msra.mxu0 0
  %1039 = vmatprep.subr.bf16.mxu0 0
  %1040 = vmatpush1.bf16.msra.mxu0 0
  %1041 = vmatprep.subr.bf16.mxu0 0
  %1042 = vmatpush1.bf16.msra.mxu0 0
  %1043 = vmatprep.subr.bf16.mxu0 0
  %1044 = vmatpush1.bf16.msra.mxu0 0
  %1045 = vmatprep.subr.bf16.mxu0 0
  %1046 = vmatpush1.bf16.msra.mxu0 0
  %1047 = vmatprep.subr.bf16.mxu0 0
  %1048 = vmatpush1.bf16.msra.mxu0 0
  %1049 = vmatprep.subr.bf16.mxu0 0
  %1050 = vmatpush1.bf16.msra.mxu0 %v1033
  %1051 = vmatprep.subr.bf16.mxu0 0
  %1052 = vmatpush2.bf16.msra.mxu0 0
  %1053 = vmatprep.subr.bf16.mxu0 0
  %1054 = vmatpush2.bf16.msra.mxu0 0
  %1055 = vmatprep.subr.bf16.mxu0 0
  %1056 = vmatpush2.bf16.msra.mxu0 0
  %1057 = vmatprep.subr.bf16.mxu0 0
  %1058 = vmatpush2.bf16.msra.mxu0 0
  %1059 = vmatprep.subr.bf16.mxu0 0
  %1060 = vmatpush2.bf16.msra.mxu0 0
  %1061 = vmatprep.subr.bf16.mxu0 0
  %1062 = vmatpush2.bf16.msra.mxu0 0
  %1063 = vmatprep.subr.bf16.mxu0 0
  %1064 = vmatpush2.bf16.msra.mxu0 0
  %1065 = vmatprep.subr.bf16.mxu0 0
  %1066 = vmatpush2.bf16.msra.mxu0 0
  %1067 = vmatprep.mubr.bf16.mxu0 0
  %1068 = vmatmul.mubr.bf16.gmra.mxu0 %v1027
  %v1069 = vpop.f32.mrf.mxu0
  %v1070 = vadd.f32 0.0, %v1069
  %v1071 = vpop.f32.mrf.mxu0
  %v1072 = vpop.f32.mrf.mxu0
  %v1073 = vadd.f32 0.0, %v1072
  %v1074 = vpop.f32.mrf.mxu0
  %1075 = vmatprep.mubr.bf16.mxu0 0
  %1076 = vmatmul.mubr.bf16.gmra.mxu0 %v1030
  %v1077 = vpop.f32.mrf.mxu0
  %v1078 = vadd.f32 0.0, %v1077
  %v1079 = vpop.f32.mrf.mxu0
  %v1080 = vpop.f32.mrf.mxu0
  %v1081 = vadd.f32 0.0, %v1080
  %v1082 = vpop.f32.mrf.mxu0
  %1083 = vdwg.mxu0
  %v1084 = vadd.f32 %v830, %v1070
  %v1085 = vadd.f32 %v833, %v1073
  %v1086 = vadd.f32 %v838, %v1078
  %v1087 = vadd.f32 %v841, %v1081
  %1088 = vrot.lane.b32.xlu0 %v350, 104
  %v1089 = vpop.permute.xlu0 %1088
  %1090 = vrot.lane.b32.xlu0 %v351, 104
  %v1091 = vpop.permute.xlu0 %1090
  %1092 = vrot.lane.b32.xlu0 %v352, 104
  %v1093 = vpop.permute.xlu0 %1092
  %1094 = vrot.lane.b32.xlu0 %v353, 104
  %v1095 = vpop.permute.xlu0 %1094
  %v1097 = vsel %vm366, %v1089, 0
  %v1100 = vsel %vm366, %v1091, 0
  %v1103 = vsel %vm366, %v1093, 0
  %v1106 = vsel %vm366, %v1095, 0
  %1108 = vmatprep.subr.bf16.mxu0 0
  %1109 = vmatpush1.bf16.xpose.msra.mxu0 0
  %1110 = vmatprep.subr.bf16.mxu0 0
  %1111 = vmatpush1.bf16.xpose.msra.mxu0 0
  %1112 = vmatprep.subr.bf16.mxu0 0
  %1113 = vmatpush1.bf16.xpose.msra.mxu0 0
  %1114 = vmatprep.subr.bf16.mxu0 0
  %1115 = vmatpush1.bf16.xpose.msra.mxu0 0
  %1116 = vmatprep.subr.bf16.mxu0 0
  %1117 = vmatpush1.bf16.xpose.msra.mxu0 0
  %1118 = vmatprep.subr.bf16.mxu0 0
  %1119 = vmatpush1.bf16.xpose.msra.mxu0 0
  %1120 = vmatprep.subr.bf16.mxu0 0
  %1121 = vmatpush1.bf16.xpose.msra.mxu0 %v1106
  %1122 = vmatprep.subr.bf16.mxu0 0
  %1123 = vmatpush1.bf16.xpose.msra.mxu0 %v1103
  %1124 = vmatprep.subr.bf16.mxu0 0
  %1125 = vmatpush2.bf16.xpose.msra.mxu0 0
  %1126 = vmatprep.subr.bf16.mxu0 0
  %1127 = vmatpush2.bf16.xpose.msra.mxu0 0
  %1128 = vmatprep.subr.bf16.mxu0 0
  %1129 = vmatpush2.bf16.xpose.msra.mxu0 0
  %1130 = vmatprep.subr.bf16.mxu0 0
  %1131 = vmatpush2.bf16.xpose.msra.mxu0 0
  %1132 = vmatprep.subr.bf16.mxu0 0
  %1133 = vmatpush2.bf16.xpose.msra.mxu0 0
  %1134 = vmatprep.subr.bf16.mxu0 0
  %1135 = vmatpush2.bf16.xpose.msra.mxu0 0
  %1136 = vmatprep.subr.bf16.mxu0 0
  %1137 = vmatpush2.bf16.xpose.msra.mxu0 0
  %1138 = vmatprep.subr.bf16.mxu0 0
  %1139 = vmatpush2.bf16.xpose.msra.mxu0 0
  %1140 = vmatprep.mubr.bf16.mxu0 0
  %1141 = vmatmul.mubr.bf16.gmra.mxu0 %v1097
  %v1142 = vpop.f32.mrf.mxu0
  %v1143 = vadd.f32 %v355, %v1142
  %v1144 = vpop.f32.mrf.mxu0
  %v1145 = vpop.f32.mrf.mxu0
  %v1146 = vadd.f32 %v357, %v1145
  %v1147 = vpop.f32.mrf.mxu0
  %1148 = vmatprep.mubr.bf16.mxu0 0
  %1149 = vmatmul.mubr.bf16.gmra.mxu0 %v1100
  %v1150 = vpop.f32.mrf.mxu0
  %v1151 = vadd.f32 %v359, %v1150
  %v1152 = vpop.f32.mrf.mxu0
  %v1153 = vpop.f32.mrf.mxu0
  %v1154 = vadd.f32 %v361, %v1153
  %v1155 = vpop.f32.mrf.mxu0
  %1156 = vdwg.mxu0
  %v1157 = vsel %vm154, %v1143, -inf
  %1158 = vmax.xlane.f32.xlu0 %v1157
  %v1159 = vpop.xlane.xlu0 %1158
  %v1160 = vsel %vm154, %v1146, -inf
  %1161 = vmax.xlane.f32.xlu0 %v1160
  %v1162 = vpop.xlane.xlu0 %1161
  %v1163 = vsel %vm154, %v1151, -inf
  %1164 = vmax.xlane.f32.xlu0 %v1163
  %v1165 = vpop.xlane.xlu0 %1164
  %v1166 = vsel %vm154, %v1154, -inf
  %1167 = vmax.xlane.f32.xlu0 %v1166
  %v1168 = vpop.xlane.xlu0 %1167
  %v1169 = vsub.f32 %v1143, %v1159
  %v1170 = vsub.f32 %v1146, %v1162
  %v1171 = vsub.f32 %v1151, %v1165
  %v1172 = vsub.f32 %v1154, %v1168
  %v1173 = vmul.f32 %v1169, 1.442695
  %v1174 = vpow.pop %v1173
  %v1175 = vmul.f32 %v1170, 1.442695
  %v1176 = vpow.pop %v1175
  %v1177 = vmul.f32 %v1171, 1.442695
  %v1178 = vpow.pop %v1177
  %v1179 = vmul.f32 %v1172, 1.442695
  %v1180 = vpow.pop %v1179
  %v1181 = vsel %vm154, %v1174, 0.0
  %1182 = vadd.xlane.f32.xlu0 %v1181
  %v1183 = vpop.xlane.xlu0 %1182
  %v1184 = vsel %vm154, %v1176, 0.0
  %1185 = vadd.xlane.f32.xlu0 %v1184
  %v1186 = vpop.xlane.xlu0 %1185
  %v1187 = vsel %vm154, %v1178, 0.0
  %1188 = vadd.xlane.f32.xlu0 %v1187
  %v1189 = vpop.xlane.xlu0 %1188
  %v1190 = vsel %vm154, %v1180, 0.0
  %1191 = vadd.xlane.f32.xlu0 %v1190
  %v1192 = vpop.xlane.xlu0 %1191
  %v1193 = vrcp.pop %v1183
  %v1194 = vmul.f32 %v1174, %v1193
  %v1195 = vrcp.pop %v1186
  %v1196 = vmul.f32 %v1176, %v1195
  %v1197 = vrcp.pop %v1189
  %v1198 = vmul.f32 %v1178, %v1197
  %v1199 = vrcp.pop %v1192
  %v1200 = vmul.f32 %v1180, %v1199
  %v1201 = vpack.c.bf16 %v1196, %v1194
  %v1202 = vpack.c.bf16 %v1200, %v1198
  %1203 = vrot.lane.b32.xlu0 %v352, 72
  %v1204 = vpop.permute.xlu0 %1203
  %1205 = vrot.lane.b32.xlu0 %v353, 72
  %v1206 = vpop.permute.xlu0 %1205
  %v1210 = vsel %vm154, %v1201, 0
  %v1213 = vsel %vm154, %v1202, 0
  %1215 = vmatprep.subr.bf16.mxu0 0
  %1216 = vmatpush1.bf16.msra.mxu0 0
  %1217 = vmatprep.subr.bf16.mxu0 0
  %1218 = vmatpush1.bf16.msra.mxu0 0
  %1219 = vmatprep.subr.bf16.mxu0 0
  %1220 = vmatpush1.bf16.msra.mxu0 0
  %1221 = vmatprep.subr.bf16.mxu0 0
  %1222 = vmatpush1.bf16.msra.mxu0 0
  %1223 = vmatprep.subr.bf16.mxu0 0
  %1224 = vmatpush1.bf16.msra.mxu0 0
  %1225 = vmatprep.subr.bf16.mxu0 0
  %1226 = vmatpush1.bf16.msra.mxu0 0
  %1227 = vmatprep.subr.bf16.mxu0 0
  %1228 = vmatpush1.bf16.msra.mxu0 %v1206
  %1229 = vmatprep.subr.bf16.mxu0 0
  %1230 = vmatpush1.bf16.msra.mxu0 %v1204
  %1231 = vmatprep.subr.bf16.mxu0 0
  %1232 = vmatpush2.bf16.msra.mxu0 0
  %1233 = vmatprep.subr.bf16.mxu0 0
  %1234 = vmatpush2.bf16.msra.mxu0 0
  %1235 = vmatprep.subr.bf16.mxu0 0
  %1236 = vmatpush2.bf16.msra.mxu0 0
  %1237 = vmatprep.subr.bf16.mxu0 0
  %1238 = vmatpush2.bf16.msra.mxu0 0
  %1239 = vmatprep.subr.bf16.mxu0 0
  %1240 = vmatpush2.bf16.msra.mxu0 0
  %1241 = vmatprep.subr.bf16.mxu0 0
  %1242 = vmatpush2.bf16.msra.mxu0 0
  %1243 = vmatprep.subr.bf16.mxu0 0
  %1244 = vmatpush2.bf16.msra.mxu0 0
  %1245 = vmatprep.subr.bf16.mxu0 0
  %1246 = vmatpush2.bf16.msra.mxu0 0
  %1247 = vmatprep.mubr.bf16.mxu0 0
  %1248 = vmatmul.mubr.bf16.gmra.mxu0 %v1210
  %v1249 = vpop.f32.mrf.mxu0
  %v1250 = vadd.f32 0.0, %v1249
  %v1251 = vpop.f32.mrf.mxu0
  %v1252 = vpop.f32.mrf.mxu0
  %v1253 = vadd.f32 0.0, %v1252
  %v1254 = vpop.f32.mrf.mxu0
  %1255 = vmatprep.mubr.bf16.mxu0 0
  %1256 = vmatmul.mubr.bf16.gmra.mxu0 %v1213
  %v1257 = vpop.f32.mrf.mxu0
  %v1258 = vadd.f32 0.0, %v1257
  %v1259 = vpop.f32.mrf.mxu0
  %v1260 = vpop.f32.mrf.mxu0
  %v1261 = vadd.f32 0.0, %v1260
  %v1262 = vpop.f32.mrf.mxu0
  %1263 = vdwg.mxu0
  %v1264 = vpack.c.bf16 %v123, %v123
  %v1265 = vpack.c.bf16 %v1253, %v1250
  %v1266 = vpack.c.bf16 %v1261, %v1258
  %1268 = vrot.lane.b32.xlu0 %v1264, 96
  %v1269 = vpop.permute.xlu0 %1268
  %v1271 = vsel %vm366, %v1265, 0
  %v1274 = vsel %vm366, %v1266, 0
  %v1277 = vsel %vm730, %v1269, 0
  %1279 = vmatprep.subr.bf16.mxu0 0
  %1280 = vmatpush1.bf16.msra.mxu0 0
  %1281 = vmatprep.subr.bf16.mxu0 0
  %1282 = vmatpush1.bf16.msra.mxu0 0
  %1283 = vmatprep.subr.bf16.mxu0 0
  %1284 = vmatpush1.bf16.msra.mxu0 0
  %1285 = vmatprep.subr.bf16.mxu0 0
  %1286 = vmatpush1.bf16.msra.mxu0 0
  %1287 = vmatprep.subr.bf16.mxu0 0
  %1288 = vmatpush1.bf16.msra.mxu0 0
  %1289 = vmatprep.subr.bf16.mxu0 0
  %1290 = vmatpush1.bf16.msra.mxu0 0
  %1291 = vmatprep.subr.bf16.mxu0 0
  %1292 = vmatpush1.bf16.msra.mxu0 0
  %1293 = vmatprep.subr.bf16.mxu0 0
  %1294 = vmatpush1.bf16.msra.mxu0 %v1277
  %1295 = vmatprep.subr.bf16.mxu0 0
  %1296 = vmatpush2.bf16.msra.mxu0 0
  %1297 = vmatprep.subr.bf16.mxu0 0
  %1298 = vmatpush2.bf16.msra.mxu0 0
  %1299 = vmatprep.subr.bf16.mxu0 0
  %1300 = vmatpush2.bf16.msra.mxu0 0
  %1301 = vmatprep.subr.bf16.mxu0 0
  %1302 = vmatpush2.bf16.msra.mxu0 0
  %1303 = vmatprep.subr.bf16.mxu0 0
  %1304 = vmatpush2.bf16.msra.mxu0 0
  %1305 = vmatprep.subr.bf16.mxu0 0
  %1306 = vmatpush2.bf16.msra.mxu0 0
  %1307 = vmatprep.subr.bf16.mxu0 0
  %1308 = vmatpush2.bf16.msra.mxu0 0
  %1309 = vmatprep.subr.bf16.mxu0 0
  %1310 = vmatpush2.bf16.msra.mxu0 0
  %1311 = vmatprep.mubr.bf16.mxu0 0
  %1312 = vmatmul.mubr.bf16.gmra.mxu0 %v1271
  %v1313 = vpop.f32.mrf.mxu0
  %v1314 = vadd.f32 0.0, %v1313
  %v1315 = vpop.f32.mrf.mxu0
  %v1316 = vpop.f32.mrf.mxu0
  %v1317 = vadd.f32 0.0, %v1316
  %v1318 = vpop.f32.mrf.mxu0
  %1319 = vmatprep.mubr.bf16.mxu0 0
  %1320 = vmatmul.mubr.bf16.gmra.mxu0 %v1274
  %v1321 = vpop.f32.mrf.mxu0
  %v1322 = vadd.f32 0.0, %v1321
  %v1323 = vpop.f32.mrf.mxu0
  %v1324 = vpop.f32.mrf.mxu0
  %v1325 = vadd.f32 0.0, %v1324
  %v1326 = vpop.f32.mrf.mxu0
  %1327 = vdwg.mxu0
  %v1328 = vadd.f32 %v1084, %v1314
  %v1329 = vadd.f32 %v1085, %v1317
  %v1330 = vadd.f32 %v1086, %v1322
  %v1331 = vadd.f32 %v1087, %v1325
  %v1332 = vadd.f32 %v21, %v1328
  %v1333 = vadd.f32 %v22, %v1329
  %v1334 = vadd.f32 %v23, %v1330
  %v1335 = vadd.f32 %v24, %v1331
  %v1336 = vadd.f32 %v1332, %v115
  %v1337 = vadd.f32 %v1333, %v115
  %v1338 = vadd.f32 %v1334, %v115
  %v1339 = vadd.f32 %v1335, %v115
  %v1340 = vsel %vm154, %v1336, 0.0
  %1341 = vadd.xlane.f32.xlu0 %v1340
  %v1342 = vpop.xlane.xlu0 %1341
  %v1343 = vsel %vm154, %v1337, 0.0
  %1344 = vadd.xlane.f32.xlu0 %v1343
  %v1345 = vpop.xlane.xlu0 %1344
  %v1346 = vsel %vm154, %v1338, 0.0
  %1347 = vadd.xlane.f32.xlu0 %v1346
  %v1348 = vpop.xlane.xlu0 %1347
  %v1349 = vsel %vm154, %v1339, 0.0
  %1350 = vadd.xlane.f32.xlu0 %v1349
  %v1351 = vpop.xlane.xlu0 %1350
  %v1352 = vmul.f32 %v1342, %v167
  %v1353 = vmul.f32 %v1345, %v167
  %v1354 = vmul.f32 %v1348, %v167
  %v1355 = vmul.f32 %v1351, %v167
  %v1356 = vsub.f32 %v1336, %v1352
  %v1357 = vsub.f32 %v1337, %v1353
  %v1358 = vsub.f32 %v1338, %v1354
  %v1359 = vsub.f32 %v1339, %v1355
  %v1360 = vmul.f32 %v1356, %v1356
  %v1361 = vmul.f32 %v1357, %v1357
  %v1362 = vmul.f32 %v1358, %v1358
  %v1363 = vmul.f32 %v1359, %v1359
  %v1364 = vsel %vm154, %v1360, 0.0
  %1365 = vadd.xlane.f32.xlu0 %v1364
  %v1366 = vpop.xlane.xlu0 %1365
  %v1367 = vsel %vm154, %v1361, 0.0
  %1368 = vadd.xlane.f32.xlu0 %v1367
  %v1369 = vpop.xlane.xlu0 %1368
  %v1370 = vsel %vm154, %v1362, 0.0
  %1371 = vadd.xlane.f32.xlu0 %v1370
  %v1372 = vpop.xlane.xlu0 %1371
  %v1373 = vsel %vm154, %v1363, 0.0
  %1374 = vadd.xlane.f32.xlu0 %v1373
  %v1375 = vpop.xlane.xlu0 %1374
  %v1376 = vmul.f32 %v1366, %v167
  %v1377 = vmul.f32 %v1369, %v167
  %v1378 = vmul.f32 %v1372, %v167
  %v1379 = vmul.f32 %v1375, %v167
  %v1380 = vadd.f32 %v1376, 1e-05
  %v1381 = vadd.f32 %v1377, 1e-05
  %v1382 = vadd.f32 %v1378, 1e-05
  %v1383 = vadd.f32 %v1379, 1e-05
  %v1384 = vrsqrt.pop %v1380
  %v1385 = vrsqrt.pop %v1381
  %v1386 = vrsqrt.pop %v1382
  %v1387 = vrsqrt.pop %v1383
  %v1388 = vmul.f32 %v1356, %v1384
  %v1389 = vmul.f32 %v1357, %v1385
  %v1390 = vmul.f32 %v1358, %v1386
  %v1391 = vmul.f32 %v1359, %v1387
  %v1392 = vpack.c.bf16 %v1389, %v1388
  %v1393 = vpack.c.bf16 %v1391, %v1390
  %v1394 = vpack.c.bf16 %v125, %v124
  %v1395 = vpack.c.bf16 %v127, %v126
  %v1397 = vsel %vm154, %v1392, 0
  %v1400 = vsel %vm154, %v1393, 0
  %1402 = vmatprep.subr.bf16.mxu0 0
  %1403 = vmatpush1.bf16.msra.mxu0 0
  %1404 = vmatprep.subr.bf16.mxu0 0
  %1405 = vmatpush1.bf16.msra.mxu0 0
  %1406 = vmatprep.subr.bf16.mxu0 0
  %1407 = vmatpush1.bf16.msra.mxu0 0
  %1408 = vmatprep.subr.bf16.mxu0 0
  %1409 = vmatpush1.bf16.msra.mxu0 0
  %1410 = vmatprep.subr.bf16.mxu0 0
  %1411 = vmatpush1.bf16.msra.mxu0 0
  %1412 = vmatprep.subr.bf16.mxu0 0
  %1413 = vmatpush1.bf16.msra.mxu0 0
  %1414 = vmatprep.subr.bf16.mxu0 0
  %1415 = vmatpush1.bf16.msra.mxu0 %v1395
  %1416 = vmatprep.subr.bf16.mxu0 0
  %1417 = vmatpush1.bf16.msra.mxu0 %v1394
  %1418 = vmatprep.subr.bf16.mxu0 0
  %1419 = vmatpush2.bf16.msra.mxu0 0
  %1420 = vmatprep.subr.bf16.mxu0 0
  %1421 = vmatpush2.bf16.msra.mxu0 0
  %1422 = vmatprep.subr.bf16.mxu0 0
  %1423 = vmatpush2.bf16.msra.mxu0 0
  %1424 = vmatprep.subr.bf16.mxu0 0
  %1425 = vmatpush2.bf16.msra.mxu0 0
  %1426 = vmatprep.subr.bf16.mxu0 0
  %1427 = vmatpush2.bf16.msra.mxu0 0
  %1428 = vmatprep.subr.bf16.mxu0 0
  %1429 = vmatpush2.bf16.msra.mxu0 0
  %1430 = vmatprep.subr.bf16.mxu0 0
  %1431 = vmatpush2.bf16.msra.mxu0 0
  %1432 = vmatprep.subr.bf16.mxu0 0
  %1433 = vmatpush2.bf16.msra.mxu0 0
  %1434 = vmatprep.mubr.bf16.mxu0 0
  %1435 = vmatmul.mubr.bf16.gmra.mxu0 %v1397
  %v1436 = vpop.f32.mrf.mxu0
  %v1437 = vadd.f32 %v116, %v1436
  %v1438 = vpop.f32.mrf.mxu0
  %v1439 = vpop.f32.mrf.mxu0
  %v1440 = vadd.f32 %v116, %v1439
  %v1441 = vpop.f32.mrf.mxu0
  %1442 = vmatprep.mubr.bf16.mxu0 0
  %1443 = vmatmul.mubr.bf16.gmra.mxu0 %v1400
  %v1444 = vpop.f32.mrf.mxu0
  %v1445 = vadd.f32 %v116, %v1444
  %v1446 = vpop.f32.mrf.mxu0
  %v1447 = vpop.f32.mrf.mxu0
  %v1448 = vadd.f32 %v116, %v1447
  %v1449 = vpop.f32.mrf.mxu0
  %1450 = vdwg.mxu0
  %v1451 = vmul.f32 %v1437, 0.35355338
  %v1452 = vmul.f32 %v1440, 0.35355338
  %v1453 = vmul.f32 %v1445, 0.35355338
  %v1454 = vmul.f32 %v1448, 0.35355338
  %v1455 = vpack.c.bf16 %v1452, %v1451
  %v1456 = vpack.c.bf16 %v1454, %v1453
  %v1457 = vpack.c.bf16 %v1440, %v1437
  %v1458 = vpack.c.bf16 %v1448, %v1445
  %1461 = vrot.lane.b32.xlu0 %v1457, 96
  %v1462 = vpop.permute.xlu0 %1461
  %1463 = vrot.lane.b32.xlu0 %v1458, 96
  %v1464 = vpop.permute.xlu0 %1463
  %v1466 = vsel %vm366, %v1455, 0
  %v1469 = vsel %vm366, %v1456, 0
  %v1472 = vsel %vm366, %v1462, 0
  %v1475 = vsel %vm366, %v1464, 0
  %1477 = vmatprep.subr.bf16.mxu0 0
  %1478 = vmatpush1.bf16.xpose.msra.mxu0 0
  %1479 = vmatprep.subr.bf16.mxu0 0
  %1480 = vmatpush1.bf16.xpose.msra.mxu0 0
  %1481 = vmatprep.subr.bf16.mxu0 0
  %1482 = vmatpush1.bf16.xpose.msra.mxu0 0
  %1483 = vmatprep.subr.bf16.mxu0 0
  %1484 = vmatpush1.bf16.xpose.msra.mxu0 0
  %1485 = vmatprep.subr.bf16.mxu0 0
  %1486 = vmatpush1.bf16.xpose.msra.mxu0 0
  %1487 = vmatprep.subr.bf16.mxu0 0
  %1488 = vmatpush1.bf16.xpose.msra.mxu0 0
  %1489 = vmatprep.subr.bf16.mxu0 0
  %1490 = vmatpush1.bf16.xpose.msra.mxu0 %v1475
  %1491 = vmatprep.subr.bf16.mxu0 0
  %1492 = vmatpush1.bf16.xpose.msra.mxu0 %v1472
  %1493 = vmatprep.subr.bf16.mxu0 0
  %1494 = vmatpush2.bf16.xpose.msra.mxu0 0
  %1495 = vmatprep.subr.bf16.mxu0 0
  %1496 = vmatpush2.bf16.xpose.msra.mxu0 0
  %1497 = vmatprep.subr.bf16.mxu0 0
  %1498 = vmatpush2.bf16.xpose.msra.mxu0 0
  %1499 = vmatprep.subr.bf16.mxu0 0
  %1500 = vmatpush2.bf16.xpose.msra.mxu0 0
  %1501 = vmatprep.subr.bf16.mxu0 0
  %1502 = vmatpush2.bf16.xpose.msra.mxu0 0
  %1503 = vmatprep.subr.bf16.mxu0 0
  %1504 = vmatpush2.bf16.xpose.msra.mxu0 0
  %1505 = vmatprep.subr.bf16.mxu0 0
  %1506 = vmatpush2.bf16.xpose.msra.mxu0 0
  %1507 = vmatprep.subr.bf16.mxu0 0
  %1508 = vmatpush2.bf16.xpose.msra.mxu0 0
  %1509 = vmatprep.mubr.bf16.mxu0 0
  %1510 = vmatmul.mubr.bf16.gmra.mxu0 %v1466
  %v1511 = vpop.f32.mrf.mxu0
  %v1512 = vadd.f32 %v355, %v1511
  %v1513 = vpop.f32.mrf.mxu0
  %v1514 = vpop.f32.mrf.mxu0
  %v1515 = vadd.f32 %v357, %v1514
  %v1516 = vpop.f32.mrf.mxu0
  %1517 = vmatprep.mubr.bf16.mxu0 0
  %1518 = vmatmul.mubr.bf16.gmra.mxu0 %v1469
  %v1519 = vpop.f32.mrf.mxu0
  %v1520 = vadd.f32 %v359, %v1519
  %v1521 = vpop.f32.mrf.mxu0
  %v1522 = vpop.f32.mrf.mxu0
  %v1523 = vadd.f32 %v361, %v1522
  %v1524 = vpop.f32.mrf.mxu0
  %1525 = vdwg.mxu0
  %v1526 = vsel %vm154, %v1512, -inf
  %1527 = vmax.xlane.f32.xlu0 %v1526
  %v1528 = vpop.xlane.xlu0 %1527
  %v1529 = vsel %vm154, %v1515, -inf
  %1530 = vmax.xlane.f32.xlu0 %v1529
  %v1531 = vpop.xlane.xlu0 %1530
  %v1532 = vsel %vm154, %v1520, -inf
  %1533 = vmax.xlane.f32.xlu0 %v1532
  %v1534 = vpop.xlane.xlu0 %1533
  %v1535 = vsel %vm154, %v1523, -inf
  %1536 = vmax.xlane.f32.xlu0 %v1535
  %v1537 = vpop.xlane.xlu0 %1536
  %v1538 = vsub.f32 %v1512, %v1528
  %v1539 = vsub.f32 %v1515, %v1531
  %v1540 = vsub.f32 %v1520, %v1534
  %v1541 = vsub.f32 %v1523, %v1537
  %v1542 = vmul.f32 %v1538, 1.442695
  %v1543 = vpow.pop %v1542
  %v1544 = vmul.f32 %v1539, 1.442695
  %v1545 = vpow.pop %v1544
  %v1546 = vmul.f32 %v1540, 1.442695
  %v1547 = vpow.pop %v1546
  %v1548 = vmul.f32 %v1541, 1.442695
  %v1549 = vpow.pop %v1548
  %v1550 = vsel %vm154, %v1543, 0.0
  %1551 = vadd.xlane.f32.xlu0 %v1550
  %v1552 = vpop.xlane.xlu0 %1551
  %v1553 = vsel %vm154, %v1545, 0.0
  %1554 = vadd.xlane.f32.xlu0 %v1553
  %v1555 = vpop.xlane.xlu0 %1554
  %v1556 = vsel %vm154, %v1547, 0.0
  %1557 = vadd.xlane.f32.xlu0 %v1556
  %v1558 = vpop.xlane.xlu0 %1557
  %v1559 = vsel %vm154, %v1549, 0.0
  %1560 = vadd.xlane.f32.xlu0 %v1559
  %v1561 = vpop.xlane.xlu0 %1560
  %v1562 = vrcp.pop %v1552
  %v1563 = vmul.f32 %v1543, %v1562
  %v1564 = vrcp.pop %v1555
  %v1565 = vmul.f32 %v1545, %v1564
  %v1566 = vrcp.pop %v1558
  %v1567 = vmul.f32 %v1547, %v1566
  %v1568 = vrcp.pop %v1561
  %v1569 = vmul.f32 %v1549, %v1568
  %v1570 = vpack.c.bf16 %v1565, %v1563
  %v1571 = vpack.c.bf16 %v1569, %v1567
  %1572 = vrot.lane.b32.xlu0 %v1457, 64
  %v1573 = vpop.permute.xlu0 %1572
  %1574 = vrot.lane.b32.xlu0 %v1458, 64
  %v1575 = vpop.permute.xlu0 %1574
  %v1579 = vsel %vm154, %v1570, 0
  %v1582 = vsel %vm154, %v1571, 0
  %1584 = vmatprep.subr.bf16.mxu0 0
  %1585 = vmatpush1.bf16.msra.mxu0 0
  %1586 = vmatprep.subr.bf16.mxu0 0
  %1587 = vmatpush1.bf16.msra.mxu0 0
  %1588 = vmatprep.subr.bf16.mxu0 0
  %1589 = vmatpush1.bf16.msra.mxu0 0
  %1590 = vmatprep.subr.bf16.mxu0 0
  %1591 = vmatpush1.bf16.msra.mxu0 0
  %1592 = vmatprep.subr.bf16.mxu0 0
  %1593 = vmatpush1.bf16.msra.mxu0 0
  %1594 = vmatprep.subr.bf16.mxu0 0
  %1595 = vmatpush1.bf16.msra.mxu0 0
  %1596 = vmatprep.subr.bf16.mxu0 0
  %1597 = vmatpush1.bf16.msra.mxu0 %v1575
  %1598 = vmatprep.subr.bf16.mxu0 0
  %1599 = vmatpush1.bf16.msra.mxu0 %v1573
  %1600 = vmatprep.subr.bf16.mxu0 0
  %1601 = vmatpush2.bf16.msra.mxu0 0
  %1602 = vmatprep.subr.bf16.mxu0 0
  %1603 = vmatpush2.bf16.msra.mxu0 0
  %1604 = vmatprep.subr.bf16.mxu0 0
  %1605 = vmatpush2.bf16.msra.mxu0 0
  %1606 = vmatprep.subr.bf16.mxu0 0
  %1607 = vmatpush2.bf16.msra.mxu0 0
  %1608 = vmatprep.subr.bf16.mxu0 0
  %1609 = vmatpush2.bf16.msra.mxu0 0
  %1610 = vmatprep.subr.bf16.mxu0 0
  %1611 = vmatpush2.bf16.msra.mxu0 0
  %1612 = vmatprep.subr.bf16.mxu0 0
  %1613 = vmatpush2.bf16.msra.mxu0 0
  %1614 = vmatprep.subr.bf16.mxu0 0
  %1615 = vmatpush2.bf16.msra.mxu0 0
  %1616 = vmatprep.mubr.bf16.mxu0 0
  %1617 = vmatmul.mubr.bf16.gmra.mxu0 %v1579
  %v1618 = vpop.f32.mrf.mxu0
  %v1619 = vadd.f32 0.0, %v1618
  %v1620 = vpop.f32.mrf.mxu0
  %v1621 = vpop.f32.mrf.mxu0
  %v1622 = vadd.f32 0.0, %v1621
  %v1623 = vpop.f32.mrf.mxu0
  %1624 = vmatprep.mubr.bf16.mxu0 0
  %1625 = vmatmul.mubr.bf16.gmra.mxu0 %v1582
  %v1626 = vpop.f32.mrf.mxu0
  %v1627 = vadd.f32 0.0, %v1626
  %v1628 = vpop.f32.mrf.mxu0
  %v1629 = vpop.f32.mrf.mxu0
  %v1630 = vadd.f32 0.0, %v1629
  %v1631 = vpop.f32.mrf.mxu0
  %1632 = vdwg.mxu0
  %v1633 = vpack.c.bf16 %v1622, %v1619
  %v1634 = vpack.c.bf16 %v1630, %v1627
  %1637 = vrot.lane.b32.xlu0 %v1455, 120
  %v1638 = vpop.permute.xlu0 %1637
  %1639 = vrot.lane.b32.xlu0 %v1456, 120
  %v1640 = vpop.permute.xlu0 %1639
  %1641 = vrot.lane.b32.xlu0 %v1457, 88
  %v1642 = vpop.permute.xlu0 %1641
  %1643 = vrot.lane.b32.xlu0 %v1458, 88
  %v1644 = vpop.permute.xlu0 %1643
  %v1646 = vsel %vm366, %v1638, 0
  %v1649 = vsel %vm366, %v1640, 0
  %v1652 = vsel %vm366, %v1642, 0
  %v1655 = vsel %vm366, %v1644, 0
  %1657 = vmatprep.subr.bf16.mxu0 0
  %1658 = vmatpush1.bf16.xpose.msra.mxu0 0
  %1659 = vmatprep.subr.bf16.mxu0 0
  %1660 = vmatpush1.bf16.xpose.msra.mxu0 0
  %1661 = vmatprep.subr.bf16.mxu0 0
  %1662 = vmatpush1.bf16.xpose.msra.mxu0 0
  %1663 = vmatprep.subr.bf16.mxu0 0
  %1664 = vmatpush1.bf16.xpose.msra.mxu0 0
  %1665 = vmatprep.subr.bf16.mxu0 0
  %1666 = vmatpush1.bf16.xpose.msra.mxu0 0
  %1667 = vmatprep.subr.bf16.mxu0 0
  %1668 = vmatpush1.bf16.xpose.msra.mxu0 0
  %1669 = vmatprep.subr.bf16.mxu0 0
  %1670 = vmatpush1.bf16.xpose.msra.mxu0 %v1655
  %1671 = vmatprep.subr.bf16.mxu0 0
  %1672 = vmatpush1.bf16.xpose.msra.mxu0 %v1652
  %1673 = vmatprep.subr.bf16.mxu0 0
  %1674 = vmatpush2.bf16.xpose.msra.mxu0 0
  %1675 = vmatprep.subr.bf16.mxu0 0
  %1676 = vmatpush2.bf16.xpose.msra.mxu0 0
  %1677 = vmatprep.subr.bf16.mxu0 0
  %1678 = vmatpush2.bf16.xpose.msra.mxu0 0
  %1679 = vmatprep.subr.bf16.mxu0 0
  %1680 = vmatpush2.bf16.xpose.msra.mxu0 0
  %1681 = vmatprep.subr.bf16.mxu0 0
  %1682 = vmatpush2.bf16.xpose.msra.mxu0 0
  %1683 = vmatprep.subr.bf16.mxu0 0
  %1684 = vmatpush2.bf16.xpose.msra.mxu0 0
  %1685 = vmatprep.subr.bf16.mxu0 0
  %1686 = vmatpush2.bf16.xpose.msra.mxu0 0
  %1687 = vmatprep.subr.bf16.mxu0 0
  %1688 = vmatpush2.bf16.xpose.msra.mxu0 0
  %1689 = vmatprep.mubr.bf16.mxu0 0
  %1690 = vmatmul.mubr.bf16.gmra.mxu0 %v1646
  %v1691 = vpop.f32.mrf.mxu0
  %v1692 = vadd.f32 %v355, %v1691
  %v1693 = vpop.f32.mrf.mxu0
  %v1694 = vpop.f32.mrf.mxu0
  %v1695 = vadd.f32 %v357, %v1694
  %v1696 = vpop.f32.mrf.mxu0
  %1697 = vmatprep.mubr.bf16.mxu0 0
  %1698 = vmatmul.mubr.bf16.gmra.mxu0 %v1649
  %v1699 = vpop.f32.mrf.mxu0
  %v1700 = vadd.f32 %v359, %v1699
  %v1701 = vpop.f32.mrf.mxu0
  %v1702 = vpop.f32.mrf.mxu0
  %v1703 = vadd.f32 %v361, %v1702
  %v1704 = vpop.f32.mrf.mxu0
  %1705 = vdwg.mxu0
  %v1706 = vsel %vm154, %v1692, -inf
  %1707 = vmax.xlane.f32.xlu0 %v1706
  %v1708 = vpop.xlane.xlu0 %1707
  %v1709 = vsel %vm154, %v1695, -inf
  %1710 = vmax.xlane.f32.xlu0 %v1709
  %v1711 = vpop.xlane.xlu0 %1710
  %v1712 = vsel %vm154, %v1700, -inf
  %1713 = vmax.xlane.f32.xlu0 %v1712
  %v1714 = vpop.xlane.xlu0 %1713
  %v1715 = vsel %vm154, %v1703, -inf
  %1716 = vmax.xlane.f32.xlu0 %v1715
  %v1717 = vpop.xlane.xlu0 %1716
  %v1718 = vsub.f32 %v1692, %v1708
  %v1719 = vsub.f32 %v1695, %v1711
  %v1720 = vsub.f32 %v1700, %v1714
  %v1721 = vsub.f32 %v1703, %v1717
  %v1722 = vmul.f32 %v1718, 1.442695
  %v1723 = vpow.pop %v1722
  %v1724 = vmul.f32 %v1719, 1.442695
  %v1725 = vpow.pop %v1724
  %v1726 = vmul.f32 %v1720, 1.442695
  %v1727 = vpow.pop %v1726
  %v1728 = vmul.f32 %v1721, 1.442695
  %v1729 = vpow.pop %v1728
  %v1730 = vsel %vm154, %v1723, 0.0
  %1731 = vadd.xlane.f32.xlu0 %v1730
  %v1732 = vpop.xlane.xlu0 %1731
  %v1733 = vsel %vm154, %v1725, 0.0
  %1734 = vadd.xlane.f32.xlu0 %v1733
  %v1735 = vpop.xlane.xlu0 %1734
  %v1736 = vsel %vm154, %v1727, 0.0
  %1737 = vadd.xlane.f32.xlu0 %v1736
  %v1738 = vpop.xlane.xlu0 %1737
  %v1739 = vsel %vm154, %v1729, 0.0
  %1740 = vadd.xlane.f32.xlu0 %v1739
  %v1741 = vpop.xlane.xlu0 %1740
  %v1742 = vrcp.pop %v1732
  %v1743 = vmul.f32 %v1723, %v1742
  %v1744 = vrcp.pop %v1735
  %v1745 = vmul.f32 %v1725, %v1744
  %v1746 = vrcp.pop %v1738
  %v1747 = vmul.f32 %v1727, %v1746
  %v1748 = vrcp.pop %v1741
  %v1749 = vmul.f32 %v1729, %v1748
  %v1750 = vpack.c.bf16 %v1745, %v1743
  %v1751 = vpack.c.bf16 %v1749, %v1747
  %1752 = vrot.lane.b32.xlu0 %v1457, 56
  %v1753 = vpop.permute.xlu0 %1752
  %1754 = vrot.lane.b32.xlu0 %v1458, 56
  %v1755 = vpop.permute.xlu0 %1754
  %v1759 = vsel %vm154, %v1750, 0
  %v1762 = vsel %vm154, %v1751, 0
  %1764 = vmatprep.subr.bf16.mxu0 0
  %1765 = vmatpush1.bf16.msra.mxu0 0
  %1766 = vmatprep.subr.bf16.mxu0 0
  %1767 = vmatpush1.bf16.msra.mxu0 0
  %1768 = vmatprep.subr.bf16.mxu0 0
  %1769 = vmatpush1.bf16.msra.mxu0 0
  %1770 = vmatprep.subr.bf16.mxu0 0
  %1771 = vmatpush1.bf16.msra.mxu0 0
  %1772 = vmatprep.subr.bf16.mxu0 0
  %1773 = vmatpush1.bf16.msra.mxu0 0
  %1774 = vmatprep.subr.bf16.mxu0 0
  %1775 = vmatpush1.bf16.msra.mxu0 0
  %1776 = vmatprep.subr.bf16.mxu0 0
  %1777 = vmatpush1.bf16.msra.mxu0 %v1755
  %1778 = vmatprep.subr.bf16.mxu0 0
  %1779 = vmatpush1.bf16.msra.mxu0 %v1753
  %1780 = vmatprep.subr.bf16.mxu0 0
  %1781 = vmatpush2.bf16.msra.mxu0 0
  %1782 = vmatprep.subr.bf16.mxu0 0
  %1783 = vmatpush2.bf16.msra.mxu0 0
  %1784 = vmatprep.subr.bf16.mxu0 0
  %1785 = vmatpush2.bf16.msra.mxu0 0
  %1786 = vmatprep.subr.bf16.mxu0 0
  %1787 = vmatpush2.bf16.msra.mxu0 0
  %1788 = vmatprep.subr.bf16.mxu0 0
  %1789 = vmatpush2.bf16.msra.mxu0 0
  %1790 = vmatprep.subr.bf16.mxu0 0
  %1791 = vmatpush2.bf16.msra.mxu0 0
  %1792 = vmatprep.subr.bf16.mxu0 0
  %1793 = vmatpush2.bf16.msra.mxu0 0
  %1794 = vmatprep.subr.bf16.mxu0 0
  %1795 = vmatpush2.bf16.msra.mxu0 0
  %1796 = vmatprep.mubr.bf16.mxu0 0
  %1797 = vmatmul.mubr.bf16.gmra.mxu0 %v1759
  %v1798 = vpop.f32.mrf.mxu0
  %v1799 = vadd.f32 0.0, %v1798
  %v1800 = vpop.f32.mrf.mxu0
  %v1801 = vpop.f32.mrf.mxu0
  %v1802 = vadd.f32 0.0, %v1801
  %v1803 = vpop.f32.mrf.mxu0
  %1804 = vmatprep.mubr.bf16.mxu0 0
  %1805 = vmatmul.mubr.bf16.gmra.mxu0 %v1762
  %v1806 = vpop.f32.mrf.mxu0
  %v1807 = vadd.f32 0.0, %v1806
  %v1808 = vpop.f32.mrf.mxu0
  %v1809 = vpop.f32.mrf.mxu0
  %v1810 = vadd.f32 0.0, %v1809
  %v1811 = vpop.f32.mrf.mxu0
  %1812 = vdwg.mxu0
  %v1813 = vpack.c.bf16 %v1802, %v1799
  %v1814 = vpack.c.bf16 %v1810, %v1807
  %1815 = vrot.lane.b32.xlu0 %v718, 64
  %v1816 = vpop.permute.xlu0 %1815
  %v1818 = vsel %vm366, %v1813, 0
  %v1821 = vsel %vm366, %v1814, 0
  %v1824 = vsel %vm730, %v1816, 0
  %1826 = vmatprep.subr.bf16.mxu0 0
  %1827 = vmatpush1.bf16.msra.mxu0 0
  %1828 = vmatprep.subr.bf16.mxu0 0
  %1829 = vmatpush1.bf16.msra.mxu0 0
  %1830 = vmatprep.subr.bf16.mxu0 0
  %1831 = vmatpush1.bf16.msra.mxu0 0
  %1832 = vmatprep.subr.bf16.mxu0 0
  %1833 = vmatpush1.bf16.msra.mxu0 0
  %1834 = vmatprep.subr.bf16.mxu0 0
  %1835 = vmatpush1.bf16.msra.mxu0 0
  %1836 = vmatprep.subr.bf16.mxu0 0
  %1837 = vmatpush1.bf16.msra.mxu0 0
  %1838 = vmatprep.subr.bf16.mxu0 0
  %1839 = vmatpush1.bf16.msra.mxu0 0
  %1840 = vmatprep.subr.bf16.mxu0 0
  %1841 = vmatpush1.bf16.msra.mxu0 %v1824
  %1842 = vmatprep.subr.bf16.mxu0 0
  %1843 = vmatpush2.bf16.msra.mxu0 0
  %1844 = vmatprep.subr.bf16.mxu0 0
  %1845 = vmatpush2.bf16.msra.mxu0 0
  %1846 = vmatprep.subr.bf16.mxu0 0
  %1847 = vmatpush2.bf16.msra.mxu0 0
  %1848 = vmatprep.subr.bf16.mxu0 0
  %1849 = vmatpush2.bf16.msra.mxu0 0
  %1850 = vmatprep.subr.bf16.mxu0 0
  %1851 = vmatpush2.bf16.msra.mxu0 0
  %1852 = vmatprep.subr.bf16.mxu0 0
  %1853 = vmatpush2.bf16.msra.mxu0 0
  %1854 = vmatprep.subr.bf16.mxu0 0
  %1855 = vmatpush2.bf16.msra.mxu0 0
  %1856 = vmatprep.subr.bf16.mxu0 0
  %1857 = vmatpush2.bf16.msra.mxu0 0
  %1858 = vmatprep.mubr.bf16.mxu0 0
  %1859 = vmatmul.mubr.bf16.gmra.mxu0 %v1818
  %v1860 = vpop.f32.mrf.mxu0
  %v1861 = vadd.f32 0.0, %v1860
  %v1862 = vpop.f32.mrf.mxu0
  %v1863 = vpop.f32.mrf.mxu0
  %v1864 = vadd.f32 0.0, %v1863
  %v1865 = vpop.f32.mrf.mxu0
  %1866 = vmatprep.mubr.bf16.mxu0 0
  %1867 = vmatmul.mubr.bf16.gmra.mxu0 %v1821
  %v1868 = vpop.f32.mrf.mxu0
  %v1869 = vadd.f32 0.0, %v1868
  %v1870 = vpop.f32.mrf.mxu0
  %v1871 = vpop.f32.mrf.mxu0
  %v1872 = vadd.f32 0.0, %v1871
  %v1873 = vpop.f32.mrf.mxu0
  %1874 = vdwg.mxu0
  %1875 = vrot.lane.b32.xlu0 %v537, 64
  %v1876 = vpop.permute.xlu0 %1875
  %v1878 = vsel %vm366, %v1633, 0
  %v1881 = vsel %vm366, %v1634, 0
  %v1884 = vsel %vm730, %v1876, 0
  %1886 = vmatprep.subr.bf16.mxu0 0
  %1887 = vmatpush1.bf16.msra.mxu0 0
  %1888 = vmatprep.subr.bf16.mxu0 0
  %1889 = vmatpush1.bf16.msra.mxu0 0
  %1890 = vmatprep.subr.bf16.mxu0 0
  %1891 = vmatpush1.bf16.msra.mxu0 0
  %1892 = vmatprep.subr.bf16.mxu0 0
  %1893 = vmatpush1.bf16.msra.mxu0 0
  %1894 = vmatprep.subr.bf16.mxu0 0
  %1895 = vmatpush1.bf16.msra.mxu0 0
  %1896 = vmatprep.subr.bf16.mxu0 0
  %1897 = vmatpush1.bf16.msra.mxu0 0
  %1898 = vmatprep.subr.bf16.mxu0 0
  %1899 = vmatpush1.bf16.msra.mxu0 0
  %1900 = vmatprep.subr.bf16.mxu0 0
  %1901 = vmatpush1.bf16.msra.mxu0 %v1884
  %1902 = vmatprep.subr.bf16.mxu0 0
  %1903 = vmatpush2.bf16.msra.mxu0 0
  %1904 = vmatprep.subr.bf16.mxu0 0
  %1905 = vmatpush2.bf16.msra.mxu0 0
  %1906 = vmatprep.subr.bf16.mxu0 0
  %1907 = vmatpush2.bf16.msra.mxu0 0
  %1908 = vmatprep.subr.bf16.mxu0 0
  %1909 = vmatpush2.bf16.msra.mxu0 0
  %1910 = vmatprep.subr.bf16.mxu0 0
  %1911 = vmatpush2.bf16.msra.mxu0 0
  %1912 = vmatprep.subr.bf16.mxu0 0
  %1913 = vmatpush2.bf16.msra.mxu0 0
  %1914 = vmatprep.subr.bf16.mxu0 0
  %1915 = vmatpush2.bf16.msra.mxu0 0
  %1916 = vmatprep.subr.bf16.mxu0 0
  %1917 = vmatpush2.bf16.msra.mxu0 0
  %1918 = vmatprep.mubr.bf16.mxu0 0
  %1919 = vmatmul.mubr.bf16.gmra.mxu0 %v1878
  %v1920 = vpop.f32.mrf.mxu0
  %v1921 = vadd.f32 %v1861, %v1920
  %v1922 = vpop.f32.mrf.mxu0
  %v1923 = vpop.f32.mrf.mxu0
  %v1924 = vadd.f32 %v1864, %v1923
  %v1925 = vpop.f32.mrf.mxu0
  %1926 = vmatprep.mubr.bf16.mxu0 0
  %1927 = vmatmul.mubr.bf16.gmra.mxu0 %v1881
  %v1928 = vpop.f32.mrf.mxu0
  %v1929 = vadd.f32 %v1869, %v1928
  %v1930 = vpop.f32.mrf.mxu0
  %v1931 = vpop.f32.mrf.mxu0
  %v1932 = vadd.f32 %v1872, %v1931
  %v1933 = vpop.f32.mrf.mxu0
  %1934 = vdwg.mxu0
  %1935 = vrot.lane.b32.xlu0 %v1455, 112
  %v1936 = vpop.permute.xlu0 %1935
  %1937 = vrot.lane.b32.xlu0 %v1456, 112
  %v1938 = vpop.permute.xlu0 %1937
  %1939 = vrot.lane.b32.xlu0 %v1457, 80
  %v1940 = vpop.permute.xlu0 %1939
  %1941 = vrot.lane.b32.xlu0 %v1458, 80
  %v1942 = vpop.permute.xlu0 %1941
  %v1944 = vsel %vm366, %v1936, 0
  %v1947 = vsel %vm366, %v1938, 0
  %v1950 = vsel %vm366, %v1940, 0
  %v1953 = vsel %vm366, %v1942, 0
  %1955 = vmatprep.subr.bf16.mxu0 0
  %1956 = vmatpush1.bf16.xpose.msra.mxu0 0
  %1957 = vmatprep.subr.bf16.mxu0 0
  %1958 = vmatpush1.bf16.xpose.msra.mxu0 0
  %1959 = vmatprep.subr.bf16.mxu0 0
  %1960 = vmatpush1.bf16.xpose.msra.mxu0 0
  %1961 = vmatprep.subr.bf16.mxu0 0
  %1962 = vmatpush1.bf16.xpose.msra.mxu0 0
  %1963 = vmatprep.subr.bf16.mxu0 0
  %1964 = vmatpush1.bf16.xpose.msra.mxu0 0
  %1965 = vmatprep.subr.bf16.mxu0 0
  %1966 = vmatpush1.bf16.xpose.msra.mxu0 0
  %1967 = vmatprep.subr.bf16.mxu0 0
  %1968 = vmatpush1.bf16.xpose.msra.mxu0 %v1953
  %1969 = vmatprep.subr.bf16.mxu0 0
  %1970 = vmatpush1.bf16.xpose.msra.mxu0 %v1950
  %1971 = vmatprep.subr.bf16.mxu0 0
  %1972 = vmatpush2.bf16.xpose.msra.mxu0 0
  %1973 = vmatprep.subr.bf16.mxu0 0
  %1974 = vmatpush2.bf16.xpose.msra.mxu0 0
  %1975 = vmatprep.subr.bf16.mxu0 0
  %1976 = vmatpush2.bf16.xpose.msra.mxu0 0
  %1977 = vmatprep.subr.bf16.mxu0 0
  %1978 = vmatpush2.bf16.xpose.msra.mxu0 0
  %1979 = vmatprep.subr.bf16.mxu0 0
  %1980 = vmatpush2.bf16.xpose.msra.mxu0 0
  %1981 = vmatprep.subr.bf16.mxu0 0
  %1982 = vmatpush2.bf16.xpose.msra.mxu0 0
  %1983 = vmatprep.subr.bf16.mxu0 0
  %1984 = vmatpush2.bf16.xpose.msra.mxu0 0
  %1985 = vmatprep.subr.bf16.mxu0 0
  %1986 = vmatpush2.bf16.xpose.msra.mxu0 0
  %1987 = vmatprep.mubr.bf16.mxu0 0
  %1988 = vmatmul.mubr.bf16.gmra.mxu0 %v1944
  %v1989 = vpop.f32.mrf.mxu0
  %v1990 = vadd.f32 %v355, %v1989
  %v1991 = vpop.f32.mrf.mxu0
  %v1992 = vpop.f32.mrf.mxu0
  %v1993 = vadd.f32 %v357, %v1992
  %v1994 = vpop.f32.mrf.mxu0
  %1995 = vmatprep.mubr.bf16.mxu0 0
  %1996 = vmatmul.mubr.bf16.gmra.mxu0 %v1947
  %v1997 = vpop.f32.mrf.mxu0
  %v1998 = vadd.f32 %v359, %v1997
  %v1999 = vpop.f32.mrf.mxu0
  %v2000 = vpop.f32.mrf.mxu0
  %v2001 = vadd.f32 %v361, %v2000
  %v2002 = vpop.f32.mrf.mxu0
  %2003 = vdwg.mxu0
  %v2004 = vsel %vm154, %v1990, -inf
  %2005 = vmax.xlane.f32.xlu0 %v2004
  %v2006 = vpop.xlane.xlu0 %2005
  %v2007 = vsel %vm154, %v1993, -inf
  %2008 = vmax.xlane.f32.xlu0 %v2007
  %v2009 = vpop.xlane.xlu0 %2008
  %v2010 = vsel %vm154, %v1998, -inf
  %2011 = vmax.xlane.f32.xlu0 %v2010
  %v2012 = vpop.xlane.xlu0 %2011
  %v2013 = vsel %vm154, %v2001, -inf
  %2014 = vmax.xlane.f32.xlu0 %v2013
  %v2015 = vpop.xlane.xlu0 %2014
  %v2016 = vsub.f32 %v1990, %v2006
  %v2017 = vsub.f32 %v1993, %v2009
  %v2018 = vsub.f32 %v1998, %v2012
  %v2019 = vsub.f32 %v2001, %v2015
  %v2020 = vmul.f32 %v2016, 1.442695
  %v2021 = vpow.pop %v2020
  %v2022 = vmul.f32 %v2017, 1.442695
  %v2023 = vpow.pop %v2022
  %v2024 = vmul.f32 %v2018, 1.442695
  %v2025 = vpow.pop %v2024
  %v2026 = vmul.f32 %v2019, 1.442695
  %v2027 = vpow.pop %v2026
  %v2028 = vsel %vm154, %v2021, 0.0
  %2029 = vadd.xlane.f32.xlu0 %v2028
  %v2030 = vpop.xlane.xlu0 %2029
  %v2031 = vsel %vm154, %v2023, 0.0
  %2032 = vadd.xlane.f32.xlu0 %v2031
  %v2033 = vpop.xlane.xlu0 %2032
  %v2034 = vsel %vm154, %v2025, 0.0
  %2035 = vadd.xlane.f32.xlu0 %v2034
  %v2036 = vpop.xlane.xlu0 %2035
  %v2037 = vsel %vm154, %v2027, 0.0
  %2038 = vadd.xlane.f32.xlu0 %v2037
  %v2039 = vpop.xlane.xlu0 %2038
  %v2040 = vrcp.pop %v2030
  %v2041 = vmul.f32 %v2021, %v2040
  %v2042 = vrcp.pop %v2033
  %v2043 = vmul.f32 %v2023, %v2042
  %v2044 = vrcp.pop %v2036
  %v2045 = vmul.f32 %v2025, %v2044
  %v2046 = vrcp.pop %v2039
  %v2047 = vmul.f32 %v2027, %v2046
  %v2048 = vpack.c.bf16 %v2043, %v2041
  %v2049 = vpack.c.bf16 %v2047, %v2045
  %2050 = vrot.lane.b32.xlu0 %v1457, 48
  %v2051 = vpop.permute.xlu0 %2050
  %2052 = vrot.lane.b32.xlu0 %v1458, 48
  %v2053 = vpop.permute.xlu0 %2052
  %v2057 = vsel %vm154, %v2048, 0
  %v2060 = vsel %vm154, %v2049, 0
  %2062 = vmatprep.subr.bf16.mxu0 0
  %2063 = vmatpush1.bf16.msra.mxu0 0
  %2064 = vmatprep.subr.bf16.mxu0 0
  %2065 = vmatpush1.bf16.msra.mxu0 0
  %2066 = vmatprep.subr.bf16.mxu0 0
  %2067 = vmatpush1.bf16.msra.mxu0 0
  %2068 = vmatprep.subr.bf16.mxu0 0
  %2069 = vmatpush1.bf16.msra.mxu0 0
  %2070 = vmatprep.subr.bf16.mxu0 0
  %2071 = vmatpush1.bf16.msra.mxu0 0
  %2072 = vmatprep.subr.bf16.mxu0 0
  %2073 = vmatpush1.bf16.msra.mxu0 0
  %2074 = vmatprep.subr.bf16.mxu0 0
  %2075 = vmatpush1.bf16.msra.mxu0 %v2053
  %2076 = vmatprep.subr.bf16.mxu0 0
  %2077 = vmatpush1.bf16.msra.mxu0 %v2051
  %2078 = vmatprep.subr.bf16.mxu0 0
  %2079 = vmatpush2.bf16.msra.mxu0 0
  %2080 = vmatprep.subr.bf16.mxu0 0
  %2081 = vmatpush2.bf16.msra.mxu0 0
  %2082 = vmatprep.subr.bf16.mxu0 0
  %2083 = vmatpush2.bf16.msra.mxu0 0
  %2084 = vmatprep.subr.bf16.mxu0 0
  %2085 = vmatpush2.bf16.msra.mxu0 0
  %2086 = vmatprep.subr.bf16.mxu0 0
  %2087 = vmatpush2.bf16.msra.mxu0 0
  %2088 = vmatprep.subr.bf16.mxu0 0
  %2089 = vmatpush2.bf16.msra.mxu0 0
  %2090 = vmatprep.subr.bf16.mxu0 0
  %2091 = vmatpush2.bf16.msra.mxu0 0
  %2092 = vmatprep.subr.bf16.mxu0 0
  %2093 = vmatpush2.bf16.msra.mxu0 0
  %2094 = vmatprep.mubr.bf16.mxu0 0
  %2095 = vmatmul.mubr.bf16.gmra.mxu0 %v2057
  %v2096 = vpop.f32.mrf.mxu0
  %v2097 = vadd.f32 0.0, %v2096
  %v2098 = vpop.f32.mrf.mxu0
  %v2099 = vpop.f32.mrf.mxu0
  %v2100 = vadd.f32 0.0, %v2099
  %v2101 = vpop.f32.mrf.mxu0
  %2102 = vmatprep.mubr.bf16.mxu0 0
  %2103 = vmatmul.mubr.bf16.gmra.mxu0 %v2060
  %v2104 = vpop.f32.mrf.mxu0
  %v2105 = vadd.f32 0.0, %v2104
  %v2106 = vpop.f32.mrf.mxu0
  %v2107 = vpop.f32.mrf.mxu0
  %v2108 = vadd.f32 0.0, %v2107
  %v2109 = vpop.f32.mrf.mxu0
  %2110 = vdwg.mxu0
  %v2111 = vpack.c.bf16 %v2100, %v2097
  %v2112 = vpack.c.bf16 %v2108, %v2105
  %2113 = vrot.lane.b32.xlu0 %v1020, 64
  %v2114 = vpop.permute.xlu0 %2113
  %v2116 = vsel %vm366, %v2111, 0
  %v2119 = vsel %vm366, %v2112, 0
  %v2122 = vsel %vm730, %v2114, 0
  %2124 = vmatprep.subr.bf16.mxu0 0
  %2125 = vmatpush1.bf16.msra.mxu0 0
  %2126 = vmatprep.subr.bf16.mxu0 0
  %2127 = vmatpush1.bf16.msra.mxu0 0
  %2128 = vmatprep.subr.bf16.mxu0 0
  %2129 = vmatpush1.bf16.msra.mxu0 0
  %2130 = vmatprep.subr.bf16.mxu0 0
  %2131 = vmatpush1.bf16.msra.mxu0 0
  %2132 = vmatprep.subr.bf16.mxu0 0
  %2133 = vmatpush1.bf16.msra.mxu0 0
  %2134 = vmatprep.subr.bf16.mxu0 0
  %2135 = vmatpush1.bf16.msra.mxu0 0
  %2136 = vmatprep.subr.bf16.mxu0 0
  %2137 = vmatpush1.bf16.msra.mxu0 0
  %2138 = vmatprep.subr.bf16.mxu0 0
  %2139 = vmatpush1.bf16.msra.mxu0 %v2122
  %2140 = vmatprep.subr.bf16.mxu0 0
  %2141 = vmatpush2.bf16.msra.mxu0 0
  %2142 = vmatprep.subr.bf16.mxu0 0
  %2143 = vmatpush2.bf16.msra.mxu0 0
  %2144 = vmatprep.subr.bf16.mxu0 0
  %2145 = vmatpush2.bf16.msra.mxu0 0
  %2146 = vmatprep.subr.bf16.mxu0 0
  %2147 = vmatpush2.bf16.msra.mxu0 0
  %2148 = vmatprep.subr.bf16.mxu0 0
  %2149 = vmatpush2.bf16.msra.mxu0 0
  %2150 = vmatprep.subr.bf16.mxu0 0
  %2151 = vmatpush2.bf16.msra.mxu0 0
  %2152 = vmatprep.subr.bf16.mxu0 0
  %2153 = vmatpush2.bf16.msra.mxu0 0
  %2154 = vmatprep.subr.bf16.mxu0 0
  %2155 = vmatpush2.bf16.msra.mxu0 0
  %2156 = vmatprep.mubr.bf16.mxu0 0
  %2157 = vmatmul.mubr.bf16.gmra.mxu0 %v2116
  %v2158 = vpop.f32.mrf.mxu0
  %v2159 = vadd.f32 0.0, %v2158
  %v2160 = vpop.f32.mrf.mxu0
  %v2161 = vpop.f32.mrf.mxu0
  %v2162 = vadd.f32 0.0, %v2161
  %v2163 = vpop.f32.mrf.mxu0
  %2164 = vmatprep.mubr.bf16.mxu0 0
  %2165 = vmatmul.mubr.bf16.gmra.mxu0 %v2119
  %v2166 = vpop.f32.mrf.mxu0
  %v2167 = vadd.f32 0.0, %v2166
  %v2168 = vpop.f32.mrf.mxu0
  %v2169 = vpop.f32.mrf.mxu0
  %v2170 = vadd.f32 0.0, %v2169
  %v2171 = vpop.f32.mrf.mxu0
  %2172 = vdwg.mxu0
  %v2173 = vadd.f32 %v1921, %v2159
  %v2174 = vadd.f32 %v1924, %v2162
  %v2175 = vadd.f32 %v1929, %v2167
  %v2176 = vadd.f32 %v1932, %v2170
  %2177 = vrot.lane.b32.xlu0 %v1455, 104
  %v2178 = vpop.permute.xlu0 %2177
  %2179 = vrot.lane.b32.xlu0 %v1456, 104
  %v2180 = vpop.permute.xlu0 %2179
  %2181 = vrot.lane.b32.xlu0 %v1457, 72
  %v2182 = vpop.permute.xlu0 %2181
  %2183 = vrot.lane.b32.xlu0 %v1458, 72
  %v2184 = vpop.permute.xlu0 %2183
  %v2186 = vsel %vm366, %v2178, 0
  %v2189 = vsel %vm366, %v2180, 0
  %v2192 = vsel %vm366, %v2182, 0
  %v2195 = vsel %vm366, %v2184, 0
  %2197 = vmatprep.subr.bf16.mxu0 0
  %2198 = vmatpush1.bf16.xpose.msra.mxu0 0
  %2199 = vmatprep.subr.bf16.mxu0 0
  %2200 = vmatpush1.bf16.xpose.msra.mxu0 0
  %2201 = vmatprep.subr.bf16.mxu0 0
  %2202 = vmatpush1.bf16.xpose.msra.mxu0 0
  %2203 = vmatprep.subr.bf16.mxu0 0
  %2204 = vmatpush1.bf16.xpose.msra.mxu0 0
  %2205 = vmatprep.subr.bf16.mxu0 0
  %2206 = vmatpush1.bf16.xpose.msra.mxu0 0
  %2207 = vmatprep.subr.bf16.mxu0 0
  %2208 = vmatpush1.bf16.xpose.msra.mxu0 0
  %2209 = vmatprep.subr.bf16.mxu0 0
  %2210 = vmatpush1.bf16.xpose.msra.mxu0 %v2195
  %2211 = vmatprep.subr.bf16.mxu0 0
  %2212 = vmatpush1.bf16.xpose.msra.mxu0 %v2192
  %2213 = vmatprep.subr.bf16.mxu0 0
  %2214 = vmatpush2.bf16.xpose.msra.mxu0 0
  %2215 = vmatprep.subr.bf16.mxu0 0
  %2216 = vmatpush2.bf16.xpose.msra.mxu0 0
  %2217 = vmatprep.subr.bf16.mxu0 0
  %2218 = vmatpush2.bf16.xpose.msra.mxu0 0
  %2219 = vmatprep.subr.bf16.mxu0 0
  %2220 = vmatpush2.bf16.xpose.msra.mxu0 0
  %2221 = vmatprep.subr.bf16.mxu0 0
  %2222 = vmatpush2.bf16.xpose.msra.mxu0 0
  %2223 = vmatprep.subr.bf16.mxu0 0
  %2224 = vmatpush2.bf16.xpose.msra.mxu0 0
  %2225 = vmatprep.subr.bf16.mxu0 0
  %2226 = vmatpush2.bf16.xpose.msra.mxu0 0
  %2227 = vmatprep.subr.bf16.mxu0 0
  %2228 = vmatpush2.bf16.xpose.msra.mxu0 0
  %2229 = vmatprep.mubr.bf16.mxu0 0
  %2230 = vmatmul.mubr.bf16.gmra.mxu0 %v2186
  %v2231 = vpop.f32.mrf.mxu0
  %v2232 = vadd.f32 %v355, %v2231
  %v2233 = vpop.f32.mrf.mxu0
  %v2234 = vpop.f32.mrf.mxu0
  %v2235 = vadd.f32 %v357, %v2234
  %v2236 = vpop.f32.mrf.mxu0
  %2237 = vmatprep.mubr.bf16.mxu0 0
  %2238 = vmatmul.mubr.bf16.gmra.mxu0 %v2189
  %v2239 = vpop.f32.mrf.mxu0
  %v2240 = vadd.f32 %v359, %v2239
  %v2241 = vpop.f32.mrf.mxu0
  %v2242 = vpop.f32.mrf.mxu0
  %v2243 = vadd.f32 %v361, %v2242
  %v2244 = vpop.f32.mrf.mxu0
  %2245 = vdwg.mxu0
  %v2246 = vsel %vm154, %v2232, -inf
  %2247 = vmax.xlane.f32.xlu0 %v2246
  %v2248 = vpop.xlane.xlu0 %2247
  %v2249 = vsel %vm154, %v2235, -inf
  %2250 = vmax.xlane.f32.xlu0 %v2249
  %v2251 = vpop.xlane.xlu0 %2250
  %v2252 = vsel %vm154, %v2240, -inf
  %2253 = vmax.xlane.f32.xlu0 %v2252
  %v2254 = vpop.xlane.xlu0 %2253
  %v2255 = vsel %vm154, %v2243, -inf
  %2256 = vmax.xlane.f32.xlu0 %v2255
  %v2257 = vpop.xlane.xlu0 %2256
  %v2258 = vsub.f32 %v2232, %v2248
  %v2259 = vsub.f32 %v2235, %v2251
  %v2260 = vsub.f32 %v2240, %v2254
  %v2261 = vsub.f32 %v2243, %v2257
  %v2262 = vmul.f32 %v2258, 1.442695
  %v2263 = vpow.pop %v2262
  %v2264 = vmul.f32 %v2259, 1.442695
  %v2265 = vpow.pop %v2264
  %v2266 = vmul.f32 %v2260, 1.442695
  %v2267 = vpow.pop %v2266
  %v2268 = vmul.f32 %v2261, 1.442695
  %v2269 = vpow.pop %v2268
  %v2270 = vsel %vm154, %v2263, 0.0
  %2271 = vadd.xlane.f32.xlu0 %v2270
  %v2272 = vpop.xlane.xlu0 %2271
  %v2273 = vsel %vm154, %v2265, 0.0
  %2274 = vadd.xlane.f32.xlu0 %v2273
  %v2275 = vpop.xlane.xlu0 %2274
  %v2276 = vsel %vm154, %v2267, 0.0
  %2277 = vadd.xlane.f32.xlu0 %v2276
  %v2278 = vpop.xlane.xlu0 %2277
  %v2279 = vsel %vm154, %v2269, 0.0
  %2280 = vadd.xlane.f32.xlu0 %v2279
  %v2281 = vpop.xlane.xlu0 %2280
  %v2282 = vrcp.pop %v2272
  %v2283 = vmul.f32 %v2263, %v2282
  %v2284 = vrcp.pop %v2275
  %v2285 = vmul.f32 %v2265, %v2284
  %v2286 = vrcp.pop %v2278
  %v2287 = vmul.f32 %v2267, %v2286
  %v2288 = vrcp.pop %v2281
  %v2289 = vmul.f32 %v2269, %v2288
  %v2290 = vpack.c.bf16 %v2285, %v2283
  %v2291 = vpack.c.bf16 %v2289, %v2287
  %2292 = vrot.lane.b32.xlu0 %v1457, 40
  %v2293 = vpop.permute.xlu0 %2292
  %2294 = vrot.lane.b32.xlu0 %v1458, 40
  %v2295 = vpop.permute.xlu0 %2294
  %v2299 = vsel %vm154, %v2290, 0
  %v2302 = vsel %vm154, %v2291, 0
  %2304 = vmatprep.subr.bf16.mxu0 0
  %2305 = vmatpush1.bf16.msra.mxu0 0
  %2306 = vmatprep.subr.bf16.mxu0 0
  %2307 = vmatpush1.bf16.msra.mxu0 0
  %2308 = vmatprep.subr.bf16.mxu0 0
  %2309 = vmatpush1.bf16.msra.mxu0 0
  %2310 = vmatprep.subr.bf16.mxu0 0
  %2311 = vmatpush1.bf16.msra.mxu0 0
  %2312 = vmatprep.subr.bf16.mxu0 0
  %2313 = vmatpush1.bf16.msra.mxu0 0
  %2314 = vmatprep.subr.bf16.mxu0 0
  %2315 = vmatpush1.bf16.msra.mxu0 0
  %2316 = vmatprep.subr.bf16.mxu0 0
  %2317 = vmatpush1.bf16.msra.mxu0 %v2295
  %2318 = vmatprep.subr.bf16.mxu0 0
  %2319 = vmatpush1.bf16.msra.mxu0 %v2293
  %2320 = vmatprep.subr.bf16.mxu0 0
  %2321 = vmatpush2.bf16.msra.mxu0 0
  %2322 = vmatprep.subr.bf16.mxu0 0
  %2323 = vmatpush2.bf16.msra.mxu0 0
  %2324 = vmatprep.subr.bf16.mxu0 0
  %2325 = vmatpush2.bf16.msra.mxu0 0
  %2326 = vmatprep.subr.bf16.mxu0 0
  %2327 = vmatpush2.bf16.msra.mxu0 0
  %2328 = vmatprep.subr.bf16.mxu0 0
  %2329 = vmatpush2.bf16.msra.mxu0 0
  %2330 = vmatprep.subr.bf16.mxu0 0
  %2331 = vmatpush2.bf16.msra.mxu0 0
  %2332 = vmatprep.subr.bf16.mxu0 0
  %2333 = vmatpush2.bf16.msra.mxu0 0
  %2334 = vmatprep.subr.bf16.mxu0 0
  %2335 = vmatpush2.bf16.msra.mxu0 0
  %2336 = vmatprep.mubr.bf16.mxu0 0
  %2337 = vmatmul.mubr.bf16.gmra.mxu0 %v2299
  %v2338 = vpop.f32.mrf.mxu0
  %v2339 = vadd.f32 0.0, %v2338
  %v2340 = vpop.f32.mrf.mxu0
  %v2341 = vpop.f32.mrf.mxu0
  %v2342 = vadd.f32 0.0, %v2341
  %v2343 = vpop.f32.mrf.mxu0
  %2344 = vmatprep.mubr.bf16.mxu0 0
  %2345 = vmatmul.mubr.bf16.gmra.mxu0 %v2302
  %v2346 = vpop.f32.mrf.mxu0
  %v2347 = vadd.f32 0.0, %v2346
  %v2348 = vpop.f32.mrf.mxu0
  %v2349 = vpop.f32.mrf.mxu0
  %v2350 = vadd.f32 0.0, %v2349
  %v2351 = vpop.f32.mrf.mxu0
  %2352 = vdwg.mxu0
  %v2353 = vpack.c.bf16 %v2342, %v2339
  %v2354 = vpack.c.bf16 %v2350, %v2347
  %2355 = vrot.lane.b32.xlu0 %v1264, 64
  %v2356 = vpop.permute.xlu0 %2355
  %v2358 = vsel %vm366, %v2353, 0
  %v2361 = vsel %vm366, %v2354, 0
  %v2364 = vsel %vm730, %v2356, 0
  %2366 = vmatprep.subr.bf16.mxu0 0
  %2367 = vmatpush1.bf16.msra.mxu0 0
  %2368 = vmatprep.subr.bf16.mxu0 0
  %2369 = vmatpush1.bf16.msra.mxu0 0
  %2370 = vmatprep.subr.bf16.mxu0 0
  %2371 = vmatpush1.bf16.msra.mxu0 0
  %2372 = vmatprep.subr.bf16.mxu0 0
  %2373 = vmatpush1.bf16.msra.mxu0 0
  %2374 = vmatprep.subr.bf16.mxu0 0
  %2375 = vmatpush1.bf16.msra.mxu0 0
  %2376 = vmatprep.subr.bf16.mxu0 0
  %2377 = vmatpush1.bf16.msra.mxu0 0
  %2378 = vmatprep.subr.bf16.mxu0 0
  %2379 = vmatpush1.bf16.msra.mxu0 0
  %2380 = vmatprep.subr.bf16.mxu0 0
  %2381 = vmatpush1.bf16.msra.mxu0 %v2364
  %2382 = vmatprep.subr.bf16.mxu0 0
  %2383 = vmatpush2.bf16.msra.mxu0 0
  %2384 = vmatprep.subr.bf16.mxu0 0
  %2385 = vmatpush2.bf16.msra.mxu0 0
  %2386 = vmatprep.subr.bf16.mxu0 0
  %2387 = vmatpush2.bf16.msra.mxu0 0
  %2388 = vmatprep.subr.bf16.mxu0 0
  %2389 = vmatpush2.bf16.msra.mxu0 0
  %2390 = vmatprep.subr.bf16.mxu0 0
  %2391 = vmatpush2.bf16.msra.mxu0 0
  %2392 = vmatprep.subr.bf16.mxu0 0
  %2393 = vmatpush2.bf16.msra.mxu0 0
  %2394 = vmatprep.subr.bf16.mxu0 0
  %2395 = vmatpush2.bf16.msra.mxu0 0
  %2396 = vmatprep.subr.bf16.mxu0 0
  %2397 = vmatpush2.bf16.msra.mxu0 0
  %2398 = vmatprep.mubr.bf16.mxu0 0
  %2399 = vmatmul.mubr.bf16.gmra.mxu0 %v2358
  %v2400 = vpop.f32.mrf.mxu0
  %v2401 = vadd.f32 0.0, %v2400
  %v2402 = vpop.f32.mrf.mxu0
  %v2403 = vpop.f32.mrf.mxu0
  %v2404 = vadd.f32 0.0, %v2403
  %v2405 = vpop.f32.mrf.mxu0
  %2406 = vmatprep.mubr.bf16.mxu0 0
  %2407 = vmatmul.mubr.bf16.gmra.mxu0 %v2361
  %v2408 = vpop.f32.mrf.mxu0
  %v2409 = vadd.f32 0.0, %v2408
  %v2410 = vpop.f32.mrf.mxu0
  %v2411 = vpop.f32.mrf.mxu0
  %v2412 = vadd.f32 0.0, %v2411
  %v2413 = vpop.f32.mrf.mxu0
  %2414 = vdwg.mxu0
  %v2415 = vadd.f32 %v2173, %v2401
  %v2416 = vadd.f32 %v2174, %v2404
  %v2417 = vadd.f32 %v2175, %v2409
  %v2418 = vadd.f32 %v2176, %v2412
  %v2419 = vadd.f32 %v1336, %v2415
  %v2420 = vadd.f32 %v1337, %v2416
  %v2421 = vadd.f32 %v1338, %v2417
  %v2422 = vadd.f32 %v1339, %v2418
  %v2423 = vadd.f32 %v2419, %v117
  %v2424 = vadd.f32 %v2420, %v117
  %v2425 = vadd.f32 %v2421, %v117
  %v2426 = vadd.f32 %v2422, %v117
  %v2427 = vsel %vm154, %v2423, 0.0
  %2428 = vadd.xlane.f32.xlu0 %v2427
  %v2429 = vpop.xlane.xlu0 %2428
  %v2430 = vsel %vm154, %v2424, 0.0
  %2431 = vadd.xlane.f32.xlu0 %v2430
  %v2432 = vpop.xlane.xlu0 %2431
  %v2433 = vsel %vm154, %v2425, 0.0
  %2434 = vadd.xlane.f32.xlu0 %v2433
  %v2435 = vpop.xlane.xlu0 %2434
  %v2436 = vsel %vm154, %v2426, 0.0
  %2437 = vadd.xlane.f32.xlu0 %v2436
  %v2438 = vpop.xlane.xlu0 %2437
  %v2439 = vmul.f32 %v2429, %v167
  %v2440 = vmul.f32 %v2432, %v167
  %v2441 = vmul.f32 %v2435, %v167
  %v2442 = vmul.f32 %v2438, %v167
  %v2443 = vsub.f32 %v2423, %v2439
  %v2444 = vsub.f32 %v2424, %v2440
  %v2445 = vsub.f32 %v2425, %v2441
  %v2446 = vsub.f32 %v2426, %v2442
  %v2447 = vmul.f32 %v2443, %v2443
  %v2448 = vmul.f32 %v2444, %v2444
  %v2449 = vmul.f32 %v2445, %v2445
  %v2450 = vmul.f32 %v2446, %v2446
  %v2451 = vsel %vm154, %v2447, 0.0
  %2452 = vadd.xlane.f32.xlu0 %v2451
  %v2453 = vpop.xlane.xlu0 %2452
  %v2454 = vsel %vm154, %v2448, 0.0
  %2455 = vadd.xlane.f32.xlu0 %v2454
  %v2456 = vpop.xlane.xlu0 %2455
  %v2457 = vsel %vm154, %v2449, 0.0
  %2458 = vadd.xlane.f32.xlu0 %v2457
  %v2459 = vpop.xlane.xlu0 %2458
  %v2460 = vsel %vm154, %v2450, 0.0
  %2461 = vadd.xlane.f32.xlu0 %v2460
  %v2462 = vpop.xlane.xlu0 %2461
  %v2463 = vmul.f32 %v2453, %v167
  %v2464 = vmul.f32 %v2456, %v167
  %v2465 = vmul.f32 %v2459, %v167
  %v2466 = vmul.f32 %v2462, %v167
  %v2467 = vadd.f32 %v2463, 1e-05
  %v2468 = vadd.f32 %v2464, 1e-05
  %v2469 = vadd.f32 %v2465, 1e-05
  %v2470 = vadd.f32 %v2466, 1e-05
  %v2471 = vrsqrt.pop %v2467
  %v2472 = vrsqrt.pop %v2468
  %v2473 = vrsqrt.pop %v2469
  %v2474 = vrsqrt.pop %v2470
  %v2475 = vmul.f32 %v2443, %v2471
  %v2476 = vmul.f32 %v2444, %v2472
  %v2477 = vmul.f32 %v2445, %v2473
  %v2478 = vmul.f32 %v2446, %v2474
  %v2479 = vpack.c.bf16 %v2476, %v2475
  %v2480 = vpack.c.bf16 %v2478, %v2477
  %v2481 = vpack.c.bf16 %v129, %v128
  %v2482 = vpack.c.bf16 %v131, %v130
  %v2484 = vsel %vm154, %v2479, 0
  %v2487 = vsel %vm154, %v2480, 0
  %2489 = vmatprep.subr.bf16.mxu0 0
  %2490 = vmatpush1.bf16.msra.mxu0 0
  %2491 = vmatprep.subr.bf16.mxu0 0
  %2492 = vmatpush1.bf16.msra.mxu0 0
  %2493 = vmatprep.subr.bf16.mxu0 0
  %2494 = vmatpush1.bf16.msra.mxu0 0
  %2495 = vmatprep.subr.bf16.mxu0 0
  %2496 = vmatpush1.bf16.msra.mxu0 0
  %2497 = vmatprep.subr.bf16.mxu0 0
  %2498 = vmatpush1.bf16.msra.mxu0 0
  %2499 = vmatprep.subr.bf16.mxu0 0
  %2500 = vmatpush1.bf16.msra.mxu0 0
  %2501 = vmatprep.subr.bf16.mxu0 0
  %2502 = vmatpush1.bf16.msra.mxu0 %v2482
  %2503 = vmatprep.subr.bf16.mxu0 0
  %2504 = vmatpush1.bf16.msra.mxu0 %v2481
  %2505 = vmatprep.subr.bf16.mxu0 0
  %2506 = vmatpush2.bf16.msra.mxu0 0
  %2507 = vmatprep.subr.bf16.mxu0 0
  %2508 = vmatpush2.bf16.msra.mxu0 0
  %2509 = vmatprep.subr.bf16.mxu0 0
  %2510 = vmatpush2.bf16.msra.mxu0 0
  %2511 = vmatprep.subr.bf16.mxu0 0
  %2512 = vmatpush2.bf16.msra.mxu0 0
  %2513 = vmatprep.subr.bf16.mxu0 0
  %2514 = vmatpush2.bf16.msra.mxu0 0
  %2515 = vmatprep.subr.bf16.mxu0 0
  %2516 = vmatpush2.bf16.msra.mxu0 0
  %2517 = vmatprep.subr.bf16.mxu0 0
  %2518 = vmatpush2.bf16.msra.mxu0 0
  %2519 = vmatprep.subr.bf16.mxu0 0
  %2520 = vmatpush2.bf16.msra.mxu0 0
  %2521 = vmatprep.mubr.bf16.mxu0 0
  %2522 = vmatmul.mubr.bf16.gmra.mxu0 %v2484
  %v2523 = vpop.f32.mrf.mxu0
  %v2524 = vadd.f32 %v118, %v2523
  %v2525 = vpop.f32.mrf.mxu0
  %v2526 = vpop.f32.mrf.mxu0
  %v2527 = vadd.f32 %v118, %v2526
  %v2528 = vpop.f32.mrf.mxu0
  %2529 = vmatprep.mubr.bf16.mxu0 0
  %2530 = vmatmul.mubr.bf16.gmra.mxu0 %v2487
  %v2531 = vpop.f32.mrf.mxu0
  %v2532 = vadd.f32 %v118, %v2531
  %v2533 = vpop.f32.mrf.mxu0
  %v2534 = vpop.f32.mrf.mxu0
  %v2535 = vadd.f32 %v118, %v2534
  %v2536 = vpop.f32.mrf.mxu0
  %2537 = vdwg.mxu0
  %v2538 = vmul.f32 %v2524, 0.5
  %v2539 = vmul.f32 %v2527, 0.5
  %v2540 = vmul.f32 %v2532, 0.5
  %v2541 = vmul.f32 %v2535, 0.5
  %v2542 = vmul.f32 %v2524, 0.044715
  %v2543 = vmul.f32 %v2527, 0.044715
  %v2544 = vmul.f32 %v2532, 0.044715
  %v2545 = vmul.f32 %v2535, 0.044715
  %v2546 = vmul.f32 %v2542, %v2524
  %v2547 = vmul.f32 %v2543, %v2527
  %v2548 = vmul.f32 %v2544, %v2532
  %v2549 = vmul.f32 %v2545, %v2535
  %v2550 = vmul.f32 %v2546, %v2524
  %v2551 = vmul.f32 %v2547, %v2527
  %v2552 = vmul.f32 %v2548, %v2532
  %v2553 = vmul.f32 %v2549, %v2535
  %v2554 = vadd.f32 %v2524, %v2550
  %v2555 = vadd.f32 %v2527, %v2551
  %v2556 = vadd.f32 %v2532, %v2552
  %v2557 = vadd.f32 %v2535, %v2553
  %v2558 = vmul.f32 %v2554, 0.7978846
  %v2559 = vmul.f32 %v2555, 0.7978846
  %v2560 = vmul.f32 %v2556, 0.7978846
  %v2561 = vmul.f32 %v2557, 0.7978846
  %v2562 = vtanh.pop %v2558
  %v2563 = vtanh.pop %v2559
  %v2564 = vtanh.pop %v2560
  %v2565 = vtanh.pop %v2561
  %v2566 = vadd.f32 %v2562, 1.0
  %v2567 = vadd.f32 %v2563, 1.0
  %v2568 = vadd.f32 %v2564, 1.0
  %v2569 = vadd.f32 %v2565, 1.0
  %v2570 = vmul.f32 %v2538, %v2566
  %v2571 = vmul.f32 %v2539, %v2567
  %v2572 = vmul.f32 %v2540, %v2568
  %v2573 = vmul.f32 %v2541, %v2569
  %v2574 = vpack.c.bf16 %v2571, %v2570
  %v2575 = vpack.c.bf16 %v2573, %v2572
  %v2592 = vunpack.c.l.b16 %v138
  %v2593 = vunpack.c.l.b16 %v139
  %v2594 = vunpack.c.l.b16 %v140
  %v2595 = vunpack.c.l.b16 %v141
  %v2596 = vunpack.c.l.b16 %v142
  %v2597 = vunpack.c.l.b16 %v143
  %v2598 = vunpack.c.l.b16 %v144
  %v2599 = vunpack.c.l.b16 %v145
  %v2600 = vunpack.c.l.b16 %v146
  %v2601 = vunpack.c.l.b16 %v147
  %v2602 = vunpack.c.l.b16 %v148
  %v2603 = vunpack.c.l.b16 %v149
  %v2604 = vunpack.c.l.b16 %v150
  %v2605 = vunpack.c.l.b16 %v151
  %v2606 = vunpack.c.l.b16 %v152
  %v2607 = vunpack.c.l.b16 %v153
  %v2608 = vpack.c.b16 %v2593, %v2592
  %v2609 = vpack.c.b16 %v2595, %v2594
  %v2610 = vpack.c.b16 %v2597, %v2596
  %v2611 = vpack.c.b16 %v2599, %v2598
  %v2612 = vpack.c.b16 %v2601, %v2600
  %v2613 = vpack.c.b16 %v2603, %v2602
  %v2614 = vpack.c.b16 %v2605, %v2604
  %v2615 = vpack.c.b16 %v2607, %v2606
  %2624 = vmatprep.subr.bf16.mxu0 0
  %2625 = vmatpush1.bf16.msra.mxu0 %v2615
  %2626 = vmatprep.subr.bf16.mxu0 0
  %2627 = vmatpush1.bf16.msra.mxu0 %v2614
  %2628 = vmatprep.subr.bf16.mxu0 0
  %2629 = vmatpush1.bf16.msra.mxu0 %v2613
  %2630 = vmatprep.subr.bf16.mxu0 0
  %2631 = vmatpush1.bf16.msra.mxu0 %v2612
  %2632 = vmatprep.subr.bf16.mxu0 0
  %2633 = vmatpush1.bf16.msra.mxu0 %v2611
  %2634 = vmatprep.subr.bf16.mxu0 0
  %2635 = vmatpush1.bf16.msra.mxu0 %v2610
  %2636 = vmatprep.subr.bf16.mxu0 0
  %2637 = vmatpush1.bf16.msra.mxu0 %v2609
  %2638 = vmatprep.subr.bf16.mxu0 0
  %2639 = vmatpush1.bf16.msra.mxu0 %v2608
  %2640 = vmatprep.subr.bf16.mxu0 0
  %2641 = vmatpush2.bf16.msra.mxu0 0
  %2642 = vmatprep.subr.bf16.mxu0 0
  %2643 = vmatpush2.bf16.msra.mxu0 0
  %2644 = vmatprep.subr.bf16.mxu0 0
  %2645 = vmatpush2.bf16.msra.mxu0 0
  %2646 = vmatprep.subr.bf16.mxu0 0
  %2647 = vmatpush2.bf16.msra.mxu0 0
  %2648 = vmatprep.subr.bf16.mxu0 0
  %2649 = vmatpush2.bf16.msra.mxu0 0
  %2650 = vmatprep.subr.bf16.mxu0 0
  %2651 = vmatpush2.bf16.msra.mxu0 0
  %2652 = vmatprep.subr.bf16.mxu0 0
  %2653 = vmatpush2.bf16.msra.mxu0 0
  %2654 = vmatprep.subr.bf16.mxu0 0
  %2655 = vmatpush2.bf16.msra.mxu0 0
  %2656 = vmatprep.mubr.bf16.mxu0 0
  %2657 = vmatmul.mubr.bf16.gmra.mxu0 %v2574
  %v2658 = vpop.f32.mrf.mxu0
  %v2659 = vadd.f32 0.0, %v2658
  %v2660 = vpop.f32.mrf.mxu0
  %v2661 = vpop.f32.mrf.mxu0
  %v2662 = vadd.f32 0.0, %v2661
  %v2663 = vpop.f32.mrf.mxu0
  %2664 = vmatprep.mubr.bf16.mxu0 0
  %2665 = vmatmul.mubr.bf16.gmra.mxu0 %v2575
  %v2666 = vpop.f32.mrf.mxu0
  %v2667 = vadd.f32 0.0, %v2666
  %v2668 = vpop.f32.mrf.mxu0
  %v2669 = vpop.f32.mrf.mxu0
  %v2670 = vadd.f32 0.0, %v2669
  %v2671 = vpop.f32.mrf.mxu0
  %2672 = vdwg.mxu0
  %v2673 = vadd.f32 %v2423, %v2659
  %v2674 = vadd.f32 %v2424, %v2662
  %v2675 = vadd.f32 %v2425, %v2667
  %v2676 = vadd.f32 %v2426, %v2670
  %v2677 = vadd.f32 %v2673, %v119
  %v2678 = vadd.f32 %v2674, %v119
  %v2679 = vadd.f32 %v2675, %v119
  %v2680 = vadd.f32 %v2676, %v119
  %v2681 = vld [vmem:[%s1 + $0x7] ss:$0 sm:$0xff]
  %v2682 = vld [vmem:[%s1 + $0x10] ss:$0 sm:$0xff]
  %v2683 = vld [vmem:[%s1 + $0x11] ss:$0 sm:$0xff]
  %v2684 = vld [vmem:[%s1 + $0x12] ss:$0 sm:$0xff]
  %v2685 = vld [vmem:[%s1 + $0x13] ss:$0 sm:$0xff]
  %v2686 = vld [vmem:[%s1 + $0x14] ss:$0 sm:$0xff]
  %v2687 = vld [vmem:[%s1 + $0x15] ss:$0 sm:$0xff]
  %s2688 = scalar_lea.vmem %s2, 96
  %v2689 = vld [vmem:[%s2688] sm:$0xff]
  %v2690 = vld [vmem:[%s2688 + $0x18] sm:$0xff]
  %v2691 = vld [vmem:[%s2688 + $0x30] sm:$0xff]
  %v2692 = vld [vmem:[%s2688 + $0x48] sm:$0xff]
  %v2693 = vld [vmem:[%s2688 + $0x8] sm:$0xff]
  %v2694 = vld [vmem:[%s2688 + $0x20] sm:$0xff]
  %v2695 = vld [vmem:[%s2688 + $0x38] sm:$0xff]
  %v2696 = vld [vmem:[%s2688 + $0x50] sm:$0xff]
  %v2697 = vld [vmem:[%s2688 + $0x10] sm:$0xff]
  %v2698 = vld [vmem:[%s2688 + $0x28] sm:$0xff]
  %v2699 = vld [vmem:[%s2688 + $0x40] sm:$0xff]
  %v2700 = vld [vmem:[%s2688 + $0x58] sm:$0xff]
  %s2701 = scalar_lea.vmem %s3, 24
  %v2702 = vld [vmem:[%s2701] sm:$0xf]
  %v2703 = vld [vmem:[%s2701 + $0x4] sm:$0xf]
  %v2704 = vld [vmem:[%s2701 + $0x8] sm:$0xf]
  %v2705 = vld [vmem:[%s2701 + $0xc] sm:$0xf]
  %v2706 = vld [vmem:[%s2701 + $0x10] sm:$0xf]
  %v2707 = vld [vmem:[%s2701 + $0x14] sm:$0xf]
  %s2708 = scalar_lea.vmem %s4, 64
  %v2709 = vld [vmem:[%s2708] sm:$0xf]
  %v2710 = vld [vmem:[%s2708 + $0x4] sm:$0xf]
  %v2711 = vld [vmem:[%s2708 + $0x8] sm:$0xf]
  %v2712 = vld [vmem:[%s2708 + $0xc] sm:$0xf]
  %v2713 = vld [vmem:[%s2708 + $0x10] sm:$0xf]
  %v2714 = vld [vmem:[%s2708 + $0x14] sm:$0xf]
  %v2715 = vld [vmem:[%s2708 + $0x18] sm:$0xf]
  %v2716 = vld [vmem:[%s2708 + $0x1c] sm:$0xf]
  %v2717 = vld [vmem:[%s2708 + $0x20] sm:$0xf]
  %v2718 = vld [vmem:[%s2708 + $0x24] sm:$0xf]
  %v2719 = vld [vmem:[%s2708 + $0x28] sm:$0xf]
  %v2720 = vld [vmem:[%s2708 + $0x2c] sm:$0xf]
  %v2721 = vld [vmem:[%s2708 + $0x30] sm:$0xf]
  %v2722 = vld [vmem:[%s2708 + $0x34] sm:$0xf]
  %v2723 = vld [vmem:[%s2708 + $0x38] sm:$0xf]
  %v2724 = vld [vmem:[%s2708 + $0x3c] sm:$0xf]
  %v2725 = vsel %vm154, %v2677, 0.0
  %2726 = vadd.xlane.f32.xlu0 %v2725
  %v2727 = vpop.xlane.xlu0 %2726
  %v2728 = vsel %vm154, %v2678, 0.0
  %2729 = vadd.xlane.f32.xlu0 %v2728
  %v2730 = vpop.xlane.xlu0 %2729
  %v2731 = vsel %vm154, %v2679, 0.0
  %2732 = vadd.xlane.f32.xlu0 %v2731
  %v2733 = vpop.xlane.xlu0 %2732
  %v2734 = vsel %vm154, %v2680, 0.0
  %2735 = vadd.xlane.f32.xlu0 %v2734
  %v2736 = vpop.xlane.xlu0 %2735
  %v2737 = vmul.f32 %v2727, %v167
  %v2738 = vmul.f32 %v2730, %v167
  %v2739 = vmul.f32 %v2733, %v167
  %v2740 = vmul.f32 %v2736, %v167
  %v2741 = vsub.f32 %v2677, %v2737
  %v2742 = vsub.f32 %v2678, %v2738
  %v2743 = vsub.f32 %v2679, %v2739
  %v2744 = vsub.f32 %v2680, %v2740
  %v2745 = vmul.f32 %v2741, %v2741
  %v2746 = vmul.f32 %v2742, %v2742
  %v2747 = vmul.f32 %v2743, %v2743
  %v2748 = vmul.f32 %v2744, %v2744
  %v2749 = vsel %vm154, %v2745, 0.0
  %2750 = vadd.xlane.f32.xlu0 %v2749
  %v2751 = vpop.xlane.xlu0 %2750
  %v2752 = vsel %vm154, %v2746, 0.0
  %2753 = vadd.xlane.f32.xlu0 %v2752
  %v2754 = vpop.xlane.xlu0 %2753
  %v2755 = vsel %vm154, %v2747, 0.0
  %2756 = vadd.xlane.f32.xlu0 %v2755
  %v2757 = vpop.xlane.xlu0 %2756
  %v2758 = vsel %vm154, %v2748, 0.0
  %2759 = vadd.xlane.f32.xlu0 %v2758
  %v2760 = vpop.xlane.xlu0 %2759
  %v2761 = vmul.f32 %v2751, %v167
  %v2762 = vmul.f32 %v2754, %v167
  %v2763 = vmul.f32 %v2757, %v167
  %v2764 = vmul.f32 %v2760, %v167
  %v2765 = vadd.f32 %v2761, 1e-05
  %v2766 = vadd.f32 %v2762, 1e-05
  %v2767 = vadd.f32 %v2763, 1e-05
  %v2768 = vadd.f32 %v2764, 1e-05
  %v2769 = vrsqrt.pop %v2765
  %v2770 = vrsqrt.pop %v2766
  %v2771 = vrsqrt.pop %v2767
  %v2772 = vrsqrt.pop %v2768
  %v2773 = vmul.f32 %v2741, %v2769
  %v2774 = vmul.f32 %v2742, %v2770
  %v2775 = vmul.f32 %v2743, %v2771
  %v2776 = vmul.f32 %v2744, %v2772
  %v2777 = vpack.c.bf16 %v2774, %v2773
  %v2778 = vpack.c.bf16 %v2776, %v2775
  %v2779 = vpack.c.bf16 %v2690, %v2689
  %v2780 = vpack.c.bf16 %v2692, %v2691
  %v2782 = vsel %vm154, %v2777, 0
  %v2785 = vsel %vm154, %v2778, 0
  %2787 = vmatprep.subr.bf16.mxu0 0
  %2788 = vmatpush1.bf16.msra.mxu0 0
  %2789 = vmatprep.subr.bf16.mxu0 0
  %2790 = vmatpush1.bf16.msra.mxu0 0
  %2791 = vmatprep.subr.bf16.mxu0 0
  %2792 = vmatpush1.bf16.msra.mxu0 0
  %2793 = vmatprep.subr.bf16.mxu0 0
  %2794 = vmatpush1.bf16.msra.mxu0 0
  %2795 = vmatprep.subr.bf16.mxu0 0
  %2796 = vmatpush1.bf16.msra.mxu0 0
  %2797 = vmatprep.subr.bf16.mxu0 0
  %2798 = vmatpush1.bf16.msra.mxu0 0
  %2799 = vmatprep.subr.bf16.mxu0 0
  %2800 = vmatpush1.bf16.msra.mxu0 %v2780
  %2801 = vmatprep.subr.bf16.mxu0 0
  %2802 = vmatpush1.bf16.msra.mxu0 %v2779
  %2803 = vmatprep.subr.bf16.mxu0 0
  %2804 = vmatpush2.bf16.msra.mxu0 0
  %2805 = vmatprep.subr.bf16.mxu0 0
  %2806 = vmatpush2.bf16.msra.mxu0 0
  %2807 = vmatprep.subr.bf16.mxu0 0
  %2808 = vmatpush2.bf16.msra.mxu0 0
  %2809 = vmatprep.subr.bf16.mxu0 0
  %2810 = vmatpush2.bf16.msra.mxu0 0
  %2811 = vmatprep.subr.bf16.mxu0 0
  %2812 = vmatpush2.bf16.msra.mxu0 0
  %2813 = vmatprep.subr.bf16.mxu0 0
  %2814 = vmatpush2.bf16.msra.mxu0 0
  %2815 = vmatprep.subr.bf16.mxu0 0
  %2816 = vmatpush2.bf16.msra.mxu0 0
  %2817 = vmatprep.subr.bf16.mxu0 0
  %2818 = vmatpush2.bf16.msra.mxu0 0
  %2819 = vmatprep.mubr.bf16.mxu0 0
  %2820 = vmatmul.mubr.bf16.gmra.mxu0 %v2782
  %v2821 = vpop.f32.mrf.mxu0
  %v2822 = vadd.f32 %v2681, %v2821
  %v2823 = vpop.f32.mrf.mxu0
  %v2824 = vpop.f32.mrf.mxu0
  %v2825 = vadd.f32 %v2681, %v2824
  %v2826 = vpop.f32.mrf.mxu0
  %2827 = vmatprep.mubr.bf16.mxu0 0
  %2828 = vmatmul.mubr.bf16.gmra.mxu0 %v2785
  %v2829 = vpop.f32.mrf.mxu0
  %v2830 = vadd.f32 %v2681, %v2829
  %v2831 = vpop.f32.mrf.mxu0
  %v2832 = vpop.f32.mrf.mxu0
  %v2833 = vadd.f32 %v2681, %v2832
  %v2834 = vpop.f32.mrf.mxu0
  %2835 = vdwg.mxu0
  %v2842 = vunpack.c.l.b16 %v2702
  %v2843 = vunpack.c.l.b16 %v2703
  %v2844 = vunpack.c.l.b16 %v2704
  %v2845 = vunpack.c.l.b16 %v2705
  %v2846 = vunpack.c.l.b16 %v2706
  %v2847 = vunpack.c.l.b16 %v2707
  %v2848 = vpack.c.b16 %v2843, %v2842
  %v2849 = vpack.c.b16 %v2845, %v2844
  %v2850 = vpack.c.b16 %v2847, %v2846
  %2854 = vmatprep.subr.bf16.mxu0 0
  %2855 = vmatpush1.bf16.msra.mxu0 0
  %2856 = vmatprep.subr.bf16.mxu0 0
  %2857 = vmatpush1.bf16.msra.mxu0 0
  %2858 = vmatprep.subr.bf16.mxu0 0
  %2859 = vmatpush1.bf16.msra.mxu0 0
  %2860 = vmatprep.subr.bf16.mxu0 0
  %2861 = vmatpush1.bf16.msra.mxu0 0
  %2862 = vmatprep.subr.bf16.mxu0 0
  %2863 = vmatpush1.bf16.msra.mxu0 0
  %2864 = vmatprep.subr.bf16.mxu0 0
  %2865 = vmatpush1.bf16.msra.mxu0 %v2850
  %2866 = vmatprep.subr.bf16.mxu0 0
  %2867 = vmatpush1.bf16.msra.mxu0 %v2849
  %2868 = vmatprep.subr.bf16.mxu0 0
  %2869 = vmatpush1.bf16.msra.mxu0 %v2848
  %2870 = vmatprep.subr.bf16.mxu0 0
  %2871 = vmatpush2.bf16.msra.mxu0 0
  %2872 = vmatprep.subr.bf16.mxu0 0
  %2873 = vmatpush2.bf16.msra.mxu0 0
  %2874 = vmatprep.subr.bf16.mxu0 0
  %2875 = vmatpush2.bf16.msra.mxu0 0
  %2876 = vmatprep.subr.bf16.mxu0 0
  %2877 = vmatpush2.bf16.msra.mxu0 0
  %2878 = vmatprep.subr.bf16.mxu0 0
  %2879 = vmatpush2.bf16.msra.mxu0 0
  %2880 = vmatprep.subr.bf16.mxu0 0
  %2881 = vmatpush2.bf16.msra.mxu0 0
  %2882 = vmatprep.subr.bf16.mxu0 0
  %2883 = vmatpush2.bf16.msra.mxu0 0
  %2884 = vmatprep.subr.bf16.mxu0 0
  %2885 = vmatpush2.bf16.msra.mxu0 0
  %2886 = vmatprep.mubr.bf16.mxu0 0
  %2887 = vmatmul.mubr.bf16.gmra.mxu0 %v292
  %v2888 = vpop.f32.mrf.mxu0
  %v2889 = vadd.f32 %v2682, %v2888
  %v2890 = vpop.f32.mrf.mxu0
  %v2891 = vpop.f32.mrf.mxu0
  %v2892 = vadd.f32 %v2682, %v2891
  %v2893 = vpop.f32.mrf.mxu0
  %2894 = vmatprep.mubr.bf16.mxu0 0
  %2895 = vmatmul.mubr.bf16.gmra.mxu0 %v295
  %v2896 = vpop.f32.mrf.mxu0
  %v2897 = vadd.f32 %v2682, %v2896
  %v2898 = vpop.f32.mrf.mxu0
  %v2899 = vpop.f32.mrf.mxu0
  %v2900 = vadd.f32 %v2682, %v2899
  %v2901 = vpop.f32.mrf.mxu0
  %2902 = vdwg.mxu0
  %v2903 = vmul.f32 %v2822, 0.35355338
  %v2904 = vmul.f32 %v2825, 0.35355338
  %v2905 = vmul.f32 %v2830, 0.35355338
  %v2906 = vmul.f32 %v2833, 0.35355338
  %v2907 = vpack.c.bf16 %v2904, %v2903
  %v2908 = vpack.c.bf16 %v2906, %v2905
  %v2909 = vpack.c.bf16 %v2892, %v2889
  %v2910 = vpack.c.bf16 %v2900, %v2897
  %v2912 = vsel %vm366, %v2907, 0
  %v2915 = vsel %vm366, %v2908, 0
  %v2918 = vsel %vm366, %v2909, 0
  %v2921 = vsel %vm366, %v2910, 0
  %2923 = vmatprep.subr.bf16.mxu0 0
  %2924 = vmatpush1.bf16.xpose.msra.mxu0 0
  %2925 = vmatprep.subr.bf16.mxu0 0
  %2926 = vmatpush1.bf16.xpose.msra.mxu0 0
  %2927 = vmatprep.subr.bf16.mxu0 0
  %2928 = vmatpush1.bf16.xpose.msra.mxu0 0
  %2929 = vmatprep.subr.bf16.mxu0 0
  %2930 = vmatpush1.bf16.xpose.msra.mxu0 0
  %2931 = vmatprep.subr.bf16.mxu0 0
  %2932 = vmatpush1.bf16.xpose.msra.mxu0 0
  %2933 = vmatprep.subr.bf16.mxu0 0
  %2934 = vmatpush1.bf16.xpose.msra.mxu0 0
  %2935 = vmatprep.subr.bf16.mxu0 0
  %2936 = vmatpush1.bf16.xpose.msra.mxu0 %v2921
  %2937 = vmatprep.subr.bf16.mxu0 0
  %2938 = vmatpush1.bf16.xpose.msra.mxu0 %v2918
  %2939 = vmatprep.subr.bf16.mxu0 0
  %2940 = vmatpush2.bf16.xpose.msra.mxu0 0
  %2941 = vmatprep.subr.bf16.mxu0 0
  %2942 = vmatpush2.bf16.xpose.msra.mxu0 0
  %2943 = vmatprep.subr.bf16.mxu0 0
  %2944 = vmatpush2.bf16.xpose.msra.mxu0 0
  %2945 = vmatprep.subr.bf16.mxu0 0
  %2946 = vmatpush2.bf16.xpose.msra.mxu0 0
  %2947 = vmatprep.subr.bf16.mxu0 0
  %2948 = vmatpush2.bf16.xpose.msra.mxu0 0
  %2949 = vmatprep.subr.bf16.mxu0 0
  %2950 = vmatpush2.bf16.xpose.msra.mxu0 0
  %2951 = vmatprep.subr.bf16.mxu0 0
  %2952 = vmatpush2.bf16.xpose.msra.mxu0 0
  %2953 = vmatprep.subr.bf16.mxu0 0
  %2954 = vmatpush2.bf16.xpose.msra.mxu0 0
  %2955 = vmatprep.mubr.bf16.mxu0 0
  %2956 = vmatmul.mubr.bf16.gmra.mxu0 %v2912
  %v2957 = vpop.f32.mrf.mxu0
  %v2958 = vadd.f32 %v355, %v2957
  %v2959 = vpop.f32.mrf.mxu0
  %v2960 = vpop.f32.mrf.mxu0
  %v2961 = vadd.f32 %v357, %v2960
  %v2962 = vpop.f32.mrf.mxu0
  %2963 = vmatprep.mubr.bf16.mxu0 0
  %2964 = vmatmul.mubr.bf16.gmra.mxu0 %v2915
  %v2965 = vpop.f32.mrf.mxu0
  %v2966 = vadd.f32 %v359, %v2965
  %v2967 = vpop.f32.mrf.mxu0
  %v2968 = vpop.f32.mrf.mxu0
  %v2969 = vadd.f32 %v361, %v2968
  %v2970 = vpop.f32.mrf.mxu0
  %2971 = vdwg.mxu0
  %v2972 = vsel %vm154, %v2958, -inf
  %2973 = vmax.xlane.f32.xlu0 %v2972
  %v2974 = vpop.xlane.xlu0 %2973
  %v2975 = vsel %vm154, %v2961, -inf
  %2976 = vmax.xlane.f32.xlu0 %v2975
  %v2977 = vpop.xlane.xlu0 %2976
  %v2978 = vsel %vm154, %v2966, -inf
  %2979 = vmax.xlane.f32.xlu0 %v2978
  %v2980 = vpop.xlane.xlu0 %2979
  %v2981 = vsel %vm154, %v2969, -inf
  %2982 = vmax.xlane.f32.xlu0 %v2981
  %v2983 = vpop.xlane.xlu0 %2982
  %v2984 = vsub.f32 %v2958, %v2974
  %v2985 = vsub.f32 %v2961, %v2977
  %v2986 = vsub.f32 %v2966, %v2980
  %v2987 = vsub.f32 %v2969, %v2983
  %v2988 = vmul.f32 %v2984, 1.442695
  %v2989 = vpow.pop %v2988
  %v2990 = vmul.f32 %v2985, 1.442695
  %v2991 = vpow.pop %v2990
  %v2992 = vmul.f32 %v2986, 1.442695
  %v2993 = vpow.pop %v2992
  %v2994 = vmul.f32 %v2987, 1.442695
  %v2995 = vpow.pop %v2994
  %v2996 = vsel %vm154, %v2989, 0.0
  %2997 = vadd.xlane.f32.xlu0 %v2996
  %v2998 = vpop.xlane.xlu0 %2997
  %v2999 = vsel %vm154, %v2991, 0.0
  %3000 = vadd.xlane.f32.xlu0 %v2999
  %v3001 = vpop.xlane.xlu0 %3000
  %v3002 = vsel %vm154, %v2993, 0.0
  %3003 = vadd.xlane.f32.xlu0 %v3002
  %v3004 = vpop.xlane.xlu0 %3003
  %v3005 = vsel %vm154, %v2995, 0.0
  %3006 = vadd.xlane.f32.xlu0 %v3005
  %v3007 = vpop.xlane.xlu0 %3006
  %v3008 = vrcp.pop %v2998
  %v3009 = vmul.f32 %v2989, %v3008
  %v3010 = vrcp.pop %v3001
  %v3011 = vmul.f32 %v2991, %v3010
  %v3012 = vrcp.pop %v3004
  %v3013 = vmul.f32 %v2993, %v3012
  %v3014 = vrcp.pop %v3007
  %v3015 = vmul.f32 %v2995, %v3014
  %v3016 = vpack.c.bf16 %v3011, %v3009
  %v3017 = vpack.c.bf16 %v3015, %v3013
  %3020 = vrot.lane.b32.xlu0 %v2909, 96
  %v3021 = vpop.permute.xlu0 %3020
  %3022 = vrot.lane.b32.xlu0 %v2910, 96
  %v3023 = vpop.permute.xlu0 %3022
  %v3027 = vsel %vm154, %v3016, 0
  %v3030 = vsel %vm154, %v3017, 0
  %3032 = vmatprep.subr.bf16.mxu0 0
  %3033 = vmatpush1.bf16.msra.mxu0 0
  %3034 = vmatprep.subr.bf16.mxu0 0
  %3035 = vmatpush1.bf16.msra.mxu0 0
  %3036 = vmatprep.subr.bf16.mxu0 0
  %3037 = vmatpush1.bf16.msra.mxu0 0
  %3038 = vmatprep.subr.bf16.mxu0 0
  %3039 = vmatpush1.bf16.msra.mxu0 0
  %3040 = vmatprep.subr.bf16.mxu0 0
  %3041 = vmatpush1.bf16.msra.mxu0 0
  %3042 = vmatprep.subr.bf16.mxu0 0
  %3043 = vmatpush1.bf16.msra.mxu0 0
  %3044 = vmatprep.subr.bf16.mxu0 0
  %3045 = vmatpush1.bf16.msra.mxu0 %v3023
  %3046 = vmatprep.subr.bf16.mxu0 0
  %3047 = vmatpush1.bf16.msra.mxu0 %v3021
  %3048 = vmatprep.subr.bf16.mxu0 0
  %3049 = vmatpush2.bf16.msra.mxu0 0
  %3050 = vmatprep.subr.bf16.mxu0 0
  %3051 = vmatpush2.bf16.msra.mxu0 0
  %3052 = vmatprep.subr.bf16.mxu0 0
  %3053 = vmatpush2.bf16.msra.mxu0 0
  %3054 = vmatprep.subr.bf16.mxu0 0
  %3055 = vmatpush2.bf16.msra.mxu0 0
  %3056 = vmatprep.subr.bf16.mxu0 0
  %3057 = vmatpush2.bf16.msra.mxu0 0
  %3058 = vmatprep.subr.bf16.mxu0 0
  %3059 = vmatpush2.bf16.msra.mxu0 0
  %3060 = vmatprep.subr.bf16.mxu0 0
  %3061 = vmatpush2.bf16.msra.mxu0 0
  %3062 = vmatprep.subr.bf16.mxu0 0
  %3063 = vmatpush2.bf16.msra.mxu0 0
  %3064 = vmatprep.mubr.bf16.mxu0 0
  %3065 = vmatmul.mubr.bf16.gmra.mxu0 %v3027
  %v3066 = vpop.f32.mrf.mxu0
  %v3067 = vadd.f32 0.0, %v3066
  %v3068 = vpop.f32.mrf.mxu0
  %v3069 = vpop.f32.mrf.mxu0
  %v3070 = vadd.f32 0.0, %v3069
  %v3071 = vpop.f32.mrf.mxu0
  %3072 = vmatprep.mubr.bf16.mxu0 0
  %3073 = vmatmul.mubr.bf16.gmra.mxu0 %v3030
  %v3074 = vpop.f32.mrf.mxu0
  %v3075 = vadd.f32 0.0, %v3074
  %v3076 = vpop.f32.mrf.mxu0
  %v3077 = vpop.f32.mrf.mxu0
  %v3078 = vadd.f32 0.0, %v3077
  %v3079 = vpop.f32.mrf.mxu0
  %3080 = vdwg.mxu0
  %v3081 = vpack.c.bf16 %v2689, %v2689
  %v3082 = vpack.c.bf16 %v3070, %v3067
  %v3083 = vpack.c.bf16 %v3078, %v3075
  %3086 = vrot.lane.b32.xlu0 %v2907, 120
  %v3087 = vpop.permute.xlu0 %3086
  %3088 = vrot.lane.b32.xlu0 %v2908, 120
  %v3089 = vpop.permute.xlu0 %3088
  %3090 = vrot.lane.b32.xlu0 %v2909, 120
  %v3091 = vpop.permute.xlu0 %3090
  %3092 = vrot.lane.b32.xlu0 %v2910, 120
  %v3093 = vpop.permute.xlu0 %3092
  %v3095 = vsel %vm366, %v3087, 0
  %v3098 = vsel %vm366, %v3089, 0
  %v3101 = vsel %vm366, %v3091, 0
  %v3104 = vsel %vm366, %v3093, 0
  %3106 = vmatprep.subr.bf16.mxu0 0
  %3107 = vmatpush1.bf16.xpose.msra.mxu0 0
  %3108 = vmatprep.subr.bf16.mxu0 0
  %3109 = vmatpush1.bf16.xpose.msra.mxu0 0
  %3110 = vmatprep.subr.bf16.mxu0 0
  %3111 = vmatpush1.bf16.xpose.msra.mxu0 0
  %3112 = vmatprep.subr.bf16.mxu0 0
  %3113 = vmatpush1.bf16.xpose.msra.mxu0 0
  %3114 = vmatprep.subr.bf16.mxu0 0
  %3115 = vmatpush1.bf16.xpose.msra.mxu0 0
  %3116 = vmatprep.subr.bf16.mxu0 0
  %3117 = vmatpush1.bf16.xpose.msra.mxu0 0
  %3118 = vmatprep.subr.bf16.mxu0 0
  %3119 = vmatpush1.bf16.xpose.msra.mxu0 %v3104
  %3120 = vmatprep.subr.bf16.mxu0 0
  %3121 = vmatpush1.bf16.xpose.msra.mxu0 %v3101
  %3122 = vmatprep.subr.bf16.mxu0 0
  %3123 = vmatpush2.bf16.xpose.msra.mxu0 0
  %3124 = vmatprep.subr.bf16.mxu0 0
  %3125 = vmatpush2.bf16.xpose.msra.mxu0 0
  %3126 = vmatprep.subr.bf16.mxu0 0
  %3127 = vmatpush2.bf16.xpose.msra.mxu0 0
  %3128 = vmatprep.subr.bf16.mxu0 0
  %3129 = vmatpush2.bf16.xpose.msra.mxu0 0
  %3130 = vmatprep.subr.bf16.mxu0 0
  %3131 = vmatpush2.bf16.xpose.msra.mxu0 0
  %3132 = vmatprep.subr.bf16.mxu0 0
  %3133 = vmatpush2.bf16.xpose.msra.mxu0 0
  %3134 = vmatprep.subr.bf16.mxu0 0
  %3135 = vmatpush2.bf16.xpose.msra.mxu0 0
  %3136 = vmatprep.subr.bf16.mxu0 0
  %3137 = vmatpush2.bf16.xpose.msra.mxu0 0
  %3138 = vmatprep.mubr.bf16.mxu0 0
  %3139 = vmatmul.mubr.bf16.gmra.mxu0 %v3095
  %v3140 = vpop.f32.mrf.mxu0
  %v3141 = vadd.f32 %v355, %v3140
  %v3142 = vpop.f32.mrf.mxu0
  %v3143 = vpop.f32.mrf.mxu0
  %v3144 = vadd.f32 %v357, %v3143
  %v3145 = vpop.f32.mrf.mxu0
  %3146 = vmatprep.mubr.bf16.mxu0 0
  %3147 = vmatmul.mubr.bf16.gmra.mxu0 %v3098
  %v3148 = vpop.f32.mrf.mxu0
  %v3149 = vadd.f32 %v359, %v3148
  %v3150 = vpop.f32.mrf.mxu0
  %v3151 = vpop.f32.mrf.mxu0
  %v3152 = vadd.f32 %v361, %v3151
  %v3153 = vpop.f32.mrf.mxu0
  %3154 = vdwg.mxu0
  %v3155 = vsel %vm154, %v3141, -inf
  %3156 = vmax.xlane.f32.xlu0 %v3155
  %v3157 = vpop.xlane.xlu0 %3156
  %v3158 = vsel %vm154, %v3144, -inf
  %3159 = vmax.xlane.f32.xlu0 %v3158
  %v3160 = vpop.xlane.xlu0 %3159
  %v3161 = vsel %vm154, %v3149, -inf
  %3162 = vmax.xlane.f32.xlu0 %v3161
  %v3163 = vpop.xlane.xlu0 %3162
  %v3164 = vsel %vm154, %v3152, -inf
  %3165 = vmax.xlane.f32.xlu0 %v3164
  %v3166 = vpop.xlane.xlu0 %3165
  %v3167 = vsub.f32 %v3141, %v3157
  %v3168 = vsub.f32 %v3144, %v3160
  %v3169 = vsub.f32 %v3149, %v3163
  %v3170 = vsub.f32 %v3152, %v3166
  %v3171 = vmul.f32 %v3167, 1.442695
  %v3172 = vpow.pop %v3171
  %v3173 = vmul.f32 %v3168, 1.442695
  %v3174 = vpow.pop %v3173
  %v3175 = vmul.f32 %v3169, 1.442695
  %v3176 = vpow.pop %v3175
  %v3177 = vmul.f32 %v3170, 1.442695
  %v3178 = vpow.pop %v3177
  %v3179 = vsel %vm154, %v3172, 0.0
  %3180 = vadd.xlane.f32.xlu0 %v3179
  %v3181 = vpop.xlane.xlu0 %3180
  %v3182 = vsel %vm154, %v3174, 0.0
  %3183 = vadd.xlane.f32.xlu0 %v3182
  %v3184 = vpop.xlane.xlu0 %3183
  %v3185 = vsel %vm154, %v3176, 0.0
  %3186 = vadd.xlane.f32.xlu0 %v3185
  %v3187 = vpop.xlane.xlu0 %3186
  %v3188 = vsel %vm154, %v3178, 0.0
  %3189 = vadd.xlane.f32.xlu0 %v3188
  %v3190 = vpop.xlane.xlu0 %3189
  %v3191 = vrcp.pop %v3181
  %v3192 = vmul.f32 %v3172, %v3191
  %v3193 = vrcp.pop %v3184
  %v3194 = vmul.f32 %v3174, %v3193
  %v3195 = vrcp.pop %v3187
  %v3196 = vmul.f32 %v3176, %v3195
  %v3197 = vrcp.pop %v3190
  %v3198 = vmul.f32 %v3178, %v3197
  %v3199 = vpack.c.bf16 %v3194, %v3192
  %v3200 = vpack.c.bf16 %v3198, %v3196
  %3201 = vrot.lane.b32.xlu0 %v2909, 88
  %v3202 = vpop.permute.xlu0 %3201
  %3203 = vrot.lane.b32.xlu0 %v2910, 88
  %v3204 = vpop.permute.xlu0 %3203
  %v3208 = vsel %vm154, %v3199, 0
  %v3211 = vsel %vm154, %v3200, 0
  %3213 = vmatprep.subr.bf16.mxu0 0
  %3214 = vmatpush1.bf16.msra.mxu0 0
  %3215 = vmatprep.subr.bf16.mxu0 0
  %3216 = vmatpush1.bf16.msra.mxu0 0
  %3217 = vmatprep.subr.bf16.mxu0 0
  %3218 = vmatpush1.bf16.msra.mxu0 0
  %3219 = vmatprep.subr.bf16.mxu0 0
  %3220 = vmatpush1.bf16.msra.mxu0 0
  %3221 = vmatprep.subr.bf16.mxu0 0
  %3222 = vmatpush1.bf16.msra.mxu0 0
  %3223 = vmatprep.subr.bf16.mxu0 0
  %3224 = vmatpush1.bf16.msra.mxu0 0
  %3225 = vmatprep.subr.bf16.mxu0 0
  %3226 = vmatpush1.bf16.msra.mxu0 %v3204
  %3227 = vmatprep.subr.bf16.mxu0 0
  %3228 = vmatpush1.bf16.msra.mxu0 %v3202
  %3229 = vmatprep.subr.bf16.mxu0 0
  %3230 = vmatpush2.bf16.msra.mxu0 0
  %3231 = vmatprep.subr.bf16.mxu0 0
  %3232 = vmatpush2.bf16.msra.mxu0 0
  %3233 = vmatprep.subr.bf16.mxu0 0
  %3234 = vmatpush2.bf16.msra.mxu0 0
  %3235 = vmatprep.subr.bf16.mxu0 0
  %3236 = vmatpush2.bf16.msra.mxu0 0
  %3237 = vmatprep.subr.bf16.mxu0 0
  %3238 = vmatpush2.bf16.msra.mxu0 0
  %3239 = vmatprep.subr.bf16.mxu0 0
  %3240 = vmatpush2.bf16.msra.mxu0 0
  %3241 = vmatprep.subr.bf16.mxu0 0
  %3242 = vmatpush2.bf16.msra.mxu0 0
  %3243 = vmatprep.subr.bf16.mxu0 0
  %3244 = vmatpush2.bf16.msra.mxu0 0
  %3245 = vmatprep.mubr.bf16.mxu0 0
  %3246 = vmatmul.mubr.bf16.gmra.mxu0 %v3208
  %v3247 = vpop.f32.mrf.mxu0
  %v3248 = vadd.f32 0.0, %v3247
  %v3249 = vpop.f32.mrf.mxu0
  %v3250 = vpop.f32.mrf.mxu0
  %v3251 = vadd.f32 0.0, %v3250
  %v3252 = vpop.f32.mrf.mxu0
  %3253 = vmatprep.mubr.bf16.mxu0 0
  %3254 = vmatmul.mubr.bf16.gmra.mxu0 %v3211
  %v3255 = vpop.f32.mrf.mxu0
  %v3256 = vadd.f32 0.0, %v3255
  %v3257 = vpop.f32.mrf.mxu0
  %v3258 = vpop.f32.mrf.mxu0
  %v3259 = vadd.f32 0.0, %v3258
  %v3260 = vpop.f32.mrf.mxu0
  %3261 = vdwg.mxu0
  %v3262 = vpack.c.bf16 %v2690, %v2690
  %v3263 = vpack.c.bf16 %v3251, %v3248
  %v3264 = vpack.c.bf16 %v3259, %v3256
  %3266 = vrot.lane.b32.xlu0 %v3262, 96
  %v3267 = vpop.permute.xlu0 %3266
  %v3269 = vsel %vm366, %v3263, 0
  %v3272 = vsel %vm366, %v3264, 0
  %v3275 = vsel %vm730, %v3267, 0
  %3277 = vmatprep.subr.bf16.mxu0 0
  %3278 = vmatpush1.bf16.msra.mxu0 0
  %3279 = vmatprep.subr.bf16.mxu0 0
  %3280 = vmatpush1.bf16.msra.mxu0 0
  %3281 = vmatprep.subr.bf16.mxu0 0
  %3282 = vmatpush1.bf16.msra.mxu0 0
  %3283 = vmatprep.subr.bf16.mxu0 0
  %3284 = vmatpush1.bf16.msra.mxu0 0
  %3285 = vmatprep.subr.bf16.mxu0 0
  %3286 = vmatpush1.bf16.msra.mxu0 0
  %3287 = vmatprep.subr.bf16.mxu0 0
  %3288 = vmatpush1.bf16.msra.mxu0 0
  %3289 = vmatprep.subr.bf16.mxu0 0
  %3290 = vmatpush1.bf16.msra.mxu0 0
  %3291 = vmatprep.subr.bf16.mxu0 0
  %3292 = vmatpush1.bf16.msra.mxu0 %v3275
  %3293 = vmatprep.subr.bf16.mxu0 0
  %3294 = vmatpush2.bf16.msra.mxu0 0
  %3295 = vmatprep.subr.bf16.mxu0 0
  %3296 = vmatpush2.bf16.msra.mxu0 0
  %3297 = vmatprep.subr.bf16.mxu0 0
  %3298 = vmatpush2.bf16.msra.mxu0 0
  %3299 = vmatprep.subr.bf16.mxu0 0
  %3300 = vmatpush2.bf16.msra.mxu0 0
  %3301 = vmatprep.subr.bf16.mxu0 0
  %3302 = vmatpush2.bf16.msra.mxu0 0
  %3303 = vmatprep.subr.bf16.mxu0 0
  %3304 = vmatpush2.bf16.msra.mxu0 0
  %3305 = vmatprep.subr.bf16.mxu0 0
  %3306 = vmatpush2.bf16.msra.mxu0 0
  %3307 = vmatprep.subr.bf16.mxu0 0
  %3308 = vmatpush2.bf16.msra.mxu0 0
  %3309 = vmatprep.mubr.bf16.mxu0 0
  %3310 = vmatmul.mubr.bf16.gmra.mxu0 %v3269
  %v3311 = vpop.f32.mrf.mxu0
  %v3312 = vadd.f32 0.0, %v3311
  %v3313 = vpop.f32.mrf.mxu0
  %v3314 = vpop.f32.mrf.mxu0
  %v3315 = vadd.f32 0.0, %v3314
  %v3316 = vpop.f32.mrf.mxu0
  %3317 = vmatprep.mubr.bf16.mxu0 0
  %3318 = vmatmul.mubr.bf16.gmra.mxu0 %v3272
  %v3319 = vpop.f32.mrf.mxu0
  %v3320 = vadd.f32 0.0, %v3319
  %v3321 = vpop.f32.mrf.mxu0
  %v3322 = vpop.f32.mrf.mxu0
  %v3323 = vadd.f32 0.0, %v3322
  %v3324 = vpop.f32.mrf.mxu0
  %3325 = vdwg.mxu0
  %3327 = vrot.lane.b32.xlu0 %v3081, 96
  %v3328 = vpop.permute.xlu0 %3327
  %v3330 = vsel %vm366, %v3082, 0
  %v3333 = vsel %vm366, %v3083, 0
  %v3336 = vsel %vm730, %v3328, 0
  %3338 = vmatprep.subr.bf16.mxu0 0
  %3339 = vmatpush1.bf16.msra.mxu0 0
  %3340 = vmatprep.subr.bf16.mxu0 0
  %3341 = vmatpush1.bf16.msra.mxu0 0
  %3342 = vmatprep.subr.bf16.mxu0 0
  %3343 = vmatpush1.bf16.msra.mxu0 0
  %3344 = vmatprep.subr.bf16.mxu0 0
  %3345 = vmatpush1.bf16.msra.mxu0 0
  %3346 = vmatprep.subr.bf16.mxu0 0
  %3347 = vmatpush1.bf16.msra.mxu0 0
  %3348 = vmatprep.subr.bf16.mxu0 0
  %3349 = vmatpush1.bf16.msra.mxu0 0
  %3350 = vmatprep.subr.bf16.mxu0 0
  %3351 = vmatpush1.bf16.msra.mxu0 0
  %3352 = vmatprep.subr.bf16.mxu0 0
  %3353 = vmatpush1.bf16.msra.mxu0 %v3336
  %3354 = vmatprep.subr.bf16.mxu0 0
  %3355 = vmatpush2.bf16.msra.mxu0 0
  %3356 = vmatprep.subr.bf16.mxu0 0
  %3357 = vmatpush2.bf16.msra.mxu0 0
  %3358 = vmatprep.subr.bf16.mxu0 0
  %3359 = vmatpush2.bf16.msra.mxu0 0
  %3360 = vmatprep.subr.bf16.mxu0 0
  %3361 = vmatpush2.bf16.msra.mxu0 0
  %3362 = vmatprep.subr.bf16.mxu0 0
  %3363 = vmatpush2.bf16.msra.mxu0 0
  %3364 = vmatprep.subr.bf16.mxu0 0
  %3365 = vmatpush2.bf16.msra.mxu0 0
  %3366 = vmatprep.subr.bf16.mxu0 0
  %3367 = vmatpush2.bf16.msra.mxu0 0
  %3368 = vmatprep.subr.bf16.mxu0 0
  %3369 = vmatpush2.bf16.msra.mxu0 0
  %3370 = vmatprep.mubr.bf16.mxu0 0
  %3371 = vmatmul.mubr.bf16.gmra.mxu0 %v3330
  %v3372 = vpop.f32.mrf.mxu0
  %v3373 = vadd.f32 %v3312, %v3372
  %v3374 = vpop.f32.mrf.mxu0
  %v3375 = vpop.f32.mrf.mxu0
  %v3376 = vadd.f32 %v3315, %v3375
  %v3377 = vpop.f32.mrf.mxu0
  %3378 = vmatprep.mubr.bf16.mxu0 0
  %3379 = vmatmul.mubr.bf16.gmra.mxu0 %v3333
  %v3380 = vpop.f32.mrf.mxu0
  %v3381 = vadd.f32 %v3320, %v3380
  %v3382 = vpop.f32.mrf.mxu0
  %v3383 = vpop.f32.mrf.mxu0
  %v3384 = vadd.f32 %v3323, %v3383
  %v3385 = vpop.f32.mrf.mxu0
  %3386 = vdwg.mxu0
  %3387 = vrot.lane.b32.xlu0 %v2907, 112
  %v3388 = vpop.permute.xlu0 %3387
  %3389 = vrot.lane.b32.xlu0 %v2908, 112
  %v3390 = vpop.permute.xlu0 %3389
  %3391 = vrot.lane.b32.xlu0 %v2909, 112
  %v3392 = vpop.permute.xlu0 %3391
  %3393 = vrot.lane.b32.xlu0 %v2910, 112
  %v3394 = vpop.permute.xlu0 %3393
  %v3396 = vsel %vm366, %v3388, 0
  %v3399 = vsel %vm366, %v3390, 0
  %v3402 = vsel %vm366, %v3392, 0
  %v3405 = vsel %vm366, %v3394, 0
  %3407 = vmatprep.subr.bf16.mxu0 0
  %3408 = vmatpush1.bf16.xpose.msra.mxu0 0
  %3409 = vmatprep.subr.bf16.mxu0 0
  %3410 = vmatpush1.bf16.xpose.msra.mxu0 0
  %3411 = vmatprep.subr.bf16.mxu0 0
  %3412 = vmatpush1.bf16.xpose.msra.mxu0 0
  %3413 = vmatprep.subr.bf16.mxu0 0
  %3414 = vmatpush1.bf16.xpose.msra.mxu0 0
  %3415 = vmatprep.subr.bf16.mxu0 0
  %3416 = vmatpush1.bf16.xpose.msra.mxu0 0
  %3417 = vmatprep.subr.bf16.mxu0 0
  %3418 = vmatpush1.bf16.xpose.msra.mxu0 0
  %3419 = vmatprep.subr.bf16.mxu0 0
  %3420 = vmatpush1.bf16.xpose.msra.mxu0 %v3405
  %3421 = vmatprep.subr.bf16.mxu0 0
  %3422 = vmatpush1.bf16.xpose.msra.mxu0 %v3402
  %3423 = vmatprep.subr.bf16.mxu0 0
  %3424 = vmatpush2.bf16.xpose.msra.mxu0 0
  %3425 = vmatprep.subr.bf16.mxu0 0
  %3426 = vmatpush2.bf16.xpose.msra.mxu0 0
  %3427 = vmatprep.subr.bf16.mxu0 0
  %3428 = vmatpush2.bf16.xpose.msra.mxu0 0
  %3429 = vmatprep.subr.bf16.mxu0 0
  %3430 = vmatpush2.bf16.xpose.msra.mxu0 0
  %3431 = vmatprep.subr.bf16.mxu0 0
  %3432 = vmatpush2.bf16.xpose.msra.mxu0 0
  %3433 = vmatprep.subr.bf16.mxu0 0
  %3434 = vmatpush2.bf16.xpose.msra.mxu0 0
  %3435 = vmatprep.subr.bf16.mxu0 0
  %3436 = vmatpush2.bf16.xpose.msra.mxu0 0
  %3437 = vmatprep.subr.bf16.mxu0 0
  %3438 = vmatpush2.bf16.xpose.msra.mxu0 0
  %3439 = vmatprep.mubr.bf16.mxu0 0
  %3440 = vmatmul.mubr.bf16.gmra.mxu0 %v3396
  %v3441 = vpop.f32.mrf.mxu0
  %v3442 = vadd.f32 %v355, %v3441
  %v3443 = vpop.f32.mrf.mxu0
  %v3444 = vpop.f32.mrf.mxu0
  %v3445 = vadd.f32 %v357, %v3444
  %v3446 = vpop.f32.mrf.mxu0
  %3447 = vmatprep.mubr.bf16.mxu0 0
  %3448 = vmatmul.mubr.bf16.gmra.mxu0 %v3399
  %v3449 = vpop.f32.mrf.mxu0
  %v3450 = vadd.f32 %v359, %v3449
  %v3451 = vpop.f32.mrf.mxu0
  %v3452 = vpop.f32.mrf.mxu0
  %v3453 = vadd.f32 %v361, %v3452
  %v3454 = vpop.f32.mrf.mxu0
  %3455 = vdwg.mxu0
  %v3456 = vsel %vm154, %v3442, -inf
  %3457 = vmax.xlane.f32.xlu0 %v3456
  %v3458 = vpop.xlane.xlu0 %3457
  %v3459 = vsel %vm154, %v3445, -inf
  %3460 = vmax.xlane.f32.xlu0 %v3459
  %v3461 = vpop.xlane.xlu0 %3460
  %v3462 = vsel %vm154, %v3450, -inf
  %3463 = vmax.xlane.f32.xlu0 %v3462
  %v3464 = vpop.xlane.xlu0 %3463
  %v3465 = vsel %vm154, %v3453, -inf
  %3466 = vmax.xlane.f32.xlu0 %v3465
  %v3467 = vpop.xlane.xlu0 %3466
  %v3468 = vsub.f32 %v3442, %v3458
  %v3469 = vsub.f32 %v3445, %v3461
  %v3470 = vsub.f32 %v3450, %v3464
  %v3471 = vsub.f32 %v3453, %v3467
  %v3472 = vmul.f32 %v3468, 1.442695
  %v3473 = vpow.pop %v3472
  %v3474 = vmul.f32 %v3469, 1.442695
  %v3475 = vpow.pop %v3474
  %v3476 = vmul.f32 %v3470, 1.442695
  %v3477 = vpow.pop %v3476
  %v3478 = vmul.f32 %v3471, 1.442695
  %v3479 = vpow.pop %v3478
  %v3480 = vsel %vm154, %v3473, 0.0
  %3481 = vadd.xlane.f32.xlu0 %v3480
  %v3482 = vpop.xlane.xlu0 %3481
  %v3483 = vsel %vm154, %v3475, 0.0
  %3484 = vadd.xlane.f32.xlu0 %v3483
  %v3485 = vpop.xlane.xlu0 %3484
  %v3486 = vsel %vm154, %v3477, 0.0
  %3487 = vadd.xlane.f32.xlu0 %v3486
  %v3488 = vpop.xlane.xlu0 %3487
  %v3489 = vsel %vm154, %v3479, 0.0
  %3490 = vadd.xlane.f32.xlu0 %v3489
  %v3491 = vpop.xlane.xlu0 %3490
  %v3492 = vrcp.pop %v3482
  %v3493 = vmul.f32 %v3473, %v3492
  %v3494 = vrcp.pop %v3485
  %v3495 = vmul.f32 %v3475, %v3494
  %v3496 = vrcp.pop %v3488
  %v3497 = vmul.f32 %v3477, %v3496
  %v3498 = vrcp.pop %v3491
  %v3499 = vmul.f32 %v3479, %v3498
  %v3500 = vpack.c.bf16 %v3495, %v3493
  %v3501 = vpack.c.bf16 %v3499, %v3497
  %3502 = vrot.lane.b32.xlu0 %v2909, 80
  %v3503 = vpop.permute.xlu0 %3502
  %3504 = vrot.lane.b32.xlu0 %v2910, 80
  %v3505 = vpop.permute.xlu0 %3504
  %v3509 = vsel %vm154, %v3500, 0
  %v3512 = vsel %vm154, %v3501, 0
  %3514 = vmatprep.subr.bf16.mxu0 0
  %3515 = vmatpush1.bf16.msra.mxu0 0
  %3516 = vmatprep.subr.bf16.mxu0 0
  %3517 = vmatpush1.bf16.msra.mxu0 0
  %3518 = vmatprep.subr.bf16.mxu0 0
  %3519 = vmatpush1.bf16.msra.mxu0 0
  %3520 = vmatprep.subr.bf16.mxu0 0
  %3521 = vmatpush1.bf16.msra.mxu0 0
  %3522 = vmatprep.subr.bf16.mxu0 0
  %3523 = vmatpush1.bf16.msra.mxu0 0
  %3524 = vmatprep.subr.bf16.mxu0 0
  %3525 = vmatpush1.bf16.msra.mxu0 0
  %3526 = vmatprep.subr.bf16.mxu0 0
  %3527 = vmatpush1.bf16.msra.mxu0 %v3505
  %3528 = vmatprep.subr.bf16.mxu0 0
  %3529 = vmatpush1.bf16.msra.mxu0 %v3503
  %3530 = vmatprep.subr.bf16.mxu0 0
  %3531 = vmatpush2.bf16.msra.mxu0 0
  %3532 = vmatprep.subr.bf16.mxu0 0
  %3533 = vmatpush2.bf16.msra.mxu0 0
  %3534 = vmatprep.subr.bf16.mxu0 0
  %3535 = vmatpush2.bf16.msra.mxu0 0
  %3536 = vmatprep.subr.bf16.mxu0 0
  %3537 = vmatpush2.bf16.msra.mxu0 0
  %3538 = vmatprep.subr.bf16.mxu0 0
  %3539 = vmatpush2.bf16.msra.mxu0 0
  %3540 = vmatprep.subr.bf16.mxu0 0
  %3541 = vmatpush2.bf16.msra.mxu0 0
  %3542 = vmatprep.subr.bf16.mxu0 0
  %3543 = vmatpush2.bf16.msra.mxu0 0
  %3544 = vmatprep.subr.bf16.mxu0 0
  %3545 = vmatpush2.bf16.msra.mxu0 0
  %3546 = vmatprep.mubr.bf16.mxu0 0
  %3547 = vmatmul.mubr.bf16.gmra.mxu0 %v3509
  %v3548 = vpop.f32.mrf.mxu0
  %v3549 = vadd.f32 0.0, %v3548
  %v3550 = vpop.f32.mrf.mxu0
  %v3551 = vpop.f32.mrf.mxu0
  %v3552 = vadd.f32 0.0, %v3551
  %v3553 = vpop.f32.mrf.mxu0
  %3554 = vmatprep.mubr.bf16.mxu0 0
  %3555 = vmatmul.mubr.bf16.gmra.mxu0 %v3512
  %v3556 = vpop.f32.mrf.mxu0
  %v3557 = vadd.f32 0.0, %v3556
  %v3558 = vpop.f32.mrf.mxu0
  %v3559 = vpop.f32.mrf.mxu0
  %v3560 = vadd.f32 0.0, %v3559
  %v3561 = vpop.f32.mrf.mxu0
  %3562 = vdwg.mxu0
  %v3563 = vpack.c.bf16 %v2691, %v2691
  %v3564 = vpack.c.bf16 %v3552, %v3549
  %v3565 = vpack.c.bf16 %v3560, %v3557
  %3567 = vrot.lane.b32.xlu0 %v3563, 96
  %v3568 = vpop.permute.xlu0 %3567
  %v3570 = vsel %vm366, %v3564, 0
  %v3573 = vsel %vm366, %v3565, 0
  %v3576 = vsel %vm730, %v3568, 0
  %3578 = vmatprep.subr.bf16.mxu0 0
  %3579 = vmatpush1.bf16.msra.mxu0 0
  %3580 = vmatprep.subr.bf16.mxu0 0
  %3581 = vmatpush1.bf16.msra.mxu0 0
  %3582 = vmatprep.subr.bf16.mxu0 0
  %3583 = vmatpush1.bf16.msra.mxu0 0
  %3584 = vmatprep.subr.bf16.mxu0 0
  %3585 = vmatpush1.bf16.msra.mxu0 0
  %3586 = vmatprep.subr.bf16.mxu0 0
  %3587 = vmatpush1.bf16.msra.mxu0 0
  %3588 = vmatprep.subr.bf16.mxu0 0
  %3589 = vmatpush1.bf16.msra.mxu0 0
  %3590 = vmatprep.subr.bf16.mxu0 0
  %3591 = vmatpush1.bf16.msra.mxu0 0
  %3592 = vmatprep.subr.bf16.mxu0 0
  %3593 = vmatpush1.bf16.msra.mxu0 %v3576
  %3594 = vmatprep.subr.bf16.mxu0 0
  %3595 = vmatpush2.bf16.msra.mxu0 0
  %3596 = vmatprep.subr.bf16.mxu0 0
  %3597 = vmatpush2.bf16.msra.mxu0 0
  %3598 = vmatprep.subr.bf16.mxu0 0
  %3599 = vmatpush2.bf16.msra.mxu0 0
  %3600 = vmatprep.subr.bf16.mxu0 0
  %3601 = vmatpush2.bf16.msra.mxu0 0
  %3602 = vmatprep.subr.bf16.mxu0 0
  %3603 = vmatpush2.bf16.msra.mxu0 0
  %3604 = vmatprep.subr.bf16.mxu0 0
  %3605 = vmatpush2.bf16.msra.mxu0 0
  %3606 = vmatprep.subr.bf16.mxu0 0
  %3607 = vmatpush2.bf16.msra.mxu0 0
  %3608 = vmatprep.subr.bf16.mxu0 0
  %3609 = vmatpush2.bf16.msra.mxu0 0
  %3610 = vmatprep.mubr.bf16.mxu0 0
  %3611 = vmatmul.mubr.bf16.gmra.mxu0 %v3570
  %v3612 = vpop.f32.mrf.mxu0
  %v3613 = vadd.f32 0.0, %v3612
  %v3614 = vpop.f32.mrf.mxu0
  %v3615 = vpop.f32.mrf.mxu0
  %v3616 = vadd.f32 0.0, %v3615
  %v3617 = vpop.f32.mrf.mxu0
  %3618 = vmatprep.mubr.bf16.mxu0 0
  %3619 = vmatmul.mubr.bf16.gmra.mxu0 %v3573
  %v3620 = vpop.f32.mrf.mxu0
  %v3621 = vadd.f32 0.0, %v3620
  %v3622 = vpop.f32.mrf.mxu0
  %v3623 = vpop.f32.mrf.mxu0
  %v3624 = vadd.f32 0.0, %v3623
  %v3625 = vpop.f32.mrf.mxu0
  %3626 = vdwg.mxu0
  %v3627 = vadd.f32 %v3373, %v3613
  %v3628 = vadd.f32 %v3376, %v3616
  %v3629 = vadd.f32 %v3381, %v3621
  %v3630 = vadd.f32 %v3384, %v3624
  %3631 = vrot.lane.b32.xlu0 %v2907, 104
  %v3632 = vpop.permute.xlu0 %3631
  %3633 = vrot.lane.b32.xlu0 %v2908, 104
  %v3634 = vpop.permute.xlu0 %3633
  %3635 = vrot.lane.b32.xlu0 %v2909, 104
  %v3636 = vpop.permute.xlu0 %3635
  %3637 = vrot.lane.b32.xlu0 %v2910, 104
  %v3638 = vpop.permute.xlu0 %3637
  %v3640 = vsel %vm366, %v3632, 0
  %v3643 = vsel %vm366, %v3634, 0
  %v3646 = vsel %vm366, %v3636, 0
  %v3649 = vsel %vm366, %v3638, 0
  %3651 = vmatprep.subr.bf16.mxu0 0
  %3652 = vmatpush1.bf16.xpose.msra.mxu0 0
  %3653 = vmatprep.subr.bf16.mxu0 0
  %3654 = vmatpush1.bf16.xpose.msra.mxu0 0
  %3655 = vmatprep.subr.bf16.mxu0 0
  %3656 = vmatpush1.bf16.xpose.msra.mxu0 0
  %3657 = vmatprep.subr.bf16.mxu0 0
  %3658 = vmatpush1.bf16.xpose.msra.mxu0 0
  %3659 = vmatprep.subr.bf16.mxu0 0
  %3660 = vmatpush1.bf16.xpose.msra.mxu0 0
  %3661 = vmatprep.subr.bf16.mxu0 0
  %3662 = vmatpush1.bf16.xpose.msra.mxu0 0
  %3663 = vmatprep.subr.bf16.mxu0 0
  %3664 = vmatpush1.bf16.xpose.msra.mxu0 %v3649
  %3665 = vmatprep.subr.bf16.mxu0 0
  %3666 = vmatpush1.bf16.xpose.msra.mxu0 %v3646
  %3667 = vmatprep.subr.bf16.mxu0 0
  %3668 = vmatpush2.bf16.xpose.msra.mxu0 0
  %3669 = vmatprep.subr.bf16.mxu0 0
  %3670 = vmatpush2.bf16.xpose.msra.mxu0 0
  %3671 = vmatprep.subr.bf16.mxu0 0
  %3672 = vmatpush2.bf16.xpose.msra.mxu0 0
  %3673 = vmatprep.subr.bf16.mxu0 0
  %3674 = vmatpush2.bf16.xpose.msra.mxu0 0
  %3675 = vmatprep.subr.bf16.mxu0 0
  %3676 = vmatpush2.bf16.xpose.msra.mxu0 0
  %3677 = vmatprep.subr.bf16.mxu0 0
  %3678 = vmatpush2.bf16.xpose.msra.mxu0 0
  %3679 = vmatprep.subr.bf16.mxu0 0
  %3680 = vmatpush2.bf16.xpose.msra.mxu0 0
  %3681 = vmatprep.subr.bf16.mxu0 0
  %3682 = vmatpush2.bf16.xpose.msra.mxu0 0
  %3683 = vmatprep.mubr.bf16.mxu0 0
  %3684 = vmatmul.mubr.bf16.gmra.mxu0 %v3640
  %v3685 = vpop.f32.mrf.mxu0
  %v3686 = vadd.f32 %v355, %v3685
  %v3687 = vpop.f32.mrf.mxu0
  %v3688 = vpop.f32.mrf.mxu0
  %v3689 = vadd.f32 %v357, %v3688
  %v3690 = vpop.f32.mrf.mxu0
  %3691 = vmatprep.mubr.bf16.mxu0 0
  %3692 = vmatmul.mubr.bf16.gmra.mxu0 %v3643
  %v3693 = vpop.f32.mrf.mxu0
  %v3694 = vadd.f32 %v359, %v3693
  %v3695 = vpop.f32.mrf.mxu0
  %v3696 = vpop.f32.mrf.mxu0
  %v3697 = vadd.f32 %v361, %v3696
  %v3698 = vpop.f32.mrf.mxu0
  %3699 = vdwg.mxu0
  %v3700 = vsel %vm154, %v3686, -inf
  %3701 = vmax.xlane.f32.xlu0 %v3700
  %v3702 = vpop.xlane.xlu0 %3701
  %v3703 = vsel %vm154, %v3689, -inf
  %3704 = vmax.xlane.f32.xlu0 %v3703
  %v3705 = vpop.xlane.xlu0 %3704
  %v3706 = vsel %vm154, %v3694, -inf
  %3707 = vmax.xlane.f32.xlu0 %v3706
  %v3708 = vpop.xlane.xlu0 %3707
  %v3709 = vsel %vm154, %v3697, -inf
  %3710 = vmax.xlane.f32.xlu0 %v3709
  %v3711 = vpop.xlane.xlu0 %3710
  %v3712 = vsub.f32 %v3686, %v3702
  %v3713 = vsub.f32 %v3689, %v3705
  %v3714 = vsub.f32 %v3694, %v3708
  %v3715 = vsub.f32 %v3697, %v3711
  %v3716 = vmul.f32 %v3712, 1.442695
  %v3717 = vpow.pop %v3716
  %v3718 = vmul.f32 %v3713, 1.442695
  %v3719 = vpow.pop %v3718
  %v3720 = vmul.f32 %v3714, 1.442695
  %v3721 = vpow.pop %v3720
  %v3722 = vmul.f32 %v3715, 1.442695
  %v3723 = vpow.pop %v3722
  %v3724 = vsel %vm154, %v3717, 0.0
  %3725 = vadd.xlane.f32.xlu0 %v3724
  %v3726 = vpop.xlane.xlu0 %3725
  %v3727 = vsel %vm154, %v3719, 0.0
  %3728 = vadd.xlane.f32.xlu0 %v3727
  %v3729 = vpop.xlane.xlu0 %3728
  %v3730 = vsel %vm154, %v3721, 0.0
  %3731 = vadd.xlane.f32.xlu0 %v3730
  %v3732 = vpop.xlane.xlu0 %3731
  %v3733 = vsel %vm154, %v3723, 0.0
  %3734 = vadd.xlane.f32.xlu0 %v3733
  %v3735 = vpop.xlane.xlu0 %3734
  %v3736 = vrcp.pop %v3726
  %v3737 = vmul.f32 %v3717, %v3736
  %v3738 = vrcp.pop %v3729
  %v3739 = vmul.f32 %v3719, %v3738
  %v3740 = vrcp.pop %v3732
  %v3741 = vmul.f32 %v3721, %v3740
  %v3742 = vrcp.pop %v3735
  %v3743 = vmul.f32 %v3723, %v3742
  %v3744 = vpack.c.bf16 %v3739, %v3737
  %v3745 = vpack.c.bf16 %v3743, %v3741
  %3746 = vrot.lane.b32.xlu0 %v2909, 72
  %v3747 = vpop.permute.xlu0 %3746
  %3748 = vrot.lane.b32.xlu0 %v2910, 72
  %v3749 = vpop.permute.xlu0 %3748
  %v3753 = vsel %vm154, %v3744, 0
  %v3756 = vsel %vm154, %v3745, 0
  %3758 = vmatprep.subr.bf16.mxu0 0
  %3759 = vmatpush1.bf16.msra.mxu0 0
  %3760 = vmatprep.subr.bf16.mxu0 0
  %3761 = vmatpush1.bf16.msra.mxu0 0
  %3762 = vmatprep.subr.bf16.mxu0 0
  %3763 = vmatpush1.bf16.msra.mxu0 0
  %3764 = vmatprep.subr.bf16.mxu0 0
  %3765 = vmatpush1.bf16.msra.mxu0 0
  %3766 = vmatprep.subr.bf16.mxu0 0
  %3767 = vmatpush1.bf16.msra.mxu0 0
  %3768 = vmatprep.subr.bf16.mxu0 0
  %3769 = vmatpush1.bf16.msra.mxu0 0
  %3770 = vmatprep.subr.bf16.mxu0 0
  %3771 = vmatpush1.bf16.msra.mxu0 %v3749
  %3772 = vmatprep.subr.bf16.mxu0 0
  %3773 = vmatpush1.bf16.msra.mxu0 %v3747
  %3774 = vmatprep.subr.bf16.mxu0 0
  %3775 = vmatpush2.bf16.msra.mxu0 0
  %3776 = vmatprep.subr.bf16.mxu0 0
  %3777 = vmatpush2.bf16.msra.mxu0 0
  %3778 = vmatprep.subr.bf16.mxu0 0
  %3779 = vmatpush2.bf16.msra.mxu0 0
  %3780 = vmatprep.subr.bf16.mxu0 0
  %3781 = vmatpush2.bf16.msra.mxu0 0
  %3782 = vmatprep.subr.bf16.mxu0 0
  %3783 = vmatpush2.bf16.msra.mxu0 0
  %3784 = vmatprep.subr.bf16.mxu0 0
  %3785 = vmatpush2.bf16.msra.mxu0 0
  %3786 = vmatprep.subr.bf16.mxu0 0
  %3787 = vmatpush2.bf16.msra.mxu0 0
  %3788 = vmatprep.subr.bf16.mxu0 0
  %3789 = vmatpush2.bf16.msra.mxu0 0
  %3790 = vmatprep.mubr.bf16.mxu0 0
  %3791 = vmatmul.mubr.bf16.gmra.mxu0 %v3753
  %v3792 = vpop.f32.mrf.mxu0
  %v3793 = vadd.f32 0.0, %v3792
  %v3794 = vpop.f32.mrf.mxu0
  %v3795 = vpop.f32.mrf.mxu0
  %v3796 = vadd.f32 0.0, %v3795
  %v3797 = vpop.f32.mrf.mxu0
  %3798 = vmatprep.mubr.bf16.mxu0 0
  %3799 = vmatmul.mubr.bf16.gmra.mxu0 %v3756
  %v3800 = vpop.f32.mrf.mxu0
  %v3801 = vadd.f32 0.0, %v3800
  %v3802 = vpop.f32.mrf.mxu0
  %v3803 = vpop.f32.mrf.mxu0
  %v3804 = vadd.f32 0.0, %v3803
  %v3805 = vpop.f32.mrf.mxu0
  %3806 = vdwg.mxu0
  %v3807 = vpack.c.bf16 %v2692, %v2692
  %v3808 = vpack.c.bf16 %v3796, %v3793
  %v3809 = vpack.c.bf16 %v3804, %v3801
  %3811 = vrot.lane.b32.xlu0 %v3807, 96
  %v3812 = vpop.permute.xlu0 %3811
  %v3814 = vsel %vm366, %v3808, 0
  %v3817 = vsel %vm366, %v3809, 0
  %v3820 = vsel %vm730, %v3812, 0
  %3822 = vmatprep.subr.bf16.mxu0 0
  %3823 = vmatpush1.bf16.msra.mxu0 0
  %3824 = vmatprep.subr.bf16.mxu0 0
  %3825 = vmatpush1.bf16.msra.mxu0 0
  %3826 = vmatprep.subr.bf16.mxu0 0
  %3827 = vmatpush1.bf16.msra.mxu0 0
  %3828 = vmatprep.subr.bf16.mxu0 0
  %3829 = vmatpush1.bf16.msra.mxu0 0
  %3830 = vmatprep.subr.bf16.mxu0 0
  %3831 = vmatpush1.bf16.msra.mxu0 0
  %3832 = vmatprep.subr.bf16.mxu0 0
  %3833 = vmatpush1.bf16.msra.mxu0 0
  %3834 = vmatprep.subr.bf16.mxu0 0
  %3835 = vmatpush1.bf16.msra.mxu0 0
  %3836 = vmatprep.subr.bf16.mxu0 0
  %3837 = vmatpush1.bf16.msra.mxu0 %v3820
  %3838 = vmatprep.subr.bf16.mxu0 0
  %3839 = vmatpush2.bf16.msra.mxu0 0
  %3840 = vmatprep.subr.bf16.mxu0 0
  %3841 = vmatpush2.bf16.msra.mxu0 0
  %3842 = vmatprep.subr.bf16.mxu0 0
  %3843 = vmatpush2.bf16.msra.mxu0 0
  %3844 = vmatprep.subr.bf16.mxu0 0
  %3845 = vmatpush2.bf16.msra.mxu0 0
  %3846 = vmatprep.subr.bf16.mxu0 0
  %3847 = vmatpush2.bf16.msra.mxu0 0
  %3848 = vmatprep.subr.bf16.mxu0 0
  %3849 = vmatpush2.bf16.msra.mxu0 0
  %3850 = vmatprep.subr.bf16.mxu0 0
  %3851 = vmatpush2.bf16.msra.mxu0 0
  %3852 = vmatprep.subr.bf16.mxu0 0
  %3853 = vmatpush2.bf16.msra.mxu0 0
  %3854 = vmatprep.mubr.bf16.mxu0 0
  %3855 = vmatmul.mubr.bf16.gmra.mxu0 %v3814
  %v3856 = vpop.f32.mrf.mxu0
  %v3857 = vadd.f32 0.0, %v3856
  %v3858 = vpop.f32.mrf.mxu0
  %v3859 = vpop.f32.mrf.mxu0
  %v3860 = vadd.f32 0.0, %v3859
  %v3861 = vpop.f32.mrf.mxu0
  %3862 = vmatprep.mubr.bf16.mxu0 0
  %3863 = vmatmul.mubr.bf16.gmra.mxu0 %v3817
  %v3864 = vpop.f32.mrf.mxu0
  %v3865 = vadd.f32 0.0, %v3864
  %v3866 = vpop.f32.mrf.mxu0
  %v3867 = vpop.f32.mrf.mxu0
  %v3868 = vadd.f32 0.0, %v3867
  %v3869 = vpop.f32.mrf.mxu0
  %3870 = vdwg.mxu0
  %v3871 = vadd.f32 %v3627, %v3857
  %v3872 = vadd.f32 %v3628, %v3860
  %v3873 = vadd.f32 %v3629, %v3865
  %v3874 = vadd.f32 %v3630, %v3868
  %v3875 = vadd.f32 %v2677, %v3871
  %v3876 = vadd.f32 %v2678, %v3872
  %v3877 = vadd.f32 %v2679, %v3873
  %v3878 = vadd.f32 %v2680, %v3874
  %v3879 = vadd.f32 %v3875, %v2683
  %v3880 = vadd.f32 %v3876, %v2683
  %v3881 = vadd.f32 %v3877, %v2683
  %v3882 = vadd.f32 %v3878, %v2683
  %v3883 = vsel %vm154, %v3879, 0.0
  %3884 = vadd.xlane.f32.xlu0 %v3883
  %v3885 = vpop.xlane.xlu0 %3884
  %v3886 = vsel %vm154, %v3880, 0.0
  %3887 = vadd.xlane.f32.xlu0 %v3886
  %v3888 = vpop.xlane.xlu0 %3887
  %v3889 = vsel %vm154, %v3881, 0.0
  %3890 = vadd.xlane.f32.xlu0 %v3889
  %v3891 = vpop.xlane.xlu0 %3890
  %v3892 = vsel %vm154, %v3882, 0.0
  %3893 = vadd.xlane.f32.xlu0 %v3892
  %v3894 = vpop.xlane.xlu0 %3893
  %v3895 = vmul.f32 %v3885, %v167
  %v3896 = vmul.f32 %v3888, %v167
  %v3897 = vmul.f32 %v3891, %v167
  %v3898 = vmul.f32 %v3894, %v167
  %v3899 = vsub.f32 %v3879, %v3895
  %v3900 = vsub.f32 %v3880, %v3896
  %v3901 = vsub.f32 %v3881, %v3897
  %v3902 = vsub.f32 %v3882, %v3898
  %v3903 = vmul.f32 %v3899, %v3899
  %v3904 = vmul.f32 %v3900, %v3900
  %v3905 = vmul.f32 %v3901, %v3901
  %v3906 = vmul.f32 %v3902, %v3902
  %v3907 = vsel %vm154, %v3903, 0.0
  %3908 = vadd.xlane.f32.xlu0 %v3907
  %v3909 = vpop.xlane.xlu0 %3908
  %v3910 = vsel %vm154, %v3904, 0.0
  %3911 = vadd.xlane.f32.xlu0 %v3910
  %v3912 = vpop.xlane.xlu0 %3911
  %v3913 = vsel %vm154, %v3905, 0.0
  %3914 = vadd.xlane.f32.xlu0 %v3913
  %v3915 = vpop.xlane.xlu0 %3914
  %v3916 = vsel %vm154, %v3906, 0.0
  %3917 = vadd.xlane.f32.xlu0 %v3916
  %v3918 = vpop.xlane.xlu0 %3917
  %v3919 = vmul.f32 %v3909, %v167
  %v3920 = vmul.f32 %v3912, %v167
  %v3921 = vmul.f32 %v3915, %v167
  %v3922 = vmul.f32 %v3918, %v167
  %v3923 = vadd.f32 %v3919, 1e-05
  %v3924 = vadd.f32 %v3920, 1e-05
  %v3925 = vadd.f32 %v3921, 1e-05
  %v3926 = vadd.f32 %v3922, 1e-05
  %v3927 = vrsqrt.pop %v3923
  %v3928 = vrsqrt.pop %v3924
  %v3929 = vrsqrt.pop %v3925
  %v3930 = vrsqrt.pop %v3926
  %v3931 = vmul.f32 %v3899, %v3927
  %v3932 = vmul.f32 %v3900, %v3928
  %v3933 = vmul.f32 %v3901, %v3929
  %v3934 = vmul.f32 %v3902, %v3930
  %v3935 = vpack.c.bf16 %v3932, %v3931
  %v3936 = vpack.c.bf16 %v3934, %v3933
  %v3937 = vpack.c.bf16 %v2694, %v2693
  %v3938 = vpack.c.bf16 %v2696, %v2695
  %v3940 = vsel %vm154, %v3935, 0
  %v3943 = vsel %vm154, %v3936, 0
  %3945 = vmatprep.subr.bf16.mxu0 0
  %3946 = vmatpush1.bf16.msra.mxu0 0
  %3947 = vmatprep.subr.bf16.mxu0 0
  %3948 = vmatpush1.bf16.msra.mxu0 0
  %3949 = vmatprep.subr.bf16.mxu0 0
  %3950 = vmatpush1.bf16.msra.mxu0 0
  %3951 = vmatprep.subr.bf16.mxu0 0
  %3952 = vmatpush1.bf16.msra.mxu0 0
  %3953 = vmatprep.subr.bf16.mxu0 0
  %3954 = vmatpush1.bf16.msra.mxu0 0
  %3955 = vmatprep.subr.bf16.mxu0 0
  %3956 = vmatpush1.bf16.msra.mxu0 0
  %3957 = vmatprep.subr.bf16.mxu0 0
  %3958 = vmatpush1.bf16.msra.mxu0 %v3938
  %3959 = vmatprep.subr.bf16.mxu0 0
  %3960 = vmatpush1.bf16.msra.mxu0 %v3937
  %3961 = vmatprep.subr.bf16.mxu0 0
  %3962 = vmatpush2.bf16.msra.mxu0 0
  %3963 = vmatprep.subr.bf16.mxu0 0
  %3964 = vmatpush2.bf16.msra.mxu0 0
  %3965 = vmatprep.subr.bf16.mxu0 0
  %3966 = vmatpush2.bf16.msra.mxu0 0
  %3967 = vmatprep.subr.bf16.mxu0 0
  %3968 = vmatpush2.bf16.msra.mxu0 0
  %3969 = vmatprep.subr.bf16.mxu0 0
  %3970 = vmatpush2.bf16.msra.mxu0 0
  %3971 = vmatprep.subr.bf16.mxu0 0
  %3972 = vmatpush2.bf16.msra.mxu0 0
  %3973 = vmatprep.subr.bf16.mxu0 0
  %3974 = vmatpush2.bf16.msra.mxu0 0
  %3975 = vmatprep.subr.bf16.mxu0 0
  %3976 = vmatpush2.bf16.msra.mxu0 0
  %3977 = vmatprep.mubr.bf16.mxu0 0
  %3978 = vmatmul.mubr.bf16.gmra.mxu0 %v3940
  %v3979 = vpop.f32.mrf.mxu0
  %v3980 = vadd.f32 %v2684, %v3979
  %v3981 = vpop.f32.mrf.mxu0
  %v3982 = vpop.f32.mrf.mxu0
  %v3983 = vadd.f32 %v2684, %v3982
  %v3984 = vpop.f32.mrf.mxu0
  %3985 = vmatprep.mubr.bf16.mxu0 0
  %3986 = vmatmul.mubr.bf16.gmra.mxu0 %v3943
  %v3987 = vpop.f32.mrf.mxu0
  %v3988 = vadd.f32 %v2684, %v3987
  %v3989 = vpop.f32.mrf.mxu0
  %v3990 = vpop.f32.mrf.mxu0
  %v3991 = vadd.f32 %v2684, %v3990
  %v3992 = vpop.f32.mrf.mxu0
  %3993 = vdwg.mxu0
  %v3994 = vmul.f32 %v3980, 0.35355338
  %v3995 = vmul.f32 %v3983, 0.35355338
  %v3996 = vmul.f32 %v3988, 0.35355338
  %v3997 = vmul.f32 %v3991, 0.35355338
  %v3998 = vpack.c.bf16 %v3995, %v3994
  %v3999 = vpack.c.bf16 %v3997, %v3996
  %v4000 = vpack.c.bf16 %v3983, %v3980
  %v4001 = vpack.c.bf16 %v3991, %v3988
  %4004 = vrot.lane.b32.xlu0 %v4000, 96
  %v4005 = vpop.permute.xlu0 %4004
  %4006 = vrot.lane.b32.xlu0 %v4001, 96
  %v4007 = vpop.permute.xlu0 %4006
  %v4009 = vsel %vm366, %v3998, 0
  %v4012 = vsel %vm366, %v3999, 0
  %v4015 = vsel %vm366, %v4005, 0
  %v4018 = vsel %vm366, %v4007, 0
  %4020 = vmatprep.subr.bf16.mxu0 0
  %4021 = vmatpush1.bf16.xpose.msra.mxu0 0
  %4022 = vmatprep.subr.bf16.mxu0 0
  %4023 = vmatpush1.bf16.xpose.msra.mxu0 0
  %4024 = vmatprep.subr.bf16.mxu0 0
  %4025 = vmatpush1.bf16.xpose.msra.mxu0 0
  %4026 = vmatprep.subr.bf16.mxu0 0
  %4027 = vmatpush1.bf16.xpose.msra.mxu0 0
  %4028 = vmatprep.subr.bf16.mxu0 0
  %4029 = vmatpush1.bf16.xpose.msra.mxu0 0
  %4030 = vmatprep.subr.bf16.mxu0 0
  %4031 = vmatpush1.bf16.xpose.msra.mxu0 0
  %4032 = vmatprep.subr.bf16.mxu0 0
  %4033 = vmatpush1.bf16.xpose.msra.mxu0 %v4018
  %4034 = vmatprep.subr.bf16.mxu0 0
  %4035 = vmatpush1.bf16.xpose.msra.mxu0 %v4015
  %4036 = vmatprep.subr.bf16.mxu0 0
  %4037 = vmatpush2.bf16.xpose.msra.mxu0 0
  %4038 = vmatprep.subr.bf16.mxu0 0
  %4039 = vmatpush2.bf16.xpose.msra.mxu0 0
  %4040 = vmatprep.subr.bf16.mxu0 0
  %4041 = vmatpush2.bf16.xpose.msra.mxu0 0
  %4042 = vmatprep.subr.bf16.mxu0 0
  %4043 = vmatpush2.bf16.xpose.msra.mxu0 0
  %4044 = vmatprep.subr.bf16.mxu0 0
  %4045 = vmatpush2.bf16.xpose.msra.mxu0 0
  %4046 = vmatprep.subr.bf16.mxu0 0
  %4047 = vmatpush2.bf16.xpose.msra.mxu0 0
  %4048 = vmatprep.subr.bf16.mxu0 0
  %4049 = vmatpush2.bf16.xpose.msra.mxu0 0
  %4050 = vmatprep.subr.bf16.mxu0 0
  %4051 = vmatpush2.bf16.xpose.msra.mxu0 0
  %4052 = vmatprep.mubr.bf16.mxu0 0
  %4053 = vmatmul.mubr.bf16.gmra.mxu0 %v4009
  %v4054 = vpop.f32.mrf.mxu0
  %v4055 = vadd.f32 %v355, %v4054
  %v4056 = vpop.f32.mrf.mxu0
  %v4057 = vpop.f32.mrf.mxu0
  %v4058 = vadd.f32 %v357, %v4057
  %v4059 = vpop.f32.mrf.mxu0
  %4060 = vmatprep.mubr.bf16.mxu0 0
  %4061 = vmatmul.mubr.bf16.gmra.mxu0 %v4012
  %v4062 = vpop.f32.mrf.mxu0
  %v4063 = vadd.f32 %v359, %v4062
  %v4064 = vpop.f32.mrf.mxu0
  %v4065 = vpop.f32.mrf.mxu0
  %v4066 = vadd.f32 %v361, %v4065
  %v4067 = vpop.f32.mrf.mxu0
  %4068 = vdwg.mxu0
  %v4069 = vsel %vm154, %v4055, -inf
  %4070 = vmax.xlane.f32.xlu0 %v4069
  %v4071 = vpop.xlane.xlu0 %4070
  %v4072 = vsel %vm154, %v4058, -inf
  %4073 = vmax.xlane.f32.xlu0 %v4072
  %v4074 = vpop.xlane.xlu0 %4073
  %v4075 = vsel %vm154, %v4063, -inf
  %4076 = vmax.xlane.f32.xlu0 %v4075
  %v4077 = vpop.xlane.xlu0 %4076
  %v4078 = vsel %vm154, %v4066, -inf
  %4079 = vmax.xlane.f32.xlu0 %v4078
  %v4080 = vpop.xlane.xlu0 %4079
  %v4081 = vsub.f32 %v4055, %v4071
  %v4082 = vsub.f32 %v4058, %v4074
  %v4083 = vsub.f32 %v4063, %v4077
  %v4084 = vsub.f32 %v4066, %v4080
  %v4085 = vmul.f32 %v4081, 1.442695
  %v4086 = vpow.pop %v4085
  %v4087 = vmul.f32 %v4082, 1.442695
  %v4088 = vpow.pop %v4087
  %v4089 = vmul.f32 %v4083, 1.442695
  %v4090 = vpow.pop %v4089
  %v4091 = vmul.f32 %v4084, 1.442695
  %v4092 = vpow.pop %v4091
  %v4093 = vsel %vm154, %v4086, 0.0
  %4094 = vadd.xlane.f32.xlu0 %v4093
  %v4095 = vpop.xlane.xlu0 %4094
  %v4096 = vsel %vm154, %v4088, 0.0
  %4097 = vadd.xlane.f32.xlu0 %v4096
  %v4098 = vpop.xlane.xlu0 %4097
  %v4099 = vsel %vm154, %v4090, 0.0
  %4100 = vadd.xlane.f32.xlu0 %v4099
  %v4101 = vpop.xlane.xlu0 %4100
  %v4102 = vsel %vm154, %v4092, 0.0
  %4103 = vadd.xlane.f32.xlu0 %v4102
  %v4104 = vpop.xlane.xlu0 %4103
  %v4105 = vrcp.pop %v4095
  %v4106 = vmul.f32 %v4086, %v4105
  %v4107 = vrcp.pop %v4098
  %v4108 = vmul.f32 %v4088, %v4107
  %v4109 = vrcp.pop %v4101
  %v4110 = vmul.f32 %v4090, %v4109
  %v4111 = vrcp.pop %v4104
  %v4112 = vmul.f32 %v4092, %v4111
  %v4113 = vpack.c.bf16 %v4108, %v4106
  %v4114 = vpack.c.bf16 %v4112, %v4110
  %4115 = vrot.lane.b32.xlu0 %v4000, 64
  %v4116 = vpop.permute.xlu0 %4115
  %4117 = vrot.lane.b32.xlu0 %v4001, 64
  %v4118 = vpop.permute.xlu0 %4117
  %v4122 = vsel %vm154, %v4113, 0
  %v4125 = vsel %vm154, %v4114, 0
  %4127 = vmatprep.subr.bf16.mxu0 0
  %4128 = vmatpush1.bf16.msra.mxu0 0
  %4129 = vmatprep.subr.bf16.mxu0 0
  %4130 = vmatpush1.bf16.msra.mxu0 0
  %4131 = vmatprep.subr.bf16.mxu0 0
  %4132 = vmatpush1.bf16.msra.mxu0 0
  %4133 = vmatprep.subr.bf16.mxu0 0
  %4134 = vmatpush1.bf16.msra.mxu0 0
  %4135 = vmatprep.subr.bf16.mxu0 0
  %4136 = vmatpush1.bf16.msra.mxu0 0
  %4137 = vmatprep.subr.bf16.mxu0 0
  %4138 = vmatpush1.bf16.msra.mxu0 0
  %4139 = vmatprep.subr.bf16.mxu0 0
  %4140 = vmatpush1.bf16.msra.mxu0 %v4118
  %4141 = vmatprep.subr.bf16.mxu0 0
  %4142 = vmatpush1.bf16.msra.mxu0 %v4116
  %4143 = vmatprep.subr.bf16.mxu0 0
  %4144 = vmatpush2.bf16.msra.mxu0 0
  %4145 = vmatprep.subr.bf16.mxu0 0
  %4146 = vmatpush2.bf16.msra.mxu0 0
  %4147 = vmatprep.subr.bf16.mxu0 0
  %4148 = vmatpush2.bf16.msra.mxu0 0
  %4149 = vmatprep.subr.bf16.mxu0 0
  %4150 = vmatpush2.bf16.msra.mxu0 0
  %4151 = vmatprep.subr.bf16.mxu0 0
  %4152 = vmatpush2.bf16.msra.mxu0 0
  %4153 = vmatprep.subr.bf16.mxu0 0
  %4154 = vmatpush2.bf16.msra.mxu0 0
  %4155 = vmatprep.subr.bf16.mxu0 0
  %4156 = vmatpush2.bf16.msra.mxu0 0
  %4157 = vmatprep.subr.bf16.mxu0 0
  %4158 = vmatpush2.bf16.msra.mxu0 0
  %4159 = vmatprep.mubr.bf16.mxu0 0
  %4160 = vmatmul.mubr.bf16.gmra.mxu0 %v4122
  %v4161 = vpop.f32.mrf.mxu0
  %v4162 = vadd.f32 0.0, %v4161
  %v4163 = vpop.f32.mrf.mxu0
  %v4164 = vpop.f32.mrf.mxu0
  %v4165 = vadd.f32 0.0, %v4164
  %v4166 = vpop.f32.mrf.mxu0
  %4167 = vmatprep.mubr.bf16.mxu0 0
  %4168 = vmatmul.mubr.bf16.gmra.mxu0 %v4125
  %v4169 = vpop.f32.mrf.mxu0
  %v4170 = vadd.f32 0.0, %v4169
  %v4171 = vpop.f32.mrf.mxu0
  %v4172 = vpop.f32.mrf.mxu0
  %v4173 = vadd.f32 0.0, %v4172
  %v4174 = vpop.f32.mrf.mxu0
  %4175 = vdwg.mxu0
  %v4176 = vpack.c.bf16 %v4165, %v4162
  %v4177 = vpack.c.bf16 %v4173, %v4170
  %4180 = vrot.lane.b32.xlu0 %v3998, 120
  %v4181 = vpop.permute.xlu0 %4180
  %4182 = vrot.lane.b32.xlu0 %v3999, 120
  %v4183 = vpop.permute.xlu0 %4182
  %4184 = vrot.lane.b32.xlu0 %v4000, 88
  %v4185 = vpop.permute.xlu0 %4184
  %4186 = vrot.lane.b32.xlu0 %v4001, 88
  %v4187 = vpop.permute.xlu0 %4186
  %v4189 = vsel %vm366, %v4181, 0
  %v4192 = vsel %vm366, %v4183, 0
  %v4195 = vsel %vm366, %v4185, 0
  %v4198 = vsel %vm366, %v4187, 0
  %4200 = vmatprep.subr.bf16.mxu0 0
  %4201 = vmatpush1.bf16.xpose.msra.mxu0 0
  %4202 = vmatprep.subr.bf16.mxu0 0
  %4203 = vmatpush1.bf16.xpose.msra.mxu0 0
  %4204 = vmatprep.subr.bf16.mxu0 0
  %4205 = vmatpush1.bf16.xpose.msra.mxu0 0
  %4206 = vmatprep.subr.bf16.mxu0 0
  %4207 = vmatpush1.bf16.xpose.msra.mxu0 0
  %4208 = vmatprep.subr.bf16.mxu0 0
  %4209 = vmatpush1.bf16.xpose.msra.mxu0 0
  %4210 = vmatprep.subr.bf16.mxu0 0
  %4211 = vmatpush1.bf16.xpose.msra.mxu0 0
  %4212 = vmatprep.subr.bf16.mxu0 0
  %4213 = vmatpush1.bf16.xpose.msra.mxu0 %v4198
  %4214 = vmatprep.subr.bf16.mxu0 0
  %4215 = vmatpush1.bf16.xpose.msra.mxu0 %v4195
  %4216 = vmatprep.subr.bf16.mxu0 0
  %4217 = vmatpush2.bf16.xpose.msra.mxu0 0
  %4218 = vmatprep.subr.bf16.mxu0 0
  %4219 = vmatpush2.bf16.xpose.msra.mxu0 0
  %4220 = vmatprep.subr.bf16.mxu0 0
  %4221 = vmatpush2.bf16.xpose.msra.mxu0 0
  %4222 = vmatprep.subr.bf16.mxu0 0
  %4223 = vmatpush2.bf16.xpose.msra.mxu0 0
  %4224 = vmatprep.subr.bf16.mxu0 0
  %4225 = vmatpush2.bf16.xpose.msra.mxu0 0
  %4226 = vmatprep.subr.bf16.mxu0 0
  %4227 = vmatpush2.bf16.xpose.msra.mxu0 0
  %4228 = vmatprep.subr.bf16.mxu0 0
  %4229 = vmatpush2.bf16.xpose.msra.mxu0 0
  %4230 = vmatprep.subr.bf16.mxu0 0
  %4231 = vmatpush2.bf16.xpose.msra.mxu0 0
  %4232 = vmatprep.mubr.bf16.mxu0 0
  %4233 = vmatmul.mubr.bf16.gmra.mxu0 %v4189
  %v4234 = vpop.f32.mrf.mxu0
  %v4235 = vadd.f32 %v355, %v4234
  %v4236 = vpop.f32.mrf.mxu0
  %v4237 = vpop.f32.mrf.mxu0
  %v4238 = vadd.f32 %v357, %v4237
  %v4239 = vpop.f32.mrf.mxu0
  %4240 = vmatprep.mubr.bf16.mxu0 0
  %4241 = vmatmul.mubr.bf16.gmra.mxu0 %v4192
  %v4242 = vpop.f32.mrf.mxu0
  %v4243 = vadd.f32 %v359, %v4242
  %v4244 = vpop.f32.mrf.mxu0
  %v4245 = vpop.f32.mrf.mxu0
  %v4246 = vadd.f32 %v361, %v4245
  %v4247 = vpop.f32.mrf.mxu0
  %4248 = vdwg.mxu0
  %v4249 = vsel %vm154, %v4235, -inf
  %4250 = vmax.xlane.f32.xlu0 %v4249
  %v4251 = vpop.xlane.xlu0 %4250
  %v4252 = vsel %vm154, %v4238, -inf
  %4253 = vmax.xlane.f32.xlu0 %v4252
  %v4254 = vpop.xlane.xlu0 %4253
  %v4255 = vsel %vm154, %v4243, -inf
  %4256 = vmax.xlane.f32.xlu0 %v4255
  %v4257 = vpop.xlane.xlu0 %4256
  %v4258 = vsel %vm154, %v4246, -inf
  %4259 = vmax.xlane.f32.xlu0 %v4258
  %v4260 = vpop.xlane.xlu0 %4259
  %v4261 = vsub.f32 %v4235, %v4251
  %v4262 = vsub.f32 %v4238, %v4254
  %v4263 = vsub.f32 %v4243, %v4257
  %v4264 = vsub.f32 %v4246, %v4260
  %v4265 = vmul.f32 %v4261, 1.442695
  %v4266 = vpow.pop %v4265
  %v4267 = vmul.f32 %v4262, 1.442695
  %v4268 = vpow.pop %v4267
  %v4269 = vmul.f32 %v4263, 1.442695
  %v4270 = vpow.pop %v4269
  %v4271 = vmul.f32 %v4264, 1.442695
  %v4272 = vpow.pop %v4271
  %v4273 = vsel %vm154, %v4266, 0.0
  %4274 = vadd.xlane.f32.xlu0 %v4273
  %v4275 = vpop.xlane.xlu0 %4274
  %v4276 = vsel %vm154, %v4268, 0.0
  %4277 = vadd.xlane.f32.xlu0 %v4276
  %v4278 = vpop.xlane.xlu0 %4277
  %v4279 = vsel %vm154, %v4270, 0.0
  %4280 = vadd.xlane.f32.xlu0 %v4279
  %v4281 = vpop.xlane.xlu0 %4280
  %v4282 = vsel %vm154, %v4272, 0.0
  %4283 = vadd.xlane.f32.xlu0 %v4282
  %v4284 = vpop.xlane.xlu0 %4283
  %v4285 = vrcp.pop %v4275
  %v4286 = vmul.f32 %v4266, %v4285
  %v4287 = vrcp.pop %v4278
  %v4288 = vmul.f32 %v4268, %v4287
  %v4289 = vrcp.pop %v4281
  %v4290 = vmul.f32 %v4270, %v4289
  %v4291 = vrcp.pop %v4284
  %v4292 = vmul.f32 %v4272, %v4291
  %v4293 = vpack.c.bf16 %v4288, %v4286
  %v4294 = vpack.c.bf16 %v4292, %v4290
  %4295 = vrot.lane.b32.xlu0 %v4000, 56
  %v4296 = vpop.permute.xlu0 %4295
  %4297 = vrot.lane.b32.xlu0 %v4001, 56
  %v4298 = vpop.permute.xlu0 %4297
  %v4302 = vsel %vm154, %v4293, 0
  %v4305 = vsel %vm154, %v4294, 0
  %4307 = vmatprep.subr.bf16.mxu0 0
  %4308 = vmatpush1.bf16.msra.mxu0 0
  %4309 = vmatprep.subr.bf16.mxu0 0
  %4310 = vmatpush1.bf16.msra.mxu0 0
  %4311 = vmatprep.subr.bf16.mxu0 0
  %4312 = vmatpush1.bf16.msra.mxu0 0
  %4313 = vmatprep.subr.bf16.mxu0 0
  %4314 = vmatpush1.bf16.msra.mxu0 0
  %4315 = vmatprep.subr.bf16.mxu0 0
  %4316 = vmatpush1.bf16.msra.mxu0 0
  %4317 = vmatprep.subr.bf16.mxu0 0
  %4318 = vmatpush1.bf16.msra.mxu0 0
  %4319 = vmatprep.subr.bf16.mxu0 0
  %4320 = vmatpush1.bf16.msra.mxu0 %v4298
  %4321 = vmatprep.subr.bf16.mxu0 0
  %4322 = vmatpush1.bf16.msra.mxu0 %v4296
  %4323 = vmatprep.subr.bf16.mxu0 0
  %4324 = vmatpush2.bf16.msra.mxu0 0
  %4325 = vmatprep.subr.bf16.mxu0 0
  %4326 = vmatpush2.bf16.msra.mxu0 0
  %4327 = vmatprep.subr.bf16.mxu0 0
  %4328 = vmatpush2.bf16.msra.mxu0 0
  %4329 = vmatprep.subr.bf16.mxu0 0
  %4330 = vmatpush2.bf16.msra.mxu0 0
  %4331 = vmatprep.subr.bf16.mxu0 0
  %4332 = vmatpush2.bf16.msra.mxu0 0
  %4333 = vmatprep.subr.bf16.mxu0 0
  %4334 = vmatpush2.bf16.msra.mxu0 0
  %4335 = vmatprep.subr.bf16.mxu0 0
  %4336 = vmatpush2.bf16.msra.mxu0 0
  %4337 = vmatprep.subr.bf16.mxu0 0
  %4338 = vmatpush2.bf16.msra.mxu0 0
  %4339 = vmatprep.mubr.bf16.mxu0 0
  %4340 = vmatmul.mubr.bf16.gmra.mxu0 %v4302
  %v4341 = vpop.f32.mrf.mxu0
  %v4342 = vadd.f32 0.0, %v4341
  %v4343 = vpop.f32.mrf.mxu0
  %v4344 = vpop.f32.mrf.mxu0
  %v4345 = vadd.f32 0.0, %v4344
  %v4346 = vpop.f32.mrf.mxu0
  %4347 = vmatprep.mubr.bf16.mxu0 0
  %4348 = vmatmul.mubr.bf16.gmra.mxu0 %v4305
  %v4349 = vpop.f32.mrf.mxu0
  %v4350 = vadd.f32 0.0, %v4349
  %v4351 = vpop.f32.mrf.mxu0
  %v4352 = vpop.f32.mrf.mxu0
  %v4353 = vadd.f32 0.0, %v4352
  %v4354 = vpop.f32.mrf.mxu0
  %4355 = vdwg.mxu0
  %v4356 = vpack.c.bf16 %v4345, %v4342
  %v4357 = vpack.c.bf16 %v4353, %v4350
  %4358 = vrot.lane.b32.xlu0 %v3262, 64
  %v4359 = vpop.permute.xlu0 %4358
  %v4361 = vsel %vm366, %v4356, 0
  %v4364 = vsel %vm366, %v4357, 0
  %v4367 = vsel %vm730, %v4359, 0
  %4369 = vmatprep.subr.bf16.mxu0 0
  %4370 = vmatpush1.bf16.msra.mxu0 0
  %4371 = vmatprep.subr.bf16.mxu0 0
  %4372 = vmatpush1.bf16.msra.mxu0 0
  %4373 = vmatprep.subr.bf16.mxu0 0
  %4374 = vmatpush1.bf16.msra.mxu0 0
  %4375 = vmatprep.subr.bf16.mxu0 0
  %4376 = vmatpush1.bf16.msra.mxu0 0
  %4377 = vmatprep.subr.bf16.mxu0 0
  %4378 = vmatpush1.bf16.msra.mxu0 0
  %4379 = vmatprep.subr.bf16.mxu0 0
  %4380 = vmatpush1.bf16.msra.mxu0 0
  %4381 = vmatprep.subr.bf16.mxu0 0
  %4382 = vmatpush1.bf16.msra.mxu0 0
  %4383 = vmatprep.subr.bf16.mxu0 0
  %4384 = vmatpush1.bf16.msra.mxu0 %v4367
  %4385 = vmatprep.subr.bf16.mxu0 0
  %4386 = vmatpush2.bf16.msra.mxu0 0
  %4387 = vmatprep.subr.bf16.mxu0 0
  %4388 = vmatpush2.bf16.msra.mxu0 0
  %4389 = vmatprep.subr.bf16.mxu0 0
  %4390 = vmatpush2.bf16.msra.mxu0 0
  %4391 = vmatprep.subr.bf16.mxu0 0
  %4392 = vmatpush2.bf16.msra.mxu0 0
  %4393 = vmatprep.subr.bf16.mxu0 0
  %4394 = vmatpush2.bf16.msra.mxu0 0
  %4395 = vmatprep.subr.bf16.mxu0 0
  %4396 = vmatpush2.bf16.msra.mxu0 0
  %4397 = vmatprep.subr.bf16.mxu0 0
  %4398 = vmatpush2.bf16.msra.mxu0 0
  %4399 = vmatprep.subr.bf16.mxu0 0
  %4400 = vmatpush2.bf16.msra.mxu0 0
  %4401 = vmatprep.mubr.bf16.mxu0 0
  %4402 = vmatmul.mubr.bf16.gmra.mxu0 %v4361
  %v4403 = vpop.f32.mrf.mxu0
  %v4404 = vadd.f32 0.0, %v4403
  %v4405 = vpop.f32.mrf.mxu0
  %v4406 = vpop.f32.mrf.mxu0
  %v4407 = vadd.f32 0.0, %v4406
  %v4408 = vpop.f32.mrf.mxu0
  %4409 = vmatprep.mubr.bf16.mxu0 0
  %4410 = vmatmul.mubr.bf16.gmra.mxu0 %v4364
  %v4411 = vpop.f32.mrf.mxu0
  %v4412 = vadd.f32 0.0, %v4411
  %v4413 = vpop.f32.mrf.mxu0
  %v4414 = vpop.f32.mrf.mxu0
  %v4415 = vadd.f32 0.0, %v4414
  %v4416 = vpop.f32.mrf.mxu0
  %4417 = vdwg.mxu0
  %4418 = vrot.lane.b32.xlu0 %v3081, 64
  %v4419 = vpop.permute.xlu0 %4418
  %v4421 = vsel %vm366, %v4176, 0
  %v4424 = vsel %vm366, %v4177, 0
  %v4427 = vsel %vm730, %v4419, 0
  %4429 = vmatprep.subr.bf16.mxu0 0
  %4430 = vmatpush1.bf16.msra.mxu0 0
  %4431 = vmatprep.subr.bf16.mxu0 0
  %4432 = vmatpush1.bf16.msra.mxu0 0
  %4433 = vmatprep.subr.bf16.mxu0 0
  %4434 = vmatpush1.bf16.msra.mxu0 0
  %4435 = vmatprep.subr.bf16.mxu0 0
  %4436 = vmatpush1.bf16.msra.mxu0 0
  %4437 = vmatprep.subr.bf16.mxu0 0
  %4438 = vmatpush1.bf16.msra.mxu0 0
  %4439 = vmatprep.subr.bf16.mxu0 0
  %4440 = vmatpush1.bf16.msra.mxu0 0
  %4441 = vmatprep.subr.bf16.mxu0 0
  %4442 = vmatpush1.bf16.msra.mxu0 0
  %4443 = vmatprep.subr.bf16.mxu0 0
  %4444 = vmatpush1.bf16.msra.mxu0 %v4427
  %4445 = vmatprep.subr.bf16.mxu0 0
  %4446 = vmatpush2.bf16.msra.mxu0 0
  %4447 = vmatprep.subr.bf16.mxu0 0
  %4448 = vmatpush2.bf16.msra.mxu0 0
  %4449 = vmatprep.subr.bf16.mxu0 0
  %4450 = vmatpush2.bf16.msra.mxu0 0
  %4451 = vmatprep.subr.bf16.mxu0 0
  %4452 = vmatpush2.bf16.msra.mxu0 0
  %4453 = vmatprep.subr.bf16.mxu0 0
  %4454 = vmatpush2.bf16.msra.mxu0 0
  %4455 = vmatprep.subr.bf16.mxu0 0
  %4456 = vmatpush2.bf16.msra.mxu0 0
  %4457 = vmatprep.subr.bf16.mxu0 0
  %4458 = vmatpush2.bf16.msra.mxu0 0
  %4459 = vmatprep.subr.bf16.mxu0 0
  %4460 = vmatpush2.bf16.msra.mxu0 0
  %4461 = vmatprep.mubr.bf16.mxu0 0
  %4462 = vmatmul.mubr.bf16.gmra.mxu0 %v4421
  %v4463 = vpop.f32.mrf.mxu0
  %v4464 = vadd.f32 %v4404, %v4463
  %v4465 = vpop.f32.mrf.mxu0
  %v4466 = vpop.f32.mrf.mxu0
  %v4467 = vadd.f32 %v4407, %v4466
  %v4468 = vpop.f32.mrf.mxu0
  %4469 = vmatprep.mubr.bf16.mxu0 0
  %4470 = vmatmul.mubr.bf16.gmra.mxu0 %v4424
  %v4471 = vpop.f32.mrf.mxu0
  %v4472 = vadd.f32 %v4412, %v4471
  %v4473 = vpop.f32.mrf.mxu0
  %v4474 = vpop.f32.mrf.mxu0
  %v4475 = vadd.f32 %v4415, %v4474
  %v4476 = vpop.f32.mrf.mxu0
  %4477 = vdwg.mxu0
  %4478 = vrot.lane.b32.xlu0 %v3998, 112
  %v4479 = vpop.permute.xlu0 %4478
  %4480 = vrot.lane.b32.xlu0 %v3999, 112
  %v4481 = vpop.permute.xlu0 %4480
  %4482 = vrot.lane.b32.xlu0 %v4000, 80
  %v4483 = vpop.permute.xlu0 %4482
  %4484 = vrot.lane.b32.xlu0 %v4001, 80
  %v4485 = vpop.permute.xlu0 %4484
  %v4487 = vsel %vm366, %v4479, 0
  %v4490 = vsel %vm366, %v4481, 0
  %v4493 = vsel %vm366, %v4483, 0
  %v4496 = vsel %vm366, %v4485, 0
  %4498 = vmatprep.subr.bf16.mxu0 0
  %4499 = vmatpush1.bf16.xpose.msra.mxu0 0
  %4500 = vmatprep.subr.bf16.mxu0 0
  %4501 = vmatpush1.bf16.xpose.msra.mxu0 0
  %4502 = vmatprep.subr.bf16.mxu0 0
  %4503 = vmatpush1.bf16.xpose.msra.mxu0 0
  %4504 = vmatprep.subr.bf16.mxu0 0
  %4505 = vmatpush1.bf16.xpose.msra.mxu0 0
  %4506 = vmatprep.subr.bf16.mxu0 0
  %4507 = vmatpush1.bf16.xpose.msra.mxu0 0
  %4508 = vmatprep.subr.bf16.mxu0 0
  %4509 = vmatpush1.bf16.xpose.msra.mxu0 0
  %4510 = vmatprep.subr.bf16.mxu0 0
  %4511 = vmatpush1.bf16.xpose.msra.mxu0 %v4496
  %4512 = vmatprep.subr.bf16.mxu0 0
  %4513 = vmatpush1.bf16.xpose.msra.mxu0 %v4493
  %4514 = vmatprep.subr.bf16.mxu0 0
  %4515 = vmatpush2.bf16.xpose.msra.mxu0 0
  %4516 = vmatprep.subr.bf16.mxu0 0
  %4517 = vmatpush2.bf16.xpose.msra.mxu0 0
  %4518 = vmatprep.subr.bf16.mxu0 0
  %4519 = vmatpush2.bf16.xpose.msra.mxu0 0
  %4520 = vmatprep.subr.bf16.mxu0 0
  %4521 = vmatpush2.bf16.xpose.msra.mxu0 0
  %4522 = vmatprep.subr.bf16.mxu0 0
  %4523 = vmatpush2.bf16.xpose.msra.mxu0 0
  %4524 = vmatprep.subr.bf16.mxu0 0
  %4525 = vmatpush2.bf16.xpose.msra.mxu0 0
  %4526 = vmatprep.subr.bf16.mxu0 0
  %4527 = vmatpush2.bf16.xpose.msra.mxu0 0
  %4528 = vmatprep.subr.bf16.mxu0 0
  %4529 = vmatpush2.bf16.xpose.msra.mxu0 0
  %4530 = vmatprep.mubr.bf16.mxu0 0
  %4531 = vmatmul.mubr.bf16.gmra.mxu0 %v4487
  %v4532 = vpop.f32.mrf.mxu0
  %v4533 = vadd.f32 %v355, %v4532
  %v4534 = vpop.f32.mrf.mxu0
  %v4535 = vpop.f32.mrf.mxu0
  %v4536 = vadd.f32 %v357, %v4535
  %v4537 = vpop.f32.mrf.mxu0
  %4538 = vmatprep.mubr.bf16.mxu0 0
  %4539 = vmatmul.mubr.bf16.gmra.mxu0 %v4490
  %v4540 = vpop.f32.mrf.mxu0
  %v4541 = vadd.f32 %v359, %v4540
  %v4542 = vpop.f32.mrf.mxu0
  %v4543 = vpop.f32.mrf.mxu0
  %v4544 = vadd.f32 %v361, %v4543
  %v4545 = vpop.f32.mrf.mxu0
  %4546 = vdwg.mxu0
  %v4547 = vsel %vm154, %v4533, -inf
  %4548 = vmax.xlane.f32.xlu0 %v4547
  %v4549 = vpop.xlane.xlu0 %4548
  %v4550 = vsel %vm154, %v4536, -inf
  %4551 = vmax.xlane.f32.xlu0 %v4550
  %v4552 = vpop.xlane.xlu0 %4551
  %v4553 = vsel %vm154, %v4541, -inf
  %4554 = vmax.xlane.f32.xlu0 %v4553
  %v4555 = vpop.xlane.xlu0 %4554
  %v4556 = vsel %vm154, %v4544, -inf
  %4557 = vmax.xlane.f32.xlu0 %v4556
  %v4558 = vpop.xlane.xlu0 %4557
  %v4559 = vsub.f32 %v4533, %v4549
  %v4560 = vsub.f32 %v4536, %v4552
  %v4561 = vsub.f32 %v4541, %v4555
  %v4562 = vsub.f32 %v4544, %v4558
  %v4563 = vmul.f32 %v4559, 1.442695
  %v4564 = vpow.pop %v4563
  %v4565 = vmul.f32 %v4560, 1.442695
  %v4566 = vpow.pop %v4565
  %v4567 = vmul.f32 %v4561, 1.442695
  %v4568 = vpow.pop %v4567
  %v4569 = vmul.f32 %v4562, 1.442695
  %v4570 = vpow.pop %v4569
  %v4571 = vsel %vm154, %v4564, 0.0
  %4572 = vadd.xlane.f32.xlu0 %v4571
  %v4573 = vpop.xlane.xlu0 %4572
  %v4574 = vsel %vm154, %v4566, 0.0
  %4575 = vadd.xlane.f32.xlu0 %v4574
  %v4576 = vpop.xlane.xlu0 %4575
  %v4577 = vsel %vm154, %v4568, 0.0
  %4578 = vadd.xlane.f32.xlu0 %v4577
  %v4579 = vpop.xlane.xlu0 %4578
  %v4580 = vsel %vm154, %v4570, 0.0
  %4581 = vadd.xlane.f32.xlu0 %v4580
  %v4582 = vpop.xlane.xlu0 %4581
  %v4583 = vrcp.pop %v4573
  %v4584 = vmul.f32 %v4564, %v4583
  %v4585 = vrcp.pop %v4576
  %v4586 = vmul.f32 %v4566, %v4585
  %v4587 = vrcp.pop %v4579
  %v4588 = vmul.f32 %v4568, %v4587
  %v4589 = vrcp.pop %v4582
  %v4590 = vmul.f32 %v4570, %v4589
  %v4591 = vpack.c.bf16 %v4586, %v4584
  %v4592 = vpack.c.bf16 %v4590, %v4588
  %4593 = vrot.lane.b32.xlu0 %v4000, 48
  %v4594 = vpop.permute.xlu0 %4593
  %4595 = vrot.lane.b32.xlu0 %v4001, 48
  %v4596 = vpop.permute.xlu0 %4595
  %v4600 = vsel %vm154, %v4591, 0
  %v4603 = vsel %vm154, %v4592, 0
  %4605 = vmatprep.subr.bf16.mxu0 0
  %4606 = vmatpush1.bf16.msra.mxu0 0
  %4607 = vmatprep.subr.bf16.mxu0 0
  %4608 = vmatpush1.bf16.msra.mxu0 0
  %4609 = vmatprep.subr.bf16.mxu0 0
  %4610 = vmatpush1.bf16.msra.mxu0 0
  %4611 = vmatprep.subr.bf16.mxu0 0
  %4612 = vmatpush1.bf16.msra.mxu0 0
  %4613 = vmatprep.subr.bf16.mxu0 0
  %4614 = vmatpush1.bf16.msra.mxu0 0
  %4615 = vmatprep.subr.bf16.mxu0 0
  %4616 = vmatpush1.bf16.msra.mxu0 0
  %4617 = vmatprep.subr.bf16.mxu0 0
  %4618 = vmatpush1.bf16.msra.mxu0 %v4596
  %4619 = vmatprep.subr.bf16.mxu0 0
  %4620 = vmatpush1.bf16.msra.mxu0 %v4594
  %4621 = vmatprep.subr.bf16.mxu0 0
  %4622 = vmatpush2.bf16.msra.mxu0 0
  %4623 = vmatprep.subr.bf16.mxu0 0
  %4624 = vmatpush2.bf16.msra.mxu0 0
  %4625 = vmatprep.subr.bf16.mxu0 0
  %4626 = vmatpush2.bf16.msra.mxu0 0
  %4627 = vmatprep.subr.bf16.mxu0 0
  %4628 = vmatpush2.bf16.msra.mxu0 0
  %4629 = vmatprep.subr.bf16.mxu0 0
  %4630 = vmatpush2.bf16.msra.mxu0 0
  %4631 = vmatprep.subr.bf16.mxu0 0
  %4632 = vmatpush2.bf16.msra.mxu0 0
  %4633 = vmatprep.subr.bf16.mxu0 0
  %4634 = vmatpush2.bf16.msra.mxu0 0
  %4635 = vmatprep.subr.bf16.mxu0 0
  %4636 = vmatpush2.bf16.msra.mxu0 0
  %4637 = vmatprep.mubr.bf16.mxu0 0
  %4638 = vmatmul.mubr.bf16.gmra.mxu0 %v4600
  %v4639 = vpop.f32.mrf.mxu0
  %v4640 = vadd.f32 0.0, %v4639
  %v4641 = vpop.f32.mrf.mxu0
  %v4642 = vpop.f32.mrf.mxu0
  %v4643 = vadd.f32 0.0, %v4642
  %v4644 = vpop.f32.mrf.mxu0
  %4645 = vmatprep.mubr.bf16.mxu0 0
  %4646 = vmatmul.mubr.bf16.gmra.mxu0 %v4603
  %v4647 = vpop.f32.mrf.mxu0
  %v4648 = vadd.f32 0.0, %v4647
  %v4649 = vpop.f32.mrf.mxu0
  %v4650 = vpop.f32.mrf.mxu0
  %v4651 = vadd.f32 0.0, %v4650
  %v4652 = vpop.f32.mrf.mxu0
  %4653 = vdwg.mxu0
  %v4654 = vpack.c.bf16 %v4643, %v4640
  %v4655 = vpack.c.bf16 %v4651, %v4648
  %4656 = vrot.lane.b32.xlu0 %v3563, 64
  %v4657 = vpop.permute.xlu0 %4656
  %v4659 = vsel %vm366, %v4654, 0
  %v4662 = vsel %vm366, %v4655, 0
  %v4665 = vsel %vm730, %v4657, 0
  %4667 = vmatprep.subr.bf16.mxu0 0
  %4668 = vmatpush1.bf16.msra.mxu0 0
  %4669 = vmatprep.subr.bf16.mxu0 0
  %4670 = vmatpush1.bf16.msra.mxu0 0
  %4671 = vmatprep.subr.bf16.mxu0 0
  %4672 = vmatpush1.bf16.msra.mxu0 0
  %4673 = vmatprep.subr.bf16.mxu0 0
  %4674 = vmatpush1.bf16.msra.mxu0 0
  %4675 = vmatprep.subr.bf16.mxu0 0
  %4676 = vmatpush1.bf16.msra.mxu0 0
  %4677 = vmatprep.subr.bf16.mxu0 0
  %4678 = vmatpush1.bf16.msra.mxu0 0
  %4679 = vmatprep.subr.bf16.mxu0 0
  %4680 = vmatpush1.bf16.msra.mxu0 0
  %4681 = vmatprep.subr.bf16.mxu0 0
  %4682 = vmatpush1.bf16.msra.mxu0 %v4665
  %4683 = vmatprep.subr.bf16.mxu0 0
  %4684 = vmatpush2.bf16.msra.mxu0 0
  %4685 = vmatprep.subr.bf16.mxu0 0
  %4686 = vmatpush2.bf16.msra.mxu0 0
  %4687 = vmatprep.subr.bf16.mxu0 0
  %4688 = vmatpush2.bf16.msra.mxu0 0
  %4689 = vmatprep.subr.bf16.mxu0 0
  %4690 = vmatpush2.bf16.msra.mxu0 0
  %4691 = vmatprep.subr.bf16.mxu0 0
  %4692 = vmatpush2.bf16.msra.mxu0 0
  %4693 = vmatprep.subr.bf16.mxu0 0
  %4694 = vmatpush2.bf16.msra.mxu0 0
  %4695 = vmatprep.subr.bf16.mxu0 0
  %4696 = vmatpush2.bf16.msra.mxu0 0
  %4697 = vmatprep.subr.bf16.mxu0 0
  %4698 = vmatpush2.bf16.msra.mxu0 0
  %4699 = vmatprep.mubr.bf16.mxu0 0
  %4700 = vmatmul.mubr.bf16.gmra.mxu0 %v4659
  %v4701 = vpop.f32.mrf.mxu0
  %v4702 = vadd.f32 0.0, %v4701
  %v4703 = vpop.f32.mrf.mxu0
  %v4704 = vpop.f32.mrf.mxu0
  %v4705 = vadd.f32 0.0, %v4704
  %v4706 = vpop.f32.mrf.mxu0
  %4707 = vmatprep.mubr.bf16.mxu0 0
  %4708 = vmatmul.mubr.bf16.gmra.mxu0 %v4662
  %v4709 = vpop.f32.mrf.mxu0
  %v4710 = vadd.f32 0.0, %v4709
  %v4711 = vpop.f32.mrf.mxu0
  %v4712 = vpop.f32.mrf.mxu0
  %v4713 = vadd.f32 0.0, %v4712
  %v4714 = vpop.f32.mrf.mxu0
  %4715 = vdwg.mxu0
  %v4716 = vadd.f32 %v4464, %v4702
  %v4717 = vadd.f32 %v4467, %v4705
  %v4718 = vadd.f32 %v4472, %v4710
  %v4719 = vadd.f32 %v4475, %v4713
  %4720 = vrot.lane.b32.xlu0 %v3998, 104
  %v4721 = vpop.permute.xlu0 %4720
  %4722 = vrot.lane.b32.xlu0 %v3999, 104
  %v4723 = vpop.permute.xlu0 %4722
  %4724 = vrot.lane.b32.xlu0 %v4000, 72
  %v4725 = vpop.permute.xlu0 %4724
  %4726 = vrot.lane.b32.xlu0 %v4001, 72
  %v4727 = vpop.permute.xlu0 %4726
  %v4729 = vsel %vm366, %v4721, 0
  %v4732 = vsel %vm366, %v4723, 0
  %v4735 = vsel %vm366, %v4725, 0
  %v4738 = vsel %vm366, %v4727, 0
  %4740 = vmatprep.subr.bf16.mxu0 0
  %4741 = vmatpush1.bf16.xpose.msra.mxu0 0
  %4742 = vmatprep.subr.bf16.mxu0 0
  %4743 = vmatpush1.bf16.xpose.msra.mxu0 0
  %4744 = vmatprep.subr.bf16.mxu0 0
  %4745 = vmatpush1.bf16.xpose.msra.mxu0 0
  %4746 = vmatprep.subr.bf16.mxu0 0
  %4747 = vmatpush1.bf16.xpose.msra.mxu0 0
  %4748 = vmatprep.subr.bf16.mxu0 0
  %4749 = vmatpush1.bf16.xpose.msra.mxu0 0
  %4750 = vmatprep.subr.bf16.mxu0 0
  %4751 = vmatpush1.bf16.xpose.msra.mxu0 0
  %4752 = vmatprep.subr.bf16.mxu0 0
  %4753 = vmatpush1.bf16.xpose.msra.mxu0 %v4738
  %4754 = vmatprep.subr.bf16.mxu0 0
  %4755 = vmatpush1.bf16.xpose.msra.mxu0 %v4735
  %4756 = vmatprep.subr.bf16.mxu0 0
  %4757 = vmatpush2.bf16.xpose.msra.mxu0 0
  %4758 = vmatprep.subr.bf16.mxu0 0
  %4759 = vmatpush2.bf16.xpose.msra.mxu0 0
  %4760 = vmatprep.subr.bf16.mxu0 0
  %4761 = vmatpush2.bf16.xpose.msra.mxu0 0
  %4762 = vmatprep.subr.bf16.mxu0 0
  %4763 = vmatpush2.bf16.xpose.msra.mxu0 0
  %4764 = vmatprep.subr.bf16.mxu0 0
  %4765 = vmatpush2.bf16.xpose.msra.mxu0 0
  %4766 = vmatprep.subr.bf16.mxu0 0
  %4767 = vmatpush2.bf16.xpose.msra.mxu0 0
  %4768 = vmatprep.subr.bf16.mxu0 0
  %4769 = vmatpush2.bf16.xpose.msra.mxu0 0
  %4770 = vmatprep.subr.bf16.mxu0 0
  %4771 = vmatpush2.bf16.xpose.msra.mxu0 0
  %4772 = vmatprep.mubr.bf16.mxu0 0
  %4773 = vmatmul.mubr.bf16.gmra.mxu0 %v4729
  %v4774 = vpop.f32.mrf.mxu0
  %v4775 = vadd.f32 %v355, %v4774
  %v4776 = vpop.f32.mrf.mxu0
  %v4777 = vpop.f32.mrf.mxu0
  %v4778 = vadd.f32 %v357, %v4777
  %v4779 = vpop.f32.mrf.mxu0
  %4780 = vmatprep.mubr.bf16.mxu0 0
  %4781 = vmatmul.mubr.bf16.gmra.mxu0 %v4732
  %v4782 = vpop.f32.mrf.mxu0
  %v4783 = vadd.f32 %v359, %v4782
  %v4784 = vpop.f32.mrf.mxu0
  %v4785 = vpop.f32.mrf.mxu0
  %v4786 = vadd.f32 %v361, %v4785
  %v4787 = vpop.f32.mrf.mxu0
  %4788 = vdwg.mxu0
  %v4789 = vsel %vm154, %v4775, -inf
  %4790 = vmax.xlane.f32.xlu0 %v4789
  %v4791 = vpop.xlane.xlu0 %4790
  %v4792 = vsel %vm154, %v4778, -inf
  %4793 = vmax.xlane.f32.xlu0 %v4792
  %v4794 = vpop.xlane.xlu0 %4793
  %v4795 = vsel %vm154, %v4783, -inf
  %4796 = vmax.xlane.f32.xlu0 %v4795
  %v4797 = vpop.xlane.xlu0 %4796
  %v4798 = vsel %vm154, %v4786, -inf
  %4799 = vmax.xlane.f32.xlu0 %v4798
  %v4800 = vpop.xlane.xlu0 %4799
  %v4801 = vsub.f32 %v4775, %v4791
  %v4802 = vsub.f32 %v4778, %v4794
  %v4803 = vsub.f32 %v4783, %v4797
  %v4804 = vsub.f32 %v4786, %v4800
  %v4805 = vmul.f32 %v4801, 1.442695
  %v4806 = vpow.pop %v4805
  %v4807 = vmul.f32 %v4802, 1.442695
  %v4808 = vpow.pop %v4807
  %v4809 = vmul.f32 %v4803, 1.442695
  %v4810 = vpow.pop %v4809
  %v4811 = vmul.f32 %v4804, 1.442695
  %v4812 = vpow.pop %v4811
  %v4813 = vsel %vm154, %v4806, 0.0
  %4814 = vadd.xlane.f32.xlu0 %v4813
  %v4815 = vpop.xlane.xlu0 %4814
  %v4816 = vsel %vm154, %v4808, 0.0
  %4817 = vadd.xlane.f32.xlu0 %v4816
  %v4818 = vpop.xlane.xlu0 %4817
  %v4819 = vsel %vm154, %v4810, 0.0
  %4820 = vadd.xlane.f32.xlu0 %v4819
  %v4821 = vpop.xlane.xlu0 %4820
  %v4822 = vsel %vm154, %v4812, 0.0
  %4823 = vadd.xlane.f32.xlu0 %v4822
  %v4824 = vpop.xlane.xlu0 %4823
  %v4825 = vrcp.pop %v4815
  %v4826 = vmul.f32 %v4806, %v4825
  %v4827 = vrcp.pop %v4818
  %v4828 = vmul.f32 %v4808, %v4827
  %v4829 = vrcp.pop %v4821
  %v4830 = vmul.f32 %v4810, %v4829
  %v4831 = vrcp.pop %v4824
  %v4832 = vmul.f32 %v4812, %v4831
  %v4833 = vpack.c.bf16 %v4828, %v4826
  %v4834 = vpack.c.bf16 %v4832, %v4830
  %4835 = vrot.lane.b32.xlu0 %v4000, 40
  %v4836 = vpop.permute.xlu0 %4835
  %4837 = vrot.lane.b32.xlu0 %v4001, 40
  %v4838 = vpop.permute.xlu0 %4837
  %v4842 = vsel %vm154, %v4833, 0
  %v4845 = vsel %vm154, %v4834, 0
  %4847 = vmatprep.subr.bf16.mxu0 0
  %4848 = vmatpush1.bf16.msra.mxu0 0
  %4849 = vmatprep.subr.bf16.mxu0 0
  %4850 = vmatpush1.bf16.msra.mxu0 0
  %4851 = vmatprep.subr.bf16.mxu0 0
  %4852 = vmatpush1.bf16.msra.mxu0 0
  %4853 = vmatprep.subr.bf16.mxu0 0
  %4854 = vmatpush1.bf16.msra.mxu0 0
  %4855 = vmatprep.subr.bf16.mxu0 0
  %4856 = vmatpush1.bf16.msra.mxu0 0
  %4857 = vmatprep.subr.bf16.mxu0 0
  %4858 = vmatpush1.bf16.msra.mxu0 0
  %4859 = vmatprep.subr.bf16.mxu0 0
  %4860 = vmatpush1.bf16.msra.mxu0 %v4838
  %4861 = vmatprep.subr.bf16.mxu0 0
  %4862 = vmatpush1.bf16.msra.mxu0 %v4836
  %4863 = vmatprep.subr.bf16.mxu0 0
  %4864 = vmatpush2.bf16.msra.mxu0 0
  %4865 = vmatprep.subr.bf16.mxu0 0
  %4866 = vmatpush2.bf16.msra.mxu0 0
  %4867 = vmatprep.subr.bf16.mxu0 0
  %4868 = vmatpush2.bf16.msra.mxu0 0
  %4869 = vmatprep.subr.bf16.mxu0 0
  %4870 = vmatpush2.bf16.msra.mxu0 0
  %4871 = vmatprep.subr.bf16.mxu0 0
  %4872 = vmatpush2.bf16.msra.mxu0 0
  %4873 = vmatprep.subr.bf16.mxu0 0
  %4874 = vmatpush2.bf16.msra.mxu0 0
  %4875 = vmatprep.subr.bf16.mxu0 0
  %4876 = vmatpush2.bf16.msra.mxu0 0
  %4877 = vmatprep.subr.bf16.mxu0 0
  %4878 = vmatpush2.bf16.msra.mxu0 0
  %4879 = vmatprep.mubr.bf16.mxu0 0
  %4880 = vmatmul.mubr.bf16.gmra.mxu0 %v4842
  %v4881 = vpop.f32.mrf.mxu0
  %v4882 = vadd.f32 0.0, %v4881
  %v4883 = vpop.f32.mrf.mxu0
  %v4884 = vpop.f32.mrf.mxu0
  %v4885 = vadd.f32 0.0, %v4884
  %v4886 = vpop.f32.mrf.mxu0
  %4887 = vmatprep.mubr.bf16.mxu0 0
  %4888 = vmatmul.mubr.bf16.gmra.mxu0 %v4845
  %v4889 = vpop.f32.mrf.mxu0
  %v4890 = vadd.f32 0.0, %v4889
  %v4891 = vpop.f32.mrf.mxu0
  %v4892 = vpop.f32.mrf.mxu0
  %v4893 = vadd.f32 0.0, %v4892
  %v4894 = vpop.f32.mrf.mxu0
  %4895 = vdwg.mxu0
  %v4896 = vpack.c.bf16 %v4885, %v4882
  %v4897 = vpack.c.bf16 %v4893, %v4890
  %4898 = vrot.lane.b32.xlu0 %v3807, 64
  %v4899 = vpop.permute.xlu0 %4898
  %v4901 = vsel %vm366, %v4896, 0
  %v4904 = vsel %vm366, %v4897, 0
  %v4907 = vsel %vm730, %v4899, 0
  %4909 = vmatprep.subr.bf16.mxu0 0
  %4910 = vmatpush1.bf16.msra.mxu0 0
  %4911 = vmatprep.subr.bf16.mxu0 0
  %4912 = vmatpush1.bf16.msra.mxu0 0
  %4913 = vmatprep.subr.bf16.mxu0 0
  %4914 = vmatpush1.bf16.msra.mxu0 0
  %4915 = vmatprep.subr.bf16.mxu0 0
  %4916 = vmatpush1.bf16.msra.mxu0 0
  %4917 = vmatprep.subr.bf16.mxu0 0
  %4918 = vmatpush1.bf16.msra.mxu0 0
  %4919 = vmatprep.subr.bf16.mxu0 0
  %4920 = vmatpush1.bf16.msra.mxu0 0
  %4921 = vmatprep.subr.bf16.mxu0 0
  %4922 = vmatpush1.bf16.msra.mxu0 0
  %4923 = vmatprep.subr.bf16.mxu0 0
  %4924 = vmatpush1.bf16.msra.mxu0 %v4907
  %4925 = vmatprep.subr.bf16.mxu0 0
  %4926 = vmatpush2.bf16.msra.mxu0 0
  %4927 = vmatprep.subr.bf16.mxu0 0
  %4928 = vmatpush2.bf16.msra.mxu0 0
  %4929 = vmatprep.subr.bf16.mxu0 0
  %4930 = vmatpush2.bf16.msra.mxu0 0
  %4931 = vmatprep.subr.bf16.mxu0 0
  %4932 = vmatpush2.bf16.msra.mxu0 0
  %4933 = vmatprep.subr.bf16.mxu0 0
  %4934 = vmatpush2.bf16.msra.mxu0 0
  %4935 = vmatprep.subr.bf16.mxu0 0
  %4936 = vmatpush2.bf16.msra.mxu0 0
  %4937 = vmatprep.subr.bf16.mxu0 0
  %4938 = vmatpush2.bf16.msra.mxu0 0
  %4939 = vmatprep.subr.bf16.mxu0 0
  %4940 = vmatpush2.bf16.msra.mxu0 0
  %4941 = vmatprep.mubr.bf16.mxu0 0
  %4942 = vmatmul.mubr.bf16.gmra.mxu0 %v4901
  %v4943 = vpop.f32.mrf.mxu0
  %v4944 = vadd.f32 0.0, %v4943
  %v4945 = vpop.f32.mrf.mxu0
  %v4946 = vpop.f32.mrf.mxu0
  %v4947 = vadd.f32 0.0, %v4946
  %v4948 = vpop.f32.mrf.mxu0
  %4949 = vmatprep.mubr.bf16.mxu0 0
  %4950 = vmatmul.mubr.bf16.gmra.mxu0 %v4904
  %v4951 = vpop.f32.mrf.mxu0
  %v4952 = vadd.f32 0.0, %v4951
  %v4953 = vpop.f32.mrf.mxu0
  %v4954 = vpop.f32.mrf.mxu0
  %v4955 = vadd.f32 0.0, %v4954
  %v4956 = vpop.f32.mrf.mxu0
  %4957 = vdwg.mxu0
  %v4958 = vadd.f32 %v4716, %v4944
  %v4959 = vadd.f32 %v4717, %v4947
  %v4960 = vadd.f32 %v4718, %v4952
  %v4961 = vadd.f32 %v4719, %v4955
  %v4962 = vadd.f32 %v3879, %v4958
  %v4963 = vadd.f32 %v3880, %v4959
  %v4964 = vadd.f32 %v3881, %v4960
  %v4965 = vadd.f32 %v3882, %v4961
  %v4966 = vadd.f32 %v4962, %v2685
  %v4967 = vadd.f32 %v4963, %v2685
  %v4968 = vadd.f32 %v4964, %v2685
  %v4969 = vadd.f32 %v4965, %v2685
  %v4970 = vsel %vm154, %v4966, 0.0
  %4971 = vadd.xlane.f32.xlu0 %v4970
  %v4972 = vpop.xlane.xlu0 %4971
  %v4973 = vsel %vm154, %v4967, 0.0
  %4974 = vadd.xlane.f32.xlu0 %v4973
  %v4975 = vpop.xlane.xlu0 %4974
  %v4976 = vsel %vm154, %v4968, 0.0
  %4977 = vadd.xlane.f32.xlu0 %v4976
  %v4978 = vpop.xlane.xlu0 %4977
  %v4979 = vsel %vm154, %v4969, 0.0
  %4980 = vadd.xlane.f32.xlu0 %v4979
  %v4981 = vpop.xlane.xlu0 %4980
  %v4982 = vmul.f32 %v4972, %v167
  %v4983 = vmul.f32 %v4975, %v167
  %v4984 = vmul.f32 %v4978, %v167
  %v4985 = vmul.f32 %v4981, %v167
  %v4986 = vsub.f32 %v4966, %v4982
  %v4987 = vsub.f32 %v4967, %v4983
  %v4988 = vsub.f32 %v4968, %v4984
  %v4989 = vsub.f32 %v4969, %v4985
  %v4990 = vmul.f32 %v4986, %v4986
  %v4991 = vmul.f32 %v4987, %v4987
  %v4992 = vmul.f32 %v4988, %v4988
  %v4993 = vmul.f32 %v4989, %v4989
  %v4994 = vsel %vm154, %v4990, 0.0
  %4995 = vadd.xlane.f32.xlu0 %v4994
  %v4996 = vpop.xlane.xlu0 %4995
  %v4997 = vsel %vm154, %v4991, 0.0
  %4998 = vadd.xlane.f32.xlu0 %v4997
  %v4999 = vpop.xlane.xlu0 %4998
  %v5000 = vsel %vm154, %v4992, 0.0
  %5001 = vadd.xlane.f32.xlu0 %v5000
  %v5002 = vpop.xlane.xlu0 %5001
  %v5003 = vsel %vm154, %v4993, 0.0
  %5004 = vadd.xlane.f32.xlu0 %v5003
  %v5005 = vpop.xlane.xlu0 %5004
  %v5006 = vmul.f32 %v4996, %v167
  %v5007 = vmul.f32 %v4999, %v167
  %v5008 = vmul.f32 %v5002, %v167
  %v5009 = vmul.f32 %v5005, %v167
  %v5010 = vadd.f32 %v5006, 1e-05
  %v5011 = vadd.f32 %v5007, 1e-05
  %v5012 = vadd.f32 %v5008, 1e-05
  %v5013 = vadd.f32 %v5009, 1e-05
  %v5014 = vrsqrt.pop %v5010
  %v5015 = vrsqrt.pop %v5011
  %v5016 = vrsqrt.pop %v5012
  %v5017 = vrsqrt.pop %v5013
  %v5018 = vmul.f32 %v4986, %v5014
  %v5019 = vmul.f32 %v4987, %v5015
  %v5020 = vmul.f32 %v4988, %v5016
  %v5021 = vmul.f32 %v4989, %v5017
  %v5022 = vpack.c.bf16 %v5019, %v5018
  %v5023 = vpack.c.bf16 %v5021, %v5020
  %v5024 = vpack.c.bf16 %v2698, %v2697
  %v5025 = vpack.c.bf16 %v2700, %v2699
  %v5027 = vsel %vm154, %v5022, 0
  %v5030 = vsel %vm154, %v5023, 0
  %5032 = vmatprep.subr.bf16.mxu0 0
  %5033 = vmatpush1.bf16.msra.mxu0 0
  %5034 = vmatprep.subr.bf16.mxu0 0
  %5035 = vmatpush1.bf16.msra.mxu0 0
  %5036 = vmatprep.subr.bf16.mxu0 0
  %5037 = vmatpush1.bf16.msra.mxu0 0
  %5038 = vmatprep.subr.bf16.mxu0 0
  %5039 = vmatpush1.bf16.msra.mxu0 0
  %5040 = vmatprep.subr.bf16.mxu0 0
  %5041 = vmatpush1.bf16.msra.mxu0 0
  %5042 = vmatprep.subr.bf16.mxu0 0
  %5043 = vmatpush1.bf16.msra.mxu0 0
  %5044 = vmatprep.subr.bf16.mxu0 0
  %5045 = vmatpush1.bf16.msra.mxu0 %v5025
  %5046 = vmatprep.subr.bf16.mxu0 0
  %5047 = vmatpush1.bf16.msra.mxu0 %v5024
  %5048 = vmatprep.subr.bf16.mxu0 0
  %5049 = vmatpush2.bf16.msra.mxu0 0
  %5050 = vmatprep.subr.bf16.mxu0 0
  %5051 = vmatpush2.bf16.msra.mxu0 0
  %5052 = vmatprep.subr.bf16.mxu0 0
  %5053 = vmatpush2.bf16.msra.mxu0 0
  %5054 = vmatprep.subr.bf16.mxu0 0
  %5055 = vmatpush2.bf16.msra.mxu0 0
  %5056 = vmatprep.subr.bf16.mxu0 0
  %5057 = vmatpush2.bf16.msra.mxu0 0
  %5058 = vmatprep.subr.bf16.mxu0 0
  %5059 = vmatpush2.bf16.msra.mxu0 0
  %5060 = vmatprep.subr.bf16.mxu0 0
  %5061 = vmatpush2.bf16.msra.mxu0 0
  %5062 = vmatprep.subr.bf16.mxu0 0
  %5063 = vmatpush2.bf16.msra.mxu0 0
  %5064 = vmatprep.mubr.bf16.mxu0 0
  %5065 = vmatmul.mubr.bf16.gmra.mxu0 %v5027
  %v5066 = vpop.f32.mrf.mxu0
  %v5067 = vadd.f32 %v2686, %v5066
  %v5068 = vpop.f32.mrf.mxu0
  %v5069 = vpop.f32.mrf.mxu0
  %v5070 = vadd.f32 %v2686, %v5069
  %v5071 = vpop.f32.mrf.mxu0
  %5072 = vmatprep.mubr.bf16.mxu0 0
  %5073 = vmatmul.mubr.bf16.gmra.mxu0 %v5030
  %v5074 = vpop.f32.mrf.mxu0
  %v5075 = vadd.f32 %v2686, %v5074
  %v5076 = vpop.f32.mrf.mxu0
  %v5077 = vpop.f32.mrf.mxu0
  %v5078 = vadd.f32 %v2686, %v5077
  %v5079 = vpop.f32.mrf.mxu0
  %5080 = vdwg.mxu0
  %v5081 = vmul.f32 %v5067, 0.5
  %v5082 = vmul.f32 %v5070, 0.5
  %v5083 = vmul.f32 %v5075, 0.5
  %v5084 = vmul.f32 %v5078, 0.5
  %v5085 = vmul.f32 %v5067, 0.044715
  %v5086 = vmul.f32 %v5070, 0.044715
  %v5087 = vmul.f32 %v5075, 0.044715
  %v5088 = vmul.f32 %v5078, 0.044715
  %v5089 = vmul.f32 %v5085, %v5067
  %v5090 = vmul.f32 %v5086, %v5070
  %v5091 = vmul.f32 %v5087, %v5075
  %v5092 = vmul.f32 %v5088, %v5078
  %v5093 = vmul.f32 %v5089, %v5067
  %v5094 = vmul.f32 %v5090, %v5070
  %v5095 = vmul.f32 %v5091, %v5075
  %v5096 = vmul.f32 %v5092, %v5078
  %v5097 = vadd.f32 %v5067, %v5093
  %v5098 = vadd.f32 %v5070, %v5094
  %v5099 = vadd.f32 %v5075, %v5095
  %v5100 = vadd.f32 %v5078, %v5096
  %v5101 = vmul.f32 %v5097, 0.7978846
  %v5102 = vmul.f32 %v5098, 0.7978846
  %v5103 = vmul.f32 %v5099, 0.7978846
  %v5104 = vmul.f32 %v5100, 0.7978846
  %v5105 = vtanh.pop %v5101
  %v5106 = vtanh.pop %v5102
  %v5107 = vtanh.pop %v5103
  %v5108 = vtanh.pop %v5104
  %v5109 = vadd.f32 %v5105, 1.0
  %v5110 = vadd.f32 %v5106, 1.0
  %v5111 = vadd.f32 %v5107, 1.0
  %v5112 = vadd.f32 %v5108, 1.0
  %v5113 = vmul.f32 %v5081, %v5109
  %v5114 = vmul.f32 %v5082, %v5110
  %v5115 = vmul.f32 %v5083, %v5111
  %v5116 = vmul.f32 %v5084, %v5112
  %v5117 = vpack.c.bf16 %v5114, %v5113
  %v5118 = vpack.c.bf16 %v5116, %v5115
  %v5135 = vunpack.c.l.b16 %v2709
  %v5136 = vunpack.c.l.b16 %v2710
  %v5137 = vunpack.c.l.b16 %v2711
  %v5138 = vunpack.c.l.b16 %v2712
  %v5139 = vunpack.c.l.b16 %v2713
  %v5140 = vunpack.c.l.b16 %v2714
  %v5141 = vunpack.c.l.b16 %v2715
  %v5142 = vunpack.c.l.b16 %v2716
  %v5143 = vunpack.c.l.b16 %v2717
  %v5144 = vunpack.c.l.b16 %v2718
  %v5145 = vunpack.c.l.b16 %v2719
  %v5146 = vunpack.c.l.b16 %v2720
  %v5147 = vunpack.c.l.b16 %v2721
  %v5148 = vunpack.c.l.b16 %v2722
  %v5149 = vunpack.c.l.b16 %v2723
  %v5150 = vunpack.c.l.b16 %v2724
  %v5151 = vpack.c.b16 %v5136, %v5135
  %v5152 = vpack.c.b16 %v5138, %v5137
  %v5153 = vpack.c.b16 %v5140, %v5139
  %v5154 = vpack.c.b16 %v5142, %v5141
  %v5155 = vpack.c.b16 %v5144, %v5143
  %v5156 = vpack.c.b16 %v5146, %v5145
  %v5157 = vpack.c.b16 %v5148, %v5147
  %v5158 = vpack.c.b16 %v5150, %v5149
  %5167 = vmatprep.subr.bf16.mxu0 0
  %5168 = vmatpush1.bf16.msra.mxu0 %v5158
  %5169 = vmatprep.subr.bf16.mxu0 0
  %5170 = vmatpush1.bf16.msra.mxu0 %v5157
  %5171 = vmatprep.subr.bf16.mxu0 0
  %5172 = vmatpush1.bf16.msra.mxu0 %v5156
  %5173 = vmatprep.subr.bf16.mxu0 0
  %5174 = vmatpush1.bf16.msra.mxu0 %v5155
  %5175 = vmatprep.subr.bf16.mxu0 0
  %5176 = vmatpush1.bf16.msra.mxu0 %v5154
  %5177 = vmatprep.subr.bf16.mxu0 0
  %5178 = vmatpush1.bf16.msra.mxu0 %v5153
  %5179 = vmatprep.subr.bf16.mxu0 0
  %5180 = vmatpush1.bf16.msra.mxu0 %v5152
  %5181 = vmatprep.subr.bf16.mxu0 0
  %5182 = vmatpush1.bf16.msra.mxu0 %v5151
  %5183 = vmatprep.subr.bf16.mxu0 0
  %5184 = vmatpush2.bf16.msra.mxu0 0
  %5185 = vmatprep.subr.bf16.mxu0 0
  %5186 = vmatpush2.bf16.msra.mxu0 0
  %5187 = vmatprep.subr.bf16.mxu0 0
  %5188 = vmatpush2.bf16.msra.mxu0 0
  %5189 = vmatprep.subr.bf16.mxu0 0
  %5190 = vmatpush2.bf16.msra.mxu0 0
  %5191 = vmatprep.subr.bf16.mxu0 0
  %5192 = vmatpush2.bf16.msra.mxu0 0
  %5193 = vmatprep.subr.bf16.mxu0 0
  %5194 = vmatpush2.bf16.msra.mxu0 0
  %5195 = vmatprep.subr.bf16.mxu0 0
  %5196 = vmatpush2.bf16.msra.mxu0 0
  %5197 = vmatprep.subr.bf16.mxu0 0
  %5198 = vmatpush2.bf16.msra.mxu0 0
  %5199 = vmatprep.mubr.bf16.mxu0 0
  %5200 = vmatmul.mubr.bf16.gmra.mxu0 %v5117
  %v5201 = vpop.f32.mrf.mxu0
  %v5202 = vadd.f32 0.0, %v5201
  %v5203 = vpop.f32.mrf.mxu0
  %v5204 = vpop.f32.mrf.mxu0
  %v5205 = vadd.f32 0.0, %v5204
  %v5206 = vpop.f32.mrf.mxu0
  %5207 = vmatprep.mubr.bf16.mxu0 0
  %5208 = vmatmul.mubr.bf16.gmra.mxu0 %v5118
  %v5209 = vpop.f32.mrf.mxu0
  %v5210 = vadd.f32 0.0, %v5209
  %v5211 = vpop.f32.mrf.mxu0
  %v5212 = vpop.f32.mrf.mxu0
  %v5213 = vadd.f32 0.0, %v5212
  %v5214 = vpop.f32.mrf.mxu0
  %5215 = vdwg.mxu0
  %v5216 = vadd.f32 %v4966, %v5202
  %v5217 = vadd.f32 %v4967, %v5205
  %v5218 = vadd.f32 %v4968, %v5210
  %v5219 = vadd.f32 %v4969, %v5213
  %v5220 = vadd.f32 %v5216, %v2687
  %v5221 = vadd.f32 %v5217, %v2687
  %v5222 = vadd.f32 %v5218, %v2687
  %v5223 = vadd.f32 %v5219, %v2687
  %s5224 = scalar_lea.vmem %s2, 192
  %v5225 = vld [vmem:[%s5224] sm:$0xff]
  %v5226 = vld [vmem:[%s5224 + $0x8] sm:$0xff]
  %v5227 = vld [vmem:[%s5224 + $0x18] sm:$0xff]
  %v5228 = vld [vmem:[%s5224 + $0x20] sm:$0xff]
  %v5229 = vld [vmem:[%s5224 + $0x30] sm:$0xff]
  %v5230 = vld [vmem:[%s5224 + $0x38] sm:$0xff]
  %v5231 = vld [vmem:[%s5224 + $0x48] sm:$0xff]
  %v5232 = vld [vmem:[%s5224 + $0x50] sm:$0xff]
  %s5233 = scalar_lea.vmem %s1, 22
  %v5234 = vld [vmem:[%s5233] ss:$8 sm:$0x3]
  %v5235 = vsel %vm154, %v5220, 0.0
  %5236 = vadd.xlane.f32.xlu0 %v5235
  %v5237 = vpop.xlane.xlu0 %5236
  %v5238 = vsel %vm154, %v5221, 0.0
  %5239 = vadd.xlane.f32.xlu0 %v5238
  %v5240 = vpop.xlane.xlu0 %5239
  %v5241 = vsel %vm154, %v5222, 0.0
  %5242 = vadd.xlane.f32.xlu0 %v5241
  %v5243 = vpop.xlane.xlu0 %5242
  %v5244 = vsel %vm154, %v5223, 0.0
  %5245 = vadd.xlane.f32.xlu0 %v5244
  %v5246 = vpop.xlane.xlu0 %5245
  %v5247 = vmul.f32 %v5237, %v167
  %v5248 = vmul.f32 %v5240, %v167
  %v5249 = vmul.f32 %v5243, %v167
  %v5250 = vmul.f32 %v5246, %v167
  %v5251 = vsub.f32 %v5220, %v5247
  %v5252 = vsub.f32 %v5221, %v5248
  %v5253 = vsub.f32 %v5222, %v5249
  %v5254 = vsub.f32 %v5223, %v5250
  %v5255 = vmul.f32 %v5251, %v5251
  %v5256 = vmul.f32 %v5252, %v5252
  %v5257 = vmul.f32 %v5253, %v5253
  %v5258 = vmul.f32 %v5254, %v5254
  %v5259 = vsel %vm154, %v5255, 0.0
  %5260 = vadd.xlane.f32.xlu0 %v5259
  %v5261 = vpop.xlane.xlu0 %5260
  %v5262 = vsel %vm154, %v5256, 0.0
  %5263 = vadd.xlane.f32.xlu0 %v5262
  %v5264 = vpop.xlane.xlu0 %5263
  %v5265 = vsel %vm154, %v5257, 0.0
  %5266 = vadd.xlane.f32.xlu0 %v5265
  %v5267 = vpop.xlane.xlu0 %5266
  %v5268 = vsel %vm154, %v5258, 0.0
  %5269 = vadd.xlane.f32.xlu0 %v5268
  %v5270 = vpop.xlane.xlu0 %5269
  %v5271 = vmul.f32 %v5261, %v167
  %v5272 = vmul.f32 %v5264, %v167
  %v5273 = vmul.f32 %v5267, %v167
  %v5274 = vmul.f32 %v5270, %v167
  %v5275 = vadd.f32 %v5271, 1e-05
  %v5276 = vadd.f32 %v5272, 1e-05
  %v5277 = vadd.f32 %v5273, 1e-05
  %v5278 = vadd.f32 %v5274, 1e-05
  %v5279 = vrsqrt.pop %v5275
  %v5280 = vrsqrt.pop %v5276
  %v5281 = vrsqrt.pop %v5277
  %v5282 = vrsqrt.pop %v5278
  %v5283 = vmul.f32 %v5251, %v5279
  %v5284 = vmul.f32 %v5252, %v5280
  %v5285 = vmul.f32 %v5253, %v5281
  %v5286 = vmul.f32 %v5254, %v5282
  %v5287 = vpack.c.bf16 %v5284, %v5283
  %v5288 = vpack.c.bf16 %v5286, %v5285
  %v5289 = vpack.c.bf16 %v5227, %v5225
  %v5290 = vpack.c.bf16 %v5228, %v5226
  %v5291 = vpack.c.bf16 %v5231, %v5229
  %v5292 = vpack.c.bf16 %v5232, %v5230
  %v5294 = vlaneseq
  %v5295 = vshrl.u32 %v5294, 7
  %v5296 = vsub.s32 0, %v5295
  %v5297 = vrot.slane %v5234, %v5296
  %v5298 = vlaneseq
  %v5299 = vshrl.u32 %v5298, 7
  %v5300 = vsub.s32 1, %v5299
  %v5301 = vrot.slane %v5234, %v5300
  %v5305 = vsel %vm154, %v5287, 0
  %v5308 = vsel %vm154, %v5288, 0
  %5310 = vmatprep.subr.bf16.mxu0 0
  %5311 = vmatpush1.bf16.msra.mxu0 0
  %5312 = vmatprep.subr.bf16.mxu0 0
  %5313 = vmatpush1.bf16.msra.mxu0 0
  %5314 = vmatprep.subr.bf16.mxu0 0
  %5315 = vmatpush1.bf16.msra.mxu0 0
  %5316 = vmatprep.subr.bf16.mxu0 0
  %5317 = vmatpush1.bf16.msra.mxu0 0
  %5318 = vmatprep.subr.bf16.mxu0 0
  %5319 = vmatpush1.bf16.msra.mxu0 0
  %5320 = vmatprep.subr.bf16.mxu0 0
  %5321 = vmatpush1.bf16.msra.mxu0 0
  %5322 = vmatprep.subr.bf16.mxu0 %v5292
  %5323 = vmatpush1.bf16.msra.mxu0 %v5291
  %5324 = vmatprep.subr.bf16.mxu0 %v5290
  %5325 = vmatpush1.bf16.msra.mxu0 %v5289
  %5326 = vmatprep.subr.bf16.mxu0 0
  %5327 = vmatpush2.bf16.msra.mxu0 0
  %5328 = vmatprep.subr.bf16.mxu0 0
  %5329 = vmatpush2.bf16.msra.mxu0 0
  %5330 = vmatprep.subr.bf16.mxu0 0
  %5331 = vmatpush2.bf16.msra.mxu0 0
  %5332 = vmatprep.subr.bf16.mxu0 0
  %5333 = vmatpush2.bf16.msra.mxu0 0
  %5334 = vmatprep.subr.bf16.mxu0 0
  %5335 = vmatpush2.bf16.msra.mxu0 0
  %5336 = vmatprep.subr.bf16.mxu0 0
  %5337 = vmatpush2.bf16.msra.mxu0 0
  %5338 = vmatprep.subr.bf16.mxu0 0
  %5339 = vmatpush2.bf16.msra.mxu0 0
  %5340 = vmatprep.subr.bf16.mxu0 0
  %5341 = vmatpush2.bf16.msra.mxu0 0
  %5342 = vmatprep.mubr.bf16.mxu0 0
  %5343 = vmatmul.mubr.bf16.gmra.mxu0 %v5305
  %v5344 = vpop.f32.mrf.mxu0
  %v5345 = vadd.f32 %v5297, %v5344
  %v5346 = vpop.f32.mrf.mxu0
  %v5347 = vadd.f32 %v5301, %v5346
  %v5348 = vpop.f32.mrf.mxu0
  %v5349 = vadd.f32 %v5297, %v5348
  %v5350 = vpop.f32.mrf.mxu0
  %v5351 = vadd.f32 %v5301, %v5350
  %5352 = vmatprep.mubr.bf16.mxu0 0
  %5353 = vmatmul.mubr.bf16.gmra.mxu0 %v5308
  %v5354 = vpop.f32.mrf.mxu0
  %v5355 = vadd.f32 %v5297, %v5354
  %v5356 = vpop.f32.mrf.mxu0
  %v5357 = vadd.f32 %v5301, %v5356
  %v5358 = vpop.f32.mrf.mxu0
  %v5359 = vadd.f32 %v5297, %v5358
  %v5360 = vpop.f32.mrf.mxu0
  %v5361 = vadd.f32 %v5301, %v5360
  %5362 = vdwg.mxu0
  %5363 = vst [vmem:[%s5] sm:$0xff] %v5345
  %5364 = vst [vmem:[%s5 + $0x8] sm:$0xff] %v5347
  %5365 = vst [vmem:[%s5 + $0x10] sm:$0xff] %v5349
  %5366 = vst [vmem:[%s5 + $0x18] sm:$0xff] %v5351
  %5367 = vst [vmem:[%s5 + $0x20] sm:$0xff] %v5355
  %5368 = vst [vmem:[%s5 + $0x28] sm:$0xff] %v5357
  %5369 = vst [vmem:[%s5 + $0x30] sm:$0xff] %v5359
  %5370 = vst [vmem:[%s5 + $0x38] sm:$0xff] %v5361
  // Predicated region
  $region22: #{decoder_forward.1} parent=0 // pred_check
    _
  $region23: #{decoder_forward.1} parent=0 // pred_check_branch
    %5372 = sbr.rel (0) target = $region25
  $region24: #{decoder_forward.1} parent=0 // pred_region
    _
  $region25: #{decoder_forward.1} parent=0 // pred_fallthru
    _
  // Predicated region
  $region26: #{decoder_forward.1} parent=0 // pred_check
    _
  $region27: #{decoder_forward.1} parent=0 // pred_check_branch
    %5374 = sbr.rel (0) target = $region29
  $region28: #{decoder_forward.1} parent=0 // pred_region
    _
  $region29: #{decoder_forward.1} parent=0 // pred_fallthru
    _

</llo_original>
